<compile_context>
chip_gen: v7x
topology: tpu7x:2x2x1
jax: 0.10.0
libtpu: 0.0.40
codegen_flags: <defaults>
</compile_context>

<pallas_src>
import functools

import jax
import jax.numpy as jnp
from jax.experimental import pallas as pl
from jax.experimental.pallas import tpu as pltpu


LANE = 128
MXU_DTYPE = jnp.bfloat16   # matmul-input / intermediate-y dtype; jnp.float32 for bit-exact conv
BN_EPS = 1e-5


def _round_up(x, m):
    return (x + m - 1) // m * m


def _pad_channels(c):
    """Small channel counts stay unpadded (full-dim blocks are legal and avoid
    16-32x zero-lane waste at C=4/8); lane-pad only for C >= 128."""
    return c if c <= LANE else _round_up(c, LANE)


def _vmem_limit_bytes():
    """~75% of physical VMEM: ~48 MiB on v7x (64 MiB), ~96 MiB on v5e/v6e (128 MiB)."""
    try:
        phys = pltpu.get_tpu_info().vmem_capacity_bytes
    except Exception:
        phys = 64 * 1024 * 1024
    return min(int(phys) * 3 // 4, 100 * 1024 * 1024)


# ----------------------------- Pallas kernels ------------------------------ #

def _conv_bn_stats_kernel(x_ref, sc_ref, sh_ref, w_ref,
                          y_ref, sum_ref, sq_ref,
                          xpad_ref, acc_ref, *, apply_input_act):
    """One batch element of: [fused previous-layer BN affine + ReLU] ->
    3x3 conv (padding=1, no bias) -> per-image BN statistics.

    x_ref   : (H, W, Ci)       previous layer's raw conv output (or block input)
    sc_ref  : (1, Ci) f32      previous layer's folded BN scale (unused for layer 0)
    sh_ref  : (1, Ci) f32      previous layer's folded BN shift (unused for layer 0)
    w_ref   : (9, Ci, Co)      conv weight, 3x3 taps flattened on the leading axis
    y_ref   : (H, W, Co)       this layer's raw conv output (MXU_DTYPE)
    sum_ref : (1, Co) f32      per-image sum of the f32 conv output
    sq_ref  : (1, Co) f32      per-image sum of squares of the f32 conv output
    xpad_ref: (H+2, W+2, Ci)   f32 VMEM scratch: zero-padded activation
    acc_ref : (H*W, Co)        f32 VMEM accumulator
    """
    h, w_sz, co = y_ref.shape
    ci = x_ref.shape[-1]

    x = x_ref[...].astype(jnp.float32)
    if apply_input_act:
        scale = sc_ref[...].reshape(1, 1, ci)
        shift = sh_ref[...].reshape(1, 1, ci)
        act = jnp.maximum(x * scale + shift, 0.0)
    else:
        act = x

    # Zero-padded activation built in VMEM *after* the affine+ReLU, exactly as
    # nn.Conv2d(padding=1) sees it. Never touches HBM.
    xpad_ref[...] = jnp.zeros_like(xpad_ref)
    xpad_ref[1:h + 1, 1:w_sz + 1, :] = act

    # 3x3 conv as 9 accumulated K=Ci matmuls (no im2col materialization).
    acc_ref[...] = jnp.zeros_like(acc_ref)
    for kh in range(3):
        for kw in range(3):
            tap = xpad_ref[kh:kh + h, kw:kw + w_sz, :]
            tap = tap.reshape(h * w_sz, ci).astype(w_ref.dtype)
            acc_ref[...] += jnp.dot(tap, w_ref[kh * 3 + kw],
                                    preferred_element_type=jnp.float32)

    acc = acc_ref[...]
    y_ref[...] = acc.reshape(h, w_sz, co).astype(y_ref.dtype)
    # BN-statistics epilogue: avoids re-reading y from HBM for batch statistics.
    sum_ref[...] = jnp.sum(acc, axis=0, keepdims=True)
    sq_ref[...] = jnp.sum(acc * acc, axis=0, keepdims=True)


def _affine_relu_kernel(y_ref, sc_ref, sh_ref, o_ref):
    """out = relu(y * scale + shift) — final layer's BN(batch stats) + ReLU."""
    co = o_ref.shape[-1]
    y = y_ref[...].astype(jnp.float32)
    scale = sc_ref[...].reshape(1, 1, co)
    shift = sh_ref[...].reshape(1, 1, co)
    o_ref[...] = jnp.maximum(y * scale + shift, 0.0)


# ------------------------------- wrappers ---------------------------------- #

def _conv_bn_stats_layer(x, scale_in, shift_in, w, apply_input_act):
    """x: (N, H, W, Ci) MXU_DTYPE; scale_in/shift_in: (1, Ci) f32; w: (3,3,Ci,Co) f32."""
    N, H, W, ci = x.shape
    co = w.shape[-1]
    wr = w.reshape(9, ci, co).astype(MXU_DTYPE)
    kernel = functools.partial(_conv_bn_stats_kernel,
                               apply_input_act=apply_input_act)
    return pl.pallas_call(
        kernel,
        out_shape=(
            jax.ShapeDtypeStruct((N, H, W, co), MXU_DTYPE),   # raw conv output (bf16)
            jax.ShapeDtypeStruct((N, 1, co), jnp.float32),    # per-image sum
            jax.ShapeDtypeStruct((N, 1, co), jnp.float32),    # per-image sum of squares
        ),
        grid=(N,),
        in_specs=[
            pl.BlockSpec((None, H, W, ci), lambda n: (n, 0, 0, 0)),
            pl.BlockSpec((1, ci), lambda n: (0, 0)),
            pl.BlockSpec((1, ci), lambda n: (0, 0)),
            pl.BlockSpec((9, ci, co), lambda n: (0, 0, 0)),   # resident weight
        ],
        out_specs=(
            pl.BlockSpec((None, H, W, co), lambda n: (n, 0, 0, 0)),
            pl.BlockSpec((None, 1, co), lambda n: (n, 0, 0)),
            pl.BlockSpec((None, 1, co), lambda n: (n, 0, 0)),
        ),
        scratch_shapes=[
            pltpu.VMEM((H + 2, W + 2, ci), jnp.float32),
            pltpu.VMEM((H * W, co), jnp.float32),
        ],
        compiler_params=pltpu.CompilerParams(
            dimension_semantics=("parallel",),
            vmem_limit_bytes=_vmem_limit_bytes()),
    )(x, scale_in, shift_in, wr)


def _affine_relu(y, scale, shift):
    """Standalone BN affine + ReLU for the final layer (f32 output)."""
    N, H, W, co = y.shape
    return pl.pallas_call(
        _affine_relu_kernel,
        out_shape=jax.ShapeDtypeStruct((N, H, W, co), jnp.float32),
        grid=(N,),
        in_specs=[
            pl.BlockSpec((None, H, W, co), lambda n: (n, 0, 0, 0)),
            pl.BlockSpec((1, co), lambda n: (0, 0)),
            pl.BlockSpec((1, co), lambda n: (0, 0)),
        ],
        out_specs=pl.BlockSpec((None, H, W, co), lambda n: (n, 0, 0, 0)),
        compiler_params=pltpu.CompilerParams(
            dimension_semantics=("parallel",),
            vmem_limit_bytes=_vmem_limit_bytes()),
    )(y, scale, shift)


def _bn_affine(ysum, ysq, gamma, beta, count):
    """Tiny per-channel glue: batch stats -> folded BN(train) affine."""
    tot = jnp.sum(ysum[:, 0, :], axis=0)
    totsq = jnp.sum(ysq[:, 0, :], axis=0)
    mean = tot / count
    # Biased variance (nn.BatchNorm2d training mode). Single-pass E[x^2]-E[x]^2
    # in f32, clamped against tiny cancellation; activations stay O(1) here so
    # a shifted/Welford combine is not needed.
    var = jnp.maximum(totsq / count - mean * mean, 0.0)
    inv = jax.lax.rsqrt(var + BN_EPS)
    scale = gamma.astype(jnp.float32) * inv
    shift = beta.astype(jnp.float32) - mean * scale
    return scale.reshape(1, -1), shift.reshape(1, -1)


def densenet_block_forward(x_nchw, params):
    """Forward matching DenseNetBlock: [conv3x3(pad=1) -> BN(train) -> ReLU] * n_layers."""
    x = jnp.transpose(x_nchw, (0, 2, 3, 1)).astype(jnp.float32)   # NCHW -> NHWC
    N, H, W, cin = x.shape
    cp = _pad_channels(cin)
    if cp != cin:
        x = jnp.pad(x, ((0, 0), (0, 0), (0, 0), (0, cp - cin)))
    count = N * H * W

    act_src = x.astype(MXU_DTYPE)
    scale = jnp.zeros((1, cp), jnp.float32)      # unused for layer 0
    shift = jnp.zeros((1, cp), jnp.float32)
    apply_act = False
    cout = None
    for (w, gamma, beta) in params:
        ci_raw, cout = w.shape[2], w.shape[3]
        ci_p, co_p = _pad_channels(ci_raw), _pad_channels(cout)
        wp = jnp.pad(w, ((0, 0), (0, 0), (0, ci_p - ci_raw), (0, co_p - cout)))
        y, ysum, ysq = _conv_bn_stats_layer(act_src, scale, shift, wp, apply_act)
        gpad = jnp.pad(gamma, (0, co_p - cout))
        bpad = jnp.pad(beta, (0, co_p - cout))
        scale, shift = _bn_affine(ysum, ysq, gpad, bpad, count)
        act_src = y
        apply_act = True

    out = _affine_relu(act_src, scale, shift)    # final BN + ReLU, f32
    out = out[..., :cout]
    return jnp.transpose(out, (0, 3, 1, 2))      # NHWC -> NCHW


def init_params(key, in_channels, out_channels, n_layers):
    """Deterministic synthetic parameters: conv weight (HWIO), BN gamma/beta.
    Conv bias is omitted on purpose — training-mode BatchNorm subtracts the
    per-channel batch mean, so a constant bias cancels exactly in the forward."""
    params = []
    cin = in_channels
    for _ in range(n_layers):
        key, k1, k3, k4 = jax.random.split(key, 4)
        fan_in = cin * 9
        w = jax.random.normal(k1, (3, 3, cin, out_channels), jnp.float32)
        w = w * (1.0 / jnp.sqrt(jnp.float32(fan_in)))
        gamma = 1.0 + 0.1 * jax.random.normal(k3, (out_channels,), jnp.float32)
        beta = 0.1 * jax.random.normal(k4, (out_channels,), jnp.float32)
        params.append((w, gamma, beta))
        cin = out_channels
    return params


def _reference_forward(x_nchw, params):
    """Pure-JAX reference (f32): conv3x3(pad=1) -> BN(batch stats) -> ReLU."""
    x = jnp.transpose(x_nchw, (0, 2, 3, 1)).astype(jnp.float32)
    for (w, gamma, beta) in params:
        y = jax.lax.conv_general_dilated(
            x, w, window_strides=(1, 1), padding="SAME",
            dimension_numbers=("NHWC", "HWIO", "NHWC"))
        mean = jnp.mean(y, axis=(0, 1, 2))
        var = jnp.mean((y - mean) ** 2, axis=(0, 1, 2))
        x = jnp.maximum((y - mean) * jax.lax.rsqrt(var + BN_EPS) * gamma + beta, 0.0)
    return jnp.transpose(x, (0, 3, 1, 2))


# --------------------------------- main ------------------------------------ #

if __name__ == "__main__":
    in_channels, out_channels, n_layers = 4, 8, 3
    N, H, W = 2, 16, 16

    key = jax.random.PRNGKey(0)
    kx, kp = jax.random.split(key)
    x = jax.random.normal(kx, (N, in_channels, H, W), jnp.float32)   # NCHW input
    params = init_params(kp, in_channels, out_channels, n_layers)

    fwd = jax.jit(densenet_block_forward)
    out = jax.block_until_ready(fwd(x, params))

    assert out.shape == (N, out_channels, H, W), out.shape
    assert out.dtype == jnp.float32
    assert bool(jnp.all(out >= 0.0))             # ReLU output is non-negative

    # Loose tolerance because matmul inputs and the intermediate y are bf16
    # (MXU_DTYPE); with MXU_DTYPE = jnp.float32 agreement is ~1e-5.
    ref = jax.block_until_ready(_reference_forward(x, params))
    assert bool(jnp.allclose(out, ref, atol=1e-1, rtol=1e-1))

    print("KERNEL_OK")
</pallas_src>

<mosaic_0001>
module attributes {stable_mosaic.version = 11 : i64} {
  func.func @_conv_bn_stats_kernel(%arg0: i32, %arg1: memref<1x16x16x8xbf16, #tpu.memory_space<vmem>>, %arg2: memref<1x8xf32, #tpu.memory_space<vmem>>, %arg3: memref<1x8xf32, #tpu.memory_space<vmem>>, %arg4: memref<9x8x8xbf16, #tpu.memory_space<vmem>>, %arg5: memref<1x16x16x8xbf16, #tpu.memory_space<vmem>>, %arg6: memref<1x1x8xf32, #tpu.memory_space<vmem>>, %arg7: memref<1x1x8xf32, #tpu.memory_space<vmem>>, %arg8: memref<18x18x8xf32, #tpu.memory_space<vmem>>, %arg9: memref<256x8xf32, #tpu.memory_space<vmem>>) attributes {dimension_semantics = [#tpu.dimension_semantics<parallel>], iteration_bounds = array<i64: 2>, scalar_prefetch = 0 : i64, scratch_operands = 2 : i64, tpu.core_type = #tpu.core_type<tc>, window_params = [{transform_indices = @transform_0, window_bounds = array<i64: 1, 16, 16, 8>}, {pipeline_mode = #tpu.pipeline_mode<synchronous>, transform_indices = @transform_1, window_bounds = array<i64: 1, 8>}, {pipeline_mode = #tpu.pipeline_mode<synchronous>, transform_indices = @transform_2, window_bounds = array<i64: 1, 8>}, {pipeline_mode = #tpu.pipeline_mode<synchronous>, transform_indices = @transform_3, window_bounds = array<i64: 9, 8, 8>}, {transform_indices = @transform_4, window_bounds = array<i64: 1, 16, 16, 8>}, {transform_indices = @transform_5, window_bounds = array<i64: 1, 1, 8>}, {transform_indices = @transform_6, window_bounds = array<i64: 1, 1, 8>}]} {
    %c0 = arith.constant 0 : index
    %c0_0 = arith.constant 0 : index
    %c0_1 = arith.constant 0 : index
    %c0_2 = arith.constant 0 : index
    %0 = vector.load %arg1[%c0, %c0_0, %c0_1, %c0_2] : memref<1x16x16x8xbf16, #tpu.memory_space<vmem>>, vector<1x16x16x8xbf16>
    %1 = vector.shape_cast %0 : vector<1x16x16x8xbf16> to vector<16x16x8xbf16>
    %2 = arith.extf %1 : vector<16x16x8xbf16> to vector<16x16x8xf32>
    %c0_3 = arith.constant 0 : index
    %c0_4 = arith.constant 0 : index
    %3 = vector.load %arg2[%c0_3, %c0_4] : memref<1x8xf32, #tpu.memory_space<vmem>>, vector<1x8xf32>
    %4 = vector.shape_cast %3 : vector<1x8xf32> to vector<1x1x8xf32>
    %c0_5 = arith.constant 0 : index
    %c0_6 = arith.constant 0 : index
    %5 = vector.load %arg3[%c0_5, %c0_6] : memref<1x8xf32, #tpu.memory_space<vmem>>, vector<1x8xf32>
    %6 = vector.shape_cast %5 : vector<1x8xf32> to vector<1x1x8xf32>
    %7 = vector.broadcast %4 : vector<1x1x8xf32> to vector<16x16x8xf32>
    %8 = arith.mulf %2, %7 : vector<16x16x8xf32>
    %9 = vector.broadcast %6 : vector<1x1x8xf32> to vector<16x16x8xf32>
    %10 = arith.addf %8, %9 : vector<16x16x8xf32>
    %cst = arith.constant 0.000000e+00 : f32
    %11 = vector.broadcast %cst : f32 to vector<16x16x8xf32>
    %12 = arith.maximumf %10, %11 : vector<16x16x8xf32>
    %cst_7 = arith.constant 0.000000e+00 : f32
    %13 = vector.broadcast %cst_7 : f32 to vector<18x18x8xf32>
    %c0_8 = arith.constant 0 : index
    %c0_9 = arith.constant 0 : index
    %c0_10 = arith.constant 0 : index
    %14 = vector.load %arg8[%c0_8, %c0_9, %c0_10] : memref<18x18x8xf32, #tpu.memory_space<vmem>>, vector<18x18x8xf32>
    tpu.vector_store %arg8[%c0_8, %c0_9, %c0_10], %13 {strides = array<i32>} : memref<18x18x8xf32, #tpu.memory_space<vmem>>, vector<18x18x8xf32>,
    %c1 = arith.constant 1 : index
    %c1_11 = arith.constant 1 : index
    %c0_12 = arith.constant 0 : index
    %15 = vector.load %arg8[%c1, %c1_11, %c0_12] : memref<18x18x8xf32, #tpu.memory_space<vmem>>, vector<16x16x8xf32>
    tpu.vector_store %arg8[%c1, %c1_11, %c0_12], %12 {strides = array<i32>} : memref<18x18x8xf32, #tpu.memory_space<vmem>>, vector<16x16x8xf32>,
    %cst_13 = arith.constant 0.000000e+00 : f32
    %16 = vector.broadcast %cst_13 : f32 to vector<256x8xf32>
    %c0_14 = arith.constant 0 : index
    %c0_15 = arith.constant 0 : index
    %17 = vector.load %arg9[%c0_14, %c0_15] : memref<256x8xf32, #tpu.memory_space<vmem>>, vector<256x8xf32>
    tpu.vector_store %arg9[%c0_14, %c0_15], %16 {strides = array<i32>} : memref<256x8xf32, #tpu.memory_space<vmem>>, vector<256x8xf32>,
    %c0_16 = arith.constant 0 : index
    %c0_17 = arith.constant 0 : index
    %c0_18 = arith.constant 0 : index
    %18 = vector.load %arg8[%c0_16, %c0_17, %c0_18] : memref<18x18x8xf32, #tpu.memory_space<vmem>>, vector<16x16x8xf32>
    %19 = vector.shape_cast %18 : vector<16x16x8xf32> to vector<256x8xf32>
    %20 = arith.truncf %19 : vector<256x8xf32> to vector<256x8xbf16>
    %c0_19 = arith.constant 0 : index
    %c0_20 = arith.constant 0 : index
    %21 = vector.load %arg9[%c0_19, %c0_20] : memref<256x8xf32, #tpu.memory_space<vmem>>, vector<256x8xf32>
    %c0_21 = arith.constant 0 : index
    %c0_22 = arith.constant 0 : index
    %c0_23 = arith.constant 0 : index
    %22 = vector.load %arg4[%c0_21, %c0_22, %c0_23] : memref<9x8x8xbf16, #tpu.memory_space<vmem>>, vector<1x8x8xbf16>
    %23 = vector.shape_cast %22 : vector<1x8x8xbf16> to vector<8x8xbf16>
    %cst_24 = arith.constant dense<0.000000e+00> : vector<256x8xf32>
    %24 = tpu.matmul %20, %23, %cst_24 {dimension_numbers = #tpu.dot_dimension_numbers<[1], [0], [0], [1], [0, 0, 1, 1], [], []>} : vector<256x8xbf16>, vector<8x8xbf16>, vector<256x8xf32> -> vector<256x8xf32>
    %25 = arith.addf %21, %24 : vector<256x8xf32>
    %c0_25 = arith.constant 0 : index
    %c0_26 = arith.constant 0 : index
    %26 = vector.load %arg9[%c0_25, %c0_26] : memref<256x8xf32, #tpu.memory_space<vmem>>, vector<256x8xf32>
    tpu.vector_store %arg9[%c0_25, %c0_26], %25 {strides = array<i32>} : memref<256x8xf32, #tpu.memory_space<vmem>>, vector<256x8xf32>,
    %c0_27 = arith.constant 0 : index
    %c1_28 = arith.constant 1 : index
    %c0_29 = arith.constant 0 : index
    %27 = vector.load %arg8[%c0_27, %c1_28, %c0_29] : memref<18x18x8xf32, #tpu.memory_space<vmem>>, vector<16x16x8xf32>
    %28 = vector.shape_cast %27 : vector<16x16x8xf32> to vector<256x8xf32>
    %29 = arith.truncf %28 : vector<256x8xf32> to vector<256x8xbf16>
    %c0_30 = arith.constant 0 : index
    %c0_31 = arith.constant 0 : index
    %30 = vector.load %arg9[%c0_30, %c0_31] : memref<256x8xf32, #tpu.memory_space<vmem>>, vector<256x8xf32>
    %c1_32 = arith.constant 1 : index
    %c0_33 = arith.constant 0 : index
    %c0_34 = arith.constant 0 : index
    %31 = vector.load %arg4[%c1_32, %c0_33, %c0_34] : memref<9x8x8xbf16, #tpu.memory_space<vmem>>, vector<1x8x8xbf16>
    %32 = vector.shape_cast %31 : vector<1x8x8xbf16> to vector<8x8xbf16>
    %cst_35 = arith.constant dense<0.000000e+00> : vector<256x8xf32>
    %33 = tpu.matmul %29, %32, %cst_35 {dimension_numbers = #tpu.dot_dimension_numbers<[1], [0], [0], [1], [0, 0, 1, 1], [], []>} : vector<256x8xbf16>, vector<8x8xbf16>, vector<256x8xf32> -> vector<256x8xf32>
    %34 = arith.addf %30, %33 : vector<256x8xf32>
    %c0_36 = arith.constant 0 : index
    %c0_37 = arith.constant 0 : index
    %35 = vector.load %arg9[%c0_36, %c0_37] : memref<256x8xf32, #tpu.memory_space<vmem>>, vector<256x8xf32>
    tpu.vector_store %arg9[%c0_36, %c0_37], %34 {strides = array<i32>} : memref<256x8xf32, #tpu.memory_space<vmem>>, vector<256x8xf32>,
    %c0_38 = arith.constant 0 : index
    %c2 = arith.constant 2 : index
    %c0_39 = arith.constant 0 : index
    %36 = vector.load %arg8[%c0_38, %c2, %c0_39] : memref<18x18x8xf32, #tpu.memory_space<vmem>>, vector<16x16x8xf32>
    %37 = vector.shape_cast %36 : vector<16x16x8xf32> to vector<256x8xf32>
    %38 = arith.truncf %37 : vector<256x8xf32> to vector<256x8xbf16>
    %c0_40 = arith.constant 0 : index
    %c0_41 = arith.constant 0 : index
    %39 = vector.load %arg9[%c0_40, %c0_41] : memref<256x8xf32, #tpu.memory_space<vmem>>, vector<256x8xf32>
    %c2_42 = arith.constant 2 : index
    %c0_43 = arith.constant 0 : index
    %c0_44 = arith.constant 0 : index
    %40 = vector.load %arg4[%c2_42, %c0_43, %c0_44] : memref<9x8x8xbf16, #tpu.memory_space<vmem>>, vector<1x8x8xbf16>
    %41 = vector.shape_cast %40 : vector<1x8x8xbf16> to vector<8x8xbf16>
    %cst_45 = arith.constant dense<0.000000e+00> : vector<256x8xf32>
    %42 = tpu.matmul %38, %41, %cst_45 {dimension_numbers = #tpu.dot_dimension_numbers<[1], [0], [0], [1], [0, 0, 1, 1], [], []>} : vector<256x8xbf16>, vector<8x8xbf16>, vector<256x8xf32> -> vector<256x8xf32>
    %43 = arith.addf %39, %42 : vector<256x8xf32>
    %c0_46 = arith.constant 0 : index
    %c0_47 = arith.constant 0 : index
    %44 = vector.load %arg9[%c0_46, %c0_47] : memref<256x8xf32, #tpu.memory_space<vmem>>, vector<256x8xf32>
    tpu.vector_store %arg9[%c0_46, %c0_47], %43 {strides = array<i32>} : memref<256x8xf32, #tpu.memory_space<vmem>>, vector<256x8xf32>,
    %c1_48 = arith.constant 1 : index
    %c0_49 = arith.constant 0 : index
    %c0_50 = arith.constant 0 : index
    %45 = vector.load %arg8[%c1_48, %c0_49, %c0_50] : memref<18x18x8xf32, #tpu.memory_space<vmem>>, vector<16x16x8xf32>
    %46 = vector.shape_cast %45 : vector<16x16x8xf32> to vector<256x8xf32>
    %47 = arith.truncf %46 : vector<256x8xf32> to vector<256x8xbf16>
    %c0_51 = arith.constant 0 : index
    %c0_52 = arith.constant 0 : index
    %48 = vector.load %arg9[%c0_51, %c0_52] : memref<256x8xf32, #tpu.memory_space<vmem>>, vector<256x8xf32>
    %c3 = arith.constant 3 : index
    %c0_53 = arith.constant 0 : index
    %c0_54 = arith.constant 0 : index
    %49 = vector.load %arg4[%c3, %c0_53, %c0_54] : memref<9x8x8xbf16, #tpu.memory_space<vmem>>, vector<1x8x8xbf16>
    %50 = vector.shape_cast %49 : vector<1x8x8xbf16> to vector<8x8xbf16>
    %cst_55 = arith.constant dense<0.000000e+00> : vector<256x8xf32>
    %51 = tpu.matmul %47, %50, %cst_55 {dimension_numbers = #tpu.dot_dimension_numbers<[1], [0], [0], [1], [0, 0, 1, 1], [], []>} : vector<256x8xbf16>, vector<8x8xbf16>, vector<256x8xf32> -> vector<256x8xf32>
    %52 = arith.addf %48, %51 : vector<256x8xf32>
    %c0_56 = arith.constant 0 : index
    %c0_57 = arith.constant 0 : index
    %53 = vector.load %arg9[%c0_56, %c0_57] : memref<256x8xf32, #tpu.memory_space<vmem>>, vector<256x8xf32>
    tpu.vector_store %arg9[%c0_56, %c0_57], %52 {strides = array<i32>} : memref<256x8xf32, #tpu.memory_space<vmem>>, vector<256x8xf32>,
    %c1_58 = arith.constant 1 : index
    %c1_59 = arith.constant 1 : index
    %c0_60 = arith.constant 0 : index
    %54 = vector.load %arg8[%c1_58, %c1_59, %c0_60] : memref<18x18x8xf32, #tpu.memory_space<vmem>>, vector<16x16x8xf32>
    %55 = vector.shape_cast %54 : vector<16x16x8xf32> to vector<256x8xf32>
    %56 = arith.truncf %55 : vector<256x8xf32> to vector<256x8xbf16>
    %c0_61 = arith.constant 0 : index
    %c0_62 = arith.constant 0 : index
    %57 = vector.load %arg9[%c0_61, %c0_62] : memref<256x8xf32, #tpu.memory_space<vmem>>, vector<256x8xf32>
    %c4 = arith.constant 4 : index
    %c0_63 = arith.constant 0 : index
    %c0_64 = arith.constant 0 : index
    %58 = vector.load %arg4[%c4, %c0_63, %c0_64] : memref<9x8x8xbf16, #tpu.memory_space<vmem>>, vector<1x8x8xbf16>
    %59 = vector.shape_cast %58 : vector<1x8x8xbf16> to vector<8x8xbf16>
    %cst_65 = arith.constant dense<0.000000e+00> : vector<256x8xf32>
    %60 = tpu.matmul %56, %59, %cst_65 {dimension_numbers = #tpu.dot_dimension_numbers<[1], [0], [0], [1], [0, 0, 1, 1], [], []>} : vector<256x8xbf16>, vector<8x8xbf16>, vector<256x8xf32> -> vector<256x8xf32>
    %61 = arith.addf %57, %60 : vector<256x8xf32>
    %c0_66 = arith.constant 0 : index
    %c0_67 = arith.constant 0 : index
    %62 = vector.load %arg9[%c0_66, %c0_67] : memref<256x8xf32, #tpu.memory_space<vmem>>, vector<256x8xf32>
    tpu.vector_store %arg9[%c0_66, %c0_67], %61 {strides = array<i32>} : memref<256x8xf32, #tpu.memory_space<vmem>>, vector<256x8xf32>,
    %c1_68 = arith.constant 1 : index
    %c2_69 = arith.constant 2 : index
    %c0_70 = arith.constant 0 : index
    %63 = vector.load %arg8[%c1_68, %c2_69, %c0_70] : memref<18x18x8xf32, #tpu.memory_space<vmem>>, vector<16x16x8xf32>
    %64 = vector.shape_cast %63 : vector<16x16x8xf32> to vector<256x8xf32>
    %65 = arith.truncf %64 : vector<256x8xf32> to vector<256x8xbf16>
    %c0_71 = arith.constant 0 : index
    %c0_72 = arith.constant 0 : index
    %66 = vector.load %arg9[%c0_71, %c0_72] : memref<256x8xf32, #tpu.memory_space<vmem>>, vector<256x8xf32>
    %c5 = arith.constant 5 : index
    %c0_73 = arith.constant 0 : index
    %c0_74 = arith.constant 0 : index
    %67 = vector.load %arg4[%c5, %c0_73, %c0_74] : memref<9x8x8xbf16, #tpu.memory_space<vmem>>, vector<1x8x8xbf16>
    %68 = vector.shape_cast %67 : vector<1x8x8xbf16> to vector<8x8xbf16>
    %cst_75 = arith.constant dense<0.000000e+00> : vector<256x8xf32>
    %69 = tpu.matmul %65, %68, %cst_75 {dimension_numbers = #tpu.dot_dimension_numbers<[1], [0], [0], [1], [0, 0, 1, 1], [], []>} : vector<256x8xbf16>, vector<8x8xbf16>, vector<256x8xf32> -> vector<256x8xf32>
    %70 = arith.addf %66, %69 : vector<256x8xf32>
    %c0_76 = arith.constant 0 : index
    %c0_77 = arith.constant 0 : index
    %71 = vector.load %arg9[%c0_76, %c0_77] : memref<256x8xf32, #tpu.memory_space<vmem>>, vector<256x8xf32>
    tpu.vector_store %arg9[%c0_76, %c0_77], %70 {strides = array<i32>} : memref<256x8xf32, #tpu.memory_space<vmem>>, vector<256x8xf32>,
    %c2_78 = arith.constant 2 : index
    %c0_79 = arith.constant 0 : index
    %c0_80 = arith.constant 0 : index
    %72 = vector.load %arg8[%c2_78, %c0_79, %c0_80] : memref<18x18x8xf32, #tpu.memory_space<vmem>>, vector<16x16x8xf32>
    %73 = vector.shape_cast %72 : vector<16x16x8xf32> to vector<256x8xf32>
    %74 = arith.truncf %73 : vector<256x8xf32> to vector<256x8xbf16>
    %c0_81 = arith.constant 0 : index
    %c0_82 = arith.constant 0 : index
    %75 = vector.load %arg9[%c0_81, %c0_82] : memref<256x8xf32, #tpu.memory_space<vmem>>, vector<256x8xf32>
    %c6 = arith.constant 6 : index
    %c0_83 = arith.constant 0 : index
    %c0_84 = arith.constant 0 : index
    %76 = vector.load %arg4[%c6, %c0_83, %c0_84] : memref<9x8x8xbf16, #tpu.memory_space<vmem>>, vector<1x8x8xbf16>
    %77 = vector.shape_cast %76 : vector<1x8x8xbf16> to vector<8x8xbf16>
    %cst_85 = arith.constant dense<0.000000e+00> : vector<256x8xf32>
    %78 = tpu.matmul %74, %77, %cst_85 {dimension_numbers = #tpu.dot_dimension_numbers<[1], [0], [0], [1], [0, 0, 1, 1], [], []>} : vector<256x8xbf16>, vector<8x8xbf16>, vector<256x8xf32> -> vector<256x8xf32>
    %79 = arith.addf %75, %78 : vector<256x8xf32>
    %c0_86 = arith.constant 0 : index
    %c0_87 = arith.constant 0 : index
    %80 = vector.load %arg9[%c0_86, %c0_87] : memref<256x8xf32, #tpu.memory_space<vmem>>, vector<256x8xf32>
    tpu.vector_store %arg9[%c0_86, %c0_87], %79 {strides = array<i32>} : memref<256x8xf32, #tpu.memory_space<vmem>>, vector<256x8xf32>,
    %c2_88 = arith.constant 2 : index
    %c1_89 = arith.constant 1 : index
    %c0_90 = arith.constant 0 : index
    %81 = vector.load %arg8[%c2_88, %c1_89, %c0_90] : memref<18x18x8xf32, #tpu.memory_space<vmem>>, vector<16x16x8xf32>
    %82 = vector.shape_cast %81 : vector<16x16x8xf32> to vector<256x8xf32>
    %83 = arith.truncf %82 : vector<256x8xf32> to vector<256x8xbf16>
    %c0_91 = arith.constant 0 : index
    %c0_92 = arith.constant 0 : index
    %84 = vector.load %arg9[%c0_91, %c0_92] : memref<256x8xf32, #tpu.memory_space<vmem>>, vector<256x8xf32>
    %c7 = arith.constant 7 : index
    %c0_93 = arith.constant 0 : index
    %c0_94 = arith.constant 0 : index
    %85 = vector.load %arg4[%c7, %c0_93, %c0_94] : memref<9x8x8xbf16, #tpu.memory_space<vmem>>, vector<1x8x8xbf16>
    %86 = vector.shape_cast %85 : vector<1x8x8xbf16> to vector<8x8xbf16>
    %cst_95 = arith.constant dense<0.000000e+00> : vector<256x8xf32>
    %87 = tpu.matmul %83, %86, %cst_95 {dimension_numbers = #tpu.dot_dimension_numbers<[1], [0], [0], [1], [0, 0, 1, 1], [], []>} : vector<256x8xbf16>, vector<8x8xbf16>, vector<256x8xf32> -> vector<256x8xf32>
    %88 = arith.addf %84, %87 : vector<256x8xf32>
    %c0_96 = arith.constant 0 : index
    %c0_97 = arith.constant 0 : index
    %89 = vector.load %arg9[%c0_96, %c0_97] : memref<256x8xf32, #tpu.memory_space<vmem>>, vector<256x8xf32>
    tpu.vector_store %arg9[%c0_96, %c0_97], %88 {strides = array<i32>} : memref<256x8xf32, #tpu.memory_space<vmem>>, vector<256x8xf32>,
    %c2_98 = arith.constant 2 : index
    %c2_99 = arith.constant 2 : index
    %c0_100 = arith.constant 0 : index
    %90 = vector.load %arg8[%c2_98, %c2_99, %c0_100] : memref<18x18x8xf32, #tpu.memory_space<vmem>>, vector<16x16x8xf32>
    %91 = vector.shape_cast %90 : vector<16x16x8xf32> to vector<256x8xf32>
    %92 = arith.truncf %91 : vector<256x8xf32> to vector<256x8xbf16>
    %c0_101 = arith.constant 0 : index
    %c0_102 = arith.constant 0 : index
    %93 = vector.load %arg9[%c0_101, %c0_102] : memref<256x8xf32, #tpu.memory_space<vmem>>, vector<256x8xf32>
    %c8 = arith.constant 8 : index
    %c0_103 = arith.constant 0 : index
    %c0_104 = arith.constant 0 : index
    %94 = vector.load %arg4[%c8, %c0_103, %c0_104] : memref<9x8x8xbf16, #tpu.memory_space<vmem>>, vector<1x8x8xbf16>
    %95 = vector.shape_cast %94 : vector<1x8x8xbf16> to vector<8x8xbf16>
    %cst_105 = arith.constant dense<0.000000e+00> : vector<256x8xf32>
    %96 = tpu.matmul %92, %95, %cst_105 {dimension_numbers = #tpu.dot_dimension_numbers<[1], [0], [0], [1], [0, 0, 1, 1], [], []>} : vector<256x8xbf16>, vector<8x8xbf16>, vector<256x8xf32> -> vector<256x8xf32>
    %97 = arith.addf %93, %96 : vector<256x8xf32>
    %c0_106 = arith.constant 0 : index
    %c0_107 = arith.constant 0 : index
    %98 = vector.load %arg9[%c0_106, %c0_107] : memref<256x8xf32, #tpu.memory_space<vmem>>, vector<256x8xf32>
    tpu.vector_store %arg9[%c0_106, %c0_107], %97 {strides = array<i32>} : memref<256x8xf32, #tpu.memory_space<vmem>>, vector<256x8xf32>,
    %c0_108 = arith.constant 0 : index
    %c0_109 = arith.constant 0 : index
    %99 = vector.load %arg9[%c0_108, %c0_109] : memref<256x8xf32, #tpu.memory_space<vmem>>, vector<256x8xf32>
    %100 = vector.shape_cast %99 : vector<256x8xf32> to vector<16x16x8xf32>
    %101 = arith.truncf %100 : vector<16x16x8xf32> to vector<16x16x8xbf16>
    %c0_110 = arith.constant 0 : index
    %c0_111 = arith.constant 0 : index
    %c0_112 = arith.constant 0 : index
    %c0_113 = arith.constant 0 : index
    %102 = vector.load %arg5[%c0_110, %c0_111, %c0_112, %c0_113] : memref<1x16x16x8xbf16, #tpu.memory_space<vmem>>, vector<1x16x16x8xbf16>
    %103 = vector.shape_cast %102 : vector<1x16x16x8xbf16> to vector<16x16x8xbf16>
    %104 = vector.shape_cast %101 : vector<16x16x8xbf16> to vector<1x16x16x8xbf16>
    tpu.vector_store %arg5[%c0_110, %c0_111, %c0_112, %c0_113], %104 {strides = array<i32>} : memref<1x16x16x8xbf16, #tpu.memory_space<vmem>>, vector<1x16x16x8xbf16>,
    %cst_114 = arith.constant dense<0.000000e+00> : vector<8xf32>
    %105 = vector.multi_reduction <add>, %99, %cst_114 [0] : vector<256x8xf32> to vector<8xf32>
    %106 = vector.shape_cast %105 : vector<8xf32> to vector<1x8xf32>
    %c0_115 = arith.constant 0 : index
    %c0_116 = arith.constant 0 : index
    %c0_117 = arith.constant 0 : index
    %107 = vector.load %arg6[%c0_115, %c0_116, %c0_117] : memref<1x1x8xf32, #tpu.memory_space<vmem>>, vector<1x1x8xf32>
    %108 = vector.shape_cast %107 : vector<1x1x8xf32> to vector<1x8xf32>
    %109 = vector.shape_cast %106 : vector<1x8xf32> to vector<1x1x8xf32>
    tpu.vector_store %arg6[%c0_115, %c0_116, %c0_117], %109 {strides = array<i32>} : memref<1x1x8xf32, #tpu.memory_space<vmem>>, vector<1x1x8xf32>,
    %110 = arith.mulf %99, %99 : vector<256x8xf32>
    %cst_118 = arith.constant dense<0.000000e+00> : vector<8xf32>
    %111 = vector.multi_reduction <add>, %110, %cst_118 [0] : vector<256x8xf32> to vector<8xf32>
    %112 = vector.shape_cast %111 : vector<8xf32> to vector<1x8xf32>
    %c0_119 = arith.constant 0 : index
    %c0_120 = arith.constant 0 : index
    %c0_121 = arith.constant 0 : index
    %113 = vector.load %arg7[%c0_119, %c0_120, %c0_121] : memref<1x1x8xf32, #tpu.memory_space<vmem>>, vector<1x1x8xf32>
    %114 = vector.shape_cast %113 : vector<1x1x8xf32> to vector<1x8xf32>
    %115 = vector.shape_cast %112 : vector<1x8xf32> to vector<1x1x8xf32>
    tpu.vector_store %arg7[%c0_119, %c0_120, %c0_121], %115 {strides = array<i32>} : memref<1x1x8xf32, #tpu.memory_space<vmem>>, vector<1x1x8xf32>,
    return
  }
  func.func @transform_0(%arg0: i32) -> (i32, i32, i32, i32) {
    %c0_i32 = arith.constant 0 : i32
    %c0_i32_0 = arith.constant 0 : i32
    %c0_i32_1 = arith.constant 0 : i32
    %c0_i32_2 = arith.constant 0 : i32
    return %arg0, %c0_i32, %c0_i32_0, %c0_i32_1 : i32, i32, i32, i32
  }
  func.func @transform_1(%arg0: i32) -> (i32, i32) {
    %c0_i32 = arith.constant 0 : i32
    %c0_i32_0 = arith.constant 0 : i32
    %c0_i32_1 = arith.constant 0 : i32
    return %c0_i32, %c0_i32_0 : i32, i32
  }
  func.func @transform_2(%arg0: i32) -> (i32, i32) {
    %c0_i32 = arith.constant 0 : i32
    %c0_i32_0 = arith.constant 0 : i32
    %c0_i32_1 = arith.constant 0 : i32
    return %c0_i32, %c0_i32_0 : i32, i32
  }
  func.func @transform_3(%arg0: i32) -> (i32, i32, i32) {
    %c0_i32 = arith.constant 0 : i32
    %c0_i32_0 = arith.constant 0 : i32
    %c0_i32_1 = arith.constant 0 : i32
    %c0_i32_2 = arith.constant 0 : i32
    return %c0_i32, %c0_i32_0, %c0_i32_1 : i32, i32, i32
  }
  func.func @transform_4(%arg0: i32) -> (i32, i32, i32, i32) {
    %c0_i32 = arith.constant 0 : i32
    %c0_i32_0 = arith.constant 0 : i32
    %c0_i32_1 = arith.constant 0 : i32
    %c0_i32_2 = arith.constant 0 : i32
    return %arg0, %c0_i32, %c0_i32_0, %c0_i32_1 : i32, i32, i32, i32
  }
  func.func @transform_5(%arg0: i32) -> (i32, i32, i32) {
    %c0_i32 = arith.constant 0 : i32
    %c0_i32_0 = arith.constant 0 : i32
    %c0_i32_1 = arith.constant 0 : i32
    return %arg0, %c0_i32, %c0_i32_0 : i32, i32, i32
  }
  func.func @transform_6(%arg0: i32) -> (i32, i32, i32) {
    %c0_i32 = arith.constant 0 : i32
    %c0_i32_0 = arith.constant 0 : i32
    %c0_i32_1 = arith.constant 0 : i32
    return %arg0, %c0_i32, %c0_i32_0 : i32, i32, i32
  }
}

module attributes {stable_mosaic.version = 11 : i64} {
  func.func @_conv_bn_stats_kernel(%arg0: i32, %arg1: memref<1x16x16x4xbf16, #tpu.memory_space<vmem>>, %arg2: memref<1x4xf32, #tpu.memory_space<vmem>>, %arg3: memref<1x4xf32, #tpu.memory_space<vmem>>, %arg4: memref<9x4x8xbf16, #tpu.memory_space<vmem>>, %arg5: memref<1x16x16x8xbf16, #tpu.memory_space<vmem>>, %arg6: memref<1x1x8xf32, #tpu.memory_space<vmem>>, %arg7: memref<1x1x8xf32, #tpu.memory_space<vmem>>, %arg8: memref<18x18x4xf32, #tpu.memory_space<vmem>>, %arg9: memref<256x8xf32, #tpu.memory_space<vmem>>) attributes {dimension_semantics = [#tpu.dimension_semantics<parallel>], iteration_bounds = array<i64: 2>, scalar_prefetch = 0 : i64, scratch_operands = 2 : i64, tpu.core_type = #tpu.core_type<tc>, window_params = [{transform_indices = @transform_0, window_bounds = array<i64: 1, 16, 16, 4>}, {pipeline_mode = #tpu.pipeline_mode<synchronous>, transform_indices = @transform_1, window_bounds = array<i64: 1, 4>}, {pipeline_mode = #tpu.pipeline_mode<synchronous>, transform_indices = @transform_2, window_bounds = array<i64: 1, 4>}, {pipeline_mode = #tpu.pipeline_mode<synchronous>, transform_indices = @transform_3, window_bounds = array<i64: 9, 4, 8>}, {transform_indices = @transform_4, window_bounds = array<i64: 1, 16, 16, 8>}, {transform_indices = @transform_5, window_bounds = array<i64: 1, 1, 8>}, {transform_indices = @transform_6, window_bounds = array<i64: 1, 1, 8>}]} {
    %c0 = arith.constant 0 : index
    %c0_0 = arith.constant 0 : index
    %c0_1 = arith.constant 0 : index
    %c0_2 = arith.constant 0 : index
    %0 = vector.load %arg1[%c0, %c0_0, %c0_1, %c0_2] : memref<1x16x16x4xbf16, #tpu.memory_space<vmem>>, vector<1x16x16x4xbf16>
    %1 = vector.shape_cast %0 : vector<1x16x16x4xbf16> to vector<16x16x4xbf16>
    %2 = arith.extf %1 : vector<16x16x4xbf16> to vector<16x16x4xf32>
    %cst = arith.constant 0.000000e+00 : f32
    %3 = vector.broadcast %cst : f32 to vector<18x18x4xf32>
    %c0_3 = arith.constant 0 : index
    %c0_4 = arith.constant 0 : index
    %c0_5 = arith.constant 0 : index
    %4 = vector.load %arg8[%c0_3, %c0_4, %c0_5] : memref<18x18x4xf32, #tpu.memory_space<vmem>>, vector<18x18x4xf32>
    tpu.vector_store %arg8[%c0_3, %c0_4, %c0_5], %3 {strides = array<i32>} : memref<18x18x4xf32, #tpu.memory_space<vmem>>, vector<18x18x4xf32>,
    %c1 = arith.constant 1 : index
    %c1_6 = arith.constant 1 : index
    %c0_7 = arith.constant 0 : index
    %5 = vector.load %arg8[%c1, %c1_6, %c0_7] : memref<18x18x4xf32, #tpu.memory_space<vmem>>, vector<16x16x4xf32>
    tpu.vector_store %arg8[%c1, %c1_6, %c0_7], %2 {strides = array<i32>} : memref<18x18x4xf32, #tpu.memory_space<vmem>>, vector<16x16x4xf32>,
    %cst_8 = arith.constant 0.000000e+00 : f32
    %6 = vector.broadcast %cst_8 : f32 to vector<256x8xf32>
    %c0_9 = arith.constant 0 : index
    %c0_10 = arith.constant 0 : index
    %7 = vector.load %arg9[%c0_9, %c0_10] : memref<256x8xf32, #tpu.memory_space<vmem>>, vector<256x8xf32>
    tpu.vector_store %arg9[%c0_9, %c0_10], %6 {strides = array<i32>} : memref<256x8xf32, #tpu.memory_space<vmem>>, vector<256x8xf32>,
    %c0_11 = arith.constant 0 : index
    %c0_12 = arith.constant 0 : index
    %c0_13 = arith.constant 0 : index
    %8 = vector.load %arg8[%c0_11, %c0_12, %c0_13] : memref<18x18x4xf32, #tpu.memory_space<vmem>>, vector<16x16x4xf32>
    %9 = vector.shape_cast %8 : vector<16x16x4xf32> to vector<256x4xf32>
    %10 = arith.truncf %9 : vector<256x4xf32> to vector<256x4xbf16>
    %c0_14 = arith.constant 0 : index
    %c0_15 = arith.constant 0 : index
    %11 = vector.load %arg9[%c0_14, %c0_15] : memref<256x8xf32, #tpu.memory_space<vmem>>, vector<256x8xf32>
    %c0_16 = arith.constant 0 : index
    %c0_17 = arith.constant 0 : index
    %c0_18 = arith.constant 0 : index
    %12 = vector.load %arg4[%c0_16, %c0_17, %c0_18] : memref<9x4x8xbf16, #tpu.memory_space<vmem>>, vector<1x4x8xbf16>
    %13 = vector.shape_cast %12 : vector<1x4x8xbf16> to vector<4x8xbf16>
    %cst_19 = arith.constant dense<0.000000e+00> : vector<256x8xf32>
    %14 = tpu.matmul %10, %13, %cst_19 {dimension_numbers = #tpu.dot_dimension_numbers<[1], [0], [0], [1], [0, 0, 1, 1], [], []>} : vector<256x4xbf16>, vector<4x8xbf16>, vector<256x8xf32> -> vector<256x8xf32>
    %15 = arith.addf %11, %14 : vector<256x8xf32>
    %c0_20 = arith.constant 0 : index
    %c0_21 = arith.constant 0 : index
    %16 = vector.load %arg9[%c0_20, %c0_21] : memref<256x8xf32, #tpu.memory_space<vmem>>, vector<256x8xf32>
    tpu.vector_store %arg9[%c0_20, %c0_21], %15 {strides = array<i32>} : memref<256x8xf32, #tpu.memory_space<vmem>>, vector<256x8xf32>,
    %c0_22 = arith.constant 0 : index
    %c1_23 = arith.constant 1 : index
    %c0_24 = arith.constant 0 : index
    %17 = vector.load %arg8[%c0_22, %c1_23, %c0_24] : memref<18x18x4xf32, #tpu.memory_space<vmem>>, vector<16x16x4xf32>
    %18 = vector.shape_cast %17 : vector<16x16x4xf32> to vector<256x4xf32>
    %19 = arith.truncf %18 : vector<256x4xf32> to vector<256x4xbf16>
    %c0_25 = arith.constant 0 : index
    %c0_26 = arith.constant 0 : index
    %20 = vector.load %arg9[%c0_25, %c0_26] : memref<256x8xf32, #tpu.memory_space<vmem>>, vector<256x8xf32>
    %c1_27 = arith.constant 1 : index
    %c0_28 = arith.constant 0 : index
    %c0_29 = arith.constant 0 : index
    %21 = vector.load %arg4[%c1_27, %c0_28, %c0_29] : memref<9x4x8xbf16, #tpu.memory_space<vmem>>, vector<1x4x8xbf16>
    %22 = vector.shape_cast %21 : vector<1x4x8xbf16> to vector<4x8xbf16>
    %cst_30 = arith.constant dense<0.000000e+00> : vector<256x8xf32>
    %23 = tpu.matmul %19, %22, %cst_30 {dimension_numbers = #tpu.dot_dimension_numbers<[1], [0], [0], [1], [0, 0, 1, 1], [], []>} : vector<256x4xbf16>, vector<4x8xbf16>, vector<256x8xf32> -> vector<256x8xf32>
    %24 = arith.addf %20, %23 : vector<256x8xf32>
    %c0_31 = arith.constant 0 : index
    %c0_32 = arith.constant 0 : index
    %25 = vector.load %arg9[%c0_31, %c0_32] : memref<256x8xf32, #tpu.memory_space<vmem>>, vector<256x8xf32>
    tpu.vector_store %arg9[%c0_31, %c0_32], %24 {strides = array<i32>} : memref<256x8xf32, #tpu.memory_space<vmem>>, vector<256x8xf32>,
    %c0_33 = arith.constant 0 : index
    %c2 = arith.constant 2 : index
    %c0_34 = arith.constant 0 : index
    %26 = vector.load %arg8[%c0_33, %c2, %c0_34] : memref<18x18x4xf32, #tpu.memory_space<vmem>>, vector<16x16x4xf32>
    %27 = vector.shape_cast %26 : vector<16x16x4xf32> to vector<256x4xf32>
    %28 = arith.truncf %27 : vector<256x4xf32> to vector<256x4xbf16>
    %c0_35 = arith.constant 0 : index
    %c0_36 = arith.constant 0 : index
    %29 = vector.load %arg9[%c0_35, %c0_36] : memref<256x8xf32, #tpu.memory_space<vmem>>, vector<256x8xf32>
    %c2_37 = arith.constant 2 : index
    %c0_38 = arith.constant 0 : index
    %c0_39 = arith.constant 0 : index
    %30 = vector.load %arg4[%c2_37, %c0_38, %c0_39] : memref<9x4x8xbf16, #tpu.memory_space<vmem>>, vector<1x4x8xbf16>
    %31 = vector.shape_cast %30 : vector<1x4x8xbf16> to vector<4x8xbf16>
    %cst_40 = arith.constant dense<0.000000e+00> : vector<256x8xf32>
    %32 = tpu.matmul %28, %31, %cst_40 {dimension_numbers = #tpu.dot_dimension_numbers<[1], [0], [0], [1], [0, 0, 1, 1], [], []>} : vector<256x4xbf16>, vector<4x8xbf16>, vector<256x8xf32> -> vector<256x8xf32>
    %33 = arith.addf %29, %32 : vector<256x8xf32>
    %c0_41 = arith.constant 0 : index
    %c0_42 = arith.constant 0 : index
    %34 = vector.load %arg9[%c0_41, %c0_42] : memref<256x8xf32, #tpu.memory_space<vmem>>, vector<256x8xf32>
    tpu.vector_store %arg9[%c0_41, %c0_42], %33 {strides = array<i32>} : memref<256x8xf32, #tpu.memory_space<vmem>>, vector<256x8xf32>,
    %c1_43 = arith.constant 1 : index
    %c0_44 = arith.constant 0 : index
    %c0_45 = arith.constant 0 : index
    %35 = vector.load %arg8[%c1_43, %c0_44, %c0_45] : memref<18x18x4xf32, #tpu.memory_space<vmem>>, vector<16x16x4xf32>
    %36 = vector.shape_cast %35 : vector<16x16x4xf32> to vector<256x4xf32>
    %37 = arith.truncf %36 : vector<256x4xf32> to vector<256x4xbf16>
    %c0_46 = arith.constant 0 : index
    %c0_47 = arith.constant 0 : index
    %38 = vector.load %arg9[%c0_46, %c0_47] : memref<256x8xf32, #tpu.memory_space<vmem>>, vector<256x8xf32>
    %c3 = arith.constant 3 : index
    %c0_48 = arith.constant 0 : index
    %c0_49 = arith.constant 0 : index
    %39 = vector.load %arg4[%c3, %c0_48, %c0_49] : memref<9x4x8xbf16, #tpu.memory_space<vmem>>, vector<1x4x8xbf16>
    %40 = vector.shape_cast %39 : vector<1x4x8xbf16> to vector<4x8xbf16>
    %cst_50 = arith.constant dense<0.000000e+00> : vector<256x8xf32>
    %41 = tpu.matmul %37, %40, %cst_50 {dimension_numbers = #tpu.dot_dimension_numbers<[1], [0], [0], [1], [0, 0, 1, 1], [], []>} : vector<256x4xbf16>, vector<4x8xbf16>, vector<256x8xf32> -> vector<256x8xf32>
    %42 = arith.addf %38, %41 : vector<256x8xf32>
    %c0_51 = arith.constant 0 : index
    %c0_52 = arith.constant 0 : index
    %43 = vector.load %arg9[%c0_51, %c0_52] : memref<256x8xf32, #tpu.memory_space<vmem>>, vector<256x8xf32>
    tpu.vector_store %arg9[%c0_51, %c0_52], %42 {strides = array<i32>} : memref<256x8xf32, #tpu.memory_space<vmem>>, vector<256x8xf32>,
    %c1_53 = arith.constant 1 : index
    %c1_54 = arith.constant 1 : index
    %c0_55 = arith.constant 0 : index
    %44 = vector.load %arg8[%c1_53, %c1_54, %c0_55] : memref<18x18x4xf32, #tpu.memory_space<vmem>>, vector<16x16x4xf32>
    %45 = vector.shape_cast %44 : vector<16x16x4xf32> to vector<256x4xf32>
    %46 = arith.truncf %45 : vector<256x4xf32> to vector<256x4xbf16>
    %c0_56 = arith.constant 0 : index
    %c0_57 = arith.constant 0 : index
    %47 = vector.load %arg9[%c0_56, %c0_57] : memref<256x8xf32, #tpu.memory_space<vmem>>, vector<256x8xf32>
    %c4 = arith.constant 4 : index
    %c0_58 = arith.constant 0 : index
    %c0_59 = arith.constant 0 : index
    %48 = vector.load %arg4[%c4, %c0_58, %c0_59] : memref<9x4x8xbf16, #tpu.memory_space<vmem>>, vector<1x4x8xbf16>
    %49 = vector.shape_cast %48 : vector<1x4x8xbf16> to vector<4x8xbf16>
    %cst_60 = arith.constant dense<0.000000e+00> : vector<256x8xf32>
    %50 = tpu.matmul %46, %49, %cst_60 {dimension_numbers = #tpu.dot_dimension_numbers<[1], [0], [0], [1], [0, 0, 1, 1], [], []>} : vector<256x4xbf16>, vector<4x8xbf16>, vector<256x8xf32> -> vector<256x8xf32>
    %51 = arith.addf %47, %50 : vector<256x8xf32>
    %c0_61 = arith.constant 0 : index
    %c0_62 = arith.constant 0 : index
    %52 = vector.load %arg9[%c0_61, %c0_62] : memref<256x8xf32, #tpu.memory_space<vmem>>, vector<256x8xf32>
    tpu.vector_store %arg9[%c0_61, %c0_62], %51 {strides = array<i32>} : memref<256x8xf32, #tpu.memory_space<vmem>>, vector<256x8xf32>,
    %c1_63 = arith.constant 1 : index
    %c2_64 = arith.constant 2 : index
    %c0_65 = arith.constant 0 : index
    %53 = vector.load %arg8[%c1_63, %c2_64, %c0_65] : memref<18x18x4xf32, #tpu.memory_space<vmem>>, vector<16x16x4xf32>
    %54 = vector.shape_cast %53 : vector<16x16x4xf32> to vector<256x4xf32>
    %55 = arith.truncf %54 : vector<256x4xf32> to vector<256x4xbf16>
    %c0_66 = arith.constant 0 : index
    %c0_67 = arith.constant 0 : index
    %56 = vector.load %arg9[%c0_66, %c0_67] : memref<256x8xf32, #tpu.memory_space<vmem>>, vector<256x8xf32>
    %c5 = arith.constant 5 : index
    %c0_68 = arith.constant 0 : index
    %c0_69 = arith.constant 0 : index
    %57 = vector.load %arg4[%c5, %c0_68, %c0_69] : memref<9x4x8xbf16, #tpu.memory_space<vmem>>, vector<1x4x8xbf16>
    %58 = vector.shape_cast %57 : vector<1x4x8xbf16> to vector<4x8xbf16>
    %cst_70 = arith.constant dense<0.000000e+00> : vector<256x8xf32>
    %59 = tpu.matmul %55, %58, %cst_70 {dimension_numbers = #tpu.dot_dimension_numbers<[1], [0], [0], [1], [0, 0, 1, 1], [], []>} : vector<256x4xbf16>, vector<4x8xbf16>, vector<256x8xf32> -> vector<256x8xf32>
    %60 = arith.addf %56, %59 : vector<256x8xf32>
    %c0_71 = arith.constant 0 : index
    %c0_72 = arith.constant 0 : index
    %61 = vector.load %arg9[%c0_71, %c0_72] : memref<256x8xf32, #tpu.memory_space<vmem>>, vector<256x8xf32>
    tpu.vector_store %arg9[%c0_71, %c0_72], %60 {strides = array<i32>} : memref<256x8xf32, #tpu.memory_space<vmem>>, vector<256x8xf32>,
    %c2_73 = arith.constant 2 : index
    %c0_74 = arith.constant 0 : index
    %c0_75 = arith.constant 0 : index
    %62 = vector.load %arg8[%c2_73, %c0_74, %c0_75] : memref<18x18x4xf32, #tpu.memory_space<vmem>>, vector<16x16x4xf32>
    %63 = vector.shape_cast %62 : vector<16x16x4xf32> to vector<256x4xf32>
    %64 = arith.truncf %63 : vector<256x4xf32> to vector<256x4xbf16>
    %c0_76 = arith.constant 0 : index
    %c0_77 = arith.constant 0 : index
    %65 = vector.load %arg9[%c0_76, %c0_77] : memref<256x8xf32, #tpu.memory_space<vmem>>, vector<256x8xf32>
    %c6 = arith.constant 6 : index
    %c0_78 = arith.constant 0 : index
    %c0_79 = arith.constant 0 : index
    %66 = vector.load %arg4[%c6, %c0_78, %c0_79] : memref<9x4x8xbf16, #tpu.memory_space<vmem>>, vector<1x4x8xbf16>
    %67 = vector.shape_cast %66 : vector<1x4x8xbf16> to vector<4x8xbf16>
    %cst_80 = arith.constant dense<0.000000e+00> : vector<256x8xf32>
    %68 = tpu.matmul %64, %67, %cst_80 {dimension_numbers = #tpu.dot_dimension_numbers<[1], [0], [0], [1], [0, 0, 1, 1], [], []>} : vector<256x4xbf16>, vector<4x8xbf16>, vector<256x8xf32> -> vector<256x8xf32>
    %69 = arith.addf %65, %68 : vector<256x8xf32>
    %c0_81 = arith.constant 0 : index
    %c0_82 = arith.constant 0 : index
    %70 = vector.load %arg9[%c0_81, %c0_82] : memref<256x8xf32, #tpu.memory_space<vmem>>, vector<256x8xf32>
    tpu.vector_store %arg9[%c0_81, %c0_82], %69 {strides = array<i32>} : memref<256x8xf32, #tpu.memory_space<vmem>>, vector<256x8xf32>,
    %c2_83 = arith.constant 2 : index
    %c1_84 = arith.constant 1 : index
    %c0_85 = arith.constant 0 : index
    %71 = vector.load %arg8[%c2_83, %c1_84, %c0_85] : memref<18x18x4xf32, #tpu.memory_space<vmem>>, vector<16x16x4xf32>
    %72 = vector.shape_cast %71 : vector<16x16x4xf32> to vector<256x4xf32>
    %73 = arith.truncf %72 : vector<256x4xf32> to vector<256x4xbf16>
    %c0_86 = arith.constant 0 : index
    %c0_87 = arith.constant 0 : index
    %74 = vector.load %arg9[%c0_86, %c0_87] : memref<256x8xf32, #tpu.memory_space<vmem>>, vector<256x8xf32>
    %c7 = arith.constant 7 : index
    %c0_88 = arith.constant 0 : index
    %c0_89 = arith.constant 0 : index
    %75 = vector.load %arg4[%c7, %c0_88, %c0_89] : memref<9x4x8xbf16, #tpu.memory_space<vmem>>, vector<1x4x8xbf16>
    %76 = vector.shape_cast %75 : vector<1x4x8xbf16> to vector<4x8xbf16>
    %cst_90 = arith.constant dense<0.000000e+00> : vector<256x8xf32>
    %77 = tpu.matmul %73, %76, %cst_90 {dimension_numbers = #tpu.dot_dimension_numbers<[1], [0], [0], [1], [0, 0, 1, 1], [], []>} : vector<256x4xbf16>, vector<4x8xbf16>, vector<256x8xf32> -> vector<256x8xf32>
    %78 = arith.addf %74, %77 : vector<256x8xf32>
    %c0_91 = arith.constant 0 : index
    %c0_92 = arith.constant 0 : index
    %79 = vector.load %arg9[%c0_91, %c0_92] : memref<256x8xf32, #tpu.memory_space<vmem>>, vector<256x8xf32>
    tpu.vector_store %arg9[%c0_91, %c0_92], %78 {strides = array<i32>} : memref<256x8xf32, #tpu.memory_space<vmem>>, vector<256x8xf32>,
    %c2_93 = arith.constant 2 : index
    %c2_94 = arith.constant 2 : index
    %c0_95 = arith.constant 0 : index
    %80 = vector.load %arg8[%c2_93, %c2_94, %c0_95] : memref<18x18x4xf32, #tpu.memory_space<vmem>>, vector<16x16x4xf32>
    %81 = vector.shape_cast %80 : vector<16x16x4xf32> to vector<256x4xf32>
    %82 = arith.truncf %81 : vector<256x4xf32> to vector<256x4xbf16>
    %c0_96 = arith.constant 0 : index
    %c0_97 = arith.constant 0 : index
    %83 = vector.load %arg9[%c0_96, %c0_97] : memref<256x8xf32, #tpu.memory_space<vmem>>, vector<256x8xf32>
    %c8 = arith.constant 8 : index
    %c0_98 = arith.constant 0 : index
    %c0_99 = arith.constant 0 : index
    %84 = vector.load %arg4[%c8, %c0_98, %c0_99] : memref<9x4x8xbf16, #tpu.memory_space<vmem>>, vector<1x4x8xbf16>
    %85 = vector.shape_cast %84 : vector<1x4x8xbf16> to vector<4x8xbf16>
    %cst_100 = arith.constant dense<0.000000e+00> : vector<256x8xf32>
    %86 = tpu.matmul %82, %85, %cst_100 {dimension_numbers = #tpu.dot_dimension_numbers<[1], [0], [0], [1], [0, 0, 1, 1], [], []>} : vector<256x4xbf16>, vector<4x8xbf16>, vector<256x8xf32> -> vector<256x8xf32>
    %87 = arith.addf %83, %86 : vector<256x8xf32>
    %c0_101 = arith.constant 0 : index
    %c0_102 = arith.constant 0 : index
    %88 = vector.load %arg9[%c0_101, %c0_102] : memref<256x8xf32, #tpu.memory_space<vmem>>, vector<256x8xf32>
    tpu.vector_store %arg9[%c0_101, %c0_102], %87 {strides = array<i32>} : memref<256x8xf32, #tpu.memory_space<vmem>>, vector<256x8xf32>,
    %c0_103 = arith.constant 0 : index
    %c0_104 = arith.constant 0 : index
    %89 = vector.load %arg9[%c0_103, %c0_104] : memref<256x8xf32, #tpu.memory_space<vmem>>, vector<256x8xf32>
    %90 = vector.shape_cast %89 : vector<256x8xf32> to vector<16x16x8xf32>
    %91 = arith.truncf %90 : vector<16x16x8xf32> to vector<16x16x8xbf16>
    %c0_105 = arith.constant 0 : index
    %c0_106 = arith.constant 0 : index
    %c0_107 = arith.constant 0 : index
    %c0_108 = arith.constant 0 : index
    %92 = vector.load %arg5[%c0_105, %c0_106, %c0_107, %c0_108] : memref<1x16x16x8xbf16, #tpu.memory_space<vmem>>, vector<1x16x16x8xbf16>
    %93 = vector.shape_cast %92 : vector<1x16x16x8xbf16> to vector<16x16x8xbf16>
    %94 = vector.shape_cast %91 : vector<16x16x8xbf16> to vector<1x16x16x8xbf16>
    tpu.vector_store %arg5[%c0_105, %c0_106, %c0_107, %c0_108], %94 {strides = array<i32>} : memref<1x16x16x8xbf16, #tpu.memory_space<vmem>>, vector<1x16x16x8xbf16>,
    %cst_109 = arith.constant dense<0.000000e+00> : vector<8xf32>
    %95 = vector.multi_reduction <add>, %89, %cst_109 [0] : vector<256x8xf32> to vector<8xf32>
    %96 = vector.shape_cast %95 : vector<8xf32> to vector<1x8xf32>
    %c0_110 = arith.constant 0 : index
    %c0_111 = arith.constant 0 : index
    %c0_112 = arith.constant 0 : index
    %97 = vector.load %arg6[%c0_110, %c0_111, %c0_112] : memref<1x1x8xf32, #tpu.memory_space<vmem>>, vector<1x1x8xf32>
    %98 = vector.shape_cast %97 : vector<1x1x8xf32> to vector<1x8xf32>
    %99 = vector.shape_cast %96 : vector<1x8xf32> to vector<1x1x8xf32>
    tpu.vector_store %arg6[%c0_110, %c0_111, %c0_112], %99 {strides = array<i32>} : memref<1x1x8xf32, #tpu.memory_space<vmem>>, vector<1x1x8xf32>,
    %100 = arith.mulf %89, %89 : vector<256x8xf32>
    %cst_113 = arith.constant dense<0.000000e+00> : vector<8xf32>
    %101 = vector.multi_reduction <add>, %100, %cst_113 [0] : vector<256x8xf32> to vector<8xf32>
    %102 = vector.shape_cast %101 : vector<8xf32> to vector<1x8xf32>
    %c0_114 = arith.constant 0 : index
    %c0_115 = arith.constant 0 : index
    %c0_116 = arith.constant 0 : index
    %103 = vector.load %arg7[%c0_114, %c0_115, %c0_116] : memref<1x1x8xf32, #tpu.memory_space<vmem>>, vector<1x1x8xf32>
    %104 = vector.shape_cast %103 : vector<1x1x8xf32> to vector<1x8xf32>
    %105 = vector.shape_cast %102 : vector<1x8xf32> to vector<1x1x8xf32>
    tpu.vector_store %arg7[%c0_114, %c0_115, %c0_116], %105 {strides = array<i32>} : memref<1x1x8xf32, #tpu.memory_space<vmem>>, vector<1x1x8xf32>,
    return
  }
  func.func @transform_0(%arg0: i32) -> (i32, i32, i32, i32) {
    %c0_i32 = arith.constant 0 : i32
    %c0_i32_0 = arith.constant 0 : i32
    %c0_i32_1 = arith.constant 0 : i32
    %c0_i32_2 = arith.constant 0 : i32
    return %arg0, %c0_i32, %c0_i32_0, %c0_i32_1 : i32, i32, i32, i32
  }
  func.func @transform_1(%arg0: i32) -> (i32, i32) {
    %c0_i32 = arith.constant 0 : i32
    %c0_i32_0 = arith.constant 0 : i32
    %c0_i32_1 = arith.constant 0 : i32
    return %c0_i32, %c0_i32_0 : i32, i32
  }
  func.func @transform_2(%arg0: i32) -> (i32, i32) {
    %c0_i32 = arith.constant 0 : i32
    %c0_i32_0 = arith.constant 0 : i32
    %c0_i32_1 = arith.constant 0 : i32
    return %c0_i32, %c0_i32_0 : i32, i32
  }
  func.func @transform_3(%arg0: i32) -> (i32, i32, i32) {
    %c0_i32 = arith.constant 0 : i32
    %c0_i32_0 = arith.constant 0 : i32
    %c0_i32_1 = arith.constant 0 : i32
    %c0_i32_2 = arith.constant 0 : i32
    return %c0_i32, %c0_i32_0, %c0_i32_1 : i32, i32, i32
  }
  func.func @transform_4(%arg0: i32) -> (i32, i32, i32, i32) {
    %c0_i32 = arith.constant 0 : i32
    %c0_i32_0 = arith.constant 0 : i32
    %c0_i32_1 = arith.constant 0 : i32
    %c0_i32_2 = arith.constant 0 : i32
    return %arg0, %c0_i32, %c0_i32_0, %c0_i32_1 : i32, i32, i32, i32
  }
  func.func @transform_5(%arg0: i32) -> (i32, i32, i32) {
    %c0_i32 = arith.constant 0 : i32
    %c0_i32_0 = arith.constant 0 : i32
    %c0_i32_1 = arith.constant 0 : i32
    return %arg0, %c0_i32, %c0_i32_0 : i32, i32, i32
  }
  func.func @transform_6(%arg0: i32) -> (i32, i32, i32) {
    %c0_i32 = arith.constant 0 : i32
    %c0_i32_0 = arith.constant 0 : i32
    %c0_i32_1 = arith.constant 0 : i32
    return %arg0, %c0_i32, %c0_i32_0 : i32, i32, i32
  }
}

module attributes {stable_mosaic.version = 11 : i64} {
  func.func @_affine_relu_kernel(%arg0: i32, %arg1: memref<1x16x16x8xbf16, #tpu.memory_space<vmem>>, %arg2: memref<1x8xf32, #tpu.memory_space<vmem>>, %arg3: memref<1x8xf32, #tpu.memory_space<vmem>>, %arg4: memref<1x16x16x8xf32, #tpu.memory_space<vmem>>) attributes {dimension_semantics = [#tpu.dimension_semantics<parallel>], iteration_bounds = array<i64: 2>, scalar_prefetch = 0 : i64, scratch_operands = 0 : i64, tpu.core_type = #tpu.core_type<tc>, window_params = [{transform_indices = @transform_0, window_bounds = array<i64: 1, 16, 16, 8>}, {pipeline_mode = #tpu.pipeline_mode<synchronous>, transform_indices = @transform_1, window_bounds = array<i64: 1, 8>}, {pipeline_mode = #tpu.pipeline_mode<synchronous>, transform_indices = @transform_2, window_bounds = array<i64: 1, 8>}, {transform_indices = @transform_3, window_bounds = array<i64: 1, 16, 16, 8>}]} {
    %c0 = arith.constant 0 : index
    %c0_0 = arith.constant 0 : index
    %c0_1 = arith.constant 0 : index
    %c0_2 = arith.constant 0 : index
    %0 = vector.load %arg1[%c0, %c0_0, %c0_1, %c0_2] : memref<1x16x16x8xbf16, #tpu.memory_space<vmem>>, vector<1x16x16x8xbf16>
    %1 = vector.shape_cast %0 : vector<1x16x16x8xbf16> to vector<16x16x8xbf16>
    %2 = arith.extf %1 : vector<16x16x8xbf16> to vector<16x16x8xf32>
    %c0_3 = arith.constant 0 : index
    %c0_4 = arith.constant 0 : index
    %3 = vector.load %arg2[%c0_3, %c0_4] : memref<1x8xf32, #tpu.memory_space<vmem>>, vector<1x8xf32>
    %4 = vector.shape_cast %3 : vector<1x8xf32> to vector<1x1x8xf32>
    %c0_5 = arith.constant 0 : index
    %c0_6 = arith.constant 0 : index
    %5 = vector.load %arg3[%c0_5, %c0_6] : memref<1x8xf32, #tpu.memory_space<vmem>>, vector<1x8xf32>
    %6 = vector.shape_cast %5 : vector<1x8xf32> to vector<1x1x8xf32>
    %7 = vector.broadcast %4 : vector<1x1x8xf32> to vector<16x16x8xf32>
    %8 = arith.mulf %2, %7 : vector<16x16x8xf32>
    %9 = vector.broadcast %6 : vector<1x1x8xf32> to vector<16x16x8xf32>
    %10 = arith.addf %8, %9 : vector<16x16x8xf32>
    %cst = arith.constant 0.000000e+00 : f32
    %11 = vector.broadcast %cst : f32 to vector<16x16x8xf32>
    %12 = arith.maximumf %10, %11 : vector<16x16x8xf32>
    %c0_7 = arith.constant 0 : index
    %c0_8 = arith.constant 0 : index
    %c0_9 = arith.constant 0 : index
    %c0_10 = arith.constant 0 : index
    %13 = vector.load %arg4[%c0_7, %c0_8, %c0_9, %c0_10] : memref<1x16x16x8xf32, #tpu.memory_space<vmem>>, vector<1x16x16x8xf32>
    %14 = vector.shape_cast %13 : vector<1x16x16x8xf32> to vector<16x16x8xf32>
    %15 = vector.shape_cast %12 : vector<16x16x8xf32> to vector<1x16x16x8xf32>
    tpu.vector_store %arg4[%c0_7, %c0_8, %c0_9, %c0_10], %15 {strides = array<i32>} : memref<1x16x16x8xf32, #tpu.memory_space<vmem>>, vector<1x16x16x8xf32>,
    return
  }
  func.func @transform_0(%arg0: i32) -> (i32, i32, i32, i32) {
    %c0_i32 = arith.constant 0 : i32
    %c0_i32_0 = arith.constant 0 : i32
    %c0_i32_1 = arith.constant 0 : i32
    %c0_i32_2 = arith.constant 0 : i32
    return %arg0, %c0_i32, %c0_i32_0, %c0_i32_1 : i32, i32, i32, i32
  }
  func.func @transform_1(%arg0: i32) -> (i32, i32) {
    %c0_i32 = arith.constant 0 : i32
    %c0_i32_0 = arith.constant 0 : i32
    %c0_i32_1 = arith.constant 0 : i32
    return %c0_i32, %c0_i32_0 : i32, i32
  }
  func.func @transform_2(%arg0: i32) -> (i32, i32) {
    %c0_i32 = arith.constant 0 : i32
    %c0_i32_0 = arith.constant 0 : i32
    %c0_i32_1 = arith.constant 0 : i32
    return %c0_i32, %c0_i32_0 : i32, i32
  }
  func.func @transform_3(%arg0: i32) -> (i32, i32, i32, i32) {
    %c0_i32 = arith.constant 0 : i32
    %c0_i32_0 = arith.constant 0 : i32
    %c0_i32_1 = arith.constant 0 : i32
    %c0_i32_2 = arith.constant 0 : i32
    return %arg0, %c0_i32, %c0_i32_0, %c0_i32_1 : i32, i32, i32, i32
  }
}

</mosaic_0001>

<llo_original>
// kernel: densenet_block_forward.7
$region0: #{densenet_block_forward.7}
  #allocation0 [shape = 'u32[]', space=smem, size = 0x4, offset = 0x4, fixed_abs, tag = 'smem constant byte address 0x4 - core index']
  #allocation1 [shape = 'u32[144,128]{1,0:T(1,128)}', space=vmem, size = 0x12000, scoped, tag = 'internal scratch']
  %s0 = inlined_call_operand.vmem [shape: bf16[2,16,16,8], index: 0, kind: input, shape index: {}]
  %s1 = inlined_call_operand.vmem [shape: f32[1,8], index: 1, kind: input, shape index: {}]
  %s2 = inlined_call_operand.vmem [shape: f32[1,8], index: 2, kind: input, shape index: {}]
  %s3 = inlined_call_operand.vmem [shape: f32[2,16,16,8], index: 3, kind: output, shape index: {}]
  %s4 = sld [smem:[#allocation0]]
  $region45: #{densenet_block_forward.7} parent=0
    _
  %s6 = ssub.s32 1, %s4
  %s7 = scalar_select 0, %s6, %s4
  loop: start=0, step=1, limit=4
  $region2: #{densenet_block_forward.7} parent=0 // loop_pre_header
    _
  $region3: #{densenet_block_forward.7} parent=0 // loop_header
    %s9 = sphi 0, %s13
    %p10 = scmp.ge.s32.totalorder %s9, 4
    %s19 = sphi 0, %s21
    %s22 = sphi 0, %s19
    %s23 = sphi 0, %s22
    %s39 = sphi 0, %s23
    %s43 = sphi 0, %s43
    %s45 = sphi 0, %s43
    %s46 = sphi 0, %s45
    %s60 = sphi 0, %s46
    %s64 = sphi 0, %s64
    %s66 = sphi 0, %s64
    %s67 = sphi 0, %s66
    %s81 = sphi 0, %s67
    %s87 = sphi 0, %s89
    %s90 = sphi 0, %s87
    %s91 = sphi 0, %s90
    %s107 = sphi 0, %s91
  $region4: #{densenet_block_forward.7} parent=0 // loop_header_branch
    %12 = sbr.rel (%p10) target = $region8
  $region5: #{densenet_block_forward.7} parent=0 // loop_body
    %s14 = ssub.s32 %s9, 1
    %s15 = ssub.s32 %s9, 2
    %s16 = sadd.s32 %s9, 1
    %s17 = ssub.s32 %s9, %s16
    %p18 = scmp.eq.s32.totalorder %s17, 0
    %s20 = sadd.s32 %s19, 1
    %s21 = scalar_select %p18, %s19, %s20
    %p24 = pneg %p18
    %p25 = scmp.eq.s32.totalorder %s9, 1
    %p26 = por %p24, %p25
    %p27 = scmp.ne.s32.totalorder %s19, %s22
    %p28 = scmp.eq.s32.totalorder %s9, 0
    %p29 = por %p27, %p28
    %p30 = scmp.ne.s32.totalorder %s19, %s22
    %p31 = scmp.eq.s32.totalorder %s14, 1
    %p32 = por %p30, %p31
    %p33 = scmp.ne.s32.totalorder %s22, %s23
    %p34 = scmp.eq.s32.totalorder %s14, 0
    %p35 = por %p33, %p34
    %p36 = scmp.ne.s32.totalorder %s22, %s23
    %p37 = scmp.eq.s32.totalorder %s15, 1
    %p38 = por %p36, %p37
    %p40 = scmp.ne.s32.totalorder %s23, %s39
    %p41 = scmp.eq.s32.totalorder %s15, 0
    %p42 = por %p40, %p41
    %s44 = sadd.s32 %s43, 1
    %p47 = scmp.eq.s32.totalorder %s9, 1
    %p48 = scmp.ne.s32.totalorder %s43, %s45
    %p49 = scmp.eq.s32.totalorder %s9, 0
    %p50 = por %p48, %p49
    %p51 = scmp.ne.s32.totalorder %s43, %s45
    %p52 = scmp.eq.s32.totalorder %s14, 1
    %p53 = por %p51, %p52
    %p54 = scmp.ne.s32.totalorder %s45, %s46
    %p55 = scmp.eq.s32.totalorder %s14, 0
    %p56 = por %p54, %p55
    %p57 = scmp.ne.s32.totalorder %s45, %s46
    %p58 = scmp.eq.s32.totalorder %s15, 1
    %p59 = por %p57, %p58
    %p61 = scmp.ne.s32.totalorder %s46, %s60
    %p62 = scmp.eq.s32.totalorder %s15, 0
    %p63 = por %p61, %p62
    %s65 = sadd.s32 %s64, 1
    %p68 = scmp.eq.s32.totalorder %s9, 1
    %p69 = scmp.ne.s32.totalorder %s64, %s66
    %p70 = scmp.eq.s32.totalorder %s9, 0
    %p71 = por %p69, %p70
    %p72 = scmp.ne.s32.totalorder %s64, %s66
    %p73 = scmp.eq.s32.totalorder %s14, 1
    %p74 = por %p72, %p73
    %p75 = scmp.ne.s32.totalorder %s66, %s67
    %p76 = scmp.eq.s32.totalorder %s14, 0
    %p77 = por %p75, %p76
    %p78 = scmp.ne.s32.totalorder %s66, %s67
    %p79 = scmp.eq.s32.totalorder %s15, 1
    %p80 = por %p78, %p79
    %p82 = scmp.ne.s32.totalorder %s67, %s81
    %p83 = scmp.eq.s32.totalorder %s15, 0
    %p84 = por %p82, %p83
    %s85 = ssub.s32 %s9, %s16
    %p86 = scmp.eq.s32.totalorder %s85, 0
    %s88 = sadd.s32 %s87, 1
    %s89 = scalar_select %p86, %s87, %s88
    %p92 = pneg %p86
    %p93 = scmp.eq.s32.totalorder %s9, 1
    %p94 = por %p92, %p93
    %p95 = scmp.ne.s32.totalorder %s87, %s90
    %p96 = scmp.eq.s32.totalorder %s9, 0
    %p97 = por %p95, %p96
    %p98 = scmp.ne.s32.totalorder %s87, %s90
    %p99 = scmp.eq.s32.totalorder %s14, 1
    %p100 = por %p98, %p99
    %p101 = scmp.ne.s32.totalorder %s90, %s91
    %p102 = scmp.eq.s32.totalorder %s14, 0
    %p103 = por %p101, %p102
    %p104 = scmp.ne.s32.totalorder %s90, %s91
    %p105 = scmp.eq.s32.totalorder %s15, 1
    %p106 = por %p104, %p105
    %p108 = scmp.ne.s32.totalorder %s91, %s107
    %p109 = scmp.eq.s32.totalorder %s15, 0
    %p110 = por %p108, %p109
    %p111 = scmp.le.s32.totalorder 1, %s9
    %p112 = scmp.lt.s32.totalorder %s9, 3
    %p113 = pnand %p111, %p112
    %p114 = pneg %p113
    // Predicated region
    $region9: #{densenet_block_forward.7} parent=5 // pred_check
      _
    $region10: #{densenet_block_forward.7} parent=5 // pred_check_branch
      %116 = sbr.rel (%p113) target = $region12
    $region11: #{densenet_block_forward.7} parent=5 // pred_region
      %s117 = ssub.s32 %s9, 1
      // Predicated region
      $region13: #{densenet_block_forward.7} parent=11 // pred_check
        %p118 = pneg %p56
      $region14: #{densenet_block_forward.7} parent=11 // pred_check_branch
        %120 = sbr.rel (%p118) target = $region16
      $region15: #{densenet_block_forward.7} parent=11 // pred_region
        _
      $region16: #{densenet_block_forward.7} parent=11 // pred_fallthru
        _
      // Predicated region
      $region17: #{densenet_block_forward.7} parent=11 // pred_check
        %p121 = pneg %p77
      $region18: #{densenet_block_forward.7} parent=11 // pred_check_branch
        %123 = sbr.rel (%p121) target = $region20
      $region19: #{densenet_block_forward.7} parent=11 // pred_region
        _
      $region20: #{densenet_block_forward.7} parent=11 // pred_fallthru
        _
    $region12: #{densenet_block_forward.7} parent=5 // pred_fallthru
      _
    %p124 = scmp.lt.s32.totalorder %s9, 2
    // Predicated region
    $region21: #{densenet_block_forward.7} parent=5 // pred_check
      %p125 = pneg %p124
    $region22: #{densenet_block_forward.7} parent=5 // pred_check_branch
      %127 = sbr.rel (%p125) target = $region24
    $region23: #{densenet_block_forward.7} parent=5 // pred_region
      // Predicated region
      $region25: #{densenet_block_forward.7} parent=23 // pred_check
        %p128 = pneg %p29
      $region26: #{densenet_block_forward.7} parent=23 // pred_check_branch
        %130 = sbr.rel (%p128) target = $region28
      $region27: #{densenet_block_forward.7} parent=23 // pred_region
        %p131 = scmp.lt.s32.totalorder %s9, 1
        %s132 = scalar_select %p131, %s9, 1
        %s133 = smul.addr %s132, 32
        %s134 = smul.addr %s133, 4
        %s135 = scalar_lea.vmem %s0, %s134
      $region28: #{densenet_block_forward.7} parent=23 // pred_fallthru
        _
    $region24: #{densenet_block_forward.7} parent=5 // pred_fallthru
      _
    %p136 = scmp.le.s32.totalorder 1, %s9
    %p137 = scmp.lt.s32.totalorder %s9, 3
    %p138 = pnand %p136, %p137
    %p139 = pneg %p138
    // Predicated region
    $region29: #{densenet_block_forward.7} parent=5 // pred_check
      _
    $region30: #{densenet_block_forward.7} parent=5 // pred_check_branch
      %141 = sbr.rel (%p138) target = $region32
    $region31: #{densenet_block_forward.7} parent=5 // pred_region
      %s142 = ssub.s32 %s9, 1
      %p143 = scmp.lt.s32.totalorder %s14, 1
      %s144 = scalar_select %p143, %s14, 1
      %s145 = smul.addr %s144, 32
      %s146 = smul.addr %s145, 4
      %s147 = scalar_lea.vmem %s0, %s146
      %p148 = pneg %p35
      %p149 = pneg %p32
      %p150 = pneg %p56
      %p151 = pneg %p53
      %p152 = pneg %p77
      %p153 = pneg %p74
      %p154 = pneg %p103
      %p155 = pneg %p100
      %p156 = scmp.lt.s32.totalorder %s14, 1
      %s157 = scalar_select %p156, %s14, 1
      %s158 = smul.addr %s157, 32
      %s159 = smul.addr %s158, 8
      %s160 = scalar_lea.vmem %s3, %s159
      %p161 = scmp.lt.s32.totalorder %s14, 1
      %s162 = scalar_select %p161, %s14, 1
      %s163 = smul.addr %s162, 32
      %s164 = smul.addr %s163, 4
      %s165 = scalar_lea.vmem %s0, %s164
      %p166 = scmp.lt.s32.totalorder %s14, 1
      %s167 = scalar_select %p166, %s14, 1
      %s168 = smul.addr %s167, 32
      %s169 = smul.addr %s168, 8
      %s170 = scalar_lea.vmem %s3, %s169
      %v171 = vld [vmem:[%s165] sm:$0xf]
      %v172 = vld [vmem:[%s165 + $0x4] sm:$0xf]
      %v173 = vld [vmem:[%s165 + $0x8] sm:$0xf]
      %v174 = vld [vmem:[%s165 + $0xc] sm:$0xf]
      %v175 = vld [vmem:[%s165 + $0x10] sm:$0xf]
      %v176 = vld [vmem:[%s165 + $0x14] sm:$0xf]
      %v177 = vld [vmem:[%s165 + $0x18] sm:$0xf]
      %v178 = vld [vmem:[%s165 + $0x1c] sm:$0xf]
      %v179 = vld [vmem:[%s165 + $0x20] sm:$0xf]
      %v180 = vld [vmem:[%s165 + $0x24] sm:$0xf]
      %v181 = vld [vmem:[%s165 + $0x28] sm:$0xf]
      %v182 = vld [vmem:[%s165 + $0x2c] sm:$0xf]
      %v183 = vld [vmem:[%s165 + $0x30] sm:$0xf]
      %v184 = vld [vmem:[%s165 + $0x34] sm:$0xf]
      %v185 = vld [vmem:[%s165 + $0x38] sm:$0xf]
      %v186 = vld [vmem:[%s165 + $0x3c] sm:$0xf]
      %v187 = vld [vmem:[%s165 + $0x40] sm:$0xf]
      %v188 = vld [vmem:[%s165 + $0x44] sm:$0xf]
      %v189 = vld [vmem:[%s165 + $0x48] sm:$0xf]
      %v190 = vld [vmem:[%s165 + $0x4c] sm:$0xf]
      %v191 = vld [vmem:[%s165 + $0x50] sm:$0xf]
      %v192 = vld [vmem:[%s165 + $0x54] sm:$0xf]
      %v193 = vld [vmem:[%s165 + $0x58] sm:$0xf]
      %v194 = vld [vmem:[%s165 + $0x5c] sm:$0xf]
      %v195 = vld [vmem:[%s165 + $0x60] sm:$0xf]
      %v196 = vld [vmem:[%s165 + $0x64] sm:$0xf]
      %v197 = vld [vmem:[%s165 + $0x68] sm:$0xf]
      %v198 = vld [vmem:[%s165 + $0x6c] sm:$0xf]
      %v199 = vld [vmem:[%s165 + $0x70] sm:$0xf]
      %v200 = vld [vmem:[%s165 + $0x74] sm:$0xf]
      %v201 = vld [vmem:[%s165 + $0x78] sm:$0xf]
      %v202 = vld [vmem:[%s165 + $0x7c] sm:$0xf]
      %v203 = vunpack.c.l.bf16 %v171
      %v204 = vunpack.c.l.bf16 %v172
      %v205 = vunpack.c.l.bf16 %v173
      %v206 = vunpack.c.l.bf16 %v174
      %v207 = vunpack.c.l.bf16 %v175
      %v208 = vunpack.c.l.bf16 %v176
      %v209 = vunpack.c.l.bf16 %v177
      %v210 = vunpack.c.l.bf16 %v178
      %v211 = vunpack.c.l.bf16 %v179
      %v212 = vunpack.c.l.bf16 %v180
      %v213 = vunpack.c.l.bf16 %v181
      %v214 = vunpack.c.l.bf16 %v182
      %v215 = vunpack.c.l.bf16 %v183
      %v216 = vunpack.c.l.bf16 %v184
      %v217 = vunpack.c.l.bf16 %v185
      %v218 = vunpack.c.l.bf16 %v186
      %v219 = vunpack.c.l.bf16 %v187
      %v220 = vunpack.c.l.bf16 %v188
      %v221 = vunpack.c.l.bf16 %v189
      %v222 = vunpack.c.l.bf16 %v190
      %v223 = vunpack.c.l.bf16 %v191
      %v224 = vunpack.c.l.bf16 %v192
      %v225 = vunpack.c.l.bf16 %v193
      %v226 = vunpack.c.l.bf16 %v194
      %v227 = vunpack.c.l.bf16 %v195
      %v228 = vunpack.c.l.bf16 %v196
      %v229 = vunpack.c.l.bf16 %v197
      %v230 = vunpack.c.l.bf16 %v198
      %v231 = vunpack.c.l.bf16 %v199
      %v232 = vunpack.c.l.bf16 %v200
      %v233 = vunpack.c.l.bf16 %v201
      %v234 = vunpack.c.l.bf16 %v202
      %v235 = vld [vmem:[%s1] sm:$0x1]
      %v236 = vld [vmem:[%s2] sm:$0x1]
      %v238 = vlaneseq
      %v239 = vshrl.u32 %v238, 7
      %v240 = vsub.s32 0, %v239
      %v241 = vrot.slane %v235, %v240
      %v243 = vmul.f32 %v203, %v241
      %v244 = vmul.f32 %v204, %v241
      %v245 = vmul.f32 %v205, %v241
      %v246 = vmul.f32 %v206, %v241
      %v247 = vmul.f32 %v207, %v241
      %v248 = vmul.f32 %v208, %v241
      %v249 = vmul.f32 %v209, %v241
      %v250 = vmul.f32 %v210, %v241
      %v251 = vmul.f32 %v211, %v241
      %v252 = vmul.f32 %v212, %v241
      %v253 = vmul.f32 %v213, %v241
      %v254 = vmul.f32 %v214, %v241
      %v255 = vmul.f32 %v215, %v241
      %v256 = vmul.f32 %v216, %v241
      %v257 = vmul.f32 %v217, %v241
      %v258 = vmul.f32 %v218, %v241
      %v259 = vmul.f32 %v219, %v241
      %v260 = vmul.f32 %v220, %v241
      %v261 = vmul.f32 %v221, %v241
      %v262 = vmul.f32 %v222, %v241
      %v263 = vmul.f32 %v223, %v241
      %v264 = vmul.f32 %v224, %v241
      %v265 = vmul.f32 %v225, %v241
      %v266 = vmul.f32 %v226, %v241
      %v267 = vmul.f32 %v227, %v241
      %v268 = vmul.f32 %v228, %v241
      %v269 = vmul.f32 %v229, %v241
      %v270 = vmul.f32 %v230, %v241
      %v271 = vmul.f32 %v231, %v241
      %v272 = vmul.f32 %v232, %v241
      %v273 = vmul.f32 %v233, %v241
      %v274 = vmul.f32 %v234, %v241
      %v276 = vlaneseq
      %v277 = vshrl.u32 %v276, 7
      %v278 = vsub.s32 0, %v277
      %v279 = vrot.slane %v236, %v278
      %v281 = vadd.f32 %v243, %v279
      %v282 = vadd.f32 %v244, %v279
      %v283 = vadd.f32 %v245, %v279
      %v284 = vadd.f32 %v246, %v279
      %v285 = vadd.f32 %v247, %v279
      %v286 = vadd.f32 %v248, %v279
      %v287 = vadd.f32 %v249, %v279
      %v288 = vadd.f32 %v250, %v279
      %v289 = vadd.f32 %v251, %v279
      %v290 = vadd.f32 %v252, %v279
      %v291 = vadd.f32 %v253, %v279
      %v292 = vadd.f32 %v254, %v279
      %v293 = vadd.f32 %v255, %v279
      %v294 = vadd.f32 %v256, %v279
      %v295 = vadd.f32 %v257, %v279
      %v296 = vadd.f32 %v258, %v279
      %v297 = vadd.f32 %v259, %v279
      %v298 = vadd.f32 %v260, %v279
      %v299 = vadd.f32 %v261, %v279
      %v300 = vadd.f32 %v262, %v279
      %v301 = vadd.f32 %v263, %v279
      %v302 = vadd.f32 %v264, %v279
      %v303 = vadd.f32 %v265, %v279
      %v304 = vadd.f32 %v266, %v279
      %v305 = vadd.f32 %v267, %v279
      %v306 = vadd.f32 %v268, %v279
      %v307 = vadd.f32 %v269, %v279
      %v308 = vadd.f32 %v270, %v279
      %v309 = vadd.f32 %v271, %v279
      %v310 = vadd.f32 %v272, %v279
      %v311 = vadd.f32 %v273, %v279
      %v312 = vadd.f32 %v274, %v279
      %v313 = vmax.f32 %v281, 0.0
      %v314 = vmax.f32 %v282, 0.0
      %v315 = vmax.f32 %v283, 0.0
      %v316 = vmax.f32 %v284, 0.0
      %v317 = vmax.f32 %v285, 0.0
      %v318 = vmax.f32 %v286, 0.0
      %v319 = vmax.f32 %v287, 0.0
      %v320 = vmax.f32 %v288, 0.0
      %v321 = vmax.f32 %v289, 0.0
      %v322 = vmax.f32 %v290, 0.0
      %v323 = vmax.f32 %v291, 0.0
      %v324 = vmax.f32 %v292, 0.0
      %v325 = vmax.f32 %v293, 0.0
      %v326 = vmax.f32 %v294, 0.0
      %v327 = vmax.f32 %v295, 0.0
      %v328 = vmax.f32 %v296, 0.0
      %v329 = vmax.f32 %v297, 0.0
      %v330 = vmax.f32 %v298, 0.0
      %v331 = vmax.f32 %v299, 0.0
      %v332 = vmax.f32 %v300, 0.0
      %v333 = vmax.f32 %v301, 0.0
      %v334 = vmax.f32 %v302, 0.0
      %v335 = vmax.f32 %v303, 0.0
      %v336 = vmax.f32 %v304, 0.0
      %v337 = vmax.f32 %v305, 0.0
      %v338 = vmax.f32 %v306, 0.0
      %v339 = vmax.f32 %v307, 0.0
      %v340 = vmax.f32 %v308, 0.0
      %v341 = vmax.f32 %v309, 0.0
      %v342 = vmax.f32 %v310, 0.0
      %v343 = vmax.f32 %v311, 0.0
      %v344 = vmax.f32 %v312, 0.0
      %vm345 = vcmask 64512
      %346 = vst.msk [vmem:[%s170] sm:$0xff] %vm345, %v313
      %347 = vst.msk [vmem:[%s170 + $0x8] sm:$0xff] %vm345, %v314
      %348 = vst.msk [vmem:[%s170 + $0x10] sm:$0xff] %vm345, %v315
      %349 = vst.msk [vmem:[%s170 + $0x18] sm:$0xff] %vm345, %v316
      %350 = vst.msk [vmem:[%s170 + $0x20] sm:$0xff] %vm345, %v317
      %351 = vst.msk [vmem:[%s170 + $0x28] sm:$0xff] %vm345, %v318
      %352 = vst.msk [vmem:[%s170 + $0x30] sm:$0xff] %vm345, %v319
      %353 = vst.msk [vmem:[%s170 + $0x38] sm:$0xff] %vm345, %v320
      %354 = vst.msk [vmem:[%s170 + $0x40] sm:$0xff] %vm345, %v321
      %355 = vst.msk [vmem:[%s170 + $0x48] sm:$0xff] %vm345, %v322
      %356 = vst.msk [vmem:[%s170 + $0x50] sm:$0xff] %vm345, %v323
      %357 = vst.msk [vmem:[%s170 + $0x58] sm:$0xff] %vm345, %v324
      %358 = vst.msk [vmem:[%s170 + $0x60] sm:$0xff] %vm345, %v325
      %359 = vst.msk [vmem:[%s170 + $0x68] sm:$0xff] %vm345, %v326
      %360 = vst.msk [vmem:[%s170 + $0x70] sm:$0xff] %vm345, %v327
      %361 = vst.msk [vmem:[%s170 + $0x78] sm:$0xff] %vm345, %v328
      %362 = vst.msk [vmem:[%s170 + $0x80] sm:$0xff] %vm345, %v329
      %363 = vst.msk [vmem:[%s170 + $0x88] sm:$0xff] %vm345, %v330
      %364 = vst.msk [vmem:[%s170 + $0x90] sm:$0xff] %vm345, %v331
      %365 = vst.msk [vmem:[%s170 + $0x98] sm:$0xff] %vm345, %v332
      %366 = vst.msk [vmem:[%s170 + $0xa0] sm:$0xff] %vm345, %v333
      %367 = vst.msk [vmem:[%s170 + $0xa8] sm:$0xff] %vm345, %v334
      %368 = vst.msk [vmem:[%s170 + $0xb0] sm:$0xff] %vm345, %v335
      %369 = vst.msk [vmem:[%s170 + $0xb8] sm:$0xff] %vm345, %v336
      %370 = vst.msk [vmem:[%s170 + $0xc0] sm:$0xff] %vm345, %v337
      %371 = vst.msk [vmem:[%s170 + $0xc8] sm:$0xff] %vm345, %v338
      %372 = vst.msk [vmem:[%s170 + $0xd0] sm:$0xff] %vm345, %v339
      %373 = vst.msk [vmem:[%s170 + $0xd8] sm:$0xff] %vm345, %v340
      %374 = vst.msk [vmem:[%s170 + $0xe0] sm:$0xff] %vm345, %v341
      %375 = vst.msk [vmem:[%s170 + $0xe8] sm:$0xff] %vm345, %v342
      %376 = vst.msk [vmem:[%s170 + $0xf0] sm:$0xff] %vm345, %v343
      %377 = vst.msk [vmem:[%s170 + $0xf8] sm:$0xff] %vm345, %v344
      %p378 = scmp.lt.s32.totalorder %s14, 1
      %s379 = scalar_select %p378, %s14, 1
      %s380 = smul.addr %s379, 32
      %s381 = smul.addr %s380, 8
      %s382 = scalar_lea.vmem %s3, %s381
      // Predicated region
      $region33: #{densenet_block_forward.7} parent=31 // pred_check
        %p383 = pneg %p100
      $region34: #{densenet_block_forward.7} parent=31 // pred_check_branch
        %385 = sbr.rel (%p383) target = $region36
      $region35: #{densenet_block_forward.7} parent=31 // pred_region
        _
      $region36: #{densenet_block_forward.7} parent=31 // pred_fallthru
        _
    $region32: #{densenet_block_forward.7} parent=5 // pred_fallthru
      _
    %p386 = scmp.le.s32.totalorder 2, %s9
    // Predicated region
    $region37: #{densenet_block_forward.7} parent=5 // pred_check
      %p387 = pneg %p386
    $region38: #{densenet_block_forward.7} parent=5 // pred_check_branch
      %389 = sbr.rel (%p387) target = $region40
    $region39: #{densenet_block_forward.7} parent=5 // pred_region
      %s390 = ssub.s32 %s9, 2
      // Predicated region
      $region41: #{densenet_block_forward.7} parent=39 // pred_check
        %p391 = pneg %p106
      $region42: #{densenet_block_forward.7} parent=39 // pred_check_branch
        %393 = sbr.rel (%p391) target = $region44
      $region43: #{densenet_block_forward.7} parent=39 // pred_region
        %p394 = scmp.lt.s32.totalorder %s15, 1
        %s395 = scalar_select %p394, %s15, 1
        %s396 = smul.addr %s395, 32
        %s397 = smul.addr %s396, 8
        %s398 = scalar_lea.vmem %s3, %s397
      $region44: #{densenet_block_forward.7} parent=39 // pred_fallthru
        _
    $region40: #{densenet_block_forward.7} parent=5 // pred_fallthru
      _
  $region6: #{densenet_block_forward.7} parent=0 // loop_footer
    %s13 = sadd.s32 1, %s9
  $region7: #{densenet_block_forward.7} parent=0 // loop_footer_branch
    %8 = sbr.rel target = $region3
  $region8: #{densenet_block_forward.7} parent=0 // loop_exit
    _

// kernel: densenet_block_forward.4
$region0: #{densenet_block_forward.4}
  #allocation0 [shape = 'u32[]', space=smem, size = 0x4, offset = 0x4, fixed_abs, tag = 'smem constant byte address 0x4 - core index']
  #allocation1 [shape = 'u32[144,128]{1,0:T(1,128)}', space=vmem, size = 0x12000, scoped, tag = 'internal scratch']
  #allocation2 [shape = 'f32[18,18,4]{2,1,0:T(8,128)}', space=vmem, size = 0x36000, scoped, tag = 'scratch operand']
  #allocation3 [shape = 'f32[256,8]{1,0:T(8,128)}', space=vmem, size = 0x20000, scoped, tag = 'scratch operand']
  %s0 = inlined_call_operand.vmem [shape: bf16[2,16,16,4], index: 0, kind: input, shape index: {}]
  %s1 = inlined_call_operand.vmem [shape: f32[1,4], index: 1, kind: input, shape index: {}, may-alias: {1,2}]
  %s2 = inlined_call_operand.vmem [shape: f32[1,4], index: 2, kind: input, shape index: {}, may-alias: {1,2}]
  %s3 = inlined_call_operand.vmem [shape: bf16[9,4,8], index: 3, kind: input, shape index: {}]
  %s4 = inlined_call_operand.vmem [shape: bf16[2,16,16,8], index: 4, kind: output, shape index: {0}]
  %s5 = inlined_call_operand.vmem [shape: f32[2,1,8], index: 5, kind: output, shape index: {1}]
  %s6 = inlined_call_operand.vmem [shape: f32[2,1,8], index: 6, kind: output, shape index: {2}]
  %7 = xla_tuple %s4, %s5, %s6
  %s8 = sld [smem:[#allocation0]]
  $region65: #{densenet_block_forward.4} parent=0
    _
  %s10 = ssub.s32 1, %s8
  %s11 = scalar_select 0, %s10, %s8
  loop: start=0, step=1, limit=4
  $region2: #{densenet_block_forward.4} parent=0 // loop_pre_header
    _
  $region3: #{densenet_block_forward.4} parent=0 // loop_header
    %s13 = sphi 0, %s17
    %p14 = scmp.ge.s32.totalorder %s13, 4
    %s23 = sphi 0, %s25
    %s26 = sphi 0, %s23
    %s27 = sphi 0, %s26
    %s43 = sphi 0, %s27
    %s47 = sphi 0, %s47
    %s49 = sphi 0, %s47
    %s50 = sphi 0, %s49
    %s64 = sphi 0, %s50
    %s68 = sphi 0, %s68
    %s70 = sphi 0, %s68
    %s71 = sphi 0, %s70
    %s85 = sphi 0, %s71
    %s89 = sphi 0, %s89
    %s91 = sphi 0, %s89
    %s92 = sphi 0, %s91
    %s106 = sphi 0, %s92
    %s112 = sphi 0, %s114
    %s115 = sphi 0, %s112
    %s116 = sphi 0, %s115
    %s132 = sphi 0, %s116
    %s138 = sphi 0, %s140
    %s141 = sphi 0, %s138
    %s142 = sphi 0, %s141
    %s158 = sphi 0, %s142
    %s164 = sphi 0, %s166
    %s167 = sphi 0, %s164
    %s168 = sphi 0, %s167
    %s184 = sphi 0, %s168
  $region4: #{densenet_block_forward.4} parent=0 // loop_header_branch
    %16 = sbr.rel (%p14) target = $region8
  $region5: #{densenet_block_forward.4} parent=0 // loop_body
    %s18 = ssub.s32 %s13, 1
    %s19 = ssub.s32 %s13, 2
    %s20 = sadd.s32 %s13, 1
    %s21 = ssub.s32 %s13, %s20
    %p22 = scmp.eq.s32.totalorder %s21, 0
    %s24 = sadd.s32 %s23, 1
    %s25 = scalar_select %p22, %s23, %s24
    %p28 = pneg %p22
    %p29 = scmp.eq.s32.totalorder %s13, 1
    %p30 = por %p28, %p29
    %p31 = scmp.ne.s32.totalorder %s23, %s26
    %p32 = scmp.eq.s32.totalorder %s13, 0
    %p33 = por %p31, %p32
    %p34 = scmp.ne.s32.totalorder %s23, %s26
    %p35 = scmp.eq.s32.totalorder %s18, 1
    %p36 = por %p34, %p35
    %p37 = scmp.ne.s32.totalorder %s26, %s27
    %p38 = scmp.eq.s32.totalorder %s18, 0
    %p39 = por %p37, %p38
    %p40 = scmp.ne.s32.totalorder %s26, %s27
    %p41 = scmp.eq.s32.totalorder %s19, 1
    %p42 = por %p40, %p41
    %p44 = scmp.ne.s32.totalorder %s27, %s43
    %p45 = scmp.eq.s32.totalorder %s19, 0
    %p46 = por %p44, %p45
    %s48 = sadd.s32 %s47, 1
    %p51 = scmp.eq.s32.totalorder %s13, 1
    %p52 = scmp.ne.s32.totalorder %s47, %s49
    %p53 = scmp.eq.s32.totalorder %s13, 0
    %p54 = por %p52, %p53
    %p55 = scmp.ne.s32.totalorder %s47, %s49
    %p56 = scmp.eq.s32.totalorder %s18, 1
    %p57 = por %p55, %p56
    %p58 = scmp.ne.s32.totalorder %s49, %s50
    %p59 = scmp.eq.s32.totalorder %s18, 0
    %p60 = por %p58, %p59
    %p61 = scmp.ne.s32.totalorder %s49, %s50
    %p62 = scmp.eq.s32.totalorder %s19, 1
    %p63 = por %p61, %p62
    %p65 = scmp.ne.s32.totalorder %s50, %s64
    %p66 = scmp.eq.s32.totalorder %s19, 0
    %p67 = por %p65, %p66
    %s69 = sadd.s32 %s68, 1
    %p72 = scmp.eq.s32.totalorder %s13, 1
    %p73 = scmp.ne.s32.totalorder %s68, %s70
    %p74 = scmp.eq.s32.totalorder %s13, 0
    %p75 = por %p73, %p74
    %p76 = scmp.ne.s32.totalorder %s68, %s70
    %p77 = scmp.eq.s32.totalorder %s18, 1
    %p78 = por %p76, %p77
    %p79 = scmp.ne.s32.totalorder %s70, %s71
    %p80 = scmp.eq.s32.totalorder %s18, 0
    %p81 = por %p79, %p80
    %p82 = scmp.ne.s32.totalorder %s70, %s71
    %p83 = scmp.eq.s32.totalorder %s19, 1
    %p84 = por %p82, %p83
    %p86 = scmp.ne.s32.totalorder %s71, %s85
    %p87 = scmp.eq.s32.totalorder %s19, 0
    %p88 = por %p86, %p87
    %s90 = sadd.s32 %s89, 1
    %p93 = scmp.eq.s32.totalorder %s13, 1
    %p94 = scmp.ne.s32.totalorder %s89, %s91
    %p95 = scmp.eq.s32.totalorder %s13, 0
    %p96 = por %p94, %p95
    %p97 = scmp.ne.s32.totalorder %s89, %s91
    %p98 = scmp.eq.s32.totalorder %s18, 1
    %p99 = por %p97, %p98
    %p100 = scmp.ne.s32.totalorder %s91, %s92
    %p101 = scmp.eq.s32.totalorder %s18, 0
    %p102 = por %p100, %p101
    %p103 = scmp.ne.s32.totalorder %s91, %s92
    %p104 = scmp.eq.s32.totalorder %s19, 1
    %p105 = por %p103, %p104
    %p107 = scmp.ne.s32.totalorder %s92, %s106
    %p108 = scmp.eq.s32.totalorder %s19, 0
    %p109 = por %p107, %p108
    %s110 = ssub.s32 %s13, %s20
    %p111 = scmp.eq.s32.totalorder %s110, 0
    %s113 = sadd.s32 %s112, 1
    %s114 = scalar_select %p111, %s112, %s113
    %p117 = pneg %p111
    %p118 = scmp.eq.s32.totalorder %s13, 1
    %p119 = por %p117, %p118
    %p120 = scmp.ne.s32.totalorder %s112, %s115
    %p121 = scmp.eq.s32.totalorder %s13, 0
    %p122 = por %p120, %p121
    %p123 = scmp.ne.s32.totalorder %s112, %s115
    %p124 = scmp.eq.s32.totalorder %s18, 1
    %p125 = por %p123, %p124
    %p126 = scmp.ne.s32.totalorder %s115, %s116
    %p127 = scmp.eq.s32.totalorder %s18, 0
    %p128 = por %p126, %p127
    %p129 = scmp.ne.s32.totalorder %s115, %s116
    %p130 = scmp.eq.s32.totalorder %s19, 1
    %p131 = por %p129, %p130
    %p133 = scmp.ne.s32.totalorder %s116, %s132
    %p134 = scmp.eq.s32.totalorder %s19, 0
    %p135 = por %p133, %p134
    %s136 = ssub.s32 %s13, %s20
    %p137 = scmp.eq.s32.totalorder %s136, 0
    %s139 = sadd.s32 %s138, 1
    %s140 = scalar_select %p137, %s138, %s139
    %p143 = pneg %p137
    %p144 = scmp.eq.s32.totalorder %s13, 1
    %p145 = por %p143, %p144
    %p146 = scmp.ne.s32.totalorder %s138, %s141
    %p147 = scmp.eq.s32.totalorder %s13, 0
    %p148 = por %p146, %p147
    %p149 = scmp.ne.s32.totalorder %s138, %s141
    %p150 = scmp.eq.s32.totalorder %s18, 1
    %p151 = por %p149, %p150
    %p152 = scmp.ne.s32.totalorder %s141, %s142
    %p153 = scmp.eq.s32.totalorder %s18, 0
    %p154 = por %p152, %p153
    %p155 = scmp.ne.s32.totalorder %s141, %s142
    %p156 = scmp.eq.s32.totalorder %s19, 1
    %p157 = por %p155, %p156
    %p159 = scmp.ne.s32.totalorder %s142, %s158
    %p160 = scmp.eq.s32.totalorder %s19, 0
    %p161 = por %p159, %p160
    %s162 = ssub.s32 %s13, %s20
    %p163 = scmp.eq.s32.totalorder %s162, 0
    %s165 = sadd.s32 %s164, 1
    %s166 = scalar_select %p163, %s164, %s165
    %p169 = pneg %p163
    %p170 = scmp.eq.s32.totalorder %s13, 1
    %p171 = por %p169, %p170
    %p172 = scmp.ne.s32.totalorder %s164, %s167
    %p173 = scmp.eq.s32.totalorder %s13, 0
    %p174 = por %p172, %p173
    %p175 = scmp.ne.s32.totalorder %s164, %s167
    %p176 = scmp.eq.s32.totalorder %s18, 1
    %p177 = por %p175, %p176
    %p178 = scmp.ne.s32.totalorder %s167, %s168
    %p179 = scmp.eq.s32.totalorder %s18, 0
    %p180 = por %p178, %p179
    %p181 = scmp.ne.s32.totalorder %s167, %s168
    %p182 = scmp.eq.s32.totalorder %s19, 1
    %p183 = por %p181, %p182
    %p185 = scmp.ne.s32.totalorder %s168, %s184
    %p186 = scmp.eq.s32.totalorder %s19, 0
    %p187 = por %p185, %p186
    %p188 = scmp.le.s32.totalorder 1, %s13
    %p189 = scmp.lt.s32.totalorder %s13, 3
    %p190 = pnand %p188, %p189
    %p191 = pneg %p190
    // Predicated region
    $region9: #{densenet_block_forward.4} parent=5 // pred_check
      _
    $region10: #{densenet_block_forward.4} parent=5 // pred_check_branch
      %193 = sbr.rel (%p190) target = $region12
    $region11: #{densenet_block_forward.4} parent=5 // pred_region
      %s194 = ssub.s32 %s13, 1
      // Predicated region
      $region13: #{densenet_block_forward.4} parent=11 // pred_check
        %p195 = pneg %p60
      $region14: #{densenet_block_forward.4} parent=11 // pred_check_branch
        %197 = sbr.rel (%p195) target = $region16
      $region15: #{densenet_block_forward.4} parent=11 // pred_region
        _
      $region16: #{densenet_block_forward.4} parent=11 // pred_fallthru
        _
      // Predicated region
      $region17: #{densenet_block_forward.4} parent=11 // pred_check
        %p198 = pneg %p81
      $region18: #{densenet_block_forward.4} parent=11 // pred_check_branch
        %200 = sbr.rel (%p198) target = $region20
      $region19: #{densenet_block_forward.4} parent=11 // pred_region
        _
      $region20: #{densenet_block_forward.4} parent=11 // pred_fallthru
        _
      // Predicated region
      $region21: #{densenet_block_forward.4} parent=11 // pred_check
        %p201 = pneg %p102
      $region22: #{densenet_block_forward.4} parent=11 // pred_check_branch
        %203 = sbr.rel (%p201) target = $region24
      $region23: #{densenet_block_forward.4} parent=11 // pred_region
        _
      $region24: #{densenet_block_forward.4} parent=11 // pred_fallthru
        _
    $region12: #{densenet_block_forward.4} parent=5 // pred_fallthru
      _
    %p204 = scmp.lt.s32.totalorder %s13, 2
    // Predicated region
    $region25: #{densenet_block_forward.4} parent=5 // pred_check
      %p205 = pneg %p204
    $region26: #{densenet_block_forward.4} parent=5 // pred_check_branch
      %207 = sbr.rel (%p205) target = $region28
    $region27: #{densenet_block_forward.4} parent=5 // pred_region
      // Predicated region
      $region29: #{densenet_block_forward.4} parent=27 // pred_check
        %p208 = pneg %p33
      $region30: #{densenet_block_forward.4} parent=27 // pred_check_branch
        %210 = sbr.rel (%p208) target = $region32
      $region31: #{densenet_block_forward.4} parent=27 // pred_region
        %p211 = scmp.lt.s32.totalorder %s13, 1
        %s212 = scalar_select %p211, %s13, 1
        %s213 = smul.addr %s212, 32
        %s214 = smul.addr %s213, 4
        %s215 = scalar_lea.vmem %s0, %s214
      $region32: #{densenet_block_forward.4} parent=27 // pred_fallthru
        _
    $region28: #{densenet_block_forward.4} parent=5 // pred_fallthru
      _
    %p216 = scmp.le.s32.totalorder 1, %s13
    %p217 = scmp.lt.s32.totalorder %s13, 3
    %p218 = pnand %p216, %p217
    %p219 = pneg %p218
    // Predicated region
    $region33: #{densenet_block_forward.4} parent=5 // pred_check
      _
    $region34: #{densenet_block_forward.4} parent=5 // pred_check_branch
      %221 = sbr.rel (%p218) target = $region36
    $region35: #{densenet_block_forward.4} parent=5 // pred_region
      %s222 = ssub.s32 %s13, 1
      %p223 = scmp.lt.s32.totalorder %s18, 1
      %s224 = scalar_select %p223, %s18, 1
      %s225 = smul.addr %s224, 32
      %s226 = smul.addr %s225, 4
      %s227 = scalar_lea.vmem %s0, %s226
      %p228 = pneg %p39
      %p229 = pneg %p36
      %p230 = pneg %p60
      %p231 = pneg %p57
      %p232 = pneg %p81
      %p233 = pneg %p78
      %p234 = pneg %p102
      %p235 = pneg %p99
      %p236 = pneg %p128
      %p237 = pneg %p125
      %p238 = scmp.lt.s32.totalorder %s18, 1
      %s239 = scalar_select %p238, %s18, 1
      %s240 = smul.addr %s239, 32
      %s241 = smul.addr %s240, 4
      %s242 = scalar_lea.vmem %s4, %s241
      %p243 = pneg %p154
      %p244 = pneg %p151
      %p245 = scmp.lt.s32.totalorder %s18, 1
      %s246 = scalar_select %p245, %s18, 1
      %s247 = scalar_lea.vmem %s5, %s246
      %p248 = pneg %p180
      %p249 = pneg %p177
      %p250 = scmp.lt.s32.totalorder %s18, 1
      %s251 = scalar_select %p250, %s18, 1
      %s252 = scalar_lea.vmem %s6, %s251
      %p253 = scmp.lt.s32.totalorder %s18, 1
      %s254 = scalar_select %p253, %s18, 1
      %s255 = smul.addr %s254, 32
      %s256 = smul.addr %s255, 4
      %s257 = scalar_lea.vmem %s0, %s256
      %p258 = scmp.lt.s32.totalorder %s18, 1
      %s259 = scalar_select %p258, %s18, 1
      %s260 = smul.addr %s259, 32
      %s261 = smul.addr %s260, 4
      %s262 = scalar_lea.vmem %s4, %s261
      %p263 = scmp.lt.s32.totalorder %s18, 1
      %s264 = scalar_select %p263, %s18, 1
      %s265 = scalar_lea.vmem %s5, %s264
      %p266 = scmp.lt.s32.totalorder %s18, 1
      %s267 = scalar_select %p266, %s18, 1
      %s268 = scalar_lea.vmem %s6, %s267
      %v270 = vld [vmem:[%s257] sm:$0xf]
      %v271 = vld [vmem:[%s257 + $0x4] sm:$0xf]
      %v272 = vld [vmem:[%s257 + $0x8] sm:$0xf]
      %v273 = vld [vmem:[%s257 + $0xc] sm:$0xf]
      %v274 = vld [vmem:[%s257 + $0x10] sm:$0xf]
      %v275 = vld [vmem:[%s257 + $0x14] sm:$0xf]
      %v276 = vld [vmem:[%s257 + $0x18] sm:$0xf]
      %v277 = vld [vmem:[%s257 + $0x1c] sm:$0xf]
      %v278 = vld [vmem:[%s257 + $0x20] sm:$0xf]
      %v279 = vld [vmem:[%s257 + $0x24] sm:$0xf]
      %v280 = vld [vmem:[%s257 + $0x28] sm:$0xf]
      %v281 = vld [vmem:[%s257 + $0x2c] sm:$0xf]
      %v282 = vld [vmem:[%s257 + $0x30] sm:$0xf]
      %v283 = vld [vmem:[%s257 + $0x34] sm:$0xf]
      %v284 = vld [vmem:[%s257 + $0x38] sm:$0xf]
      %v285 = vld [vmem:[%s257 + $0x3c] sm:$0xf]
      %v286 = vld [vmem:[%s257 + $0x40] sm:$0xf]
      %v287 = vld [vmem:[%s257 + $0x44] sm:$0xf]
      %v288 = vld [vmem:[%s257 + $0x48] sm:$0xf]
      %v289 = vld [vmem:[%s257 + $0x4c] sm:$0xf]
      %v290 = vld [vmem:[%s257 + $0x50] sm:$0xf]
      %v291 = vld [vmem:[%s257 + $0x54] sm:$0xf]
      %v292 = vld [vmem:[%s257 + $0x58] sm:$0xf]
      %v293 = vld [vmem:[%s257 + $0x5c] sm:$0xf]
      %v294 = vld [vmem:[%s257 + $0x60] sm:$0xf]
      %v295 = vld [vmem:[%s257 + $0x64] sm:$0xf]
      %v296 = vld [vmem:[%s257 + $0x68] sm:$0xf]
      %v297 = vld [vmem:[%s257 + $0x6c] sm:$0xf]
      %v298 = vld [vmem:[%s257 + $0x70] sm:$0xf]
      %v299 = vld [vmem:[%s257 + $0x74] sm:$0xf]
      %v300 = vld [vmem:[%s257 + $0x78] sm:$0xf]
      %v301 = vld [vmem:[%s257 + $0x7c] sm:$0xf]
      %v302 = vunpack.c.l.bf16 %v270
      %v303 = vunpack.c.l.bf16 %v271
      %v304 = vunpack.c.l.bf16 %v272
      %v305 = vunpack.c.l.bf16 %v273
      %v306 = vunpack.c.l.bf16 %v274
      %v307 = vunpack.c.l.bf16 %v275
      %v308 = vunpack.c.l.bf16 %v276
      %v309 = vunpack.c.l.bf16 %v277
      %v310 = vunpack.c.l.bf16 %v278
      %v311 = vunpack.c.l.bf16 %v279
      %v312 = vunpack.c.l.bf16 %v280
      %v313 = vunpack.c.l.bf16 %v281
      %v314 = vunpack.c.l.bf16 %v282
      %v315 = vunpack.c.l.bf16 %v283
      %v316 = vunpack.c.l.bf16 %v284
      %v317 = vunpack.c.l.bf16 %v285
      %v318 = vunpack.c.l.bf16 %v286
      %v319 = vunpack.c.l.bf16 %v287
      %v320 = vunpack.c.l.bf16 %v288
      %v321 = vunpack.c.l.bf16 %v289
      %v322 = vunpack.c.l.bf16 %v290
      %v323 = vunpack.c.l.bf16 %v291
      %v324 = vunpack.c.l.bf16 %v292
      %v325 = vunpack.c.l.bf16 %v293
      %v326 = vunpack.c.l.bf16 %v294
      %v327 = vunpack.c.l.bf16 %v295
      %v328 = vunpack.c.l.bf16 %v296
      %v329 = vunpack.c.l.bf16 %v297
      %v330 = vunpack.c.l.bf16 %v298
      %v331 = vunpack.c.l.bf16 %v299
      %v332 = vunpack.c.l.bf16 %v300
      %v333 = vunpack.c.l.bf16 %v301
      %vm334 = vcmask 31744
      %335 = vst.msk [vmem:[#allocation2] sm:$0xff] %vm334, 0.0
      %336 = vst.msk [vmem:[#allocation2 + $0x8] sm:$0xff] %vm334, 0.0
      %vm337 = vcmask 25600
      %338 = vst.msk [vmem:[#allocation2 + $0x10] sm:$0x3] %vm337, 0.0
      %339 = vst.msk [vmem:[#allocation2 + $0x18] sm:$0xff] %vm334, 0.0
      %340 = vst.msk [vmem:[#allocation2 + $0x20] sm:$0xff] %vm334, 0.0
      %341 = vst.msk [vmem:[#allocation2 + $0x28] sm:$0x3] %vm337, 0.0
      %342 = vst.msk [vmem:[#allocation2 + $0x30] sm:$0xff] %vm334, 0.0
      %343 = vst.msk [vmem:[#allocation2 + $0x38] sm:$0xff] %vm334, 0.0
      %344 = vst.msk [vmem:[#allocation2 + $0x40] sm:$0x3] %vm337, 0.0
      %345 = vst.msk [vmem:[#allocation2 + $0x48] sm:$0xff] %vm334, 0.0
      %346 = vst.msk [vmem:[#allocation2 + $0x50] sm:$0xff] %vm334, 0.0
      %347 = vst.msk [vmem:[#allocation2 + $0x58] sm:$0x3] %vm337, 0.0
      %348 = vst.msk [vmem:[#allocation2 + $0x60] sm:$0xff] %vm334, 0.0
      %349 = vst.msk [vmem:[#allocation2 + $0x68] sm:$0xff] %vm334, 0.0
      %350 = vst.msk [vmem:[#allocation2 + $0x70] sm:$0x3] %vm337, 0.0
      %351 = vst.msk [vmem:[#allocation2 + $0x78] sm:$0xff] %vm334, 0.0
      %352 = vst.msk [vmem:[#allocation2 + $0x80] sm:$0xff] %vm334, 0.0
      %353 = vst.msk [vmem:[#allocation2 + $0x88] sm:$0x3] %vm337, 0.0
      %354 = vst.msk [vmem:[#allocation2 + $0x90] sm:$0xff] %vm334, 0.0
      %355 = vst.msk [vmem:[#allocation2 + $0x98] sm:$0xff] %vm334, 0.0
      %356 = vst.msk [vmem:[#allocation2 + $0xa0] sm:$0x3] %vm337, 0.0
      %357 = vst.msk [vmem:[#allocation2 + $0xa8] sm:$0xff] %vm334, 0.0
      %358 = vst.msk [vmem:[#allocation2 + $0xb0] sm:$0xff] %vm334, 0.0
      %359 = vst.msk [vmem:[#allocation2 + $0xb8] sm:$0x3] %vm337, 0.0
      %360 = vst.msk [vmem:[#allocation2 + $0xc0] sm:$0xff] %vm334, 0.0
      %361 = vst.msk [vmem:[#allocation2 + $0xc8] sm:$0xff] %vm334, 0.0
      %362 = vst.msk [vmem:[#allocation2 + $0xd0] sm:$0x3] %vm337, 0.0
      %363 = vst.msk [vmem:[#allocation2 + $0xd8] sm:$0xff] %vm334, 0.0
      %364 = vst.msk [vmem:[#allocation2 + $0xe0] sm:$0xff] %vm334, 0.0
      %365 = vst.msk [vmem:[#allocation2 + $0xe8] sm:$0x3] %vm337, 0.0
      %366 = vst.msk [vmem:[#allocation2 + $0xf0] sm:$0xff] %vm334, 0.0
      %367 = vst.msk [vmem:[#allocation2 + $0xf8] sm:$0xff] %vm334, 0.0
      %368 = vst.msk [vmem:[#allocation2 + $0x100] sm:$0x3] %vm337, 0.0
      %369 = vst.msk [vmem:[#allocation2 + $0x108] sm:$0xff] %vm334, 0.0
      %370 = vst.msk [vmem:[#allocation2 + $0x110] sm:$0xff] %vm334, 0.0
      %371 = vst.msk [vmem:[#allocation2 + $0x118] sm:$0x3] %vm337, 0.0
      %372 = vst.msk [vmem:[#allocation2 + $0x120] sm:$0xff] %vm334, 0.0
      %373 = vst.msk [vmem:[#allocation2 + $0x128] sm:$0xff] %vm334, 0.0
      %374 = vst.msk [vmem:[#allocation2 + $0x130] sm:$0x3] %vm337, 0.0
      %375 = vst.msk [vmem:[#allocation2 + $0x138] sm:$0xff] %vm334, 0.0
      %376 = vst.msk [vmem:[#allocation2 + $0x140] sm:$0xff] %vm334, 0.0
      %377 = vst.msk [vmem:[#allocation2 + $0x148] sm:$0x3] %vm337, 0.0
      %378 = vst.msk [vmem:[#allocation2 + $0x150] sm:$0xff] %vm334, 0.0
      %379 = vst.msk [vmem:[#allocation2 + $0x158] sm:$0xff] %vm334, 0.0
      %380 = vst.msk [vmem:[#allocation2 + $0x160] sm:$0x3] %vm337, 0.0
      %381 = vst.msk [vmem:[#allocation2 + $0x168] sm:$0xff] %vm334, 0.0
      %382 = vst.msk [vmem:[#allocation2 + $0x170] sm:$0xff] %vm334, 0.0
      %383 = vst.msk [vmem:[#allocation2 + $0x178] sm:$0x3] %vm337, 0.0
      %384 = vst.msk [vmem:[#allocation2 + $0x180] sm:$0xff] %vm334, 0.0
      %385 = vst.msk [vmem:[#allocation2 + $0x188] sm:$0xff] %vm334, 0.0
      %386 = vst.msk [vmem:[#allocation2 + $0x190] sm:$0x3] %vm337, 0.0
      %387 = vst.msk [vmem:[#allocation2 + $0x198] sm:$0xff] %vm334, 0.0
      %388 = vst.msk [vmem:[#allocation2 + $0x1a0] sm:$0xff] %vm334, 0.0
      %389 = vst.msk [vmem:[#allocation2 + $0x1a8] sm:$0x3] %vm337, 0.0
      %s390 = scalar_lea.vmem [#allocation2], 24
      %391 = vst.msk [vmem:[%s390 + $0x1] sm:$0xff] %vm334, %v302
      %392 = vst.msk [vmem:[%s390 + $0x9] sm:$0xff] %vm334, %v303
      %393 = vst.msk [vmem:[%s390 + $0x19] sm:$0xff] %vm334, %v304
      %394 = vst.msk [vmem:[%s390 + $0x21] sm:$0xff] %vm334, %v305
      %395 = vst.msk [vmem:[%s390 + $0x31] sm:$0xff] %vm334, %v306
      %396 = vst.msk [vmem:[%s390 + $0x39] sm:$0xff] %vm334, %v307
      %397 = vst.msk [vmem:[%s390 + $0x49] sm:$0xff] %vm334, %v308
      %398 = vst.msk [vmem:[%s390 + $0x51] sm:$0xff] %vm334, %v309
      %399 = vst.msk [vmem:[%s390 + $0x61] sm:$0xff] %vm334, %v310
      %400 = vst.msk [vmem:[%s390 + $0x69] sm:$0xff] %vm334, %v311
      %401 = vst.msk [vmem:[%s390 + $0x79] sm:$0xff] %vm334, %v312
      %402 = vst.msk [vmem:[%s390 + $0x81] sm:$0xff] %vm334, %v313
      %403 = vst.msk [vmem:[%s390 + $0x91] sm:$0xff] %vm334, %v314
      %404 = vst.msk [vmem:[%s390 + $0x99] sm:$0xff] %vm334, %v315
      %405 = vst.msk [vmem:[%s390 + $0xa9] sm:$0xff] %vm334, %v316
      %406 = vst.msk [vmem:[%s390 + $0xb1] sm:$0xff] %vm334, %v317
      %407 = vst.msk [vmem:[%s390 + $0xc1] sm:$0xff] %vm334, %v318
      %408 = vst.msk [vmem:[%s390 + $0xc9] sm:$0xff] %vm334, %v319
      %409 = vst.msk [vmem:[%s390 + $0xd9] sm:$0xff] %vm334, %v320
      %410 = vst.msk [vmem:[%s390 + $0xe1] sm:$0xff] %vm334, %v321
      %411 = vst.msk [vmem:[%s390 + $0xf1] sm:$0xff] %vm334, %v322
      %412 = vst.msk [vmem:[%s390 + $0xf9] sm:$0xff] %vm334, %v323
      %413 = vst.msk [vmem:[%s390 + $0x109] sm:$0xff] %vm334, %v324
      %414 = vst.msk [vmem:[%s390 + $0x111] sm:$0xff] %vm334, %v325
      %415 = vst.msk [vmem:[%s390 + $0x121] sm:$0xff] %vm334, %v326
      %416 = vst.msk [vmem:[%s390 + $0x129] sm:$0xff] %vm334, %v327
      %417 = vst.msk [vmem:[%s390 + $0x139] sm:$0xff] %vm334, %v328
      %418 = vst.msk [vmem:[%s390 + $0x141] sm:$0xff] %vm334, %v329
      %419 = vst.msk [vmem:[%s390 + $0x151] sm:$0xff] %vm334, %v330
      %420 = vst.msk [vmem:[%s390 + $0x159] sm:$0xff] %vm334, %v331
      %421 = vst.msk [vmem:[%s390 + $0x169] sm:$0xff] %vm334, %v332
      %422 = vst.msk [vmem:[%s390 + $0x171] sm:$0xff] %vm334, %v333
      %vm423 = vcmask 64512
      %424 = vst.msk [vmem:[#allocation3] sm:$0xff] %vm423, 0.0
      %425 = vst.msk [vmem:[#allocation3 + $0x8] sm:$0xff] %vm423, 0.0
      %426 = vst.msk [vmem:[#allocation3 + $0x10] sm:$0xff] %vm423, 0.0
      %427 = vst.msk [vmem:[#allocation3 + $0x18] sm:$0xff] %vm423, 0.0
      %428 = vst.msk [vmem:[#allocation3 + $0x20] sm:$0xff] %vm423, 0.0
      %429 = vst.msk [vmem:[#allocation3 + $0x28] sm:$0xff] %vm423, 0.0
      %430 = vst.msk [vmem:[#allocation3 + $0x30] sm:$0xff] %vm423, 0.0
      %431 = vst.msk [vmem:[#allocation3 + $0x38] sm:$0xff] %vm423, 0.0
      %432 = vst.msk [vmem:[#allocation3 + $0x40] sm:$0xff] %vm423, 0.0
      %433 = vst.msk [vmem:[#allocation3 + $0x48] sm:$0xff] %vm423, 0.0
      %434 = vst.msk [vmem:[#allocation3 + $0x50] sm:$0xff] %vm423, 0.0
      %435 = vst.msk [vmem:[#allocation3 + $0x58] sm:$0xff] %vm423, 0.0
      %436 = vst.msk [vmem:[#allocation3 + $0x60] sm:$0xff] %vm423, 0.0
      %437 = vst.msk [vmem:[#allocation3 + $0x68] sm:$0xff] %vm423, 0.0
      %438 = vst.msk [vmem:[#allocation3 + $0x70] sm:$0xff] %vm423, 0.0
      %439 = vst.msk [vmem:[#allocation3 + $0x78] sm:$0xff] %vm423, 0.0
      %440 = vst.msk [vmem:[#allocation3 + $0x80] sm:$0xff] %vm423, 0.0
      %441 = vst.msk [vmem:[#allocation3 + $0x88] sm:$0xff] %vm423, 0.0
      %442 = vst.msk [vmem:[#allocation3 + $0x90] sm:$0xff] %vm423, 0.0
      %443 = vst.msk [vmem:[#allocation3 + $0x98] sm:$0xff] %vm423, 0.0
      %444 = vst.msk [vmem:[#allocation3 + $0xa0] sm:$0xff] %vm423, 0.0
      %445 = vst.msk [vmem:[#allocation3 + $0xa8] sm:$0xff] %vm423, 0.0
      %446 = vst.msk [vmem:[#allocation3 + $0xb0] sm:$0xff] %vm423, 0.0
      %447 = vst.msk [vmem:[#allocation3 + $0xb8] sm:$0xff] %vm423, 0.0
      %448 = vst.msk [vmem:[#allocation3 + $0xc0] sm:$0xff] %vm423, 0.0
      %449 = vst.msk [vmem:[#allocation3 + $0xc8] sm:$0xff] %vm423, 0.0
      %450 = vst.msk [vmem:[#allocation3 + $0xd0] sm:$0xff] %vm423, 0.0
      %451 = vst.msk [vmem:[#allocation3 + $0xd8] sm:$0xff] %vm423, 0.0
      %452 = vst.msk [vmem:[#allocation3 + $0xe0] sm:$0xff] %vm423, 0.0
      %453 = vst.msk [vmem:[#allocation3 + $0xe8] sm:$0xff] %vm423, 0.0
      %454 = vst.msk [vmem:[#allocation3 + $0xf0] sm:$0xff] %vm423, 0.0
      %455 = vst.msk [vmem:[#allocation3 + $0xf8] sm:$0xff] %vm423, 0.0
      %v456 = vld [vmem:[#allocation2] sm:$0xff]
      %v457 = vld [vmem:[#allocation2 + $0x8] sm:$0xff]
      %v458 = vld [vmem:[#allocation2 + $0x18] sm:$0xff]
      %v459 = vld [vmem:[#allocation2 + $0x20] sm:$0xff]
      %v460 = vld [vmem:[#allocation2 + $0x30] sm:$0xff]
      %v461 = vld [vmem:[#allocation2 + $0x38] sm:$0xff]
      %v462 = vld [vmem:[#allocation2 + $0x48] sm:$0xff]
      %v463 = vld [vmem:[#allocation2 + $0x50] sm:$0xff]
      %v464 = vld [vmem:[#allocation2 + $0x60] sm:$0xff]
      %v465 = vld [vmem:[#allocation2 + $0x68] sm:$0xff]
      %v466 = vld [vmem:[#allocation2 + $0x78] sm:$0xff]
      %v467 = vld [vmem:[#allocation2 + $0x80] sm:$0xff]
      %v468 = vld [vmem:[#allocation2 + $0x90] sm:$0xff]
      %v469 = vld [vmem:[#allocation2 + $0x98] sm:$0xff]
      %v470 = vld [vmem:[#allocation2 + $0xa8] sm:$0xff]
      %v471 = vld [vmem:[#allocation2 + $0xb0] sm:$0xff]
      %v472 = vld [vmem:[#allocation2 + $0xc0] sm:$0xff]
      %v473 = vld [vmem:[#allocation2 + $0xc8] sm:$0xff]
      %v474 = vld [vmem:[#allocation2 + $0xd8] sm:$0xff]
      %v475 = vld [vmem:[#allocation2 + $0xe0] sm:$0xff]
      %v476 = vld [vmem:[#allocation2 + $0xf0] sm:$0xff]
      %v477 = vld [vmem:[#allocation2 + $0xf8] sm:$0xff]
      %v478 = vld [vmem:[#allocation2 + $0x108] sm:$0xff]
      %v479 = vld [vmem:[#allocation2 + $0x110] sm:$0xff]
      %v480 = vld [vmem:[#allocation2 + $0x120] sm:$0xff]
      %v481 = vld [vmem:[#allocation2 + $0x128] sm:$0xff]
      %v482 = vld [vmem:[#allocation2 + $0x138] sm:$0xff]
      %v483 = vld [vmem:[#allocation2 + $0x140] sm:$0xff]
      %v484 = vld [vmem:[#allocation2 + $0x150] sm:$0xff]
      %v485 = vld [vmem:[#allocation2 + $0x158] sm:$0xff]
      %v486 = vld [vmem:[#allocation2 + $0x168] sm:$0xff]
      %v487 = vld [vmem:[#allocation2 + $0x170] sm:$0xff]
      %v488 = vpack.c.bf16 %v457, %v456
      %v489 = vpack.c.bf16 %v459, %v458
      %v490 = vpack.c.bf16 %v461, %v460
      %v491 = vpack.c.bf16 %v463, %v462
      %v492 = vpack.c.bf16 %v465, %v464
      %v493 = vpack.c.bf16 %v467, %v466
      %v494 = vpack.c.bf16 %v469, %v468
      %v495 = vpack.c.bf16 %v471, %v470
      %v496 = vpack.c.bf16 %v473, %v472
      %v497 = vpack.c.bf16 %v475, %v474
      %v498 = vpack.c.bf16 %v477, %v476
      %v499 = vpack.c.bf16 %v479, %v478
      %v500 = vpack.c.bf16 %v481, %v480
      %v501 = vpack.c.bf16 %v483, %v482
      %v502 = vpack.c.bf16 %v485, %v484
      %v503 = vpack.c.bf16 %v487, %v486
      %v504 = vld [vmem:[#allocation3] sm:$0xff]
      %v505 = vld [vmem:[#allocation3 + $0x8] sm:$0xff]
      %v506 = vld [vmem:[#allocation3 + $0x10] sm:$0xff]
      %v507 = vld [vmem:[#allocation3 + $0x18] sm:$0xff]
      %v508 = vld [vmem:[#allocation3 + $0x20] sm:$0xff]
      %v509 = vld [vmem:[#allocation3 + $0x28] sm:$0xff]
      %v510 = vld [vmem:[#allocation3 + $0x30] sm:$0xff]
      %v511 = vld [vmem:[#allocation3 + $0x38] sm:$0xff]
      %v512 = vld [vmem:[#allocation3 + $0x40] sm:$0xff]
      %v513 = vld [vmem:[#allocation3 + $0x48] sm:$0xff]
      %v514 = vld [vmem:[#allocation3 + $0x50] sm:$0xff]
      %v515 = vld [vmem:[#allocation3 + $0x58] sm:$0xff]
      %v516 = vld [vmem:[#allocation3 + $0x60] sm:$0xff]
      %v517 = vld [vmem:[#allocation3 + $0x68] sm:$0xff]
      %v518 = vld [vmem:[#allocation3 + $0x70] sm:$0xff]
      %v519 = vld [vmem:[#allocation3 + $0x78] sm:$0xff]
      %v520 = vld [vmem:[#allocation3 + $0x80] sm:$0xff]
      %v521 = vld [vmem:[#allocation3 + $0x88] sm:$0xff]
      %v522 = vld [vmem:[#allocation3 + $0x90] sm:$0xff]
      %v523 = vld [vmem:[#allocation3 + $0x98] sm:$0xff]
      %v524 = vld [vmem:[#allocation3 + $0xa0] sm:$0xff]
      %v525 = vld [vmem:[#allocation3 + $0xa8] sm:$0xff]
      %v526 = vld [vmem:[#allocation3 + $0xb0] sm:$0xff]
      %v527 = vld [vmem:[#allocation3 + $0xb8] sm:$0xff]
      %v528 = vld [vmem:[#allocation3 + $0xc0] sm:$0xff]
      %v529 = vld [vmem:[#allocation3 + $0xc8] sm:$0xff]
      %v530 = vld [vmem:[#allocation3 + $0xd0] sm:$0xff]
      %v531 = vld [vmem:[#allocation3 + $0xd8] sm:$0xff]
      %v532 = vld [vmem:[#allocation3 + $0xe0] sm:$0xff]
      %v533 = vld [vmem:[#allocation3 + $0xe8] sm:$0xff]
      %v534 = vld [vmem:[#allocation3 + $0xf0] sm:$0xff]
      %v535 = vld [vmem:[#allocation3 + $0xf8] sm:$0xff]
      %v536 = vld [vmem:[%s3] sm:$0x3]
      %v538 = vsel %vm334, %v488, 0
      %v541 = vsel %vm334, %v489, 0
      %v544 = vsel %vm334, %v490, 0
      %v547 = vsel %vm334, %v491, 0
      %v550 = vsel %vm334, %v492, 0
      %v553 = vsel %vm334, %v493, 0
      %v556 = vsel %vm334, %v494, 0
      %v559 = vsel %vm334, %v495, 0
      %v562 = vsel %vm334, %v496, 0
      %v565 = vsel %vm334, %v497, 0
      %v568 = vsel %vm334, %v498, 0
      %v571 = vsel %vm334, %v499, 0
      %v574 = vsel %vm334, %v500, 0
      %v577 = vsel %vm334, %v501, 0
      %v580 = vsel %vm334, %v502, 0
      %v583 = vsel %vm334, %v503, 0
      %vm585 = vcmask 1041408
      %v587 = vsel %vm585, %v536, 0
      %589 = vmatprep.subr.bf16.mxu0 0
      %590 = vmatpush1.bf16.msra.mxu0 %v587
      %591 = vmatprep.subr.bf16.mxu0 0
      %592 = vmatpush1.bf16.msra.mxu0 0
      %593 = vmatprep.subr.bf16.mxu0 0
      %594 = vmatpush1.bf16.msra.mxu0 0
      %595 = vmatprep.subr.bf16.mxu0 0
      %596 = vmatpush1.bf16.msra.mxu0 0
      %597 = vmatprep.subr.bf16.mxu0 0
      %598 = vmatpush1.bf16.msra.mxu0 0
      %599 = vmatprep.subr.bf16.mxu0 0
      %600 = vmatpush1.bf16.msra.mxu0 0
      %601 = vmatprep.subr.bf16.mxu0 0
      %602 = vmatpush1.bf16.msra.mxu0 0
      %603 = vmatprep.subr.bf16.mxu0 0
      %604 = vmatpush1.bf16.msra.mxu0 0
      %605 = vmatprep.subr.bf16.mxu0 0
      %606 = vmatpush1.bf16.msra.mxu0 0
      %607 = vmatprep.subr.bf16.mxu0 0
      %608 = vmatpush1.bf16.msra.mxu0 0
      %609 = vmatprep.subr.bf16.mxu0 0
      %610 = vmatpush1.bf16.msra.mxu0 0
      %611 = vmatprep.subr.bf16.mxu0 0
      %612 = vmatpush1.bf16.msra.mxu0 0
      %613 = vmatprep.subr.bf16.mxu0 0
      %614 = vmatpush1.bf16.msra.mxu0 0
      %615 = vmatprep.subr.bf16.mxu0 0
      %616 = vmatpush1.bf16.msra.mxu0 0
      %617 = vmatprep.subr.bf16.mxu0 0
      %618 = vmatpush1.bf16.msra.mxu0 0
      %619 = vmatprep.subr.bf16.mxu0 0
      %620 = vmatpush1.bf16.msra.mxu0 0
      %621 = vmatprep.mubr.bf16.mxu0 0
      %622 = vmatmul.mubr.bf16.gmra.mrb[0].mxu0 %v538
      %v623 = vpop.f32.mrb[0].mxu0
      %v624 = vadd.f32 0.0, %v623
      %v625 = vpop.f32.mrb[0].mxu0
      %v626 = vpop.f32.mrb[0].mxu0
      %v627 = vadd.f32 0.0, %v626
      %v628 = vpop.f32.mrb[0].mxu0
      %629 = vmatprep.mubr.bf16.mxu0 0
      %630 = vmatmul.mubr.bf16.gmra.mrb[0].mxu0 %v541
      %v631 = vpop.f32.mrb[0].mxu0
      %v632 = vadd.f32 0.0, %v631
      %v633 = vpop.f32.mrb[0].mxu0
      %v634 = vpop.f32.mrb[0].mxu0
      %v635 = vadd.f32 0.0, %v634
      %v636 = vpop.f32.mrb[0].mxu0
      %637 = vmatprep.mubr.bf16.mxu0 0
      %638 = vmatmul.mubr.bf16.gmra.mrb[0].mxu0 %v544
      %v639 = vpop.f32.mrb[0].mxu0
      %v640 = vadd.f32 0.0, %v639
      %v641 = vpop.f32.mrb[0].mxu0
      %v642 = vpop.f32.mrb[0].mxu0
      %v643 = vadd.f32 0.0, %v642
      %v644 = vpop.f32.mrb[0].mxu0
      %645 = vmatprep.mubr.bf16.mxu0 0
      %646 = vmatmul.mubr.bf16.gmra.mrb[0].mxu0 %v547
      %v647 = vpop.f32.mrb[0].mxu0
      %v648 = vadd.f32 0.0, %v647
      %v649 = vpop.f32.mrb[0].mxu0
      %v650 = vpop.f32.mrb[0].mxu0
      %v651 = vadd.f32 0.0, %v650
      %v652 = vpop.f32.mrb[0].mxu0
      %653 = vmatprep.mubr.bf16.mxu0 0
      %654 = vmatmul.mubr.bf16.gmra.mrb[0].mxu0 %v550
      %v655 = vpop.f32.mrb[0].mxu0
      %v656 = vadd.f32 0.0, %v655
      %v657 = vpop.f32.mrb[0].mxu0
      %v658 = vpop.f32.mrb[0].mxu0
      %v659 = vadd.f32 0.0, %v658
      %v660 = vpop.f32.mrb[0].mxu0
      %661 = vmatprep.mubr.bf16.mxu0 0
      %662 = vmatmul.mubr.bf16.gmra.mrb[0].mxu0 %v553
      %v663 = vpop.f32.mrb[0].mxu0
      %v664 = vadd.f32 0.0, %v663
      %v665 = vpop.f32.mrb[0].mxu0
      %v666 = vpop.f32.mrb[0].mxu0
      %v667 = vadd.f32 0.0, %v666
      %v668 = vpop.f32.mrb[0].mxu0
      %669 = vmatprep.mubr.bf16.mxu0 0
      %670 = vmatmul.mubr.bf16.gmra.mrb[0].mxu0 %v556
      %v671 = vpop.f32.mrb[0].mxu0
      %v672 = vadd.f32 0.0, %v671
      %v673 = vpop.f32.mrb[0].mxu0
      %v674 = vpop.f32.mrb[0].mxu0
      %v675 = vadd.f32 0.0, %v674
      %v676 = vpop.f32.mrb[0].mxu0
      %677 = vmatprep.mubr.bf16.mxu0 0
      %678 = vmatmul.mubr.bf16.gmra.mrb[0].mxu0 %v559
      %v679 = vpop.f32.mrb[0].mxu0
      %v680 = vadd.f32 0.0, %v679
      %v681 = vpop.f32.mrb[0].mxu0
      %v682 = vpop.f32.mrb[0].mxu0
      %v683 = vadd.f32 0.0, %v682
      %v684 = vpop.f32.mrb[0].mxu0
      %685 = vmatprep.mubr.bf16.mxu0 0
      %686 = vmatmul.mubr.bf16.gmra.mrb[0].mxu0 %v562
      %v687 = vpop.f32.mrb[0].mxu0
      %v688 = vadd.f32 0.0, %v687
      %v689 = vpop.f32.mrb[0].mxu0
      %v690 = vpop.f32.mrb[0].mxu0
      %v691 = vadd.f32 0.0, %v690
      %v692 = vpop.f32.mrb[0].mxu0
      %693 = vmatprep.mubr.bf16.mxu0 0
      %694 = vmatmul.mubr.bf16.gmra.mrb[0].mxu0 %v565
      %v695 = vpop.f32.mrb[0].mxu0
      %v696 = vadd.f32 0.0, %v695
      %v697 = vpop.f32.mrb[0].mxu0
      %v698 = vpop.f32.mrb[0].mxu0
      %v699 = vadd.f32 0.0, %v698
      %v700 = vpop.f32.mrb[0].mxu0
      %701 = vmatprep.mubr.bf16.mxu0 0
      %702 = vmatmul.mubr.bf16.gmra.mrb[0].mxu0 %v568
      %v703 = vpop.f32.mrb[0].mxu0
      %v704 = vadd.f32 0.0, %v703
      %v705 = vpop.f32.mrb[0].mxu0
      %v706 = vpop.f32.mrb[0].mxu0
      %v707 = vadd.f32 0.0, %v706
      %v708 = vpop.f32.mrb[0].mxu0
      %709 = vmatprep.mubr.bf16.mxu0 0
      %710 = vmatmul.mubr.bf16.gmra.mrb[0].mxu0 %v571
      %v711 = vpop.f32.mrb[0].mxu0
      %v712 = vadd.f32 0.0, %v711
      %v713 = vpop.f32.mrb[0].mxu0
      %v714 = vpop.f32.mrb[0].mxu0
      %v715 = vadd.f32 0.0, %v714
      %v716 = vpop.f32.mrb[0].mxu0
      %717 = vmatprep.mubr.bf16.mxu0 0
      %718 = vmatmul.mubr.bf16.gmra.mrb[0].mxu0 %v574
      %v719 = vpop.f32.mrb[0].mxu0
      %v720 = vadd.f32 0.0, %v719
      %v721 = vpop.f32.mrb[0].mxu0
      %v722 = vpop.f32.mrb[0].mxu0
      %v723 = vadd.f32 0.0, %v722
      %v724 = vpop.f32.mrb[0].mxu0
      %725 = vmatprep.mubr.bf16.mxu0 0
      %726 = vmatmul.mubr.bf16.gmra.mrb[0].mxu0 %v577
      %v727 = vpop.f32.mrb[0].mxu0
      %v728 = vadd.f32 0.0, %v727
      %v729 = vpop.f32.mrb[0].mxu0
      %v730 = vpop.f32.mrb[0].mxu0
      %v731 = vadd.f32 0.0, %v730
      %v732 = vpop.f32.mrb[0].mxu0
      %733 = vmatprep.mubr.bf16.mxu0 0
      %734 = vmatmul.mubr.bf16.gmra.mrb[0].mxu0 %v580
      %v735 = vpop.f32.mrb[0].mxu0
      %v736 = vadd.f32 0.0, %v735
      %v737 = vpop.f32.mrb[0].mxu0
      %v738 = vpop.f32.mrb[0].mxu0
      %v739 = vadd.f32 0.0, %v738
      %v740 = vpop.f32.mrb[0].mxu0
      %741 = vmatprep.mubr.bf16.mxu0 0
      %742 = vmatmul.mubr.bf16.gmra.mrb[0].mxu0 %v583
      %v743 = vpop.f32.mrb[0].mxu0
      %v744 = vadd.f32 0.0, %v743
      %v745 = vpop.f32.mrb[0].mxu0
      %v746 = vpop.f32.mrb[0].mxu0
      %v747 = vadd.f32 0.0, %v746
      %v748 = vpop.f32.mrb[0].mxu0
      %749 = vdwg.mxu0
      %v750 = vadd.f32 %v504, %v624
      %v751 = vadd.f32 %v505, %v627
      %v752 = vadd.f32 %v506, %v632
      %v753 = vadd.f32 %v507, %v635
      %v754 = vadd.f32 %v508, %v640
      %v755 = vadd.f32 %v509, %v643
      %v756 = vadd.f32 %v510, %v648
      %v757 = vadd.f32 %v511, %v651
      %v758 = vadd.f32 %v512, %v656
      %v759 = vadd.f32 %v513, %v659
      %v760 = vadd.f32 %v514, %v664
      %v761 = vadd.f32 %v515, %v667
      %v762 = vadd.f32 %v516, %v672
      %v763 = vadd.f32 %v517, %v675
      %v764 = vadd.f32 %v518, %v680
      %v765 = vadd.f32 %v519, %v683
      %v766 = vadd.f32 %v520, %v688
      %v767 = vadd.f32 %v521, %v691
      %v768 = vadd.f32 %v522, %v696
      %v769 = vadd.f32 %v523, %v699
      %v770 = vadd.f32 %v524, %v704
      %v771 = vadd.f32 %v525, %v707
      %v772 = vadd.f32 %v526, %v712
      %v773 = vadd.f32 %v527, %v715
      %v774 = vadd.f32 %v528, %v720
      %v775 = vadd.f32 %v529, %v723
      %v776 = vadd.f32 %v530, %v728
      %v777 = vadd.f32 %v531, %v731
      %v778 = vadd.f32 %v532, %v736
      %v779 = vadd.f32 %v533, %v739
      %v780 = vadd.f32 %v534, %v744
      %v781 = vadd.f32 %v535, %v747
      %782 = vst.msk [vmem:[#allocation3] sm:$0xff] %vm423, %v750
      %783 = vst.msk [vmem:[#allocation3 + $0x8] sm:$0xff] %vm423, %v751
      %784 = vst.msk [vmem:[#allocation3 + $0x10] sm:$0xff] %vm423, %v752
      %785 = vst.msk [vmem:[#allocation3 + $0x18] sm:$0xff] %vm423, %v753
      %786 = vst.msk [vmem:[#allocation3 + $0x20] sm:$0xff] %vm423, %v754
      %787 = vst.msk [vmem:[#allocation3 + $0x28] sm:$0xff] %vm423, %v755
      %788 = vst.msk [vmem:[#allocation3 + $0x30] sm:$0xff] %vm423, %v756
      %789 = vst.msk [vmem:[#allocation3 + $0x38] sm:$0xff] %vm423, %v757
      %790 = vst.msk [vmem:[#allocation3 + $0x40] sm:$0xff] %vm423, %v758
      %791 = vst.msk [vmem:[#allocation3 + $0x48] sm:$0xff] %vm423, %v759
      %792 = vst.msk [vmem:[#allocation3 + $0x50] sm:$0xff] %vm423, %v760
      %793 = vst.msk [vmem:[#allocation3 + $0x58] sm:$0xff] %vm423, %v761
      %794 = vst.msk [vmem:[#allocation3 + $0x60] sm:$0xff] %vm423, %v762
      %795 = vst.msk [vmem:[#allocation3 + $0x68] sm:$0xff] %vm423, %v763
      %796 = vst.msk [vmem:[#allocation3 + $0x70] sm:$0xff] %vm423, %v764
      %797 = vst.msk [vmem:[#allocation3 + $0x78] sm:$0xff] %vm423, %v765
      %798 = vst.msk [vmem:[#allocation3 + $0x80] sm:$0xff] %vm423, %v766
      %799 = vst.msk [vmem:[#allocation3 + $0x88] sm:$0xff] %vm423, %v767
      %800 = vst.msk [vmem:[#allocation3 + $0x90] sm:$0xff] %vm423, %v768
      %801 = vst.msk [vmem:[#allocation3 + $0x98] sm:$0xff] %vm423, %v769
      %802 = vst.msk [vmem:[#allocation3 + $0xa0] sm:$0xff] %vm423, %v770
      %803 = vst.msk [vmem:[#allocation3 + $0xa8] sm:$0xff] %vm423, %v771
      %804 = vst.msk [vmem:[#allocation3 + $0xb0] sm:$0xff] %vm423, %v772
      %805 = vst.msk [vmem:[#allocation3 + $0xb8] sm:$0xff] %vm423, %v773
      %806 = vst.msk [vmem:[#allocation3 + $0xc0] sm:$0xff] %vm423, %v774
      %807 = vst.msk [vmem:[#allocation3 + $0xc8] sm:$0xff] %vm423, %v775
      %808 = vst.msk [vmem:[#allocation3 + $0xd0] sm:$0xff] %vm423, %v776
      %809 = vst.msk [vmem:[#allocation3 + $0xd8] sm:$0xff] %vm423, %v777
      %810 = vst.msk [vmem:[#allocation3 + $0xe0] sm:$0xff] %vm423, %v778
      %811 = vst.msk [vmem:[#allocation3 + $0xe8] sm:$0xff] %vm423, %v779
      %812 = vst.msk [vmem:[#allocation3 + $0xf0] sm:$0xff] %vm423, %v780
      %813 = vst.msk [vmem:[#allocation3 + $0xf8] sm:$0xff] %vm423, %v781
      %v814 = vld [vmem:[#allocation2 + $0x1] sm:$0xff]
      %v815 = vld [vmem:[#allocation2 + $0x9] sm:$0xff]
      %v816 = vld [vmem:[#allocation2 + $0x19] sm:$0xff]
      %v817 = vld [vmem:[#allocation2 + $0x21] sm:$0xff]
      %v818 = vld [vmem:[#allocation2 + $0x31] sm:$0xff]
      %v819 = vld [vmem:[#allocation2 + $0x39] sm:$0xff]
      %v820 = vld [vmem:[#allocation2 + $0x49] sm:$0xff]
      %v821 = vld [vmem:[#allocation2 + $0x51] sm:$0xff]
      %v822 = vld [vmem:[#allocation2 + $0x61] sm:$0xff]
      %v823 = vld [vmem:[#allocation2 + $0x69] sm:$0xff]
      %v824 = vld [vmem:[#allocation2 + $0x79] sm:$0xff]
      %v825 = vld [vmem:[#allocation2 + $0x81] sm:$0xff]
      %v826 = vld [vmem:[#allocation2 + $0x91] sm:$0xff]
      %v827 = vld [vmem:[#allocation2 + $0x99] sm:$0xff]
      %v828 = vld [vmem:[#allocation2 + $0xa9] sm:$0xff]
      %v829 = vld [vmem:[#allocation2 + $0xb1] sm:$0xff]
      %v830 = vld [vmem:[#allocation2 + $0xc1] sm:$0xff]
      %v831 = vld [vmem:[#allocation2 + $0xc9] sm:$0xff]
      %v832 = vld [vmem:[#allocation2 + $0xd9] sm:$0xff]
      %v833 = vld [vmem:[#allocation2 + $0xe1] sm:$0xff]
      %v834 = vld [vmem:[#allocation2 + $0xf1] sm:$0xff]
      %v835 = vld [vmem:[#allocation2 + $0xf9] sm:$0xff]
      %v836 = vld [vmem:[#allocation2 + $0x109] sm:$0xff]
      %v837 = vld [vmem:[#allocation2 + $0x111] sm:$0xff]
      %v838 = vld [vmem:[#allocation2 + $0x121] sm:$0xff]
      %v839 = vld [vmem:[#allocation2 + $0x129] sm:$0xff]
      %v840 = vld [vmem:[#allocation2 + $0x139] sm:$0xff]
      %v841 = vld [vmem:[#allocation2 + $0x141] sm:$0xff]
      %v842 = vld [vmem:[#allocation2 + $0x151] sm:$0xff]
      %v843 = vld [vmem:[#allocation2 + $0x159] sm:$0xff]
      %v844 = vld [vmem:[#allocation2 + $0x169] sm:$0xff]
      %v845 = vld [vmem:[#allocation2 + $0x171] sm:$0xff]
      %v846 = vpack.c.bf16 %v815, %v814
      %v847 = vpack.c.bf16 %v817, %v816
      %v848 = vpack.c.bf16 %v819, %v818
      %v849 = vpack.c.bf16 %v821, %v820
      %v850 = vpack.c.bf16 %v823, %v822
      %v851 = vpack.c.bf16 %v825, %v824
      %v852 = vpack.c.bf16 %v827, %v826
      %v853 = vpack.c.bf16 %v829, %v828
      %v854 = vpack.c.bf16 %v831, %v830
      %v855 = vpack.c.bf16 %v833, %v832
      %v856 = vpack.c.bf16 %v835, %v834
      %v857 = vpack.c.bf16 %v837, %v836
      %v858 = vpack.c.bf16 %v839, %v838
      %v859 = vpack.c.bf16 %v841, %v840
      %v860 = vpack.c.bf16 %v843, %v842
      %v861 = vpack.c.bf16 %v845, %v844
      %v862 = vld [vmem:[#allocation3] sm:$0xff]
      %v863 = vld [vmem:[#allocation3 + $0x8] sm:$0xff]
      %v864 = vld [vmem:[#allocation3 + $0x10] sm:$0xff]
      %v865 = vld [vmem:[#allocation3 + $0x18] sm:$0xff]
      %v866 = vld [vmem:[#allocation3 + $0x20] sm:$0xff]
      %v867 = vld [vmem:[#allocation3 + $0x28] sm:$0xff]
      %v868 = vld [vmem:[#allocation3 + $0x30] sm:$0xff]
      %v869 = vld [vmem:[#allocation3 + $0x38] sm:$0xff]
      %v870 = vld [vmem:[#allocation3 + $0x40] sm:$0xff]
      %v871 = vld [vmem:[#allocation3 + $0x48] sm:$0xff]
      %v872 = vld [vmem:[#allocation3 + $0x50] sm:$0xff]
      %v873 = vld [vmem:[#allocation3 + $0x58] sm:$0xff]
      %v874 = vld [vmem:[#allocation3 + $0x60] sm:$0xff]
      %v875 = vld [vmem:[#allocation3 + $0x68] sm:$0xff]
      %v876 = vld [vmem:[#allocation3 + $0x70] sm:$0xff]
      %v877 = vld [vmem:[#allocation3 + $0x78] sm:$0xff]
      %v878 = vld [vmem:[#allocation3 + $0x80] sm:$0xff]
      %v879 = vld [vmem:[#allocation3 + $0x88] sm:$0xff]
      %v880 = vld [vmem:[#allocation3 + $0x90] sm:$0xff]
      %v881 = vld [vmem:[#allocation3 + $0x98] sm:$0xff]
      %v882 = vld [vmem:[#allocation3 + $0xa0] sm:$0xff]
      %v883 = vld [vmem:[#allocation3 + $0xa8] sm:$0xff]
      %v884 = vld [vmem:[#allocation3 + $0xb0] sm:$0xff]
      %v885 = vld [vmem:[#allocation3 + $0xb8] sm:$0xff]
      %v886 = vld [vmem:[#allocation3 + $0xc0] sm:$0xff]
      %v887 = vld [vmem:[#allocation3 + $0xc8] sm:$0xff]
      %v888 = vld [vmem:[#allocation3 + $0xd0] sm:$0xff]
      %v889 = vld [vmem:[#allocation3 + $0xd8] sm:$0xff]
      %v890 = vld [vmem:[#allocation3 + $0xe0] sm:$0xff]
      %v891 = vld [vmem:[#allocation3 + $0xe8] sm:$0xff]
      %v892 = vld [vmem:[#allocation3 + $0xf0] sm:$0xff]
      %v893 = vld [vmem:[#allocation3 + $0xf8] sm:$0xff]
      %s894 = scalar_lea.vmem %s3, 2
      %v895 = vld [vmem:[%s894] sm:$0x3]
      %v897 = vsel %vm334, %v846, 0
      %v900 = vsel %vm334, %v847, 0
      %v903 = vsel %vm334, %v848, 0
      %v906 = vsel %vm334, %v849, 0
      %v909 = vsel %vm334, %v850, 0
      %v912 = vsel %vm334, %v851, 0
      %v915 = vsel %vm334, %v852, 0
      %v918 = vsel %vm334, %v853, 0
      %v921 = vsel %vm334, %v854, 0
      %v924 = vsel %vm334, %v855, 0
      %v927 = vsel %vm334, %v856, 0
      %v930 = vsel %vm334, %v857, 0
      %v933 = vsel %vm334, %v858, 0
      %v936 = vsel %vm334, %v859, 0
      %v939 = vsel %vm334, %v860, 0
      %v942 = vsel %vm334, %v861, 0
      %v945 = vsel %vm585, %v895, 0
      %947 = vmatprep.subr.bf16.mxu0 0
      %948 = vmatpush1.bf16.msra.mxu0 %v945
      %949 = vmatprep.subr.bf16.mxu0 0
      %950 = vmatpush1.bf16.msra.mxu0 0
      %951 = vmatprep.subr.bf16.mxu0 0
      %952 = vmatpush1.bf16.msra.mxu0 0
      %953 = vmatprep.subr.bf16.mxu0 0
      %954 = vmatpush1.bf16.msra.mxu0 0
      %955 = vmatprep.subr.bf16.mxu0 0
      %956 = vmatpush1.bf16.msra.mxu0 0
      %957 = vmatprep.subr.bf16.mxu0 0
      %958 = vmatpush1.bf16.msra.mxu0 0
      %959 = vmatprep.subr.bf16.mxu0 0
      %960 = vmatpush1.bf16.msra.mxu0 0
      %961 = vmatprep.subr.bf16.mxu0 0
      %962 = vmatpush1.bf16.msra.mxu0 0
      %963 = vmatprep.subr.bf16.mxu0 0
      %964 = vmatpush1.bf16.msra.mxu0 0
      %965 = vmatprep.subr.bf16.mxu0 0
      %966 = vmatpush1.bf16.msra.mxu0 0
      %967 = vmatprep.subr.bf16.mxu0 0
      %968 = vmatpush1.bf16.msra.mxu0 0
      %969 = vmatprep.subr.bf16.mxu0 0
      %970 = vmatpush1.bf16.msra.mxu0 0
      %971 = vmatprep.subr.bf16.mxu0 0
      %972 = vmatpush1.bf16.msra.mxu0 0
      %973 = vmatprep.subr.bf16.mxu0 0
      %974 = vmatpush1.bf16.msra.mxu0 0
      %975 = vmatprep.subr.bf16.mxu0 0
      %976 = vmatpush1.bf16.msra.mxu0 0
      %977 = vmatprep.subr.bf16.mxu0 0
      %978 = vmatpush1.bf16.msra.mxu0 0
      %979 = vmatprep.mubr.bf16.mxu0 0
      %980 = vmatmul.mubr.bf16.gmra.mrb[0].mxu0 %v897
      %v981 = vpop.f32.mrb[0].mxu0
      %v982 = vadd.f32 0.0, %v981
      %v983 = vpop.f32.mrb[0].mxu0
      %v984 = vpop.f32.mrb[0].mxu0
      %v985 = vadd.f32 0.0, %v984
      %v986 = vpop.f32.mrb[0].mxu0
      %987 = vmatprep.mubr.bf16.mxu0 0
      %988 = vmatmul.mubr.bf16.gmra.mrb[0].mxu0 %v900
      %v989 = vpop.f32.mrb[0].mxu0
      %v990 = vadd.f32 0.0, %v989
      %v991 = vpop.f32.mrb[0].mxu0
      %v992 = vpop.f32.mrb[0].mxu0
      %v993 = vadd.f32 0.0, %v992
      %v994 = vpop.f32.mrb[0].mxu0
      %995 = vmatprep.mubr.bf16.mxu0 0
      %996 = vmatmul.mubr.bf16.gmra.mrb[0].mxu0 %v903
      %v997 = vpop.f32.mrb[0].mxu0
      %v998 = vadd.f32 0.0, %v997
      %v999 = vpop.f32.mrb[0].mxu0
      %v1000 = vpop.f32.mrb[0].mxu0
      %v1001 = vadd.f32 0.0, %v1000
      %v1002 = vpop.f32.mrb[0].mxu0
      %1003 = vmatprep.mubr.bf16.mxu0 0
      %1004 = vmatmul.mubr.bf16.gmra.mrb[0].mxu0 %v906
      %v1005 = vpop.f32.mrb[0].mxu0
      %v1006 = vadd.f32 0.0, %v1005
      %v1007 = vpop.f32.mrb[0].mxu0
      %v1008 = vpop.f32.mrb[0].mxu0
      %v1009 = vadd.f32 0.0, %v1008
      %v1010 = vpop.f32.mrb[0].mxu0
      %1011 = vmatprep.mubr.bf16.mxu0 0
      %1012 = vmatmul.mubr.bf16.gmra.mrb[0].mxu0 %v909
      %v1013 = vpop.f32.mrb[0].mxu0
      %v1014 = vadd.f32 0.0, %v1013
      %v1015 = vpop.f32.mrb[0].mxu0
      %v1016 = vpop.f32.mrb[0].mxu0
      %v1017 = vadd.f32 0.0, %v1016
      %v1018 = vpop.f32.mrb[0].mxu0
      %1019 = vmatprep.mubr.bf16.mxu0 0
      %1020 = vmatmul.mubr.bf16.gmra.mrb[0].mxu0 %v912
      %v1021 = vpop.f32.mrb[0].mxu0
      %v1022 = vadd.f32 0.0, %v1021
      %v1023 = vpop.f32.mrb[0].mxu0
      %v1024 = vpop.f32.mrb[0].mxu0
      %v1025 = vadd.f32 0.0, %v1024
      %v1026 = vpop.f32.mrb[0].mxu0
      %1027 = vmatprep.mubr.bf16.mxu0 0
      %1028 = vmatmul.mubr.bf16.gmra.mrb[0].mxu0 %v915
      %v1029 = vpop.f32.mrb[0].mxu0
      %v1030 = vadd.f32 0.0, %v1029
      %v1031 = vpop.f32.mrb[0].mxu0
      %v1032 = vpop.f32.mrb[0].mxu0
      %v1033 = vadd.f32 0.0, %v1032
      %v1034 = vpop.f32.mrb[0].mxu0
      %1035 = vmatprep.mubr.bf16.mxu0 0
      %1036 = vmatmul.mubr.bf16.gmra.mrb[0].mxu0 %v918
      %v1037 = vpop.f32.mrb[0].mxu0
      %v1038 = vadd.f32 0.0, %v1037
      %v1039 = vpop.f32.mrb[0].mxu0
      %v1040 = vpop.f32.mrb[0].mxu0
      %v1041 = vadd.f32 0.0, %v1040
      %v1042 = vpop.f32.mrb[0].mxu0
      %1043 = vmatprep.mubr.bf16.mxu0 0
      %1044 = vmatmul.mubr.bf16.gmra.mrb[0].mxu0 %v921
      %v1045 = vpop.f32.mrb[0].mxu0
      %v1046 = vadd.f32 0.0, %v1045
      %v1047 = vpop.f32.mrb[0].mxu0
      %v1048 = vpop.f32.mrb[0].mxu0
      %v1049 = vadd.f32 0.0, %v1048
      %v1050 = vpop.f32.mrb[0].mxu0
      %1051 = vmatprep.mubr.bf16.mxu0 0
      %1052 = vmatmul.mubr.bf16.gmra.mrb[0].mxu0 %v924
      %v1053 = vpop.f32.mrb[0].mxu0
      %v1054 = vadd.f32 0.0, %v1053
      %v1055 = vpop.f32.mrb[0].mxu0
      %v1056 = vpop.f32.mrb[0].mxu0
      %v1057 = vadd.f32 0.0, %v1056
      %v1058 = vpop.f32.mrb[0].mxu0
      %1059 = vmatprep.mubr.bf16.mxu0 0
      %1060 = vmatmul.mubr.bf16.gmra.mrb[0].mxu0 %v927
      %v1061 = vpop.f32.mrb[0].mxu0
      %v1062 = vadd.f32 0.0, %v1061
      %v1063 = vpop.f32.mrb[0].mxu0
      %v1064 = vpop.f32.mrb[0].mxu0
      %v1065 = vadd.f32 0.0, %v1064
      %v1066 = vpop.f32.mrb[0].mxu0
      %1067 = vmatprep.mubr.bf16.mxu0 0
      %1068 = vmatmul.mubr.bf16.gmra.mrb[0].mxu0 %v930
      %v1069 = vpop.f32.mrb[0].mxu0
      %v1070 = vadd.f32 0.0, %v1069
      %v1071 = vpop.f32.mrb[0].mxu0
      %v1072 = vpop.f32.mrb[0].mxu0
      %v1073 = vadd.f32 0.0, %v1072
      %v1074 = vpop.f32.mrb[0].mxu0
      %1075 = vmatprep.mubr.bf16.mxu0 0
      %1076 = vmatmul.mubr.bf16.gmra.mrb[0].mxu0 %v933
      %v1077 = vpop.f32.mrb[0].mxu0
      %v1078 = vadd.f32 0.0, %v1077
      %v1079 = vpop.f32.mrb[0].mxu0
      %v1080 = vpop.f32.mrb[0].mxu0
      %v1081 = vadd.f32 0.0, %v1080
      %v1082 = vpop.f32.mrb[0].mxu0
      %1083 = vmatprep.mubr.bf16.mxu0 0
      %1084 = vmatmul.mubr.bf16.gmra.mrb[0].mxu0 %v936
      %v1085 = vpop.f32.mrb[0].mxu0
      %v1086 = vadd.f32 0.0, %v1085
      %v1087 = vpop.f32.mrb[0].mxu0
      %v1088 = vpop.f32.mrb[0].mxu0
      %v1089 = vadd.f32 0.0, %v1088
      %v1090 = vpop.f32.mrb[0].mxu0
      %1091 = vmatprep.mubr.bf16.mxu0 0
      %1092 = vmatmul.mubr.bf16.gmra.mrb[0].mxu0 %v939
      %v1093 = vpop.f32.mrb[0].mxu0
      %v1094 = vadd.f32 0.0, %v1093
      %v1095 = vpop.f32.mrb[0].mxu0
      %v1096 = vpop.f32.mrb[0].mxu0
      %v1097 = vadd.f32 0.0, %v1096
      %v1098 = vpop.f32.mrb[0].mxu0
      %1099 = vmatprep.mubr.bf16.mxu0 0
      %1100 = vmatmul.mubr.bf16.gmra.mrb[0].mxu0 %v942
      %v1101 = vpop.f32.mrb[0].mxu0
      %v1102 = vadd.f32 0.0, %v1101
      %v1103 = vpop.f32.mrb[0].mxu0
      %v1104 = vpop.f32.mrb[0].mxu0
      %v1105 = vadd.f32 0.0, %v1104
      %v1106 = vpop.f32.mrb[0].mxu0
      %1107 = vdwg.mxu0
      %v1108 = vadd.f32 %v862, %v982
      %v1109 = vadd.f32 %v863, %v985
      %v1110 = vadd.f32 %v864, %v990
      %v1111 = vadd.f32 %v865, %v993
      %v1112 = vadd.f32 %v866, %v998
      %v1113 = vadd.f32 %v867, %v1001
      %v1114 = vadd.f32 %v868, %v1006
      %v1115 = vadd.f32 %v869, %v1009
      %v1116 = vadd.f32 %v870, %v1014
      %v1117 = vadd.f32 %v871, %v1017
      %v1118 = vadd.f32 %v872, %v1022
      %v1119 = vadd.f32 %v873, %v1025
      %v1120 = vadd.f32 %v874, %v1030
      %v1121 = vadd.f32 %v875, %v1033
      %v1122 = vadd.f32 %v876, %v1038
      %v1123 = vadd.f32 %v877, %v1041
      %v1124 = vadd.f32 %v878, %v1046
      %v1125 = vadd.f32 %v879, %v1049
      %v1126 = vadd.f32 %v880, %v1054
      %v1127 = vadd.f32 %v881, %v1057
      %v1128 = vadd.f32 %v882, %v1062
      %v1129 = vadd.f32 %v883, %v1065
      %v1130 = vadd.f32 %v884, %v1070
      %v1131 = vadd.f32 %v885, %v1073
      %v1132 = vadd.f32 %v886, %v1078
      %v1133 = vadd.f32 %v887, %v1081
      %v1134 = vadd.f32 %v888, %v1086
      %v1135 = vadd.f32 %v889, %v1089
      %v1136 = vadd.f32 %v890, %v1094
      %v1137 = vadd.f32 %v891, %v1097
      %v1138 = vadd.f32 %v892, %v1102
      %v1139 = vadd.f32 %v893, %v1105
      %1140 = vst.msk [vmem:[#allocation3] sm:$0xff] %vm423, %v1108
      %1141 = vst.msk [vmem:[#allocation3 + $0x8] sm:$0xff] %vm423, %v1109
      %1142 = vst.msk [vmem:[#allocation3 + $0x10] sm:$0xff] %vm423, %v1110
      %1143 = vst.msk [vmem:[#allocation3 + $0x18] sm:$0xff] %vm423, %v1111
      %1144 = vst.msk [vmem:[#allocation3 + $0x20] sm:$0xff] %vm423, %v1112
      %1145 = vst.msk [vmem:[#allocation3 + $0x28] sm:$0xff] %vm423, %v1113
      %1146 = vst.msk [vmem:[#allocation3 + $0x30] sm:$0xff] %vm423, %v1114
      %1147 = vst.msk [vmem:[#allocation3 + $0x38] sm:$0xff] %vm423, %v1115
      %1148 = vst.msk [vmem:[#allocation3 + $0x40] sm:$0xff] %vm423, %v1116
      %1149 = vst.msk [vmem:[#allocation3 + $0x48] sm:$0xff] %vm423, %v1117
      %1150 = vst.msk [vmem:[#allocation3 + $0x50] sm:$0xff] %vm423, %v1118
      %1151 = vst.msk [vmem:[#allocation3 + $0x58] sm:$0xff] %vm423, %v1119
      %1152 = vst.msk [vmem:[#allocation3 + $0x60] sm:$0xff] %vm423, %v1120
      %1153 = vst.msk [vmem:[#allocation3 + $0x68] sm:$0xff] %vm423, %v1121
      %1154 = vst.msk [vmem:[#allocation3 + $0x70] sm:$0xff] %vm423, %v1122
      %1155 = vst.msk [vmem:[#allocation3 + $0x78] sm:$0xff] %vm423, %v1123
      %1156 = vst.msk [vmem:[#allocation3 + $0x80] sm:$0xff] %vm423, %v1124
      %1157 = vst.msk [vmem:[#allocation3 + $0x88] sm:$0xff] %vm423, %v1125
      %1158 = vst.msk [vmem:[#allocation3 + $0x90] sm:$0xff] %vm423, %v1126
      %1159 = vst.msk [vmem:[#allocation3 + $0x98] sm:$0xff] %vm423, %v1127
      %1160 = vst.msk [vmem:[#allocation3 + $0xa0] sm:$0xff] %vm423, %v1128
      %1161 = vst.msk [vmem:[#allocation3 + $0xa8] sm:$0xff] %vm423, %v1129
      %1162 = vst.msk [vmem:[#allocation3 + $0xb0] sm:$0xff] %vm423, %v1130
      %1163 = vst.msk [vmem:[#allocation3 + $0xb8] sm:$0xff] %vm423, %v1131
      %1164 = vst.msk [vmem:[#allocation3 + $0xc0] sm:$0xff] %vm423, %v1132
      %1165 = vst.msk [vmem:[#allocation3 + $0xc8] sm:$0xff] %vm423, %v1133
      %1166 = vst.msk [vmem:[#allocation3 + $0xd0] sm:$0xff] %vm423, %v1134
      %1167 = vst.msk [vmem:[#allocation3 + $0xd8] sm:$0xff] %vm423, %v1135
      %1168 = vst.msk [vmem:[#allocation3 + $0xe0] sm:$0xff] %vm423, %v1136
      %1169 = vst.msk [vmem:[#allocation3 + $0xe8] sm:$0xff] %vm423, %v1137
      %1170 = vst.msk [vmem:[#allocation3 + $0xf0] sm:$0xff] %vm423, %v1138
      %1171 = vst.msk [vmem:[#allocation3 + $0xf8] sm:$0xff] %vm423, %v1139
      %v1172 = vld [vmem:[#allocation2 + $0x2] sm:$0xff]
      %v1173 = vld [vmem:[#allocation2 + $0xa] sm:$0xff]
      %v1174 = vld [vmem:[#allocation2 + $0x1a] sm:$0xff]
      %v1175 = vld [vmem:[#allocation2 + $0x22] sm:$0xff]
      %v1176 = vld [vmem:[#allocation2 + $0x32] sm:$0xff]
      %v1177 = vld [vmem:[#allocation2 + $0x3a] sm:$0xff]
      %v1178 = vld [vmem:[#allocation2 + $0x4a] sm:$0xff]
      %v1179 = vld [vmem:[#allocation2 + $0x52] sm:$0xff]
      %v1180 = vld [vmem:[#allocation2 + $0x62] sm:$0xff]
      %v1181 = vld [vmem:[#allocation2 + $0x6a] sm:$0xff]
      %v1182 = vld [vmem:[#allocation2 + $0x7a] sm:$0xff]
      %v1183 = vld [vmem:[#allocation2 + $0x82] sm:$0xff]
      %v1184 = vld [vmem:[#allocation2 + $0x92] sm:$0xff]
      %v1185 = vld [vmem:[#allocation2 + $0x9a] sm:$0xff]
      %v1186 = vld [vmem:[#allocation2 + $0xaa] sm:$0xff]
      %v1187 = vld [vmem:[#allocation2 + $0xb2] sm:$0xff]
      %v1188 = vld [vmem:[#allocation2 + $0xc2] sm:$0xff]
      %v1189 = vld [vmem:[#allocation2 + $0xca] sm:$0xff]
      %v1190 = vld [vmem:[#allocation2 + $0xda] sm:$0xff]
      %v1191 = vld [vmem:[#allocation2 + $0xe2] sm:$0xff]
      %v1192 = vld [vmem:[#allocation2 + $0xf2] sm:$0xff]
      %v1193 = vld [vmem:[#allocation2 + $0xfa] sm:$0xff]
      %v1194 = vld [vmem:[#allocation2 + $0x10a] sm:$0xff]
      %v1195 = vld [vmem:[#allocation2 + $0x112] sm:$0xff]
      %v1196 = vld [vmem:[#allocation2 + $0x122] sm:$0xff]
      %v1197 = vld [vmem:[#allocation2 + $0x12a] sm:$0xff]
      %v1198 = vld [vmem:[#allocation2 + $0x13a] sm:$0xff]
      %v1199 = vld [vmem:[#allocation2 + $0x142] sm:$0xff]
      %v1200 = vld [vmem:[#allocation2 + $0x152] sm:$0xff]
      %v1201 = vld [vmem:[#allocation2 + $0x15a] sm:$0xff]
      %v1202 = vld [vmem:[#allocation2 + $0x16a] sm:$0xff]
      %v1203 = vld [vmem:[#allocation2 + $0x172] sm:$0xff]
      %v1204 = vpack.c.bf16 %v1173, %v1172
      %v1205 = vpack.c.bf16 %v1175, %v1174
      %v1206 = vpack.c.bf16 %v1177, %v1176
      %v1207 = vpack.c.bf16 %v1179, %v1178
      %v1208 = vpack.c.bf16 %v1181, %v1180
      %v1209 = vpack.c.bf16 %v1183, %v1182
      %v1210 = vpack.c.bf16 %v1185, %v1184
      %v1211 = vpack.c.bf16 %v1187, %v1186
      %v1212 = vpack.c.bf16 %v1189, %v1188
      %v1213 = vpack.c.bf16 %v1191, %v1190
      %v1214 = vpack.c.bf16 %v1193, %v1192
      %v1215 = vpack.c.bf16 %v1195, %v1194
      %v1216 = vpack.c.bf16 %v1197, %v1196
      %v1217 = vpack.c.bf16 %v1199, %v1198
      %v1218 = vpack.c.bf16 %v1201, %v1200
      %v1219 = vpack.c.bf16 %v1203, %v1202
      %v1220 = vld [vmem:[#allocation3] sm:$0xff]
      %v1221 = vld [vmem:[#allocation3 + $0x8] sm:$0xff]
      %v1222 = vld [vmem:[#allocation3 + $0x10] sm:$0xff]
      %v1223 = vld [vmem:[#allocation3 + $0x18] sm:$0xff]
      %v1224 = vld [vmem:[#allocation3 + $0x20] sm:$0xff]
      %v1225 = vld [vmem:[#allocation3 + $0x28] sm:$0xff]
      %v1226 = vld [vmem:[#allocation3 + $0x30] sm:$0xff]
      %v1227 = vld [vmem:[#allocation3 + $0x38] sm:$0xff]
      %v1228 = vld [vmem:[#allocation3 + $0x40] sm:$0xff]
      %v1229 = vld [vmem:[#allocation3 + $0x48] sm:$0xff]
      %v1230 = vld [vmem:[#allocation3 + $0x50] sm:$0xff]
      %v1231 = vld [vmem:[#allocation3 + $0x58] sm:$0xff]
      %v1232 = vld [vmem:[#allocation3 + $0x60] sm:$0xff]
      %v1233 = vld [vmem:[#allocation3 + $0x68] sm:$0xff]
      %v1234 = vld [vmem:[#allocation3 + $0x70] sm:$0xff]
      %v1235 = vld [vmem:[#allocation3 + $0x78] sm:$0xff]
      %v1236 = vld [vmem:[#allocation3 + $0x80] sm:$0xff]
      %v1237 = vld [vmem:[#allocation3 + $0x88] sm:$0xff]
      %v1238 = vld [vmem:[#allocation3 + $0x90] sm:$0xff]
      %v1239 = vld [vmem:[#allocation3 + $0x98] sm:$0xff]
      %v1240 = vld [vmem:[#allocation3 + $0xa0] sm:$0xff]
      %v1241 = vld [vmem:[#allocation3 + $0xa8] sm:$0xff]
      %v1242 = vld [vmem:[#allocation3 + $0xb0] sm:$0xff]
      %v1243 = vld [vmem:[#allocation3 + $0xb8] sm:$0xff]
      %v1244 = vld [vmem:[#allocation3 + $0xc0] sm:$0xff]
      %v1245 = vld [vmem:[#allocation3 + $0xc8] sm:$0xff]
      %v1246 = vld [vmem:[#allocation3 + $0xd0] sm:$0xff]
      %v1247 = vld [vmem:[#allocation3 + $0xd8] sm:$0xff]
      %v1248 = vld [vmem:[#allocation3 + $0xe0] sm:$0xff]
      %v1249 = vld [vmem:[#allocation3 + $0xe8] sm:$0xff]
      %v1250 = vld [vmem:[#allocation3 + $0xf0] sm:$0xff]
      %v1251 = vld [vmem:[#allocation3 + $0xf8] sm:$0xff]
      %s1252 = scalar_lea.vmem %s3, 4
      %v1253 = vld [vmem:[%s1252] sm:$0x3]
      %v1255 = vsel %vm334, %v1204, 0
      %v1258 = vsel %vm334, %v1205, 0
      %v1261 = vsel %vm334, %v1206, 0
      %v1264 = vsel %vm334, %v1207, 0
      %v1267 = vsel %vm334, %v1208, 0
      %v1270 = vsel %vm334, %v1209, 0
      %v1273 = vsel %vm334, %v1210, 0
      %v1276 = vsel %vm334, %v1211, 0
      %v1279 = vsel %vm334, %v1212, 0
      %v1282 = vsel %vm334, %v1213, 0
      %v1285 = vsel %vm334, %v1214, 0
      %v1288 = vsel %vm334, %v1215, 0
      %v1291 = vsel %vm334, %v1216, 0
      %v1294 = vsel %vm334, %v1217, 0
      %v1297 = vsel %vm334, %v1218, 0
      %v1300 = vsel %vm334, %v1219, 0
      %v1303 = vsel %vm585, %v1253, 0
      %1305 = vmatprep.subr.bf16.mxu0 0
      %1306 = vmatpush1.bf16.msra.mxu0 %v1303
      %1307 = vmatprep.subr.bf16.mxu0 0
      %1308 = vmatpush1.bf16.msra.mxu0 0
      %1309 = vmatprep.subr.bf16.mxu0 0
      %1310 = vmatpush1.bf16.msra.mxu0 0
      %1311 = vmatprep.subr.bf16.mxu0 0
      %1312 = vmatpush1.bf16.msra.mxu0 0
      %1313 = vmatprep.subr.bf16.mxu0 0
      %1314 = vmatpush1.bf16.msra.mxu0 0
      %1315 = vmatprep.subr.bf16.mxu0 0
      %1316 = vmatpush1.bf16.msra.mxu0 0
      %1317 = vmatprep.subr.bf16.mxu0 0
      %1318 = vmatpush1.bf16.msra.mxu0 0
      %1319 = vmatprep.subr.bf16.mxu0 0
      %1320 = vmatpush1.bf16.msra.mxu0 0
      %1321 = vmatprep.subr.bf16.mxu0 0
      %1322 = vmatpush1.bf16.msra.mxu0 0
      %1323 = vmatprep.subr.bf16.mxu0 0
      %1324 = vmatpush1.bf16.msra.mxu0 0
      %1325 = vmatprep.subr.bf16.mxu0 0
      %1326 = vmatpush1.bf16.msra.mxu0 0
      %1327 = vmatprep.subr.bf16.mxu0 0
      %1328 = vmatpush1.bf16.msra.mxu0 0
      %1329 = vmatprep.subr.bf16.mxu0 0
      %1330 = vmatpush1.bf16.msra.mxu0 0
      %1331 = vmatprep.subr.bf16.mxu0 0
      %1332 = vmatpush1.bf16.msra.mxu0 0
      %1333 = vmatprep.subr.bf16.mxu0 0
      %1334 = vmatpush1.bf16.msra.mxu0 0
      %1335 = vmatprep.subr.bf16.mxu0 0
      %1336 = vmatpush1.bf16.msra.mxu0 0
      %1337 = vmatprep.mubr.bf16.mxu0 0
      %1338 = vmatmul.mubr.bf16.gmra.mrb[0].mxu0 %v1255
      %v1339 = vpop.f32.mrb[0].mxu0
      %v1340 = vadd.f32 0.0, %v1339
      %v1341 = vpop.f32.mrb[0].mxu0
      %v1342 = vpop.f32.mrb[0].mxu0
      %v1343 = vadd.f32 0.0, %v1342
      %v1344 = vpop.f32.mrb[0].mxu0
      %1345 = vmatprep.mubr.bf16.mxu0 0
      %1346 = vmatmul.mubr.bf16.gmra.mrb[0].mxu0 %v1258
      %v1347 = vpop.f32.mrb[0].mxu0
      %v1348 = vadd.f32 0.0, %v1347
      %v1349 = vpop.f32.mrb[0].mxu0
      %v1350 = vpop.f32.mrb[0].mxu0
      %v1351 = vadd.f32 0.0, %v1350
      %v1352 = vpop.f32.mrb[0].mxu0
      %1353 = vmatprep.mubr.bf16.mxu0 0
      %1354 = vmatmul.mubr.bf16.gmra.mrb[0].mxu0 %v1261
      %v1355 = vpop.f32.mrb[0].mxu0
      %v1356 = vadd.f32 0.0, %v1355
      %v1357 = vpop.f32.mrb[0].mxu0
      %v1358 = vpop.f32.mrb[0].mxu0
      %v1359 = vadd.f32 0.0, %v1358
      %v1360 = vpop.f32.mrb[0].mxu0
      %1361 = vmatprep.mubr.bf16.mxu0 0
      %1362 = vmatmul.mubr.bf16.gmra.mrb[0].mxu0 %v1264
      %v1363 = vpop.f32.mrb[0].mxu0
      %v1364 = vadd.f32 0.0, %v1363
      %v1365 = vpop.f32.mrb[0].mxu0
      %v1366 = vpop.f32.mrb[0].mxu0
      %v1367 = vadd.f32 0.0, %v1366
      %v1368 = vpop.f32.mrb[0].mxu0
      %1369 = vmatprep.mubr.bf16.mxu0 0
      %1370 = vmatmul.mubr.bf16.gmra.mrb[0].mxu0 %v1267
      %v1371 = vpop.f32.mrb[0].mxu0
      %v1372 = vadd.f32 0.0, %v1371
      %v1373 = vpop.f32.mrb[0].mxu0
      %v1374 = vpop.f32.mrb[0].mxu0
      %v1375 = vadd.f32 0.0, %v1374
      %v1376 = vpop.f32.mrb[0].mxu0
      %1377 = vmatprep.mubr.bf16.mxu0 0
      %1378 = vmatmul.mubr.bf16.gmra.mrb[0].mxu0 %v1270
      %v1379 = vpop.f32.mrb[0].mxu0
      %v1380 = vadd.f32 0.0, %v1379
      %v1381 = vpop.f32.mrb[0].mxu0
      %v1382 = vpop.f32.mrb[0].mxu0
      %v1383 = vadd.f32 0.0, %v1382
      %v1384 = vpop.f32.mrb[0].mxu0
      %1385 = vmatprep.mubr.bf16.mxu0 0
      %1386 = vmatmul.mubr.bf16.gmra.mrb[0].mxu0 %v1273
      %v1387 = vpop.f32.mrb[0].mxu0
      %v1388 = vadd.f32 0.0, %v1387
      %v1389 = vpop.f32.mrb[0].mxu0
      %v1390 = vpop.f32.mrb[0].mxu0
      %v1391 = vadd.f32 0.0, %v1390
      %v1392 = vpop.f32.mrb[0].mxu0
      %1393 = vmatprep.mubr.bf16.mxu0 0
      %1394 = vmatmul.mubr.bf16.gmra.mrb[0].mxu0 %v1276
      %v1395 = vpop.f32.mrb[0].mxu0
      %v1396 = vadd.f32 0.0, %v1395
      %v1397 = vpop.f32.mrb[0].mxu0
      %v1398 = vpop.f32.mrb[0].mxu0
      %v1399 = vadd.f32 0.0, %v1398
      %v1400 = vpop.f32.mrb[0].mxu0
      %1401 = vmatprep.mubr.bf16.mxu0 0
      %1402 = vmatmul.mubr.bf16.gmra.mrb[0].mxu0 %v1279
      %v1403 = vpop.f32.mrb[0].mxu0
      %v1404 = vadd.f32 0.0, %v1403
      %v1405 = vpop.f32.mrb[0].mxu0
      %v1406 = vpop.f32.mrb[0].mxu0
      %v1407 = vadd.f32 0.0, %v1406
      %v1408 = vpop.f32.mrb[0].mxu0
      %1409 = vmatprep.mubr.bf16.mxu0 0
      %1410 = vmatmul.mubr.bf16.gmra.mrb[0].mxu0 %v1282
      %v1411 = vpop.f32.mrb[0].mxu0
      %v1412 = vadd.f32 0.0, %v1411
      %v1413 = vpop.f32.mrb[0].mxu0
      %v1414 = vpop.f32.mrb[0].mxu0
      %v1415 = vadd.f32 0.0, %v1414
      %v1416 = vpop.f32.mrb[0].mxu0
      %1417 = vmatprep.mubr.bf16.mxu0 0
      %1418 = vmatmul.mubr.bf16.gmra.mrb[0].mxu0 %v1285
      %v1419 = vpop.f32.mrb[0].mxu0
      %v1420 = vadd.f32 0.0, %v1419
      %v1421 = vpop.f32.mrb[0].mxu0
      %v1422 = vpop.f32.mrb[0].mxu0
      %v1423 = vadd.f32 0.0, %v1422
      %v1424 = vpop.f32.mrb[0].mxu0
      %1425 = vmatprep.mubr.bf16.mxu0 0
      %1426 = vmatmul.mubr.bf16.gmra.mrb[0].mxu0 %v1288
      %v1427 = vpop.f32.mrb[0].mxu0
      %v1428 = vadd.f32 0.0, %v1427
      %v1429 = vpop.f32.mrb[0].mxu0
      %v1430 = vpop.f32.mrb[0].mxu0
      %v1431 = vadd.f32 0.0, %v1430
      %v1432 = vpop.f32.mrb[0].mxu0
      %1433 = vmatprep.mubr.bf16.mxu0 0
      %1434 = vmatmul.mubr.bf16.gmra.mrb[0].mxu0 %v1291
      %v1435 = vpop.f32.mrb[0].mxu0
      %v1436 = vadd.f32 0.0, %v1435
      %v1437 = vpop.f32.mrb[0].mxu0
      %v1438 = vpop.f32.mrb[0].mxu0
      %v1439 = vadd.f32 0.0, %v1438
      %v1440 = vpop.f32.mrb[0].mxu0
      %1441 = vmatprep.mubr.bf16.mxu0 0
      %1442 = vmatmul.mubr.bf16.gmra.mrb[0].mxu0 %v1294
      %v1443 = vpop.f32.mrb[0].mxu0
      %v1444 = vadd.f32 0.0, %v1443
      %v1445 = vpop.f32.mrb[0].mxu0
      %v1446 = vpop.f32.mrb[0].mxu0
      %v1447 = vadd.f32 0.0, %v1446
      %v1448 = vpop.f32.mrb[0].mxu0
      %1449 = vmatprep.mubr.bf16.mxu0 0
      %1450 = vmatmul.mubr.bf16.gmra.mrb[0].mxu0 %v1297
      %v1451 = vpop.f32.mrb[0].mxu0
      %v1452 = vadd.f32 0.0, %v1451
      %v1453 = vpop.f32.mrb[0].mxu0
      %v1454 = vpop.f32.mrb[0].mxu0
      %v1455 = vadd.f32 0.0, %v1454
      %v1456 = vpop.f32.mrb[0].mxu0
      %1457 = vmatprep.mubr.bf16.mxu0 0
      %1458 = vmatmul.mubr.bf16.gmra.mrb[0].mxu0 %v1300
      %v1459 = vpop.f32.mrb[0].mxu0
      %v1460 = vadd.f32 0.0, %v1459
      %v1461 = vpop.f32.mrb[0].mxu0
      %v1462 = vpop.f32.mrb[0].mxu0
      %v1463 = vadd.f32 0.0, %v1462
      %v1464 = vpop.f32.mrb[0].mxu0
      %1465 = vdwg.mxu0
      %v1466 = vadd.f32 %v1220, %v1340
      %v1467 = vadd.f32 %v1221, %v1343
      %v1468 = vadd.f32 %v1222, %v1348
      %v1469 = vadd.f32 %v1223, %v1351
      %v1470 = vadd.f32 %v1224, %v1356
      %v1471 = vadd.f32 %v1225, %v1359
      %v1472 = vadd.f32 %v1226, %v1364
      %v1473 = vadd.f32 %v1227, %v1367
      %v1474 = vadd.f32 %v1228, %v1372
      %v1475 = vadd.f32 %v1229, %v1375
      %v1476 = vadd.f32 %v1230, %v1380
      %v1477 = vadd.f32 %v1231, %v1383
      %v1478 = vadd.f32 %v1232, %v1388
      %v1479 = vadd.f32 %v1233, %v1391
      %v1480 = vadd.f32 %v1234, %v1396
      %v1481 = vadd.f32 %v1235, %v1399
      %v1482 = vadd.f32 %v1236, %v1404
      %v1483 = vadd.f32 %v1237, %v1407
      %v1484 = vadd.f32 %v1238, %v1412
      %v1485 = vadd.f32 %v1239, %v1415
      %v1486 = vadd.f32 %v1240, %v1420
      %v1487 = vadd.f32 %v1241, %v1423
      %v1488 = vadd.f32 %v1242, %v1428
      %v1489 = vadd.f32 %v1243, %v1431
      %v1490 = vadd.f32 %v1244, %v1436
      %v1491 = vadd.f32 %v1245, %v1439
      %v1492 = vadd.f32 %v1246, %v1444
      %v1493 = vadd.f32 %v1247, %v1447
      %v1494 = vadd.f32 %v1248, %v1452
      %v1495 = vadd.f32 %v1249, %v1455
      %v1496 = vadd.f32 %v1250, %v1460
      %v1497 = vadd.f32 %v1251, %v1463
      %1498 = vst.msk [vmem:[#allocation3] sm:$0xff] %vm423, %v1466
      %1499 = vst.msk [vmem:[#allocation3 + $0x8] sm:$0xff] %vm423, %v1467
      %1500 = vst.msk [vmem:[#allocation3 + $0x10] sm:$0xff] %vm423, %v1468
      %1501 = vst.msk [vmem:[#allocation3 + $0x18] sm:$0xff] %vm423, %v1469
      %1502 = vst.msk [vmem:[#allocation3 + $0x20] sm:$0xff] %vm423, %v1470
      %1503 = vst.msk [vmem:[#allocation3 + $0x28] sm:$0xff] %vm423, %v1471
      %1504 = vst.msk [vmem:[#allocation3 + $0x30] sm:$0xff] %vm423, %v1472
      %1505 = vst.msk [vmem:[#allocation3 + $0x38] sm:$0xff] %vm423, %v1473
      %1506 = vst.msk [vmem:[#allocation3 + $0x40] sm:$0xff] %vm423, %v1474
      %1507 = vst.msk [vmem:[#allocation3 + $0x48] sm:$0xff] %vm423, %v1475
      %1508 = vst.msk [vmem:[#allocation3 + $0x50] sm:$0xff] %vm423, %v1476
      %1509 = vst.msk [vmem:[#allocation3 + $0x58] sm:$0xff] %vm423, %v1477
      %1510 = vst.msk [vmem:[#allocation3 + $0x60] sm:$0xff] %vm423, %v1478
      %1511 = vst.msk [vmem:[#allocation3 + $0x68] sm:$0xff] %vm423, %v1479
      %1512 = vst.msk [vmem:[#allocation3 + $0x70] sm:$0xff] %vm423, %v1480
      %1513 = vst.msk [vmem:[#allocation3 + $0x78] sm:$0xff] %vm423, %v1481
      %1514 = vst.msk [vmem:[#allocation3 + $0x80] sm:$0xff] %vm423, %v1482
      %1515 = vst.msk [vmem:[#allocation3 + $0x88] sm:$0xff] %vm423, %v1483
      %1516 = vst.msk [vmem:[#allocation3 + $0x90] sm:$0xff] %vm423, %v1484
      %1517 = vst.msk [vmem:[#allocation3 + $0x98] sm:$0xff] %vm423, %v1485
      %1518 = vst.msk [vmem:[#allocation3 + $0xa0] sm:$0xff] %vm423, %v1486
      %1519 = vst.msk [vmem:[#allocation3 + $0xa8] sm:$0xff] %vm423, %v1487
      %1520 = vst.msk [vmem:[#allocation3 + $0xb0] sm:$0xff] %vm423, %v1488
      %1521 = vst.msk [vmem:[#allocation3 + $0xb8] sm:$0xff] %vm423, %v1489
      %1522 = vst.msk [vmem:[#allocation3 + $0xc0] sm:$0xff] %vm423, %v1490
      %1523 = vst.msk [vmem:[#allocation3 + $0xc8] sm:$0xff] %vm423, %v1491
      %1524 = vst.msk [vmem:[#allocation3 + $0xd0] sm:$0xff] %vm423, %v1492
      %1525 = vst.msk [vmem:[#allocation3 + $0xd8] sm:$0xff] %vm423, %v1493
      %1526 = vst.msk [vmem:[#allocation3 + $0xe0] sm:$0xff] %vm423, %v1494
      %1527 = vst.msk [vmem:[#allocation3 + $0xe8] sm:$0xff] %vm423, %v1495
      %1528 = vst.msk [vmem:[#allocation3 + $0xf0] sm:$0xff] %vm423, %v1496
      %1529 = vst.msk [vmem:[#allocation3 + $0xf8] sm:$0xff] %vm423, %v1497
      %v1530 = vld [vmem:[%s390] sm:$0xff]
      %v1531 = vld [vmem:[%s390 + $0x8] sm:$0xff]
      %v1532 = vld [vmem:[%s390 + $0x18] sm:$0xff]
      %v1533 = vld [vmem:[%s390 + $0x20] sm:$0xff]
      %v1534 = vld [vmem:[%s390 + $0x30] sm:$0xff]
      %v1535 = vld [vmem:[%s390 + $0x38] sm:$0xff]
      %v1536 = vld [vmem:[%s390 + $0x48] sm:$0xff]
      %v1537 = vld [vmem:[%s390 + $0x50] sm:$0xff]
      %v1538 = vld [vmem:[%s390 + $0x60] sm:$0xff]
      %v1539 = vld [vmem:[%s390 + $0x68] sm:$0xff]
      %v1540 = vld [vmem:[%s390 + $0x78] sm:$0xff]
      %v1541 = vld [vmem:[%s390 + $0x80] sm:$0xff]
      %v1542 = vld [vmem:[%s390 + $0x90] sm:$0xff]
      %v1543 = vld [vmem:[%s390 + $0x98] sm:$0xff]
      %v1544 = vld [vmem:[%s390 + $0xa8] sm:$0xff]
      %v1545 = vld [vmem:[%s390 + $0xb0] sm:$0xff]
      %v1546 = vld [vmem:[%s390 + $0xc0] sm:$0xff]
      %v1547 = vld [vmem:[%s390 + $0xc8] sm:$0xff]
      %v1548 = vld [vmem:[%s390 + $0xd8] sm:$0xff]
      %v1549 = vld [vmem:[%s390 + $0xe0] sm:$0xff]
      %v1550 = vld [vmem:[%s390 + $0xf0] sm:$0xff]
      %v1551 = vld [vmem:[%s390 + $0xf8] sm:$0xff]
      %v1552 = vld [vmem:[%s390 + $0x108] sm:$0xff]
      %v1553 = vld [vmem:[%s390 + $0x110] sm:$0xff]
      %v1554 = vld [vmem:[%s390 + $0x120] sm:$0xff]
      %v1555 = vld [vmem:[%s390 + $0x128] sm:$0xff]
      %v1556 = vld [vmem:[%s390 + $0x138] sm:$0xff]
      %v1557 = vld [vmem:[%s390 + $0x140] sm:$0xff]
      %v1558 = vld [vmem:[%s390 + $0x150] sm:$0xff]
      %v1559 = vld [vmem:[%s390 + $0x158] sm:$0xff]
      %v1560 = vld [vmem:[%s390 + $0x168] sm:$0xff]
      %v1561 = vld [vmem:[%s390 + $0x170] sm:$0xff]
      %v1562 = vpack.c.bf16 %v1531, %v1530
      %v1563 = vpack.c.bf16 %v1533, %v1532
      %v1564 = vpack.c.bf16 %v1535, %v1534
      %v1565 = vpack.c.bf16 %v1537, %v1536
      %v1566 = vpack.c.bf16 %v1539, %v1538
      %v1567 = vpack.c.bf16 %v1541, %v1540
      %v1568 = vpack.c.bf16 %v1543, %v1542
      %v1569 = vpack.c.bf16 %v1545, %v1544
      %v1570 = vpack.c.bf16 %v1547, %v1546
      %v1571 = vpack.c.bf16 %v1549, %v1548
      %v1572 = vpack.c.bf16 %v1551, %v1550
      %v1573 = vpack.c.bf16 %v1553, %v1552
      %v1574 = vpack.c.bf16 %v1555, %v1554
      %v1575 = vpack.c.bf16 %v1557, %v1556
      %v1576 = vpack.c.bf16 %v1559, %v1558
      %v1577 = vpack.c.bf16 %v1561, %v1560
      %v1578 = vld [vmem:[#allocation3] sm:$0xff]
      %v1579 = vld [vmem:[#allocation3 + $0x8] sm:$0xff]
      %v1580 = vld [vmem:[#allocation3 + $0x10] sm:$0xff]
      %v1581 = vld [vmem:[#allocation3 + $0x18] sm:$0xff]
      %v1582 = vld [vmem:[#allocation3 + $0x20] sm:$0xff]
      %v1583 = vld [vmem:[#allocation3 + $0x28] sm:$0xff]
      %v1584 = vld [vmem:[#allocation3 + $0x30] sm:$0xff]
      %v1585 = vld [vmem:[#allocation3 + $0x38] sm:$0xff]
      %v1586 = vld [vmem:[#allocation3 + $0x40] sm:$0xff]
      %v1587 = vld [vmem:[#allocation3 + $0x48] sm:$0xff]
      %v1588 = vld [vmem:[#allocation3 + $0x50] sm:$0xff]
      %v1589 = vld [vmem:[#allocation3 + $0x58] sm:$0xff]
      %v1590 = vld [vmem:[#allocation3 + $0x60] sm:$0xff]
      %v1591 = vld [vmem:[#allocation3 + $0x68] sm:$0xff]
      %v1592 = vld [vmem:[#allocation3 + $0x70] sm:$0xff]
      %v1593 = vld [vmem:[#allocation3 + $0x78] sm:$0xff]
      %v1594 = vld [vmem:[#allocation3 + $0x80] sm:$0xff]
      %v1595 = vld [vmem:[#allocation3 + $0x88] sm:$0xff]
      %v1596 = vld [vmem:[#allocation3 + $0x90] sm:$0xff]
      %v1597 = vld [vmem:[#allocation3 + $0x98] sm:$0xff]
      %v1598 = vld [vmem:[#allocation3 + $0xa0] sm:$0xff]
      %v1599 = vld [vmem:[#allocation3 + $0xa8] sm:$0xff]
      %v1600 = vld [vmem:[#allocation3 + $0xb0] sm:$0xff]
      %v1601 = vld [vmem:[#allocation3 + $0xb8] sm:$0xff]
      %v1602 = vld [vmem:[#allocation3 + $0xc0] sm:$0xff]
      %v1603 = vld [vmem:[#allocation3 + $0xc8] sm:$0xff]
      %v1604 = vld [vmem:[#allocation3 + $0xd0] sm:$0xff]
      %v1605 = vld [vmem:[#allocation3 + $0xd8] sm:$0xff]
      %v1606 = vld [vmem:[#allocation3 + $0xe0] sm:$0xff]
      %v1607 = vld [vmem:[#allocation3 + $0xe8] sm:$0xff]
      %v1608 = vld [vmem:[#allocation3 + $0xf0] sm:$0xff]
      %v1609 = vld [vmem:[#allocation3 + $0xf8] sm:$0xff]
      %s1610 = scalar_lea.vmem %s3, 6
      %v1611 = vld [vmem:[%s1610] sm:$0x3]
      %v1613 = vsel %vm334, %v1562, 0
      %v1616 = vsel %vm334, %v1563, 0
      %v1619 = vsel %vm334, %v1564, 0
      %v1622 = vsel %vm334, %v1565, 0
      %v1625 = vsel %vm334, %v1566, 0
      %v1628 = vsel %vm334, %v1567, 0
      %v1631 = vsel %vm334, %v1568, 0
      %v1634 = vsel %vm334, %v1569, 0
      %v1637 = vsel %vm334, %v1570, 0
      %v1640 = vsel %vm334, %v1571, 0
      %v1643 = vsel %vm334, %v1572, 0
      %v1646 = vsel %vm334, %v1573, 0
      %v1649 = vsel %vm334, %v1574, 0
      %v1652 = vsel %vm334, %v1575, 0
      %v1655 = vsel %vm334, %v1576, 0
      %v1658 = vsel %vm334, %v1577, 0
      %v1661 = vsel %vm585, %v1611, 0
      %1663 = vmatprep.subr.bf16.mxu0 0
      %1664 = vmatpush1.bf16.msra.mxu0 %v1661
      %1665 = vmatprep.subr.bf16.mxu0 0
      %1666 = vmatpush1.bf16.msra.mxu0 0
      %1667 = vmatprep.subr.bf16.mxu0 0
      %1668 = vmatpush1.bf16.msra.mxu0 0
      %1669 = vmatprep.subr.bf16.mxu0 0
      %1670 = vmatpush1.bf16.msra.mxu0 0
      %1671 = vmatprep.subr.bf16.mxu0 0
      %1672 = vmatpush1.bf16.msra.mxu0 0
      %1673 = vmatprep.subr.bf16.mxu0 0
      %1674 = vmatpush1.bf16.msra.mxu0 0
      %1675 = vmatprep.subr.bf16.mxu0 0
      %1676 = vmatpush1.bf16.msra.mxu0 0
      %1677 = vmatprep.subr.bf16.mxu0 0
      %1678 = vmatpush1.bf16.msra.mxu0 0
      %1679 = vmatprep.subr.bf16.mxu0 0
      %1680 = vmatpush1.bf16.msra.mxu0 0
      %1681 = vmatprep.subr.bf16.mxu0 0
      %1682 = vmatpush1.bf16.msra.mxu0 0
      %1683 = vmatprep.subr.bf16.mxu0 0
      %1684 = vmatpush1.bf16.msra.mxu0 0
      %1685 = vmatprep.subr.bf16.mxu0 0
      %1686 = vmatpush1.bf16.msra.mxu0 0
      %1687 = vmatprep.subr.bf16.mxu0 0
      %1688 = vmatpush1.bf16.msra.mxu0 0
      %1689 = vmatprep.subr.bf16.mxu0 0
      %1690 = vmatpush1.bf16.msra.mxu0 0
      %1691 = vmatprep.subr.bf16.mxu0 0
      %1692 = vmatpush1.bf16.msra.mxu0 0
      %1693 = vmatprep.subr.bf16.mxu0 0
      %1694 = vmatpush1.bf16.msra.mxu0 0
      %1695 = vmatprep.mubr.bf16.mxu0 0
      %1696 = vmatmul.mubr.bf16.gmra.mrb[0].mxu0 %v1613
      %v1697 = vpop.f32.mrb[0].mxu0
      %v1698 = vadd.f32 0.0, %v1697
      %v1699 = vpop.f32.mrb[0].mxu0
      %v1700 = vpop.f32.mrb[0].mxu0
      %v1701 = vadd.f32 0.0, %v1700
      %v1702 = vpop.f32.mrb[0].mxu0
      %1703 = vmatprep.mubr.bf16.mxu0 0
      %1704 = vmatmul.mubr.bf16.gmra.mrb[0].mxu0 %v1616
      %v1705 = vpop.f32.mrb[0].mxu0
      %v1706 = vadd.f32 0.0, %v1705
      %v1707 = vpop.f32.mrb[0].mxu0
      %v1708 = vpop.f32.mrb[0].mxu0
      %v1709 = vadd.f32 0.0, %v1708
      %v1710 = vpop.f32.mrb[0].mxu0
      %1711 = vmatprep.mubr.bf16.mxu0 0
      %1712 = vmatmul.mubr.bf16.gmra.mrb[0].mxu0 %v1619
      %v1713 = vpop.f32.mrb[0].mxu0
      %v1714 = vadd.f32 0.0, %v1713
      %v1715 = vpop.f32.mrb[0].mxu0
      %v1716 = vpop.f32.mrb[0].mxu0
      %v1717 = vadd.f32 0.0, %v1716
      %v1718 = vpop.f32.mrb[0].mxu0
      %1719 = vmatprep.mubr.bf16.mxu0 0
      %1720 = vmatmul.mubr.bf16.gmra.mrb[0].mxu0 %v1622
      %v1721 = vpop.f32.mrb[0].mxu0
      %v1722 = vadd.f32 0.0, %v1721
      %v1723 = vpop.f32.mrb[0].mxu0
      %v1724 = vpop.f32.mrb[0].mxu0
      %v1725 = vadd.f32 0.0, %v1724
      %v1726 = vpop.f32.mrb[0].mxu0
      %1727 = vmatprep.mubr.bf16.mxu0 0
      %1728 = vmatmul.mubr.bf16.gmra.mrb[0].mxu0 %v1625
      %v1729 = vpop.f32.mrb[0].mxu0
      %v1730 = vadd.f32 0.0, %v1729
      %v1731 = vpop.f32.mrb[0].mxu0
      %v1732 = vpop.f32.mrb[0].mxu0
      %v1733 = vadd.f32 0.0, %v1732
      %v1734 = vpop.f32.mrb[0].mxu0
      %1735 = vmatprep.mubr.bf16.mxu0 0
      %1736 = vmatmul.mubr.bf16.gmra.mrb[0].mxu0 %v1628
      %v1737 = vpop.f32.mrb[0].mxu0
      %v1738 = vadd.f32 0.0, %v1737
      %v1739 = vpop.f32.mrb[0].mxu0
      %v1740 = vpop.f32.mrb[0].mxu0
      %v1741 = vadd.f32 0.0, %v1740
      %v1742 = vpop.f32.mrb[0].mxu0
      %1743 = vmatprep.mubr.bf16.mxu0 0
      %1744 = vmatmul.mubr.bf16.gmra.mrb[0].mxu0 %v1631
      %v1745 = vpop.f32.mrb[0].mxu0
      %v1746 = vadd.f32 0.0, %v1745
      %v1747 = vpop.f32.mrb[0].mxu0
      %v1748 = vpop.f32.mrb[0].mxu0
      %v1749 = vadd.f32 0.0, %v1748
      %v1750 = vpop.f32.mrb[0].mxu0
      %1751 = vmatprep.mubr.bf16.mxu0 0
      %1752 = vmatmul.mubr.bf16.gmra.mrb[0].mxu0 %v1634
      %v1753 = vpop.f32.mrb[0].mxu0
      %v1754 = vadd.f32 0.0, %v1753
      %v1755 = vpop.f32.mrb[0].mxu0
      %v1756 = vpop.f32.mrb[0].mxu0
      %v1757 = vadd.f32 0.0, %v1756
      %v1758 = vpop.f32.mrb[0].mxu0
      %1759 = vmatprep.mubr.bf16.mxu0 0
      %1760 = vmatmul.mubr.bf16.gmra.mrb[0].mxu0 %v1637
      %v1761 = vpop.f32.mrb[0].mxu0
      %v1762 = vadd.f32 0.0, %v1761
      %v1763 = vpop.f32.mrb[0].mxu0
      %v1764 = vpop.f32.mrb[0].mxu0
      %v1765 = vadd.f32 0.0, %v1764
      %v1766 = vpop.f32.mrb[0].mxu0
      %1767 = vmatprep.mubr.bf16.mxu0 0
      %1768 = vmatmul.mubr.bf16.gmra.mrb[0].mxu0 %v1640
      %v1769 = vpop.f32.mrb[0].mxu0
      %v1770 = vadd.f32 0.0, %v1769
      %v1771 = vpop.f32.mrb[0].mxu0
      %v1772 = vpop.f32.mrb[0].mxu0
      %v1773 = vadd.f32 0.0, %v1772
      %v1774 = vpop.f32.mrb[0].mxu0
      %1775 = vmatprep.mubr.bf16.mxu0 0
      %1776 = vmatmul.mubr.bf16.gmra.mrb[0].mxu0 %v1643
      %v1777 = vpop.f32.mrb[0].mxu0
      %v1778 = vadd.f32 0.0, %v1777
      %v1779 = vpop.f32.mrb[0].mxu0
      %v1780 = vpop.f32.mrb[0].mxu0
      %v1781 = vadd.f32 0.0, %v1780
      %v1782 = vpop.f32.mrb[0].mxu0
      %1783 = vmatprep.mubr.bf16.mxu0 0
      %1784 = vmatmul.mubr.bf16.gmra.mrb[0].mxu0 %v1646
      %v1785 = vpop.f32.mrb[0].mxu0
      %v1786 = vadd.f32 0.0, %v1785
      %v1787 = vpop.f32.mrb[0].mxu0
      %v1788 = vpop.f32.mrb[0].mxu0
      %v1789 = vadd.f32 0.0, %v1788
      %v1790 = vpop.f32.mrb[0].mxu0
      %1791 = vmatprep.mubr.bf16.mxu0 0
      %1792 = vmatmul.mubr.bf16.gmra.mrb[0].mxu0 %v1649
      %v1793 = vpop.f32.mrb[0].mxu0
      %v1794 = vadd.f32 0.0, %v1793
      %v1795 = vpop.f32.mrb[0].mxu0
      %v1796 = vpop.f32.mrb[0].mxu0
      %v1797 = vadd.f32 0.0, %v1796
      %v1798 = vpop.f32.mrb[0].mxu0
      %1799 = vmatprep.mubr.bf16.mxu0 0
      %1800 = vmatmul.mubr.bf16.gmra.mrb[0].mxu0 %v1652
      %v1801 = vpop.f32.mrb[0].mxu0
      %v1802 = vadd.f32 0.0, %v1801
      %v1803 = vpop.f32.mrb[0].mxu0
      %v1804 = vpop.f32.mrb[0].mxu0
      %v1805 = vadd.f32 0.0, %v1804
      %v1806 = vpop.f32.mrb[0].mxu0
      %1807 = vmatprep.mubr.bf16.mxu0 0
      %1808 = vmatmul.mubr.bf16.gmra.mrb[0].mxu0 %v1655
      %v1809 = vpop.f32.mrb[0].mxu0
      %v1810 = vadd.f32 0.0, %v1809
      %v1811 = vpop.f32.mrb[0].mxu0
      %v1812 = vpop.f32.mrb[0].mxu0
      %v1813 = vadd.f32 0.0, %v1812
      %v1814 = vpop.f32.mrb[0].mxu0
      %1815 = vmatprep.mubr.bf16.mxu0 0
      %1816 = vmatmul.mubr.bf16.gmra.mrb[0].mxu0 %v1658
      %v1817 = vpop.f32.mrb[0].mxu0
      %v1818 = vadd.f32 0.0, %v1817
      %v1819 = vpop.f32.mrb[0].mxu0
      %v1820 = vpop.f32.mrb[0].mxu0
      %v1821 = vadd.f32 0.0, %v1820
      %v1822 = vpop.f32.mrb[0].mxu0
      %1823 = vdwg.mxu0
      %v1824 = vadd.f32 %v1578, %v1698
      %v1825 = vadd.f32 %v1579, %v1701
      %v1826 = vadd.f32 %v1580, %v1706
      %v1827 = vadd.f32 %v1581, %v1709
      %v1828 = vadd.f32 %v1582, %v1714
      %v1829 = vadd.f32 %v1583, %v1717
      %v1830 = vadd.f32 %v1584, %v1722
      %v1831 = vadd.f32 %v1585, %v1725
      %v1832 = vadd.f32 %v1586, %v1730
      %v1833 = vadd.f32 %v1587, %v1733
      %v1834 = vadd.f32 %v1588, %v1738
      %v1835 = vadd.f32 %v1589, %v1741
      %v1836 = vadd.f32 %v1590, %v1746
      %v1837 = vadd.f32 %v1591, %v1749
      %v1838 = vadd.f32 %v1592, %v1754
      %v1839 = vadd.f32 %v1593, %v1757
      %v1840 = vadd.f32 %v1594, %v1762
      %v1841 = vadd.f32 %v1595, %v1765
      %v1842 = vadd.f32 %v1596, %v1770
      %v1843 = vadd.f32 %v1597, %v1773
      %v1844 = vadd.f32 %v1598, %v1778
      %v1845 = vadd.f32 %v1599, %v1781
      %v1846 = vadd.f32 %v1600, %v1786
      %v1847 = vadd.f32 %v1601, %v1789
      %v1848 = vadd.f32 %v1602, %v1794
      %v1849 = vadd.f32 %v1603, %v1797
      %v1850 = vadd.f32 %v1604, %v1802
      %v1851 = vadd.f32 %v1605, %v1805
      %v1852 = vadd.f32 %v1606, %v1810
      %v1853 = vadd.f32 %v1607, %v1813
      %v1854 = vadd.f32 %v1608, %v1818
      %v1855 = vadd.f32 %v1609, %v1821
      %1856 = vst.msk [vmem:[#allocation3] sm:$0xff] %vm423, %v1824
      %1857 = vst.msk [vmem:[#allocation3 + $0x8] sm:$0xff] %vm423, %v1825
      %1858 = vst.msk [vmem:[#allocation3 + $0x10] sm:$0xff] %vm423, %v1826
      %1859 = vst.msk [vmem:[#allocation3 + $0x18] sm:$0xff] %vm423, %v1827
      %1860 = vst.msk [vmem:[#allocation3 + $0x20] sm:$0xff] %vm423, %v1828
      %1861 = vst.msk [vmem:[#allocation3 + $0x28] sm:$0xff] %vm423, %v1829
      %1862 = vst.msk [vmem:[#allocation3 + $0x30] sm:$0xff] %vm423, %v1830
      %1863 = vst.msk [vmem:[#allocation3 + $0x38] sm:$0xff] %vm423, %v1831
      %1864 = vst.msk [vmem:[#allocation3 + $0x40] sm:$0xff] %vm423, %v1832
      %1865 = vst.msk [vmem:[#allocation3 + $0x48] sm:$0xff] %vm423, %v1833
      %1866 = vst.msk [vmem:[#allocation3 + $0x50] sm:$0xff] %vm423, %v1834
      %1867 = vst.msk [vmem:[#allocation3 + $0x58] sm:$0xff] %vm423, %v1835
      %1868 = vst.msk [vmem:[#allocation3 + $0x60] sm:$0xff] %vm423, %v1836
      %1869 = vst.msk [vmem:[#allocation3 + $0x68] sm:$0xff] %vm423, %v1837
      %1870 = vst.msk [vmem:[#allocation3 + $0x70] sm:$0xff] %vm423, %v1838
      %1871 = vst.msk [vmem:[#allocation3 + $0x78] sm:$0xff] %vm423, %v1839
      %1872 = vst.msk [vmem:[#allocation3 + $0x80] sm:$0xff] %vm423, %v1840
      %1873 = vst.msk [vmem:[#allocation3 + $0x88] sm:$0xff] %vm423, %v1841
      %1874 = vst.msk [vmem:[#allocation3 + $0x90] sm:$0xff] %vm423, %v1842
      %1875 = vst.msk [vmem:[#allocation3 + $0x98] sm:$0xff] %vm423, %v1843
      %1876 = vst.msk [vmem:[#allocation3 + $0xa0] sm:$0xff] %vm423, %v1844
      %1877 = vst.msk [vmem:[#allocation3 + $0xa8] sm:$0xff] %vm423, %v1845
      %1878 = vst.msk [vmem:[#allocation3 + $0xb0] sm:$0xff] %vm423, %v1846
      %1879 = vst.msk [vmem:[#allocation3 + $0xb8] sm:$0xff] %vm423, %v1847
      %1880 = vst.msk [vmem:[#allocation3 + $0xc0] sm:$0xff] %vm423, %v1848
      %1881 = vst.msk [vmem:[#allocation3 + $0xc8] sm:$0xff] %vm423, %v1849
      %1882 = vst.msk [vmem:[#allocation3 + $0xd0] sm:$0xff] %vm423, %v1850
      %1883 = vst.msk [vmem:[#allocation3 + $0xd8] sm:$0xff] %vm423, %v1851
      %1884 = vst.msk [vmem:[#allocation3 + $0xe0] sm:$0xff] %vm423, %v1852
      %1885 = vst.msk [vmem:[#allocation3 + $0xe8] sm:$0xff] %vm423, %v1853
      %1886 = vst.msk [vmem:[#allocation3 + $0xf0] sm:$0xff] %vm423, %v1854
      %1887 = vst.msk [vmem:[#allocation3 + $0xf8] sm:$0xff] %vm423, %v1855
      %v1888 = vld [vmem:[%s390 + $0x1] sm:$0xff]
      %v1889 = vld [vmem:[%s390 + $0x9] sm:$0xff]
      %v1890 = vld [vmem:[%s390 + $0x19] sm:$0xff]
      %v1891 = vld [vmem:[%s390 + $0x21] sm:$0xff]
      %v1892 = vld [vmem:[%s390 + $0x31] sm:$0xff]
      %v1893 = vld [vmem:[%s390 + $0x39] sm:$0xff]
      %v1894 = vld [vmem:[%s390 + $0x49] sm:$0xff]
      %v1895 = vld [vmem:[%s390 + $0x51] sm:$0xff]
      %v1896 = vld [vmem:[%s390 + $0x61] sm:$0xff]
      %v1897 = vld [vmem:[%s390 + $0x69] sm:$0xff]
      %v1898 = vld [vmem:[%s390 + $0x79] sm:$0xff]
      %v1899 = vld [vmem:[%s390 + $0x81] sm:$0xff]
      %v1900 = vld [vmem:[%s390 + $0x91] sm:$0xff]
      %v1901 = vld [vmem:[%s390 + $0x99] sm:$0xff]
      %v1902 = vld [vmem:[%s390 + $0xa9] sm:$0xff]
      %v1903 = vld [vmem:[%s390 + $0xb1] sm:$0xff]
      %v1904 = vld [vmem:[%s390 + $0xc1] sm:$0xff]
      %v1905 = vld [vmem:[%s390 + $0xc9] sm:$0xff]
      %v1906 = vld [vmem:[%s390 + $0xd9] sm:$0xff]
      %v1907 = vld [vmem:[%s390 + $0xe1] sm:$0xff]
      %v1908 = vld [vmem:[%s390 + $0xf1] sm:$0xff]
      %v1909 = vld [vmem:[%s390 + $0xf9] sm:$0xff]
      %v1910 = vld [vmem:[%s390 + $0x109] sm:$0xff]
      %v1911 = vld [vmem:[%s390 + $0x111] sm:$0xff]
      %v1912 = vld [vmem:[%s390 + $0x121] sm:$0xff]
      %v1913 = vld [vmem:[%s390 + $0x129] sm:$0xff]
      %v1914 = vld [vmem:[%s390 + $0x139] sm:$0xff]
      %v1915 = vld [vmem:[%s390 + $0x141] sm:$0xff]
      %v1916 = vld [vmem:[%s390 + $0x151] sm:$0xff]
      %v1917 = vld [vmem:[%s390 + $0x159] sm:$0xff]
      %v1918 = vld [vmem:[%s390 + $0x169] sm:$0xff]
      %v1919 = vld [vmem:[%s390 + $0x171] sm:$0xff]
      %v1920 = vpack.c.bf16 %v1889, %v1888
      %v1921 = vpack.c.bf16 %v1891, %v1890
      %v1922 = vpack.c.bf16 %v1893, %v1892
      %v1923 = vpack.c.bf16 %v1895, %v1894
      %v1924 = vpack.c.bf16 %v1897, %v1896
      %v1925 = vpack.c.bf16 %v1899, %v1898
      %v1926 = vpack.c.bf16 %v1901, %v1900
      %v1927 = vpack.c.bf16 %v1903, %v1902
      %v1928 = vpack.c.bf16 %v1905, %v1904
      %v1929 = vpack.c.bf16 %v1907, %v1906
      %v1930 = vpack.c.bf16 %v1909, %v1908
      %v1931 = vpack.c.bf16 %v1911, %v1910
      %v1932 = vpack.c.bf16 %v1913, %v1912
      %v1933 = vpack.c.bf16 %v1915, %v1914
      %v1934 = vpack.c.bf16 %v1917, %v1916
      %v1935 = vpack.c.bf16 %v1919, %v1918
      %v1936 = vld [vmem:[#allocation3] sm:$0xff]
      %v1937 = vld [vmem:[#allocation3 + $0x8] sm:$0xff]
      %v1938 = vld [vmem:[#allocation3 + $0x10] sm:$0xff]
      %v1939 = vld [vmem:[#allocation3 + $0x18] sm:$0xff]
      %v1940 = vld [vmem:[#allocation3 + $0x20] sm:$0xff]
      %v1941 = vld [vmem:[#allocation3 + $0x28] sm:$0xff]
      %v1942 = vld [vmem:[#allocation3 + $0x30] sm:$0xff]
      %v1943 = vld [vmem:[#allocation3 + $0x38] sm:$0xff]
      %v1944 = vld [vmem:[#allocation3 + $0x40] sm:$0xff]
      %v1945 = vld [vmem:[#allocation3 + $0x48] sm:$0xff]
      %v1946 = vld [vmem:[#allocation3 + $0x50] sm:$0xff]
      %v1947 = vld [vmem:[#allocation3 + $0x58] sm:$0xff]
      %v1948 = vld [vmem:[#allocation3 + $0x60] sm:$0xff]
      %v1949 = vld [vmem:[#allocation3 + $0x68] sm:$0xff]
      %v1950 = vld [vmem:[#allocation3 + $0x70] sm:$0xff]
      %v1951 = vld [vmem:[#allocation3 + $0x78] sm:$0xff]
      %v1952 = vld [vmem:[#allocation3 + $0x80] sm:$0xff]
      %v1953 = vld [vmem:[#allocation3 + $0x88] sm:$0xff]
      %v1954 = vld [vmem:[#allocation3 + $0x90] sm:$0xff]
      %v1955 = vld [vmem:[#allocation3 + $0x98] sm:$0xff]
      %v1956 = vld [vmem:[#allocation3 + $0xa0] sm:$0xff]
      %v1957 = vld [vmem:[#allocation3 + $0xa8] sm:$0xff]
      %v1958 = vld [vmem:[#allocation3 + $0xb0] sm:$0xff]
      %v1959 = vld [vmem:[#allocation3 + $0xb8] sm:$0xff]
      %v1960 = vld [vmem:[#allocation3 + $0xc0] sm:$0xff]
      %v1961 = vld [vmem:[#allocation3 + $0xc8] sm:$0xff]
      %v1962 = vld [vmem:[#allocation3 + $0xd0] sm:$0xff]
      %v1963 = vld [vmem:[#allocation3 + $0xd8] sm:$0xff]
      %v1964 = vld [vmem:[#allocation3 + $0xe0] sm:$0xff]
      %v1965 = vld [vmem:[#allocation3 + $0xe8] sm:$0xff]
      %v1966 = vld [vmem:[#allocation3 + $0xf0] sm:$0xff]
      %v1967 = vld [vmem:[#allocation3 + $0xf8] sm:$0xff]
      %s1968 = scalar_lea.vmem %s3, 8
      %v1969 = vld [vmem:[%s1968] sm:$0x3]
      %v1971 = vsel %vm334, %v1920, 0
      %v1974 = vsel %vm334, %v1921, 0
      %v1977 = vsel %vm334, %v1922, 0
      %v1980 = vsel %vm334, %v1923, 0
      %v1983 = vsel %vm334, %v1924, 0
      %v1986 = vsel %vm334, %v1925, 0
      %v1989 = vsel %vm334, %v1926, 0
      %v1992 = vsel %vm334, %v1927, 0
      %v1995 = vsel %vm334, %v1928, 0
      %v1998 = vsel %vm334, %v1929, 0
      %v2001 = vsel %vm334, %v1930, 0
      %v2004 = vsel %vm334, %v1931, 0
      %v2007 = vsel %vm334, %v1932, 0
      %v2010 = vsel %vm334, %v1933, 0
      %v2013 = vsel %vm334, %v1934, 0
      %v2016 = vsel %vm334, %v1935, 0
      %v2019 = vsel %vm585, %v1969, 0
      %2021 = vmatprep.subr.bf16.mxu0 0
      %2022 = vmatpush1.bf16.msra.mxu0 %v2019
      %2023 = vmatprep.subr.bf16.mxu0 0
      %2024 = vmatpush1.bf16.msra.mxu0 0
      %2025 = vmatprep.subr.bf16.mxu0 0
      %2026 = vmatpush1.bf16.msra.mxu0 0
      %2027 = vmatprep.subr.bf16.mxu0 0
      %2028 = vmatpush1.bf16.msra.mxu0 0
      %2029 = vmatprep.subr.bf16.mxu0 0
      %2030 = vmatpush1.bf16.msra.mxu0 0
      %2031 = vmatprep.subr.bf16.mxu0 0
      %2032 = vmatpush1.bf16.msra.mxu0 0
      %2033 = vmatprep.subr.bf16.mxu0 0
      %2034 = vmatpush1.bf16.msra.mxu0 0
      %2035 = vmatprep.subr.bf16.mxu0 0
      %2036 = vmatpush1.bf16.msra.mxu0 0
      %2037 = vmatprep.subr.bf16.mxu0 0
      %2038 = vmatpush1.bf16.msra.mxu0 0
      %2039 = vmatprep.subr.bf16.mxu0 0
      %2040 = vmatpush1.bf16.msra.mxu0 0
      %2041 = vmatprep.subr.bf16.mxu0 0
      %2042 = vmatpush1.bf16.msra.mxu0 0
      %2043 = vmatprep.subr.bf16.mxu0 0
      %2044 = vmatpush1.bf16.msra.mxu0 0
      %2045 = vmatprep.subr.bf16.mxu0 0
      %2046 = vmatpush1.bf16.msra.mxu0 0
      %2047 = vmatprep.subr.bf16.mxu0 0
      %2048 = vmatpush1.bf16.msra.mxu0 0
      %2049 = vmatprep.subr.bf16.mxu0 0
      %2050 = vmatpush1.bf16.msra.mxu0 0
      %2051 = vmatprep.subr.bf16.mxu0 0
      %2052 = vmatpush1.bf16.msra.mxu0 0
      %2053 = vmatprep.mubr.bf16.mxu0 0
      %2054 = vmatmul.mubr.bf16.gmra.mrb[0].mxu0 %v1971
      %v2055 = vpop.f32.mrb[0].mxu0
      %v2056 = vadd.f32 0.0, %v2055
      %v2057 = vpop.f32.mrb[0].mxu0
      %v2058 = vpop.f32.mrb[0].mxu0
      %v2059 = vadd.f32 0.0, %v2058
      %v2060 = vpop.f32.mrb[0].mxu0
      %2061 = vmatprep.mubr.bf16.mxu0 0
      %2062 = vmatmul.mubr.bf16.gmra.mrb[0].mxu0 %v1974
      %v2063 = vpop.f32.mrb[0].mxu0
      %v2064 = vadd.f32 0.0, %v2063
      %v2065 = vpop.f32.mrb[0].mxu0
      %v2066 = vpop.f32.mrb[0].mxu0
      %v2067 = vadd.f32 0.0, %v2066
      %v2068 = vpop.f32.mrb[0].mxu0
      %2069 = vmatprep.mubr.bf16.mxu0 0
      %2070 = vmatmul.mubr.bf16.gmra.mrb[0].mxu0 %v1977
      %v2071 = vpop.f32.mrb[0].mxu0
      %v2072 = vadd.f32 0.0, %v2071
      %v2073 = vpop.f32.mrb[0].mxu0
      %v2074 = vpop.f32.mrb[0].mxu0
      %v2075 = vadd.f32 0.0, %v2074
      %v2076 = vpop.f32.mrb[0].mxu0
      %2077 = vmatprep.mubr.bf16.mxu0 0
      %2078 = vmatmul.mubr.bf16.gmra.mrb[0].mxu0 %v1980
      %v2079 = vpop.f32.mrb[0].mxu0
      %v2080 = vadd.f32 0.0, %v2079
      %v2081 = vpop.f32.mrb[0].mxu0
      %v2082 = vpop.f32.mrb[0].mxu0
      %v2083 = vadd.f32 0.0, %v2082
      %v2084 = vpop.f32.mrb[0].mxu0
      %2085 = vmatprep.mubr.bf16.mxu0 0
      %2086 = vmatmul.mubr.bf16.gmra.mrb[0].mxu0 %v1983
      %v2087 = vpop.f32.mrb[0].mxu0
      %v2088 = vadd.f32 0.0, %v2087
      %v2089 = vpop.f32.mrb[0].mxu0
      %v2090 = vpop.f32.mrb[0].mxu0
      %v2091 = vadd.f32 0.0, %v2090
      %v2092 = vpop.f32.mrb[0].mxu0
      %2093 = vmatprep.mubr.bf16.mxu0 0
      %2094 = vmatmul.mubr.bf16.gmra.mrb[0].mxu0 %v1986
      %v2095 = vpop.f32.mrb[0].mxu0
      %v2096 = vadd.f32 0.0, %v2095
      %v2097 = vpop.f32.mrb[0].mxu0
      %v2098 = vpop.f32.mrb[0].mxu0
      %v2099 = vadd.f32 0.0, %v2098
      %v2100 = vpop.f32.mrb[0].mxu0
      %2101 = vmatprep.mubr.bf16.mxu0 0
      %2102 = vmatmul.mubr.bf16.gmra.mrb[0].mxu0 %v1989
      %v2103 = vpop.f32.mrb[0].mxu0
      %v2104 = vadd.f32 0.0, %v2103
      %v2105 = vpop.f32.mrb[0].mxu0
      %v2106 = vpop.f32.mrb[0].mxu0
      %v2107 = vadd.f32 0.0, %v2106
      %v2108 = vpop.f32.mrb[0].mxu0
      %2109 = vmatprep.mubr.bf16.mxu0 0
      %2110 = vmatmul.mubr.bf16.gmra.mrb[0].mxu0 %v1992
      %v2111 = vpop.f32.mrb[0].mxu0
      %v2112 = vadd.f32 0.0, %v2111
      %v2113 = vpop.f32.mrb[0].mxu0
      %v2114 = vpop.f32.mrb[0].mxu0
      %v2115 = vadd.f32 0.0, %v2114
      %v2116 = vpop.f32.mrb[0].mxu0
      %2117 = vmatprep.mubr.bf16.mxu0 0
      %2118 = vmatmul.mubr.bf16.gmra.mrb[0].mxu0 %v1995
      %v2119 = vpop.f32.mrb[0].mxu0
      %v2120 = vadd.f32 0.0, %v2119
      %v2121 = vpop.f32.mrb[0].mxu0
      %v2122 = vpop.f32.mrb[0].mxu0
      %v2123 = vadd.f32 0.0, %v2122
      %v2124 = vpop.f32.mrb[0].mxu0
      %2125 = vmatprep.mubr.bf16.mxu0 0
      %2126 = vmatmul.mubr.bf16.gmra.mrb[0].mxu0 %v1998
      %v2127 = vpop.f32.mrb[0].mxu0
      %v2128 = vadd.f32 0.0, %v2127
      %v2129 = vpop.f32.mrb[0].mxu0
      %v2130 = vpop.f32.mrb[0].mxu0
      %v2131 = vadd.f32 0.0, %v2130
      %v2132 = vpop.f32.mrb[0].mxu0
      %2133 = vmatprep.mubr.bf16.mxu0 0
      %2134 = vmatmul.mubr.bf16.gmra.mrb[0].mxu0 %v2001
      %v2135 = vpop.f32.mrb[0].mxu0
      %v2136 = vadd.f32 0.0, %v2135
      %v2137 = vpop.f32.mrb[0].mxu0
      %v2138 = vpop.f32.mrb[0].mxu0
      %v2139 = vadd.f32 0.0, %v2138
      %v2140 = vpop.f32.mrb[0].mxu0
      %2141 = vmatprep.mubr.bf16.mxu0 0
      %2142 = vmatmul.mubr.bf16.gmra.mrb[0].mxu0 %v2004
      %v2143 = vpop.f32.mrb[0].mxu0
      %v2144 = vadd.f32 0.0, %v2143
      %v2145 = vpop.f32.mrb[0].mxu0
      %v2146 = vpop.f32.mrb[0].mxu0
      %v2147 = vadd.f32 0.0, %v2146
      %v2148 = vpop.f32.mrb[0].mxu0
      %2149 = vmatprep.mubr.bf16.mxu0 0
      %2150 = vmatmul.mubr.bf16.gmra.mrb[0].mxu0 %v2007
      %v2151 = vpop.f32.mrb[0].mxu0
      %v2152 = vadd.f32 0.0, %v2151
      %v2153 = vpop.f32.mrb[0].mxu0
      %v2154 = vpop.f32.mrb[0].mxu0
      %v2155 = vadd.f32 0.0, %v2154
      %v2156 = vpop.f32.mrb[0].mxu0
      %2157 = vmatprep.mubr.bf16.mxu0 0
      %2158 = vmatmul.mubr.bf16.gmra.mrb[0].mxu0 %v2010
      %v2159 = vpop.f32.mrb[0].mxu0
      %v2160 = vadd.f32 0.0, %v2159
      %v2161 = vpop.f32.mrb[0].mxu0
      %v2162 = vpop.f32.mrb[0].mxu0
      %v2163 = vadd.f32 0.0, %v2162
      %v2164 = vpop.f32.mrb[0].mxu0
      %2165 = vmatprep.mubr.bf16.mxu0 0
      %2166 = vmatmul.mubr.bf16.gmra.mrb[0].mxu0 %v2013
      %v2167 = vpop.f32.mrb[0].mxu0
      %v2168 = vadd.f32 0.0, %v2167
      %v2169 = vpop.f32.mrb[0].mxu0
      %v2170 = vpop.f32.mrb[0].mxu0
      %v2171 = vadd.f32 0.0, %v2170
      %v2172 = vpop.f32.mrb[0].mxu0
      %2173 = vmatprep.mubr.bf16.mxu0 0
      %2174 = vmatmul.mubr.bf16.gmra.mrb[0].mxu0 %v2016
      %v2175 = vpop.f32.mrb[0].mxu0
      %v2176 = vadd.f32 0.0, %v2175
      %v2177 = vpop.f32.mrb[0].mxu0
      %v2178 = vpop.f32.mrb[0].mxu0
      %v2179 = vadd.f32 0.0, %v2178
      %v2180 = vpop.f32.mrb[0].mxu0
      %2181 = vdwg.mxu0
      %v2182 = vadd.f32 %v1936, %v2056
      %v2183 = vadd.f32 %v1937, %v2059
      %v2184 = vadd.f32 %v1938, %v2064
      %v2185 = vadd.f32 %v1939, %v2067
      %v2186 = vadd.f32 %v1940, %v2072
      %v2187 = vadd.f32 %v1941, %v2075
      %v2188 = vadd.f32 %v1942, %v2080
      %v2189 = vadd.f32 %v1943, %v2083
      %v2190 = vadd.f32 %v1944, %v2088
      %v2191 = vadd.f32 %v1945, %v2091
      %v2192 = vadd.f32 %v1946, %v2096
      %v2193 = vadd.f32 %v1947, %v2099
      %v2194 = vadd.f32 %v1948, %v2104
      %v2195 = vadd.f32 %v1949, %v2107
      %v2196 = vadd.f32 %v1950, %v2112
      %v2197 = vadd.f32 %v1951, %v2115
      %v2198 = vadd.f32 %v1952, %v2120
      %v2199 = vadd.f32 %v1953, %v2123
      %v2200 = vadd.f32 %v1954, %v2128
      %v2201 = vadd.f32 %v1955, %v2131
      %v2202 = vadd.f32 %v1956, %v2136
      %v2203 = vadd.f32 %v1957, %v2139
      %v2204 = vadd.f32 %v1958, %v2144
      %v2205 = vadd.f32 %v1959, %v2147
      %v2206 = vadd.f32 %v1960, %v2152
      %v2207 = vadd.f32 %v1961, %v2155
      %v2208 = vadd.f32 %v1962, %v2160
      %v2209 = vadd.f32 %v1963, %v2163
      %v2210 = vadd.f32 %v1964, %v2168
      %v2211 = vadd.f32 %v1965, %v2171
      %v2212 = vadd.f32 %v1966, %v2176
      %v2213 = vadd.f32 %v1967, %v2179
      %2214 = vst.msk [vmem:[#allocation3] sm:$0xff] %vm423, %v2182
      %2215 = vst.msk [vmem:[#allocation3 + $0x8] sm:$0xff] %vm423, %v2183
      %2216 = vst.msk [vmem:[#allocation3 + $0x10] sm:$0xff] %vm423, %v2184
      %2217 = vst.msk [vmem:[#allocation3 + $0x18] sm:$0xff] %vm423, %v2185
      %2218 = vst.msk [vmem:[#allocation3 + $0x20] sm:$0xff] %vm423, %v2186
      %2219 = vst.msk [vmem:[#allocation3 + $0x28] sm:$0xff] %vm423, %v2187
      %2220 = vst.msk [vmem:[#allocation3 + $0x30] sm:$0xff] %vm423, %v2188
      %2221 = vst.msk [vmem:[#allocation3 + $0x38] sm:$0xff] %vm423, %v2189
      %2222 = vst.msk [vmem:[#allocation3 + $0x40] sm:$0xff] %vm423, %v2190
      %2223 = vst.msk [vmem:[#allocation3 + $0x48] sm:$0xff] %vm423, %v2191
      %2224 = vst.msk [vmem:[#allocation3 + $0x50] sm:$0xff] %vm423, %v2192
      %2225 = vst.msk [vmem:[#allocation3 + $0x58] sm:$0xff] %vm423, %v2193
      %2226 = vst.msk [vmem:[#allocation3 + $0x60] sm:$0xff] %vm423, %v2194
      %2227 = vst.msk [vmem:[#allocation3 + $0x68] sm:$0xff] %vm423, %v2195
      %2228 = vst.msk [vmem:[#allocation3 + $0x70] sm:$0xff] %vm423, %v2196
      %2229 = vst.msk [vmem:[#allocation3 + $0x78] sm:$0xff] %vm423, %v2197
      %2230 = vst.msk [vmem:[#allocation3 + $0x80] sm:$0xff] %vm423, %v2198
      %2231 = vst.msk [vmem:[#allocation3 + $0x88] sm:$0xff] %vm423, %v2199
      %2232 = vst.msk [vmem:[#allocation3 + $0x90] sm:$0xff] %vm423, %v2200
      %2233 = vst.msk [vmem:[#allocation3 + $0x98] sm:$0xff] %vm423, %v2201
      %2234 = vst.msk [vmem:[#allocation3 + $0xa0] sm:$0xff] %vm423, %v2202
      %2235 = vst.msk [vmem:[#allocation3 + $0xa8] sm:$0xff] %vm423, %v2203
      %2236 = vst.msk [vmem:[#allocation3 + $0xb0] sm:$0xff] %vm423, %v2204
      %2237 = vst.msk [vmem:[#allocation3 + $0xb8] sm:$0xff] %vm423, %v2205
      %2238 = vst.msk [vmem:[#allocation3 + $0xc0] sm:$0xff] %vm423, %v2206
      %2239 = vst.msk [vmem:[#allocation3 + $0xc8] sm:$0xff] %vm423, %v2207
      %2240 = vst.msk [vmem:[#allocation3 + $0xd0] sm:$0xff] %vm423, %v2208
      %2241 = vst.msk [vmem:[#allocation3 + $0xd8] sm:$0xff] %vm423, %v2209
      %2242 = vst.msk [vmem:[#allocation3 + $0xe0] sm:$0xff] %vm423, %v2210
      %2243 = vst.msk [vmem:[#allocation3 + $0xe8] sm:$0xff] %vm423, %v2211
      %2244 = vst.msk [vmem:[#allocation3 + $0xf0] sm:$0xff] %vm423, %v2212
      %2245 = vst.msk [vmem:[#allocation3 + $0xf8] sm:$0xff] %vm423, %v2213
      %v2246 = vld [vmem:[%s390 + $0x2] sm:$0xff]
      %v2247 = vld [vmem:[%s390 + $0xa] sm:$0xff]
      %v2248 = vld [vmem:[%s390 + $0x1a] sm:$0xff]
      %v2249 = vld [vmem:[%s390 + $0x22] sm:$0xff]
      %v2250 = vld [vmem:[%s390 + $0x32] sm:$0xff]
      %v2251 = vld [vmem:[%s390 + $0x3a] sm:$0xff]
      %v2252 = vld [vmem:[%s390 + $0x4a] sm:$0xff]
      %v2253 = vld [vmem:[%s390 + $0x52] sm:$0xff]
      %v2254 = vld [vmem:[%s390 + $0x62] sm:$0xff]
      %v2255 = vld [vmem:[%s390 + $0x6a] sm:$0xff]
      %v2256 = vld [vmem:[%s390 + $0x7a] sm:$0xff]
      %v2257 = vld [vmem:[%s390 + $0x82] sm:$0xff]
      %v2258 = vld [vmem:[%s390 + $0x92] sm:$0xff]
      %v2259 = vld [vmem:[%s390 + $0x9a] sm:$0xff]
      %v2260 = vld [vmem:[%s390 + $0xaa] sm:$0xff]
      %v2261 = vld [vmem:[%s390 + $0xb2] sm:$0xff]
      %v2262 = vld [vmem:[%s390 + $0xc2] sm:$0xff]
      %v2263 = vld [vmem:[%s390 + $0xca] sm:$0xff]
      %v2264 = vld [vmem:[%s390 + $0xda] sm:$0xff]
      %v2265 = vld [vmem:[%s390 + $0xe2] sm:$0xff]
      %v2266 = vld [vmem:[%s390 + $0xf2] sm:$0xff]
      %v2267 = vld [vmem:[%s390 + $0xfa] sm:$0xff]
      %v2268 = vld [vmem:[%s390 + $0x10a] sm:$0xff]
      %v2269 = vld [vmem:[%s390 + $0x112] sm:$0xff]
      %v2270 = vld [vmem:[%s390 + $0x122] sm:$0xff]
      %v2271 = vld [vmem:[%s390 + $0x12a] sm:$0xff]
      %v2272 = vld [vmem:[%s390 + $0x13a] sm:$0xff]
      %v2273 = vld [vmem:[%s390 + $0x142] sm:$0xff]
      %v2274 = vld [vmem:[%s390 + $0x152] sm:$0xff]
      %v2275 = vld [vmem:[%s390 + $0x15a] sm:$0xff]
      %v2276 = vld [vmem:[%s390 + $0x16a] sm:$0xff]
      %v2277 = vld [vmem:[%s390 + $0x172] sm:$0xff]
      %v2278 = vpack.c.bf16 %v2247, %v2246
      %v2279 = vpack.c.bf16 %v2249, %v2248
      %v2280 = vpack.c.bf16 %v2251, %v2250
      %v2281 = vpack.c.bf16 %v2253, %v2252
      %v2282 = vpack.c.bf16 %v2255, %v2254
      %v2283 = vpack.c.bf16 %v2257, %v2256
      %v2284 = vpack.c.bf16 %v2259, %v2258
      %v2285 = vpack.c.bf16 %v2261, %v2260
      %v2286 = vpack.c.bf16 %v2263, %v2262
      %v2287 = vpack.c.bf16 %v2265, %v2264
      %v2288 = vpack.c.bf16 %v2267, %v2266
      %v2289 = vpack.c.bf16 %v2269, %v2268
      %v2290 = vpack.c.bf16 %v2271, %v2270
      %v2291 = vpack.c.bf16 %v2273, %v2272
      %v2292 = vpack.c.bf16 %v2275, %v2274
      %v2293 = vpack.c.bf16 %v2277, %v2276
      %v2294 = vld [vmem:[#allocation3] sm:$0xff]
      %v2295 = vld [vmem:[#allocation3 + $0x8] sm:$0xff]
      %v2296 = vld [vmem:[#allocation3 + $0x10] sm:$0xff]
      %v2297 = vld [vmem:[#allocation3 + $0x18] sm:$0xff]
      %v2298 = vld [vmem:[#allocation3 + $0x20] sm:$0xff]
      %v2299 = vld [vmem:[#allocation3 + $0x28] sm:$0xff]
      %v2300 = vld [vmem:[#allocation3 + $0x30] sm:$0xff]
      %v2301 = vld [vmem:[#allocation3 + $0x38] sm:$0xff]
      %v2302 = vld [vmem:[#allocation3 + $0x40] sm:$0xff]
      %v2303 = vld [vmem:[#allocation3 + $0x48] sm:$0xff]
      %v2304 = vld [vmem:[#allocation3 + $0x50] sm:$0xff]
      %v2305 = vld [vmem:[#allocation3 + $0x58] sm:$0xff]
      %v2306 = vld [vmem:[#allocation3 + $0x60] sm:$0xff]
      %v2307 = vld [vmem:[#allocation3 + $0x68] sm:$0xff]
      %v2308 = vld [vmem:[#allocation3 + $0x70] sm:$0xff]
      %v2309 = vld [vmem:[#allocation3 + $0x78] sm:$0xff]
      %v2310 = vld [vmem:[#allocation3 + $0x80] sm:$0xff]
      %v2311 = vld [vmem:[#allocation3 + $0x88] sm:$0xff]
      %v2312 = vld [vmem:[#allocation3 + $0x90] sm:$0xff]
      %v2313 = vld [vmem:[#allocation3 + $0x98] sm:$0xff]
      %v2314 = vld [vmem:[#allocation3 + $0xa0] sm:$0xff]
      %v2315 = vld [vmem:[#allocation3 + $0xa8] sm:$0xff]
      %v2316 = vld [vmem:[#allocation3 + $0xb0] sm:$0xff]
      %v2317 = vld [vmem:[#allocation3 + $0xb8] sm:$0xff]
      %v2318 = vld [vmem:[#allocation3 + $0xc0] sm:$0xff]
      %v2319 = vld [vmem:[#allocation3 + $0xc8] sm:$0xff]
      %v2320 = vld [vmem:[#allocation3 + $0xd0] sm:$0xff]
      %v2321 = vld [vmem:[#allocation3 + $0xd8] sm:$0xff]
      %v2322 = vld [vmem:[#allocation3 + $0xe0] sm:$0xff]
      %v2323 = vld [vmem:[#allocation3 + $0xe8] sm:$0xff]
      %v2324 = vld [vmem:[#allocation3 + $0xf0] sm:$0xff]
      %v2325 = vld [vmem:[#allocation3 + $0xf8] sm:$0xff]
      %s2326 = scalar_lea.vmem %s3, 10
      %v2327 = vld [vmem:[%s2326] sm:$0x3]
      %v2329 = vsel %vm334, %v2278, 0
      %v2332 = vsel %vm334, %v2279, 0
      %v2335 = vsel %vm334, %v2280, 0
      %v2338 = vsel %vm334, %v2281, 0
      %v2341 = vsel %vm334, %v2282, 0
      %v2344 = vsel %vm334, %v2283, 0
      %v2347 = vsel %vm334, %v2284, 0
      %v2350 = vsel %vm334, %v2285, 0
      %v2353 = vsel %vm334, %v2286, 0
      %v2356 = vsel %vm334, %v2287, 0
      %v2359 = vsel %vm334, %v2288, 0
      %v2362 = vsel %vm334, %v2289, 0
      %v2365 = vsel %vm334, %v2290, 0
      %v2368 = vsel %vm334, %v2291, 0
      %v2371 = vsel %vm334, %v2292, 0
      %v2374 = vsel %vm334, %v2293, 0
      %v2377 = vsel %vm585, %v2327, 0
      %2379 = vmatprep.subr.bf16.mxu0 0
      %2380 = vmatpush1.bf16.msra.mxu0 %v2377
      %2381 = vmatprep.subr.bf16.mxu0 0
      %2382 = vmatpush1.bf16.msra.mxu0 0
      %2383 = vmatprep.subr.bf16.mxu0 0
      %2384 = vmatpush1.bf16.msra.mxu0 0
      %2385 = vmatprep.subr.bf16.mxu0 0
      %2386 = vmatpush1.bf16.msra.mxu0 0
      %2387 = vmatprep.subr.bf16.mxu0 0
      %2388 = vmatpush1.bf16.msra.mxu0 0
      %2389 = vmatprep.subr.bf16.mxu0 0
      %2390 = vmatpush1.bf16.msra.mxu0 0
      %2391 = vmatprep.subr.bf16.mxu0 0
      %2392 = vmatpush1.bf16.msra.mxu0 0
      %2393 = vmatprep.subr.bf16.mxu0 0
      %2394 = vmatpush1.bf16.msra.mxu0 0
      %2395 = vmatprep.subr.bf16.mxu0 0
      %2396 = vmatpush1.bf16.msra.mxu0 0
      %2397 = vmatprep.subr.bf16.mxu0 0
      %2398 = vmatpush1.bf16.msra.mxu0 0
      %2399 = vmatprep.subr.bf16.mxu0 0
      %2400 = vmatpush1.bf16.msra.mxu0 0
      %2401 = vmatprep.subr.bf16.mxu0 0
      %2402 = vmatpush1.bf16.msra.mxu0 0
      %2403 = vmatprep.subr.bf16.mxu0 0
      %2404 = vmatpush1.bf16.msra.mxu0 0
      %2405 = vmatprep.subr.bf16.mxu0 0
      %2406 = vmatpush1.bf16.msra.mxu0 0
      %2407 = vmatprep.subr.bf16.mxu0 0
      %2408 = vmatpush1.bf16.msra.mxu0 0
      %2409 = vmatprep.subr.bf16.mxu0 0
      %2410 = vmatpush1.bf16.msra.mxu0 0
      %2411 = vmatprep.mubr.bf16.mxu0 0
      %2412 = vmatmul.mubr.bf16.gmra.mrb[0].mxu0 %v2329
      %v2413 = vpop.f32.mrb[0].mxu0
      %v2414 = vadd.f32 0.0, %v2413
      %v2415 = vpop.f32.mrb[0].mxu0
      %v2416 = vpop.f32.mrb[0].mxu0
      %v2417 = vadd.f32 0.0, %v2416
      %v2418 = vpop.f32.mrb[0].mxu0
      %2419 = vmatprep.mubr.bf16.mxu0 0
      %2420 = vmatmul.mubr.bf16.gmra.mrb[0].mxu0 %v2332
      %v2421 = vpop.f32.mrb[0].mxu0
      %v2422 = vadd.f32 0.0, %v2421
      %v2423 = vpop.f32.mrb[0].mxu0
      %v2424 = vpop.f32.mrb[0].mxu0
      %v2425 = vadd.f32 0.0, %v2424
      %v2426 = vpop.f32.mrb[0].mxu0
      %2427 = vmatprep.mubr.bf16.mxu0 0
      %2428 = vmatmul.mubr.bf16.gmra.mrb[0].mxu0 %v2335
      %v2429 = vpop.f32.mrb[0].mxu0
      %v2430 = vadd.f32 0.0, %v2429
      %v2431 = vpop.f32.mrb[0].mxu0
      %v2432 = vpop.f32.mrb[0].mxu0
      %v2433 = vadd.f32 0.0, %v2432
      %v2434 = vpop.f32.mrb[0].mxu0
      %2435 = vmatprep.mubr.bf16.mxu0 0
      %2436 = vmatmul.mubr.bf16.gmra.mrb[0].mxu0 %v2338
      %v2437 = vpop.f32.mrb[0].mxu0
      %v2438 = vadd.f32 0.0, %v2437
      %v2439 = vpop.f32.mrb[0].mxu0
      %v2440 = vpop.f32.mrb[0].mxu0
      %v2441 = vadd.f32 0.0, %v2440
      %v2442 = vpop.f32.mrb[0].mxu0
      %2443 = vmatprep.mubr.bf16.mxu0 0
      %2444 = vmatmul.mubr.bf16.gmra.mrb[0].mxu0 %v2341
      %v2445 = vpop.f32.mrb[0].mxu0
      %v2446 = vadd.f32 0.0, %v2445
      %v2447 = vpop.f32.mrb[0].mxu0
      %v2448 = vpop.f32.mrb[0].mxu0
      %v2449 = vadd.f32 0.0, %v2448
      %v2450 = vpop.f32.mrb[0].mxu0
      %2451 = vmatprep.mubr.bf16.mxu0 0
      %2452 = vmatmul.mubr.bf16.gmra.mrb[0].mxu0 %v2344
      %v2453 = vpop.f32.mrb[0].mxu0
      %v2454 = vadd.f32 0.0, %v2453
      %v2455 = vpop.f32.mrb[0].mxu0
      %v2456 = vpop.f32.mrb[0].mxu0
      %v2457 = vadd.f32 0.0, %v2456
      %v2458 = vpop.f32.mrb[0].mxu0
      %2459 = vmatprep.mubr.bf16.mxu0 0
      %2460 = vmatmul.mubr.bf16.gmra.mrb[0].mxu0 %v2347
      %v2461 = vpop.f32.mrb[0].mxu0
      %v2462 = vadd.f32 0.0, %v2461
      %v2463 = vpop.f32.mrb[0].mxu0
      %v2464 = vpop.f32.mrb[0].mxu0
      %v2465 = vadd.f32 0.0, %v2464
      %v2466 = vpop.f32.mrb[0].mxu0
      %2467 = vmatprep.mubr.bf16.mxu0 0
      %2468 = vmatmul.mubr.bf16.gmra.mrb[0].mxu0 %v2350
      %v2469 = vpop.f32.mrb[0].mxu0
      %v2470 = vadd.f32 0.0, %v2469
      %v2471 = vpop.f32.mrb[0].mxu0
      %v2472 = vpop.f32.mrb[0].mxu0
      %v2473 = vadd.f32 0.0, %v2472
      %v2474 = vpop.f32.mrb[0].mxu0
      %2475 = vmatprep.mubr.bf16.mxu0 0
      %2476 = vmatmul.mubr.bf16.gmra.mrb[0].mxu0 %v2353
      %v2477 = vpop.f32.mrb[0].mxu0
      %v2478 = vadd.f32 0.0, %v2477
      %v2479 = vpop.f32.mrb[0].mxu0
      %v2480 = vpop.f32.mrb[0].mxu0
      %v2481 = vadd.f32 0.0, %v2480
      %v2482 = vpop.f32.mrb[0].mxu0
      %2483 = vmatprep.mubr.bf16.mxu0 0
      %2484 = vmatmul.mubr.bf16.gmra.mrb[0].mxu0 %v2356
      %v2485 = vpop.f32.mrb[0].mxu0
      %v2486 = vadd.f32 0.0, %v2485
      %v2487 = vpop.f32.mrb[0].mxu0
      %v2488 = vpop.f32.mrb[0].mxu0
      %v2489 = vadd.f32 0.0, %v2488
      %v2490 = vpop.f32.mrb[0].mxu0
      %2491 = vmatprep.mubr.bf16.mxu0 0
      %2492 = vmatmul.mubr.bf16.gmra.mrb[0].mxu0 %v2359
      %v2493 = vpop.f32.mrb[0].mxu0
      %v2494 = vadd.f32 0.0, %v2493
      %v2495 = vpop.f32.mrb[0].mxu0
      %v2496 = vpop.f32.mrb[0].mxu0
      %v2497 = vadd.f32 0.0, %v2496
      %v2498 = vpop.f32.mrb[0].mxu0
      %2499 = vmatprep.mubr.bf16.mxu0 0
      %2500 = vmatmul.mubr.bf16.gmra.mrb[0].mxu0 %v2362
      %v2501 = vpop.f32.mrb[0].mxu0
      %v2502 = vadd.f32 0.0, %v2501
      %v2503 = vpop.f32.mrb[0].mxu0
      %v2504 = vpop.f32.mrb[0].mxu0
      %v2505 = vadd.f32 0.0, %v2504
      %v2506 = vpop.f32.mrb[0].mxu0
      %2507 = vmatprep.mubr.bf16.mxu0 0
      %2508 = vmatmul.mubr.bf16.gmra.mrb[0].mxu0 %v2365
      %v2509 = vpop.f32.mrb[0].mxu0
      %v2510 = vadd.f32 0.0, %v2509
      %v2511 = vpop.f32.mrb[0].mxu0
      %v2512 = vpop.f32.mrb[0].mxu0
      %v2513 = vadd.f32 0.0, %v2512
      %v2514 = vpop.f32.mrb[0].mxu0
      %2515 = vmatprep.mubr.bf16.mxu0 0
      %2516 = vmatmul.mubr.bf16.gmra.mrb[0].mxu0 %v2368
      %v2517 = vpop.f32.mrb[0].mxu0
      %v2518 = vadd.f32 0.0, %v2517
      %v2519 = vpop.f32.mrb[0].mxu0
      %v2520 = vpop.f32.mrb[0].mxu0
      %v2521 = vadd.f32 0.0, %v2520
      %v2522 = vpop.f32.mrb[0].mxu0
      %2523 = vmatprep.mubr.bf16.mxu0 0
      %2524 = vmatmul.mubr.bf16.gmra.mrb[0].mxu0 %v2371
      %v2525 = vpop.f32.mrb[0].mxu0
      %v2526 = vadd.f32 0.0, %v2525
      %v2527 = vpop.f32.mrb[0].mxu0
      %v2528 = vpop.f32.mrb[0].mxu0
      %v2529 = vadd.f32 0.0, %v2528
      %v2530 = vpop.f32.mrb[0].mxu0
      %2531 = vmatprep.mubr.bf16.mxu0 0
      %2532 = vmatmul.mubr.bf16.gmra.mrb[0].mxu0 %v2374
      %v2533 = vpop.f32.mrb[0].mxu0
      %v2534 = vadd.f32 0.0, %v2533
      %v2535 = vpop.f32.mrb[0].mxu0
      %v2536 = vpop.f32.mrb[0].mxu0
      %v2537 = vadd.f32 0.0, %v2536
      %v2538 = vpop.f32.mrb[0].mxu0
      %2539 = vdwg.mxu0
      %v2540 = vadd.f32 %v2294, %v2414
      %v2541 = vadd.f32 %v2295, %v2417
      %v2542 = vadd.f32 %v2296, %v2422
      %v2543 = vadd.f32 %v2297, %v2425
      %v2544 = vadd.f32 %v2298, %v2430
      %v2545 = vadd.f32 %v2299, %v2433
      %v2546 = vadd.f32 %v2300, %v2438
      %v2547 = vadd.f32 %v2301, %v2441
      %v2548 = vadd.f32 %v2302, %v2446
      %v2549 = vadd.f32 %v2303, %v2449
      %v2550 = vadd.f32 %v2304, %v2454
      %v2551 = vadd.f32 %v2305, %v2457
      %v2552 = vadd.f32 %v2306, %v2462
      %v2553 = vadd.f32 %v2307, %v2465
      %v2554 = vadd.f32 %v2308, %v2470
      %v2555 = vadd.f32 %v2309, %v2473
      %v2556 = vadd.f32 %v2310, %v2478
      %v2557 = vadd.f32 %v2311, %v2481
      %v2558 = vadd.f32 %v2312, %v2486
      %v2559 = vadd.f32 %v2313, %v2489
      %v2560 = vadd.f32 %v2314, %v2494
      %v2561 = vadd.f32 %v2315, %v2497
      %v2562 = vadd.f32 %v2316, %v2502
      %v2563 = vadd.f32 %v2317, %v2505
      %v2564 = vadd.f32 %v2318, %v2510
      %v2565 = vadd.f32 %v2319, %v2513
      %v2566 = vadd.f32 %v2320, %v2518
      %v2567 = vadd.f32 %v2321, %v2521
      %v2568 = vadd.f32 %v2322, %v2526
      %v2569 = vadd.f32 %v2323, %v2529
      %v2570 = vadd.f32 %v2324, %v2534
      %v2571 = vadd.f32 %v2325, %v2537
      %2572 = vst.msk [vmem:[#allocation3] sm:$0xff] %vm423, %v2540
      %2573 = vst.msk [vmem:[#allocation3 + $0x8] sm:$0xff] %vm423, %v2541
      %2574 = vst.msk [vmem:[#allocation3 + $0x10] sm:$0xff] %vm423, %v2542
      %2575 = vst.msk [vmem:[#allocation3 + $0x18] sm:$0xff] %vm423, %v2543
      %2576 = vst.msk [vmem:[#allocation3 + $0x20] sm:$0xff] %vm423, %v2544
      %2577 = vst.msk [vmem:[#allocation3 + $0x28] sm:$0xff] %vm423, %v2545
      %2578 = vst.msk [vmem:[#allocation3 + $0x30] sm:$0xff] %vm423, %v2546
      %2579 = vst.msk [vmem:[#allocation3 + $0x38] sm:$0xff] %vm423, %v2547
      %2580 = vst.msk [vmem:[#allocation3 + $0x40] sm:$0xff] %vm423, %v2548
      %2581 = vst.msk [vmem:[#allocation3 + $0x48] sm:$0xff] %vm423, %v2549
      %2582 = vst.msk [vmem:[#allocation3 + $0x50] sm:$0xff] %vm423, %v2550
      %2583 = vst.msk [vmem:[#allocation3 + $0x58] sm:$0xff] %vm423, %v2551
      %2584 = vst.msk [vmem:[#allocation3 + $0x60] sm:$0xff] %vm423, %v2552
      %2585 = vst.msk [vmem:[#allocation3 + $0x68] sm:$0xff] %vm423, %v2553
      %2586 = vst.msk [vmem:[#allocation3 + $0x70] sm:$0xff] %vm423, %v2554
      %2587 = vst.msk [vmem:[#allocation3 + $0x78] sm:$0xff] %vm423, %v2555
      %2588 = vst.msk [vmem:[#allocation3 + $0x80] sm:$0xff] %vm423, %v2556
      %2589 = vst.msk [vmem:[#allocation3 + $0x88] sm:$0xff] %vm423, %v2557
      %2590 = vst.msk [vmem:[#allocation3 + $0x90] sm:$0xff] %vm423, %v2558
      %2591 = vst.msk [vmem:[#allocation3 + $0x98] sm:$0xff] %vm423, %v2559
      %2592 = vst.msk [vmem:[#allocation3 + $0xa0] sm:$0xff] %vm423, %v2560
      %2593 = vst.msk [vmem:[#allocation3 + $0xa8] sm:$0xff] %vm423, %v2561
      %2594 = vst.msk [vmem:[#allocation3 + $0xb0] sm:$0xff] %vm423, %v2562
      %2595 = vst.msk [vmem:[#allocation3 + $0xb8] sm:$0xff] %vm423, %v2563
      %2596 = vst.msk [vmem:[#allocation3 + $0xc0] sm:$0xff] %vm423, %v2564
      %2597 = vst.msk [vmem:[#allocation3 + $0xc8] sm:$0xff] %vm423, %v2565
      %2598 = vst.msk [vmem:[#allocation3 + $0xd0] sm:$0xff] %vm423, %v2566
      %2599 = vst.msk [vmem:[#allocation3 + $0xd8] sm:$0xff] %vm423, %v2567
      %2600 = vst.msk [vmem:[#allocation3 + $0xe0] sm:$0xff] %vm423, %v2568
      %2601 = vst.msk [vmem:[#allocation3 + $0xe8] sm:$0xff] %vm423, %v2569
      %2602 = vst.msk [vmem:[#allocation3 + $0xf0] sm:$0xff] %vm423, %v2570
      %2603 = vst.msk [vmem:[#allocation3 + $0xf8] sm:$0xff] %vm423, %v2571
      %s2604 = scalar_lea.vmem [#allocation2], 48
      %v2605 = vld [vmem:[%s2604] sm:$0xff]
      %v2606 = vld [vmem:[%s2604 + $0x8] sm:$0xff]
      %v2607 = vld [vmem:[%s2604 + $0x18] sm:$0xff]
      %v2608 = vld [vmem:[%s2604 + $0x20] sm:$0xff]
      %v2609 = vld [vmem:[%s2604 + $0x30] sm:$0xff]
      %v2610 = vld [vmem:[%s2604 + $0x38] sm:$0xff]
      %v2611 = vld [vmem:[%s2604 + $0x48] sm:$0xff]
      %v2612 = vld [vmem:[%s2604 + $0x50] sm:$0xff]
      %v2613 = vld [vmem:[%s2604 + $0x60] sm:$0xff]
      %v2614 = vld [vmem:[%s2604 + $0x68] sm:$0xff]
      %v2615 = vld [vmem:[%s2604 + $0x78] sm:$0xff]
      %v2616 = vld [vmem:[%s2604 + $0x80] sm:$0xff]
      %v2617 = vld [vmem:[%s2604 + $0x90] sm:$0xff]
      %v2618 = vld [vmem:[%s2604 + $0x98] sm:$0xff]
      %v2619 = vld [vmem:[%s2604 + $0xa8] sm:$0xff]
      %v2620 = vld [vmem:[%s2604 + $0xb0] sm:$0xff]
      %v2621 = vld [vmem:[%s2604 + $0xc0] sm:$0xff]
      %v2622 = vld [vmem:[%s2604 + $0xc8] sm:$0xff]
      %v2623 = vld [vmem:[%s2604 + $0xd8] sm:$0xff]
      %v2624 = vld [vmem:[%s2604 + $0xe0] sm:$0xff]
      %v2625 = vld [vmem:[%s2604 + $0xf0] sm:$0xff]
      %v2626 = vld [vmem:[%s2604 + $0xf8] sm:$0xff]
      %v2627 = vld [vmem:[%s2604 + $0x108] sm:$0xff]
      %v2628 = vld [vmem:[%s2604 + $0x110] sm:$0xff]
      %v2629 = vld [vmem:[%s2604 + $0x120] sm:$0xff]
      %v2630 = vld [vmem:[%s2604 + $0x128] sm:$0xff]
      %v2631 = vld [vmem:[%s2604 + $0x138] sm:$0xff]
      %v2632 = vld [vmem:[%s2604 + $0x140] sm:$0xff]
      %v2633 = vld [vmem:[%s2604 + $0x150] sm:$0xff]
      %v2634 = vld [vmem:[%s2604 + $0x158] sm:$0xff]
      %v2635 = vld [vmem:[%s2604 + $0x168] sm:$0xff]
      %v2636 = vld [vmem:[%s2604 + $0x170] sm:$0xff]
      %v2637 = vpack.c.bf16 %v2606, %v2605
      %v2638 = vpack.c.bf16 %v2608, %v2607
      %v2639 = vpack.c.bf16 %v2610, %v2609
      %v2640 = vpack.c.bf16 %v2612, %v2611
      %v2641 = vpack.c.bf16 %v2614, %v2613
      %v2642 = vpack.c.bf16 %v2616, %v2615
      %v2643 = vpack.c.bf16 %v2618, %v2617
      %v2644 = vpack.c.bf16 %v2620, %v2619
      %v2645 = vpack.c.bf16 %v2622, %v2621
      %v2646 = vpack.c.bf16 %v2624, %v2623
      %v2647 = vpack.c.bf16 %v2626, %v2625
      %v2648 = vpack.c.bf16 %v2628, %v2627
      %v2649 = vpack.c.bf16 %v2630, %v2629
      %v2650 = vpack.c.bf16 %v2632, %v2631
      %v2651 = vpack.c.bf16 %v2634, %v2633
      %v2652 = vpack.c.bf16 %v2636, %v2635
      %v2653 = vld [vmem:[#allocation3] sm:$0xff]
      %v2654 = vld [vmem:[#allocation3 + $0x8] sm:$0xff]
      %v2655 = vld [vmem:[#allocation3 + $0x10] sm:$0xff]
      %v2656 = vld [vmem:[#allocation3 + $0x18] sm:$0xff]
      %v2657 = vld [vmem:[#allocation3 + $0x20] sm:$0xff]
      %v2658 = vld [vmem:[#allocation3 + $0x28] sm:$0xff]
      %v2659 = vld [vmem:[#allocation3 + $0x30] sm:$0xff]
      %v2660 = vld [vmem:[#allocation3 + $0x38] sm:$0xff]
      %v2661 = vld [vmem:[#allocation3 + $0x40] sm:$0xff]
      %v2662 = vld [vmem:[#allocation3 + $0x48] sm:$0xff]
      %v2663 = vld [vmem:[#allocation3 + $0x50] sm:$0xff]
      %v2664 = vld [vmem:[#allocation3 + $0x58] sm:$0xff]
      %v2665 = vld [vmem:[#allocation3 + $0x60] sm:$0xff]
      %v2666 = vld [vmem:[#allocation3 + $0x68] sm:$0xff]
      %v2667 = vld [vmem:[#allocation3 + $0x70] sm:$0xff]
      %v2668 = vld [vmem:[#allocation3 + $0x78] sm:$0xff]
      %v2669 = vld [vmem:[#allocation3 + $0x80] sm:$0xff]
      %v2670 = vld [vmem:[#allocation3 + $0x88] sm:$0xff]
      %v2671 = vld [vmem:[#allocation3 + $0x90] sm:$0xff]
      %v2672 = vld [vmem:[#allocation3 + $0x98] sm:$0xff]
      %v2673 = vld [vmem:[#allocation3 + $0xa0] sm:$0xff]
      %v2674 = vld [vmem:[#allocation3 + $0xa8] sm:$0xff]
      %v2675 = vld [vmem:[#allocation3 + $0xb0] sm:$0xff]
      %v2676 = vld [vmem:[#allocation3 + $0xb8] sm:$0xff]
      %v2677 = vld [vmem:[#allocation3 + $0xc0] sm:$0xff]
      %v2678 = vld [vmem:[#allocation3 + $0xc8] sm:$0xff]
      %v2679 = vld [vmem:[#allocation3 + $0xd0] sm:$0xff]
      %v2680 = vld [vmem:[#allocation3 + $0xd8] sm:$0xff]
      %v2681 = vld [vmem:[#allocation3 + $0xe0] sm:$0xff]
      %v2682 = vld [vmem:[#allocation3 + $0xe8] sm:$0xff]
      %v2683 = vld [vmem:[#allocation3 + $0xf0] sm:$0xff]
      %v2684 = vld [vmem:[#allocation3 + $0xf8] sm:$0xff]
      %s2685 = scalar_lea.vmem %s3, 12
      %v2686 = vld [vmem:[%s2685] sm:$0x3]
      %v2688 = vsel %vm334, %v2637, 0
      %v2691 = vsel %vm334, %v2638, 0
      %v2694 = vsel %vm334, %v2639, 0
      %v2697 = vsel %vm334, %v2640, 0
      %v2700 = vsel %vm334, %v2641, 0
      %v2703 = vsel %vm334, %v2642, 0
      %v2706 = vsel %vm334, %v2643, 0
      %v2709 = vsel %vm334, %v2644, 0
      %v2712 = vsel %vm334, %v2645, 0
      %v2715 = vsel %vm334, %v2646, 0
      %v2718 = vsel %vm334, %v2647, 0
      %v2721 = vsel %vm334, %v2648, 0
      %v2724 = vsel %vm334, %v2649, 0
      %v2727 = vsel %vm334, %v2650, 0
      %v2730 = vsel %vm334, %v2651, 0
      %v2733 = vsel %vm334, %v2652, 0
      %v2736 = vsel %vm585, %v2686, 0
      %2738 = vmatprep.subr.bf16.mxu0 0
      %2739 = vmatpush1.bf16.msra.mxu0 %v2736
      %2740 = vmatprep.subr.bf16.mxu0 0
      %2741 = vmatpush1.bf16.msra.mxu0 0
      %2742 = vmatprep.subr.bf16.mxu0 0
      %2743 = vmatpush1.bf16.msra.mxu0 0
      %2744 = vmatprep.subr.bf16.mxu0 0
      %2745 = vmatpush1.bf16.msra.mxu0 0
      %2746 = vmatprep.subr.bf16.mxu0 0
      %2747 = vmatpush1.bf16.msra.mxu0 0
      %2748 = vmatprep.subr.bf16.mxu0 0
      %2749 = vmatpush1.bf16.msra.mxu0 0
      %2750 = vmatprep.subr.bf16.mxu0 0
      %2751 = vmatpush1.bf16.msra.mxu0 0
      %2752 = vmatprep.subr.bf16.mxu0 0
      %2753 = vmatpush1.bf16.msra.mxu0 0
      %2754 = vmatprep.subr.bf16.mxu0 0
      %2755 = vmatpush1.bf16.msra.mxu0 0
      %2756 = vmatprep.subr.bf16.mxu0 0
      %2757 = vmatpush1.bf16.msra.mxu0 0
      %2758 = vmatprep.subr.bf16.mxu0 0
      %2759 = vmatpush1.bf16.msra.mxu0 0
      %2760 = vmatprep.subr.bf16.mxu0 0
      %2761 = vmatpush1.bf16.msra.mxu0 0
      %2762 = vmatprep.subr.bf16.mxu0 0
      %2763 = vmatpush1.bf16.msra.mxu0 0
      %2764 = vmatprep.subr.bf16.mxu0 0
      %2765 = vmatpush1.bf16.msra.mxu0 0
      %2766 = vmatprep.subr.bf16.mxu0 0
      %2767 = vmatpush1.bf16.msra.mxu0 0
      %2768 = vmatprep.subr.bf16.mxu0 0
      %2769 = vmatpush1.bf16.msra.mxu0 0
      %2770 = vmatprep.mubr.bf16.mxu0 0
      %2771 = vmatmul.mubr.bf16.gmra.mrb[0].mxu0 %v2688
      %v2772 = vpop.f32.mrb[0].mxu0
      %v2773 = vadd.f32 0.0, %v2772
      %v2774 = vpop.f32.mrb[0].mxu0
      %v2775 = vpop.f32.mrb[0].mxu0
      %v2776 = vadd.f32 0.0, %v2775
      %v2777 = vpop.f32.mrb[0].mxu0
      %2778 = vmatprep.mubr.bf16.mxu0 0
      %2779 = vmatmul.mubr.bf16.gmra.mrb[0].mxu0 %v2691
      %v2780 = vpop.f32.mrb[0].mxu0
      %v2781 = vadd.f32 0.0, %v2780
      %v2782 = vpop.f32.mrb[0].mxu0
      %v2783 = vpop.f32.mrb[0].mxu0
      %v2784 = vadd.f32 0.0, %v2783
      %v2785 = vpop.f32.mrb[0].mxu0
      %2786 = vmatprep.mubr.bf16.mxu0 0
      %2787 = vmatmul.mubr.bf16.gmra.mrb[0].mxu0 %v2694
      %v2788 = vpop.f32.mrb[0].mxu0
      %v2789 = vadd.f32 0.0, %v2788
      %v2790 = vpop.f32.mrb[0].mxu0
      %v2791 = vpop.f32.mrb[0].mxu0
      %v2792 = vadd.f32 0.0, %v2791
      %v2793 = vpop.f32.mrb[0].mxu0
      %2794 = vmatprep.mubr.bf16.mxu0 0
      %2795 = vmatmul.mubr.bf16.gmra.mrb[0].mxu0 %v2697
      %v2796 = vpop.f32.mrb[0].mxu0
      %v2797 = vadd.f32 0.0, %v2796
      %v2798 = vpop.f32.mrb[0].mxu0
      %v2799 = vpop.f32.mrb[0].mxu0
      %v2800 = vadd.f32 0.0, %v2799
      %v2801 = vpop.f32.mrb[0].mxu0
      %2802 = vmatprep.mubr.bf16.mxu0 0
      %2803 = vmatmul.mubr.bf16.gmra.mrb[0].mxu0 %v2700
      %v2804 = vpop.f32.mrb[0].mxu0
      %v2805 = vadd.f32 0.0, %v2804
      %v2806 = vpop.f32.mrb[0].mxu0
      %v2807 = vpop.f32.mrb[0].mxu0
      %v2808 = vadd.f32 0.0, %v2807
      %v2809 = vpop.f32.mrb[0].mxu0
      %2810 = vmatprep.mubr.bf16.mxu0 0
      %2811 = vmatmul.mubr.bf16.gmra.mrb[0].mxu0 %v2703
      %v2812 = vpop.f32.mrb[0].mxu0
      %v2813 = vadd.f32 0.0, %v2812
      %v2814 = vpop.f32.mrb[0].mxu0
      %v2815 = vpop.f32.mrb[0].mxu0
      %v2816 = vadd.f32 0.0, %v2815
      %v2817 = vpop.f32.mrb[0].mxu0
      %2818 = vmatprep.mubr.bf16.mxu0 0
      %2819 = vmatmul.mubr.bf16.gmra.mrb[0].mxu0 %v2706
      %v2820 = vpop.f32.mrb[0].mxu0
      %v2821 = vadd.f32 0.0, %v2820
      %v2822 = vpop.f32.mrb[0].mxu0
      %v2823 = vpop.f32.mrb[0].mxu0
      %v2824 = vadd.f32 0.0, %v2823
      %v2825 = vpop.f32.mrb[0].mxu0
      %2826 = vmatprep.mubr.bf16.mxu0 0
      %2827 = vmatmul.mubr.bf16.gmra.mrb[0].mxu0 %v2709
      %v2828 = vpop.f32.mrb[0].mxu0
      %v2829 = vadd.f32 0.0, %v2828
      %v2830 = vpop.f32.mrb[0].mxu0
      %v2831 = vpop.f32.mrb[0].mxu0
      %v2832 = vadd.f32 0.0, %v2831
      %v2833 = vpop.f32.mrb[0].mxu0
      %2834 = vmatprep.mubr.bf16.mxu0 0
      %2835 = vmatmul.mubr.bf16.gmra.mrb[0].mxu0 %v2712
      %v2836 = vpop.f32.mrb[0].mxu0
      %v2837 = vadd.f32 0.0, %v2836
      %v2838 = vpop.f32.mrb[0].mxu0
      %v2839 = vpop.f32.mrb[0].mxu0
      %v2840 = vadd.f32 0.0, %v2839
      %v2841 = vpop.f32.mrb[0].mxu0
      %2842 = vmatprep.mubr.bf16.mxu0 0
      %2843 = vmatmul.mubr.bf16.gmra.mrb[0].mxu0 %v2715
      %v2844 = vpop.f32.mrb[0].mxu0
      %v2845 = vadd.f32 0.0, %v2844
      %v2846 = vpop.f32.mrb[0].mxu0
      %v2847 = vpop.f32.mrb[0].mxu0
      %v2848 = vadd.f32 0.0, %v2847
      %v2849 = vpop.f32.mrb[0].mxu0
      %2850 = vmatprep.mubr.bf16.mxu0 0
      %2851 = vmatmul.mubr.bf16.gmra.mrb[0].mxu0 %v2718
      %v2852 = vpop.f32.mrb[0].mxu0
      %v2853 = vadd.f32 0.0, %v2852
      %v2854 = vpop.f32.mrb[0].mxu0
      %v2855 = vpop.f32.mrb[0].mxu0
      %v2856 = vadd.f32 0.0, %v2855
      %v2857 = vpop.f32.mrb[0].mxu0
      %2858 = vmatprep.mubr.bf16.mxu0 0
      %2859 = vmatmul.mubr.bf16.gmra.mrb[0].mxu0 %v2721
      %v2860 = vpop.f32.mrb[0].mxu0
      %v2861 = vadd.f32 0.0, %v2860
      %v2862 = vpop.f32.mrb[0].mxu0
      %v2863 = vpop.f32.mrb[0].mxu0
      %v2864 = vadd.f32 0.0, %v2863
      %v2865 = vpop.f32.mrb[0].mxu0
      %2866 = vmatprep.mubr.bf16.mxu0 0
      %2867 = vmatmul.mubr.bf16.gmra.mrb[0].mxu0 %v2724
      %v2868 = vpop.f32.mrb[0].mxu0
      %v2869 = vadd.f32 0.0, %v2868
      %v2870 = vpop.f32.mrb[0].mxu0
      %v2871 = vpop.f32.mrb[0].mxu0
      %v2872 = vadd.f32 0.0, %v2871
      %v2873 = vpop.f32.mrb[0].mxu0
      %2874 = vmatprep.mubr.bf16.mxu0 0
      %2875 = vmatmul.mubr.bf16.gmra.mrb[0].mxu0 %v2727
      %v2876 = vpop.f32.mrb[0].mxu0
      %v2877 = vadd.f32 0.0, %v2876
      %v2878 = vpop.f32.mrb[0].mxu0
      %v2879 = vpop.f32.mrb[0].mxu0
      %v2880 = vadd.f32 0.0, %v2879
      %v2881 = vpop.f32.mrb[0].mxu0
      %2882 = vmatprep.mubr.bf16.mxu0 0
      %2883 = vmatmul.mubr.bf16.gmra.mrb[0].mxu0 %v2730
      %v2884 = vpop.f32.mrb[0].mxu0
      %v2885 = vadd.f32 0.0, %v2884
      %v2886 = vpop.f32.mrb[0].mxu0
      %v2887 = vpop.f32.mrb[0].mxu0
      %v2888 = vadd.f32 0.0, %v2887
      %v2889 = vpop.f32.mrb[0].mxu0
      %2890 = vmatprep.mubr.bf16.mxu0 0
      %2891 = vmatmul.mubr.bf16.gmra.mrb[0].mxu0 %v2733
      %v2892 = vpop.f32.mrb[0].mxu0
      %v2893 = vadd.f32 0.0, %v2892
      %v2894 = vpop.f32.mrb[0].mxu0
      %v2895 = vpop.f32.mrb[0].mxu0
      %v2896 = vadd.f32 0.0, %v2895
      %v2897 = vpop.f32.mrb[0].mxu0
      %2898 = vdwg.mxu0
      %v2899 = vadd.f32 %v2653, %v2773
      %v2900 = vadd.f32 %v2654, %v2776
      %v2901 = vadd.f32 %v2655, %v2781
      %v2902 = vadd.f32 %v2656, %v2784
      %v2903 = vadd.f32 %v2657, %v2789
      %v2904 = vadd.f32 %v2658, %v2792
      %v2905 = vadd.f32 %v2659, %v2797
      %v2906 = vadd.f32 %v2660, %v2800
      %v2907 = vadd.f32 %v2661, %v2805
      %v2908 = vadd.f32 %v2662, %v2808
      %v2909 = vadd.f32 %v2663, %v2813
      %v2910 = vadd.f32 %v2664, %v2816
      %v2911 = vadd.f32 %v2665, %v2821
      %v2912 = vadd.f32 %v2666, %v2824
      %v2913 = vadd.f32 %v2667, %v2829
      %v2914 = vadd.f32 %v2668, %v2832
      %v2915 = vadd.f32 %v2669, %v2837
      %v2916 = vadd.f32 %v2670, %v2840
      %v2917 = vadd.f32 %v2671, %v2845
      %v2918 = vadd.f32 %v2672, %v2848
      %v2919 = vadd.f32 %v2673, %v2853
      %v2920 = vadd.f32 %v2674, %v2856
      %v2921 = vadd.f32 %v2675, %v2861
      %v2922 = vadd.f32 %v2676, %v2864
      %v2923 = vadd.f32 %v2677, %v2869
      %v2924 = vadd.f32 %v2678, %v2872
      %v2925 = vadd.f32 %v2679, %v2877
      %v2926 = vadd.f32 %v2680, %v2880
      %v2927 = vadd.f32 %v2681, %v2885
      %v2928 = vadd.f32 %v2682, %v2888
      %v2929 = vadd.f32 %v2683, %v2893
      %v2930 = vadd.f32 %v2684, %v2896
      %2931 = vst.msk [vmem:[#allocation3] sm:$0xff] %vm423, %v2899
      %2932 = vst.msk [vmem:[#allocation3 + $0x8] sm:$0xff] %vm423, %v2900
      %2933 = vst.msk [vmem:[#allocation3 + $0x10] sm:$0xff] %vm423, %v2901
      %2934 = vst.msk [vmem:[#allocation3 + $0x18] sm:$0xff] %vm423, %v2902
      %2935 = vst.msk [vmem:[#allocation3 + $0x20] sm:$0xff] %vm423, %v2903
      %2936 = vst.msk [vmem:[#allocation3 + $0x28] sm:$0xff] %vm423, %v2904
      %2937 = vst.msk [vmem:[#allocation3 + $0x30] sm:$0xff] %vm423, %v2905
      %2938 = vst.msk [vmem:[#allocation3 + $0x38] sm:$0xff] %vm423, %v2906
      %2939 = vst.msk [vmem:[#allocation3 + $0x40] sm:$0xff] %vm423, %v2907
      %2940 = vst.msk [vmem:[#allocation3 + $0x48] sm:$0xff] %vm423, %v2908
      %2941 = vst.msk [vmem:[#allocation3 + $0x50] sm:$0xff] %vm423, %v2909
      %2942 = vst.msk [vmem:[#allocation3 + $0x58] sm:$0xff] %vm423, %v2910
      %2943 = vst.msk [vmem:[#allocation3 + $0x60] sm:$0xff] %vm423, %v2911
      %2944 = vst.msk [vmem:[#allocation3 + $0x68] sm:$0xff] %vm423, %v2912
      %2945 = vst.msk [vmem:[#allocation3 + $0x70] sm:$0xff] %vm423, %v2913
      %2946 = vst.msk [vmem:[#allocation3 + $0x78] sm:$0xff] %vm423, %v2914
      %2947 = vst.msk [vmem:[#allocation3 + $0x80] sm:$0xff] %vm423, %v2915
      %2948 = vst.msk [vmem:[#allocation3 + $0x88] sm:$0xff] %vm423, %v2916
      %2949 = vst.msk [vmem:[#allocation3 + $0x90] sm:$0xff] %vm423, %v2917
      %2950 = vst.msk [vmem:[#allocation3 + $0x98] sm:$0xff] %vm423, %v2918
      %2951 = vst.msk [vmem:[#allocation3 + $0xa0] sm:$0xff] %vm423, %v2919
      %2952 = vst.msk [vmem:[#allocation3 + $0xa8] sm:$0xff] %vm423, %v2920
      %2953 = vst.msk [vmem:[#allocation3 + $0xb0] sm:$0xff] %vm423, %v2921
      %2954 = vst.msk [vmem:[#allocation3 + $0xb8] sm:$0xff] %vm423, %v2922
      %2955 = vst.msk [vmem:[#allocation3 + $0xc0] sm:$0xff] %vm423, %v2923
      %2956 = vst.msk [vmem:[#allocation3 + $0xc8] sm:$0xff] %vm423, %v2924
      %2957 = vst.msk [vmem:[#allocation3 + $0xd0] sm:$0xff] %vm423, %v2925
      %2958 = vst.msk [vmem:[#allocation3 + $0xd8] sm:$0xff] %vm423, %v2926
      %2959 = vst.msk [vmem:[#allocation3 + $0xe0] sm:$0xff] %vm423, %v2927
      %2960 = vst.msk [vmem:[#allocation3 + $0xe8] sm:$0xff] %vm423, %v2928
      %2961 = vst.msk [vmem:[#allocation3 + $0xf0] sm:$0xff] %vm423, %v2929
      %2962 = vst.msk [vmem:[#allocation3 + $0xf8] sm:$0xff] %vm423, %v2930
      %v2963 = vld [vmem:[%s2604 + $0x1] sm:$0xff]
      %v2964 = vld [vmem:[%s2604 + $0x9] sm:$0xff]
      %v2965 = vld [vmem:[%s2604 + $0x19] sm:$0xff]
      %v2966 = vld [vmem:[%s2604 + $0x21] sm:$0xff]
      %v2967 = vld [vmem:[%s2604 + $0x31] sm:$0xff]
      %v2968 = vld [vmem:[%s2604 + $0x39] sm:$0xff]
      %v2969 = vld [vmem:[%s2604 + $0x49] sm:$0xff]
      %v2970 = vld [vmem:[%s2604 + $0x51] sm:$0xff]
      %v2971 = vld [vmem:[%s2604 + $0x61] sm:$0xff]
      %v2972 = vld [vmem:[%s2604 + $0x69] sm:$0xff]
      %v2973 = vld [vmem:[%s2604 + $0x79] sm:$0xff]
      %v2974 = vld [vmem:[%s2604 + $0x81] sm:$0xff]
      %v2975 = vld [vmem:[%s2604 + $0x91] sm:$0xff]
      %v2976 = vld [vmem:[%s2604 + $0x99] sm:$0xff]
      %v2977 = vld [vmem:[%s2604 + $0xa9] sm:$0xff]
      %v2978 = vld [vmem:[%s2604 + $0xb1] sm:$0xff]
      %v2979 = vld [vmem:[%s2604 + $0xc1] sm:$0xff]
      %v2980 = vld [vmem:[%s2604 + $0xc9] sm:$0xff]
      %v2981 = vld [vmem:[%s2604 + $0xd9] sm:$0xff]
      %v2982 = vld [vmem:[%s2604 + $0xe1] sm:$0xff]
      %v2983 = vld [vmem:[%s2604 + $0xf1] sm:$0xff]
      %v2984 = vld [vmem:[%s2604 + $0xf9] sm:$0xff]
      %v2985 = vld [vmem:[%s2604 + $0x109] sm:$0xff]
      %v2986 = vld [vmem:[%s2604 + $0x111] sm:$0xff]
      %v2987 = vld [vmem:[%s2604 + $0x121] sm:$0xff]
      %v2988 = vld [vmem:[%s2604 + $0x129] sm:$0xff]
      %v2989 = vld [vmem:[%s2604 + $0x139] sm:$0xff]
      %v2990 = vld [vmem:[%s2604 + $0x141] sm:$0xff]
      %v2991 = vld [vmem:[%s2604 + $0x151] sm:$0xff]
      %v2992 = vld [vmem:[%s2604 + $0x159] sm:$0xff]
      %v2993 = vld [vmem:[%s2604 + $0x169] sm:$0xff]
      %v2994 = vld [vmem:[%s2604 + $0x171] sm:$0xff]
      %v2995 = vpack.c.bf16 %v2964, %v2963
      %v2996 = vpack.c.bf16 %v2966, %v2965
      %v2997 = vpack.c.bf16 %v2968, %v2967
      %v2998 = vpack.c.bf16 %v2970, %v2969
      %v2999 = vpack.c.bf16 %v2972, %v2971
      %v3000 = vpack.c.bf16 %v2974, %v2973
      %v3001 = vpack.c.bf16 %v2976, %v2975
      %v3002 = vpack.c.bf16 %v2978, %v2977
      %v3003 = vpack.c.bf16 %v2980, %v2979
      %v3004 = vpack.c.bf16 %v2982, %v2981
      %v3005 = vpack.c.bf16 %v2984, %v2983
      %v3006 = vpack.c.bf16 %v2986, %v2985
      %v3007 = vpack.c.bf16 %v2988, %v2987
      %v3008 = vpack.c.bf16 %v2990, %v2989
      %v3009 = vpack.c.bf16 %v2992, %v2991
      %v3010 = vpack.c.bf16 %v2994, %v2993
      %v3011 = vld [vmem:[#allocation3] sm:$0xff]
      %v3012 = vld [vmem:[#allocation3 + $0x8] sm:$0xff]
      %v3013 = vld [vmem:[#allocation3 + $0x10] sm:$0xff]
      %v3014 = vld [vmem:[#allocation3 + $0x18] sm:$0xff]
      %v3015 = vld [vmem:[#allocation3 + $0x20] sm:$0xff]
      %v3016 = vld [vmem:[#allocation3 + $0x28] sm:$0xff]
      %v3017 = vld [vmem:[#allocation3 + $0x30] sm:$0xff]
      %v3018 = vld [vmem:[#allocation3 + $0x38] sm:$0xff]
      %v3019 = vld [vmem:[#allocation3 + $0x40] sm:$0xff]
      %v3020 = vld [vmem:[#allocation3 + $0x48] sm:$0xff]
      %v3021 = vld [vmem:[#allocation3 + $0x50] sm:$0xff]
      %v3022 = vld [vmem:[#allocation3 + $0x58] sm:$0xff]
      %v3023 = vld [vmem:[#allocation3 + $0x60] sm:$0xff]
      %v3024 = vld [vmem:[#allocation3 + $0x68] sm:$0xff]
      %v3025 = vld [vmem:[#allocation3 + $0x70] sm:$0xff]
      %v3026 = vld [vmem:[#allocation3 + $0x78] sm:$0xff]
      %v3027 = vld [vmem:[#allocation3 + $0x80] sm:$0xff]
      %v3028 = vld [vmem:[#allocation3 + $0x88] sm:$0xff]
      %v3029 = vld [vmem:[#allocation3 + $0x90] sm:$0xff]
      %v3030 = vld [vmem:[#allocation3 + $0x98] sm:$0xff]
      %v3031 = vld [vmem:[#allocation3 + $0xa0] sm:$0xff]
      %v3032 = vld [vmem:[#allocation3 + $0xa8] sm:$0xff]
      %v3033 = vld [vmem:[#allocation3 + $0xb0] sm:$0xff]
      %v3034 = vld [vmem:[#allocation3 + $0xb8] sm:$0xff]
      %v3035 = vld [vmem:[#allocation3 + $0xc0] sm:$0xff]
      %v3036 = vld [vmem:[#allocation3 + $0xc8] sm:$0xff]
      %v3037 = vld [vmem:[#allocation3 + $0xd0] sm:$0xff]
      %v3038 = vld [vmem:[#allocation3 + $0xd8] sm:$0xff]
      %v3039 = vld [vmem:[#allocation3 + $0xe0] sm:$0xff]
      %v3040 = vld [vmem:[#allocation3 + $0xe8] sm:$0xff]
      %v3041 = vld [vmem:[#allocation3 + $0xf0] sm:$0xff]
      %v3042 = vld [vmem:[#allocation3 + $0xf8] sm:$0xff]
      %s3043 = scalar_lea.vmem %s3, 14
      %v3044 = vld [vmem:[%s3043] sm:$0x3]
      %v3046 = vsel %vm334, %v2995, 0
      %v3049 = vsel %vm334, %v2996, 0
      %v3052 = vsel %vm334, %v2997, 0
      %v3055 = vsel %vm334, %v2998, 0
      %v3058 = vsel %vm334, %v2999, 0
      %v3061 = vsel %vm334, %v3000, 0
      %v3064 = vsel %vm334, %v3001, 0
      %v3067 = vsel %vm334, %v3002, 0
      %v3070 = vsel %vm334, %v3003, 0
      %v3073 = vsel %vm334, %v3004, 0
      %v3076 = vsel %vm334, %v3005, 0
      %v3079 = vsel %vm334, %v3006, 0
      %v3082 = vsel %vm334, %v3007, 0
      %v3085 = vsel %vm334, %v3008, 0
      %v3088 = vsel %vm334, %v3009, 0
      %v3091 = vsel %vm334, %v3010, 0
      %v3094 = vsel %vm585, %v3044, 0
      %3096 = vmatprep.subr.bf16.mxu0 0
      %3097 = vmatpush1.bf16.msra.mxu0 %v3094
      %3098 = vmatprep.subr.bf16.mxu0 0
      %3099 = vmatpush1.bf16.msra.mxu0 0
      %3100 = vmatprep.subr.bf16.mxu0 0
      %3101 = vmatpush1.bf16.msra.mxu0 0
      %3102 = vmatprep.subr.bf16.mxu0 0
      %3103 = vmatpush1.bf16.msra.mxu0 0
      %3104 = vmatprep.subr.bf16.mxu0 0
      %3105 = vmatpush1.bf16.msra.mxu0 0
      %3106 = vmatprep.subr.bf16.mxu0 0
      %3107 = vmatpush1.bf16.msra.mxu0 0
      %3108 = vmatprep.subr.bf16.mxu0 0
      %3109 = vmatpush1.bf16.msra.mxu0 0
      %3110 = vmatprep.subr.bf16.mxu0 0
      %3111 = vmatpush1.bf16.msra.mxu0 0
      %3112 = vmatprep.subr.bf16.mxu0 0
      %3113 = vmatpush1.bf16.msra.mxu0 0
      %3114 = vmatprep.subr.bf16.mxu0 0
      %3115 = vmatpush1.bf16.msra.mxu0 0
      %3116 = vmatprep.subr.bf16.mxu0 0
      %3117 = vmatpush1.bf16.msra.mxu0 0
      %3118 = vmatprep.subr.bf16.mxu0 0
      %3119 = vmatpush1.bf16.msra.mxu0 0
      %3120 = vmatprep.subr.bf16.mxu0 0
      %3121 = vmatpush1.bf16.msra.mxu0 0
      %3122 = vmatprep.subr.bf16.mxu0 0
      %3123 = vmatpush1.bf16.msra.mxu0 0
      %3124 = vmatprep.subr.bf16.mxu0 0
      %3125 = vmatpush1.bf16.msra.mxu0 0
      %3126 = vmatprep.subr.bf16.mxu0 0
      %3127 = vmatpush1.bf16.msra.mxu0 0
      %3128 = vmatprep.mubr.bf16.mxu0 0
      %3129 = vmatmul.mubr.bf16.gmra.mrb[0].mxu0 %v3046
      %v3130 = vpop.f32.mrb[0].mxu0
      %v3131 = vadd.f32 0.0, %v3130
      %v3132 = vpop.f32.mrb[0].mxu0
      %v3133 = vpop.f32.mrb[0].mxu0
      %v3134 = vadd.f32 0.0, %v3133
      %v3135 = vpop.f32.mrb[0].mxu0
      %3136 = vmatprep.mubr.bf16.mxu0 0
      %3137 = vmatmul.mubr.bf16.gmra.mrb[0].mxu0 %v3049
      %v3138 = vpop.f32.mrb[0].mxu0
      %v3139 = vadd.f32 0.0, %v3138
      %v3140 = vpop.f32.mrb[0].mxu0
      %v3141 = vpop.f32.mrb[0].mxu0
      %v3142 = vadd.f32 0.0, %v3141
      %v3143 = vpop.f32.mrb[0].mxu0
      %3144 = vmatprep.mubr.bf16.mxu0 0
      %3145 = vmatmul.mubr.bf16.gmra.mrb[0].mxu0 %v3052
      %v3146 = vpop.f32.mrb[0].mxu0
      %v3147 = vadd.f32 0.0, %v3146
      %v3148 = vpop.f32.mrb[0].mxu0
      %v3149 = vpop.f32.mrb[0].mxu0
      %v3150 = vadd.f32 0.0, %v3149
      %v3151 = vpop.f32.mrb[0].mxu0
      %3152 = vmatprep.mubr.bf16.mxu0 0
      %3153 = vmatmul.mubr.bf16.gmra.mrb[0].mxu0 %v3055
      %v3154 = vpop.f32.mrb[0].mxu0
      %v3155 = vadd.f32 0.0, %v3154
      %v3156 = vpop.f32.mrb[0].mxu0
      %v3157 = vpop.f32.mrb[0].mxu0
      %v3158 = vadd.f32 0.0, %v3157
      %v3159 = vpop.f32.mrb[0].mxu0
      %3160 = vmatprep.mubr.bf16.mxu0 0
      %3161 = vmatmul.mubr.bf16.gmra.mrb[0].mxu0 %v3058
      %v3162 = vpop.f32.mrb[0].mxu0
      %v3163 = vadd.f32 0.0, %v3162
      %v3164 = vpop.f32.mrb[0].mxu0
      %v3165 = vpop.f32.mrb[0].mxu0
      %v3166 = vadd.f32 0.0, %v3165
      %v3167 = vpop.f32.mrb[0].mxu0
      %3168 = vmatprep.mubr.bf16.mxu0 0
      %3169 = vmatmul.mubr.bf16.gmra.mrb[0].mxu0 %v3061
      %v3170 = vpop.f32.mrb[0].mxu0
      %v3171 = vadd.f32 0.0, %v3170
      %v3172 = vpop.f32.mrb[0].mxu0
      %v3173 = vpop.f32.mrb[0].mxu0
      %v3174 = vadd.f32 0.0, %v3173
      %v3175 = vpop.f32.mrb[0].mxu0
      %3176 = vmatprep.mubr.bf16.mxu0 0
      %3177 = vmatmul.mubr.bf16.gmra.mrb[0].mxu0 %v3064
      %v3178 = vpop.f32.mrb[0].mxu0
      %v3179 = vadd.f32 0.0, %v3178
      %v3180 = vpop.f32.mrb[0].mxu0
      %v3181 = vpop.f32.mrb[0].mxu0
      %v3182 = vadd.f32 0.0, %v3181
      %v3183 = vpop.f32.mrb[0].mxu0
      %3184 = vmatprep.mubr.bf16.mxu0 0
      %3185 = vmatmul.mubr.bf16.gmra.mrb[0].mxu0 %v3067
      %v3186 = vpop.f32.mrb[0].mxu0
      %v3187 = vadd.f32 0.0, %v3186
      %v3188 = vpop.f32.mrb[0].mxu0
      %v3189 = vpop.f32.mrb[0].mxu0
      %v3190 = vadd.f32 0.0, %v3189
      %v3191 = vpop.f32.mrb[0].mxu0
      %3192 = vmatprep.mubr.bf16.mxu0 0
      %3193 = vmatmul.mubr.bf16.gmra.mrb[0].mxu0 %v3070
      %v3194 = vpop.f32.mrb[0].mxu0
      %v3195 = vadd.f32 0.0, %v3194
      %v3196 = vpop.f32.mrb[0].mxu0
      %v3197 = vpop.f32.mrb[0].mxu0
      %v3198 = vadd.f32 0.0, %v3197
      %v3199 = vpop.f32.mrb[0].mxu0
      %3200 = vmatprep.mubr.bf16.mxu0 0
      %3201 = vmatmul.mubr.bf16.gmra.mrb[0].mxu0 %v3073
      %v3202 = vpop.f32.mrb[0].mxu0
      %v3203 = vadd.f32 0.0, %v3202
      %v3204 = vpop.f32.mrb[0].mxu0
      %v3205 = vpop.f32.mrb[0].mxu0
      %v3206 = vadd.f32 0.0, %v3205
      %v3207 = vpop.f32.mrb[0].mxu0
      %3208 = vmatprep.mubr.bf16.mxu0 0
      %3209 = vmatmul.mubr.bf16.gmra.mrb[0].mxu0 %v3076
      %v3210 = vpop.f32.mrb[0].mxu0
      %v3211 = vadd.f32 0.0, %v3210
      %v3212 = vpop.f32.mrb[0].mxu0
      %v3213 = vpop.f32.mrb[0].mxu0
      %v3214 = vadd.f32 0.0, %v3213
      %v3215 = vpop.f32.mrb[0].mxu0
      %3216 = vmatprep.mubr.bf16.mxu0 0
      %3217 = vmatmul.mubr.bf16.gmra.mrb[0].mxu0 %v3079
      %v3218 = vpop.f32.mrb[0].mxu0
      %v3219 = vadd.f32 0.0, %v3218
      %v3220 = vpop.f32.mrb[0].mxu0
      %v3221 = vpop.f32.mrb[0].mxu0
      %v3222 = vadd.f32 0.0, %v3221
      %v3223 = vpop.f32.mrb[0].mxu0
      %3224 = vmatprep.mubr.bf16.mxu0 0
      %3225 = vmatmul.mubr.bf16.gmra.mrb[0].mxu0 %v3082
      %v3226 = vpop.f32.mrb[0].mxu0
      %v3227 = vadd.f32 0.0, %v3226
      %v3228 = vpop.f32.mrb[0].mxu0
      %v3229 = vpop.f32.mrb[0].mxu0
      %v3230 = vadd.f32 0.0, %v3229
      %v3231 = vpop.f32.mrb[0].mxu0
      %3232 = vmatprep.mubr.bf16.mxu0 0
      %3233 = vmatmul.mubr.bf16.gmra.mrb[0].mxu0 %v3085
      %v3234 = vpop.f32.mrb[0].mxu0
      %v3235 = vadd.f32 0.0, %v3234
      %v3236 = vpop.f32.mrb[0].mxu0
      %v3237 = vpop.f32.mrb[0].mxu0
      %v3238 = vadd.f32 0.0, %v3237
      %v3239 = vpop.f32.mrb[0].mxu0
      %3240 = vmatprep.mubr.bf16.mxu0 0
      %3241 = vmatmul.mubr.bf16.gmra.mrb[0].mxu0 %v3088
      %v3242 = vpop.f32.mrb[0].mxu0
      %v3243 = vadd.f32 0.0, %v3242
      %v3244 = vpop.f32.mrb[0].mxu0
      %v3245 = vpop.f32.mrb[0].mxu0
      %v3246 = vadd.f32 0.0, %v3245
      %v3247 = vpop.f32.mrb[0].mxu0
      %3248 = vmatprep.mubr.bf16.mxu0 0
      %3249 = vmatmul.mubr.bf16.gmra.mrb[0].mxu0 %v3091
      %v3250 = vpop.f32.mrb[0].mxu0
      %v3251 = vadd.f32 0.0, %v3250
      %v3252 = vpop.f32.mrb[0].mxu0
      %v3253 = vpop.f32.mrb[0].mxu0
      %v3254 = vadd.f32 0.0, %v3253
      %v3255 = vpop.f32.mrb[0].mxu0
      %3256 = vdwg.mxu0
      %v3257 = vadd.f32 %v3011, %v3131
      %v3258 = vadd.f32 %v3012, %v3134
      %v3259 = vadd.f32 %v3013, %v3139
      %v3260 = vadd.f32 %v3014, %v3142
      %v3261 = vadd.f32 %v3015, %v3147
      %v3262 = vadd.f32 %v3016, %v3150
      %v3263 = vadd.f32 %v3017, %v3155
      %v3264 = vadd.f32 %v3018, %v3158
      %v3265 = vadd.f32 %v3019, %v3163
      %v3266 = vadd.f32 %v3020, %v3166
      %v3267 = vadd.f32 %v3021, %v3171
      %v3268 = vadd.f32 %v3022, %v3174
      %v3269 = vadd.f32 %v3023, %v3179
      %v3270 = vadd.f32 %v3024, %v3182
      %v3271 = vadd.f32 %v3025, %v3187
      %v3272 = vadd.f32 %v3026, %v3190
      %v3273 = vadd.f32 %v3027, %v3195
      %v3274 = vadd.f32 %v3028, %v3198
      %v3275 = vadd.f32 %v3029, %v3203
      %v3276 = vadd.f32 %v3030, %v3206
      %v3277 = vadd.f32 %v3031, %v3211
      %v3278 = vadd.f32 %v3032, %v3214
      %v3279 = vadd.f32 %v3033, %v3219
      %v3280 = vadd.f32 %v3034, %v3222
      %v3281 = vadd.f32 %v3035, %v3227
      %v3282 = vadd.f32 %v3036, %v3230
      %v3283 = vadd.f32 %v3037, %v3235
      %v3284 = vadd.f32 %v3038, %v3238
      %v3285 = vadd.f32 %v3039, %v3243
      %v3286 = vadd.f32 %v3040, %v3246
      %v3287 = vadd.f32 %v3041, %v3251
      %v3288 = vadd.f32 %v3042, %v3254
      %3289 = vst.msk [vmem:[#allocation3] sm:$0xff] %vm423, %v3257
      %3290 = vst.msk [vmem:[#allocation3 + $0x8] sm:$0xff] %vm423, %v3258
      %3291 = vst.msk [vmem:[#allocation3 + $0x10] sm:$0xff] %vm423, %v3259
      %3292 = vst.msk [vmem:[#allocation3 + $0x18] sm:$0xff] %vm423, %v3260
      %3293 = vst.msk [vmem:[#allocation3 + $0x20] sm:$0xff] %vm423, %v3261
      %3294 = vst.msk [vmem:[#allocation3 + $0x28] sm:$0xff] %vm423, %v3262
      %3295 = vst.msk [vmem:[#allocation3 + $0x30] sm:$0xff] %vm423, %v3263
      %3296 = vst.msk [vmem:[#allocation3 + $0x38] sm:$0xff] %vm423, %v3264
      %3297 = vst.msk [vmem:[#allocation3 + $0x40] sm:$0xff] %vm423, %v3265
      %3298 = vst.msk [vmem:[#allocation3 + $0x48] sm:$0xff] %vm423, %v3266
      %3299 = vst.msk [vmem:[#allocation3 + $0x50] sm:$0xff] %vm423, %v3267
      %3300 = vst.msk [vmem:[#allocation3 + $0x58] sm:$0xff] %vm423, %v3268
      %3301 = vst.msk [vmem:[#allocation3 + $0x60] sm:$0xff] %vm423, %v3269
      %3302 = vst.msk [vmem:[#allocation3 + $0x68] sm:$0xff] %vm423, %v3270
      %3303 = vst.msk [vmem:[#allocation3 + $0x70] sm:$0xff] %vm423, %v3271
      %3304 = vst.msk [vmem:[#allocation3 + $0x78] sm:$0xff] %vm423, %v3272
      %3305 = vst.msk [vmem:[#allocation3 + $0x80] sm:$0xff] %vm423, %v3273
      %3306 = vst.msk [vmem:[#allocation3 + $0x88] sm:$0xff] %vm423, %v3274
      %3307 = vst.msk [vmem:[#allocation3 + $0x90] sm:$0xff] %vm423, %v3275
      %3308 = vst.msk [vmem:[#allocation3 + $0x98] sm:$0xff] %vm423, %v3276
      %3309 = vst.msk [vmem:[#allocation3 + $0xa0] sm:$0xff] %vm423, %v3277
      %3310 = vst.msk [vmem:[#allocation3 + $0xa8] sm:$0xff] %vm423, %v3278
      %3311 = vst.msk [vmem:[#allocation3 + $0xb0] sm:$0xff] %vm423, %v3279
      %3312 = vst.msk [vmem:[#allocation3 + $0xb8] sm:$0xff] %vm423, %v3280
      %3313 = vst.msk [vmem:[#allocation3 + $0xc0] sm:$0xff] %vm423, %v3281
      %3314 = vst.msk [vmem:[#allocation3 + $0xc8] sm:$0xff] %vm423, %v3282
      %3315 = vst.msk [vmem:[#allocation3 + $0xd0] sm:$0xff] %vm423, %v3283
      %3316 = vst.msk [vmem:[#allocation3 + $0xd8] sm:$0xff] %vm423, %v3284
      %3317 = vst.msk [vmem:[#allocation3 + $0xe0] sm:$0xff] %vm423, %v3285
      %3318 = vst.msk [vmem:[#allocation3 + $0xe8] sm:$0xff] %vm423, %v3286
      %3319 = vst.msk [vmem:[#allocation3 + $0xf0] sm:$0xff] %vm423, %v3287
      %3320 = vst.msk [vmem:[#allocation3 + $0xf8] sm:$0xff] %vm423, %v3288
      %v3321 = vld [vmem:[%s2604 + $0x2] sm:$0xff]
      %v3322 = vld [vmem:[%s2604 + $0xa] sm:$0xff]
      %v3323 = vld [vmem:[%s2604 + $0x1a] sm:$0xff]
      %v3324 = vld [vmem:[%s2604 + $0x22] sm:$0xff]
      %v3325 = vld [vmem:[%s2604 + $0x32] sm:$0xff]
      %v3326 = vld [vmem:[%s2604 + $0x3a] sm:$0xff]
      %v3327 = vld [vmem:[%s2604 + $0x4a] sm:$0xff]
      %v3328 = vld [vmem:[%s2604 + $0x52] sm:$0xff]
      %v3329 = vld [vmem:[%s2604 + $0x62] sm:$0xff]
      %v3330 = vld [vmem:[%s2604 + $0x6a] sm:$0xff]
      %v3331 = vld [vmem:[%s2604 + $0x7a] sm:$0xff]
      %v3332 = vld [vmem:[%s2604 + $0x82] sm:$0xff]
      %v3333 = vld [vmem:[%s2604 + $0x92] sm:$0xff]
      %v3334 = vld [vmem:[%s2604 + $0x9a] sm:$0xff]
      %v3335 = vld [vmem:[%s2604 + $0xaa] sm:$0xff]
      %v3336 = vld [vmem:[%s2604 + $0xb2] sm:$0xff]
      %v3337 = vld [vmem:[%s2604 + $0xc2] sm:$0xff]
      %v3338 = vld [vmem:[%s2604 + $0xca] sm:$0xff]
      %v3339 = vld [vmem:[%s2604 + $0xda] sm:$0xff]
      %v3340 = vld [vmem:[%s2604 + $0xe2] sm:$0xff]
      %v3341 = vld [vmem:[%s2604 + $0xf2] sm:$0xff]
      %v3342 = vld [vmem:[%s2604 + $0xfa] sm:$0xff]
      %v3343 = vld [vmem:[%s2604 + $0x10a] sm:$0xff]
      %v3344 = vld [vmem:[%s2604 + $0x112] sm:$0xff]
      %v3345 = vld [vmem:[%s2604 + $0x122] sm:$0xff]
      %v3346 = vld [vmem:[%s2604 + $0x12a] sm:$0xff]
      %v3347 = vld [vmem:[%s2604 + $0x13a] sm:$0xff]
      %v3348 = vld [vmem:[%s2604 + $0x142] sm:$0xff]
      %v3349 = vld [vmem:[%s2604 + $0x152] sm:$0xff]
      %v3350 = vld [vmem:[%s2604 + $0x15a] sm:$0xff]
      %v3351 = vld [vmem:[%s2604 + $0x16a] sm:$0xff]
      %v3352 = vld [vmem:[%s2604 + $0x172] sm:$0xff]
      %v3353 = vpack.c.bf16 %v3322, %v3321
      %v3354 = vpack.c.bf16 %v3324, %v3323
      %v3355 = vpack.c.bf16 %v3326, %v3325
      %v3356 = vpack.c.bf16 %v3328, %v3327
      %v3357 = vpack.c.bf16 %v3330, %v3329
      %v3358 = vpack.c.bf16 %v3332, %v3331
      %v3359 = vpack.c.bf16 %v3334, %v3333
      %v3360 = vpack.c.bf16 %v3336, %v3335
      %v3361 = vpack.c.bf16 %v3338, %v3337
      %v3362 = vpack.c.bf16 %v3340, %v3339
      %v3363 = vpack.c.bf16 %v3342, %v3341
      %v3364 = vpack.c.bf16 %v3344, %v3343
      %v3365 = vpack.c.bf16 %v3346, %v3345
      %v3366 = vpack.c.bf16 %v3348, %v3347
      %v3367 = vpack.c.bf16 %v3350, %v3349
      %v3368 = vpack.c.bf16 %v3352, %v3351
      %v3369 = vld [vmem:[#allocation3] sm:$0xff]
      %v3370 = vld [vmem:[#allocation3 + $0x8] sm:$0xff]
      %v3371 = vld [vmem:[#allocation3 + $0x10] sm:$0xff]
      %v3372 = vld [vmem:[#allocation3 + $0x18] sm:$0xff]
      %v3373 = vld [vmem:[#allocation3 + $0x20] sm:$0xff]
      %v3374 = vld [vmem:[#allocation3 + $0x28] sm:$0xff]
      %v3375 = vld [vmem:[#allocation3 + $0x30] sm:$0xff]
      %v3376 = vld [vmem:[#allocation3 + $0x38] sm:$0xff]
      %v3377 = vld [vmem:[#allocation3 + $0x40] sm:$0xff]
      %v3378 = vld [vmem:[#allocation3 + $0x48] sm:$0xff]
      %v3379 = vld [vmem:[#allocation3 + $0x50] sm:$0xff]
      %v3380 = vld [vmem:[#allocation3 + $0x58] sm:$0xff]
      %v3381 = vld [vmem:[#allocation3 + $0x60] sm:$0xff]
      %v3382 = vld [vmem:[#allocation3 + $0x68] sm:$0xff]
      %v3383 = vld [vmem:[#allocation3 + $0x70] sm:$0xff]
      %v3384 = vld [vmem:[#allocation3 + $0x78] sm:$0xff]
      %v3385 = vld [vmem:[#allocation3 + $0x80] sm:$0xff]
      %v3386 = vld [vmem:[#allocation3 + $0x88] sm:$0xff]
      %v3387 = vld [vmem:[#allocation3 + $0x90] sm:$0xff]
      %v3388 = vld [vmem:[#allocation3 + $0x98] sm:$0xff]
      %v3389 = vld [vmem:[#allocation3 + $0xa0] sm:$0xff]
      %v3390 = vld [vmem:[#allocation3 + $0xa8] sm:$0xff]
      %v3391 = vld [vmem:[#allocation3 + $0xb0] sm:$0xff]
      %v3392 = vld [vmem:[#allocation3 + $0xb8] sm:$0xff]
      %v3393 = vld [vmem:[#allocation3 + $0xc0] sm:$0xff]
      %v3394 = vld [vmem:[#allocation3 + $0xc8] sm:$0xff]
      %v3395 = vld [vmem:[#allocation3 + $0xd0] sm:$0xff]
      %v3396 = vld [vmem:[#allocation3 + $0xd8] sm:$0xff]
      %v3397 = vld [vmem:[#allocation3 + $0xe0] sm:$0xff]
      %v3398 = vld [vmem:[#allocation3 + $0xe8] sm:$0xff]
      %v3399 = vld [vmem:[#allocation3 + $0xf0] sm:$0xff]
      %v3400 = vld [vmem:[#allocation3 + $0xf8] sm:$0xff]
      %s3401 = scalar_lea.vmem %s3, 16
      %v3402 = vld [vmem:[%s3401] sm:$0x3]
      %v3404 = vsel %vm334, %v3353, 0
      %v3407 = vsel %vm334, %v3354, 0
      %v3410 = vsel %vm334, %v3355, 0
      %v3413 = vsel %vm334, %v3356, 0
      %v3416 = vsel %vm334, %v3357, 0
      %v3419 = vsel %vm334, %v3358, 0
      %v3422 = vsel %vm334, %v3359, 0
      %v3425 = vsel %vm334, %v3360, 0
      %v3428 = vsel %vm334, %v3361, 0
      %v3431 = vsel %vm334, %v3362, 0
      %v3434 = vsel %vm334, %v3363, 0
      %v3437 = vsel %vm334, %v3364, 0
      %v3440 = vsel %vm334, %v3365, 0
      %v3443 = vsel %vm334, %v3366, 0
      %v3446 = vsel %vm334, %v3367, 0
      %v3449 = vsel %vm334, %v3368, 0
      %v3452 = vsel %vm585, %v3402, 0
      %3454 = vmatprep.subr.bf16.mxu0 0
      %3455 = vmatpush1.bf16.msra.mxu0 %v3452
      %3456 = vmatprep.subr.bf16.mxu0 0
      %3457 = vmatpush1.bf16.msra.mxu0 0
      %3458 = vmatprep.subr.bf16.mxu0 0
      %3459 = vmatpush1.bf16.msra.mxu0 0
      %3460 = vmatprep.subr.bf16.mxu0 0
      %3461 = vmatpush1.bf16.msra.mxu0 0
      %3462 = vmatprep.subr.bf16.mxu0 0
      %3463 = vmatpush1.bf16.msra.mxu0 0
      %3464 = vmatprep.subr.bf16.mxu0 0
      %3465 = vmatpush1.bf16.msra.mxu0 0
      %3466 = vmatprep.subr.bf16.mxu0 0
      %3467 = vmatpush1.bf16.msra.mxu0 0
      %3468 = vmatprep.subr.bf16.mxu0 0
      %3469 = vmatpush1.bf16.msra.mxu0 0
      %3470 = vmatprep.subr.bf16.mxu0 0
      %3471 = vmatpush1.bf16.msra.mxu0 0
      %3472 = vmatprep.subr.bf16.mxu0 0
      %3473 = vmatpush1.bf16.msra.mxu0 0
      %3474 = vmatprep.subr.bf16.mxu0 0
      %3475 = vmatpush1.bf16.msra.mxu0 0
      %3476 = vmatprep.subr.bf16.mxu0 0
      %3477 = vmatpush1.bf16.msra.mxu0 0
      %3478 = vmatprep.subr.bf16.mxu0 0
      %3479 = vmatpush1.bf16.msra.mxu0 0
      %3480 = vmatprep.subr.bf16.mxu0 0
      %3481 = vmatpush1.bf16.msra.mxu0 0
      %3482 = vmatprep.subr.bf16.mxu0 0
      %3483 = vmatpush1.bf16.msra.mxu0 0
      %3484 = vmatprep.subr.bf16.mxu0 0
      %3485 = vmatpush1.bf16.msra.mxu0 0
      %3486 = vmatprep.mubr.bf16.mxu0 0
      %3487 = vmatmul.mubr.bf16.gmra.mrb[0].mxu0 %v3404
      %v3488 = vpop.f32.mrb[0].mxu0
      %v3489 = vadd.f32 0.0, %v3488
      %v3490 = vpop.f32.mrb[0].mxu0
      %v3491 = vpop.f32.mrb[0].mxu0
      %v3492 = vadd.f32 0.0, %v3491
      %v3493 = vpop.f32.mrb[0].mxu0
      %3494 = vmatprep.mubr.bf16.mxu0 0
      %3495 = vmatmul.mubr.bf16.gmra.mrb[0].mxu0 %v3407
      %v3496 = vpop.f32.mrb[0].mxu0
      %v3497 = vadd.f32 0.0, %v3496
      %v3498 = vpop.f32.mrb[0].mxu0
      %v3499 = vpop.f32.mrb[0].mxu0
      %v3500 = vadd.f32 0.0, %v3499
      %v3501 = vpop.f32.mrb[0].mxu0
      %3502 = vmatprep.mubr.bf16.mxu0 0
      %3503 = vmatmul.mubr.bf16.gmra.mrb[0].mxu0 %v3410
      %v3504 = vpop.f32.mrb[0].mxu0
      %v3505 = vadd.f32 0.0, %v3504
      %v3506 = vpop.f32.mrb[0].mxu0
      %v3507 = vpop.f32.mrb[0].mxu0
      %v3508 = vadd.f32 0.0, %v3507
      %v3509 = vpop.f32.mrb[0].mxu0
      %3510 = vmatprep.mubr.bf16.mxu0 0
      %3511 = vmatmul.mubr.bf16.gmra.mrb[0].mxu0 %v3413
      %v3512 = vpop.f32.mrb[0].mxu0
      %v3513 = vadd.f32 0.0, %v3512
      %v3514 = vpop.f32.mrb[0].mxu0
      %v3515 = vpop.f32.mrb[0].mxu0
      %v3516 = vadd.f32 0.0, %v3515
      %v3517 = vpop.f32.mrb[0].mxu0
      %3518 = vmatprep.mubr.bf16.mxu0 0
      %3519 = vmatmul.mubr.bf16.gmra.mrb[0].mxu0 %v3416
      %v3520 = vpop.f32.mrb[0].mxu0
      %v3521 = vadd.f32 0.0, %v3520
      %v3522 = vpop.f32.mrb[0].mxu0
      %v3523 = vpop.f32.mrb[0].mxu0
      %v3524 = vadd.f32 0.0, %v3523
      %v3525 = vpop.f32.mrb[0].mxu0
      %3526 = vmatprep.mubr.bf16.mxu0 0
      %3527 = vmatmul.mubr.bf16.gmra.mrb[0].mxu0 %v3419
      %v3528 = vpop.f32.mrb[0].mxu0
      %v3529 = vadd.f32 0.0, %v3528
      %v3530 = vpop.f32.mrb[0].mxu0
      %v3531 = vpop.f32.mrb[0].mxu0
      %v3532 = vadd.f32 0.0, %v3531
      %v3533 = vpop.f32.mrb[0].mxu0
      %3534 = vmatprep.mubr.bf16.mxu0 0
      %3535 = vmatmul.mubr.bf16.gmra.mrb[0].mxu0 %v3422
      %v3536 = vpop.f32.mrb[0].mxu0
      %v3537 = vadd.f32 0.0, %v3536
      %v3538 = vpop.f32.mrb[0].mxu0
      %v3539 = vpop.f32.mrb[0].mxu0
      %v3540 = vadd.f32 0.0, %v3539
      %v3541 = vpop.f32.mrb[0].mxu0
      %3542 = vmatprep.mubr.bf16.mxu0 0
      %3543 = vmatmul.mubr.bf16.gmra.mrb[0].mxu0 %v3425
      %v3544 = vpop.f32.mrb[0].mxu0
      %v3545 = vadd.f32 0.0, %v3544
      %v3546 = vpop.f32.mrb[0].mxu0
      %v3547 = vpop.f32.mrb[0].mxu0
      %v3548 = vadd.f32 0.0, %v3547
      %v3549 = vpop.f32.mrb[0].mxu0
      %3550 = vmatprep.mubr.bf16.mxu0 0
      %3551 = vmatmul.mubr.bf16.gmra.mrb[0].mxu0 %v3428
      %v3552 = vpop.f32.mrb[0].mxu0
      %v3553 = vadd.f32 0.0, %v3552
      %v3554 = vpop.f32.mrb[0].mxu0
      %v3555 = vpop.f32.mrb[0].mxu0
      %v3556 = vadd.f32 0.0, %v3555
      %v3557 = vpop.f32.mrb[0].mxu0
      %3558 = vmatprep.mubr.bf16.mxu0 0
      %3559 = vmatmul.mubr.bf16.gmra.mrb[0].mxu0 %v3431
      %v3560 = vpop.f32.mrb[0].mxu0
      %v3561 = vadd.f32 0.0, %v3560
      %v3562 = vpop.f32.mrb[0].mxu0
      %v3563 = vpop.f32.mrb[0].mxu0
      %v3564 = vadd.f32 0.0, %v3563
      %v3565 = vpop.f32.mrb[0].mxu0
      %3566 = vmatprep.mubr.bf16.mxu0 0
      %3567 = vmatmul.mubr.bf16.gmra.mrb[0].mxu0 %v3434
      %v3568 = vpop.f32.mrb[0].mxu0
      %v3569 = vadd.f32 0.0, %v3568
      %v3570 = vpop.f32.mrb[0].mxu0
      %v3571 = vpop.f32.mrb[0].mxu0
      %v3572 = vadd.f32 0.0, %v3571
      %v3573 = vpop.f32.mrb[0].mxu0
      %3574 = vmatprep.mubr.bf16.mxu0 0
      %3575 = vmatmul.mubr.bf16.gmra.mrb[0].mxu0 %v3437
      %v3576 = vpop.f32.mrb[0].mxu0
      %v3577 = vadd.f32 0.0, %v3576
      %v3578 = vpop.f32.mrb[0].mxu0
      %v3579 = vpop.f32.mrb[0].mxu0
      %v3580 = vadd.f32 0.0, %v3579
      %v3581 = vpop.f32.mrb[0].mxu0
      %3582 = vmatprep.mubr.bf16.mxu0 0
      %3583 = vmatmul.mubr.bf16.gmra.mrb[0].mxu0 %v3440
      %v3584 = vpop.f32.mrb[0].mxu0
      %v3585 = vadd.f32 0.0, %v3584
      %v3586 = vpop.f32.mrb[0].mxu0
      %v3587 = vpop.f32.mrb[0].mxu0
      %v3588 = vadd.f32 0.0, %v3587
      %v3589 = vpop.f32.mrb[0].mxu0
      %3590 = vmatprep.mubr.bf16.mxu0 0
      %3591 = vmatmul.mubr.bf16.gmra.mrb[0].mxu0 %v3443
      %v3592 = vpop.f32.mrb[0].mxu0
      %v3593 = vadd.f32 0.0, %v3592
      %v3594 = vpop.f32.mrb[0].mxu0
      %v3595 = vpop.f32.mrb[0].mxu0
      %v3596 = vadd.f32 0.0, %v3595
      %v3597 = vpop.f32.mrb[0].mxu0
      %3598 = vmatprep.mubr.bf16.mxu0 0
      %3599 = vmatmul.mubr.bf16.gmra.mrb[0].mxu0 %v3446
      %v3600 = vpop.f32.mrb[0].mxu0
      %v3601 = vadd.f32 0.0, %v3600
      %v3602 = vpop.f32.mrb[0].mxu0
      %v3603 = vpop.f32.mrb[0].mxu0
      %v3604 = vadd.f32 0.0, %v3603
      %v3605 = vpop.f32.mrb[0].mxu0
      %3606 = vmatprep.mubr.bf16.mxu0 0
      %3607 = vmatmul.mubr.bf16.gmra.mrb[0].mxu0 %v3449
      %v3608 = vpop.f32.mrb[0].mxu0
      %v3609 = vadd.f32 0.0, %v3608
      %v3610 = vpop.f32.mrb[0].mxu0
      %v3611 = vpop.f32.mrb[0].mxu0
      %v3612 = vadd.f32 0.0, %v3611
      %v3613 = vpop.f32.mrb[0].mxu0
      %3614 = vdwg.mxu0
      %v3615 = vadd.f32 %v3369, %v3489
      %v3616 = vadd.f32 %v3370, %v3492
      %v3617 = vadd.f32 %v3371, %v3497
      %v3618 = vadd.f32 %v3372, %v3500
      %v3619 = vadd.f32 %v3373, %v3505
      %v3620 = vadd.f32 %v3374, %v3508
      %v3621 = vadd.f32 %v3375, %v3513
      %v3622 = vadd.f32 %v3376, %v3516
      %v3623 = vadd.f32 %v3377, %v3521
      %v3624 = vadd.f32 %v3378, %v3524
      %v3625 = vadd.f32 %v3379, %v3529
      %v3626 = vadd.f32 %v3380, %v3532
      %v3627 = vadd.f32 %v3381, %v3537
      %v3628 = vadd.f32 %v3382, %v3540
      %v3629 = vadd.f32 %v3383, %v3545
      %v3630 = vadd.f32 %v3384, %v3548
      %v3631 = vadd.f32 %v3385, %v3553
      %v3632 = vadd.f32 %v3386, %v3556
      %v3633 = vadd.f32 %v3387, %v3561
      %v3634 = vadd.f32 %v3388, %v3564
      %v3635 = vadd.f32 %v3389, %v3569
      %v3636 = vadd.f32 %v3390, %v3572
      %v3637 = vadd.f32 %v3391, %v3577
      %v3638 = vadd.f32 %v3392, %v3580
      %v3639 = vadd.f32 %v3393, %v3585
      %v3640 = vadd.f32 %v3394, %v3588
      %v3641 = vadd.f32 %v3395, %v3593
      %v3642 = vadd.f32 %v3396, %v3596
      %v3643 = vadd.f32 %v3397, %v3601
      %v3644 = vadd.f32 %v3398, %v3604
      %v3645 = vadd.f32 %v3399, %v3609
      %v3646 = vadd.f32 %v3400, %v3612
      %3647 = vst.msk [vmem:[#allocation3] sm:$0xff] %vm423, %v3615
      %3648 = vst.msk [vmem:[#allocation3 + $0x8] sm:$0xff] %vm423, %v3616
      %3649 = vst.msk [vmem:[#allocation3 + $0x10] sm:$0xff] %vm423, %v3617
      %3650 = vst.msk [vmem:[#allocation3 + $0x18] sm:$0xff] %vm423, %v3618
      %3651 = vst.msk [vmem:[#allocation3 + $0x20] sm:$0xff] %vm423, %v3619
      %3652 = vst.msk [vmem:[#allocation3 + $0x28] sm:$0xff] %vm423, %v3620
      %3653 = vst.msk [vmem:[#allocation3 + $0x30] sm:$0xff] %vm423, %v3621
      %3654 = vst.msk [vmem:[#allocation3 + $0x38] sm:$0xff] %vm423, %v3622
      %3655 = vst.msk [vmem:[#allocation3 + $0x40] sm:$0xff] %vm423, %v3623
      %3656 = vst.msk [vmem:[#allocation3 + $0x48] sm:$0xff] %vm423, %v3624
      %3657 = vst.msk [vmem:[#allocation3 + $0x50] sm:$0xff] %vm423, %v3625
      %3658 = vst.msk [vmem:[#allocation3 + $0x58] sm:$0xff] %vm423, %v3626
      %3659 = vst.msk [vmem:[#allocation3 + $0x60] sm:$0xff] %vm423, %v3627
      %3660 = vst.msk [vmem:[#allocation3 + $0x68] sm:$0xff] %vm423, %v3628
      %3661 = vst.msk [vmem:[#allocation3 + $0x70] sm:$0xff] %vm423, %v3629
      %3662 = vst.msk [vmem:[#allocation3 + $0x78] sm:$0xff] %vm423, %v3630
      %3663 = vst.msk [vmem:[#allocation3 + $0x80] sm:$0xff] %vm423, %v3631
      %3664 = vst.msk [vmem:[#allocation3 + $0x88] sm:$0xff] %vm423, %v3632
      %3665 = vst.msk [vmem:[#allocation3 + $0x90] sm:$0xff] %vm423, %v3633
      %3666 = vst.msk [vmem:[#allocation3 + $0x98] sm:$0xff] %vm423, %v3634
      %3667 = vst.msk [vmem:[#allocation3 + $0xa0] sm:$0xff] %vm423, %v3635
      %3668 = vst.msk [vmem:[#allocation3 + $0xa8] sm:$0xff] %vm423, %v3636
      %3669 = vst.msk [vmem:[#allocation3 + $0xb0] sm:$0xff] %vm423, %v3637
      %3670 = vst.msk [vmem:[#allocation3 + $0xb8] sm:$0xff] %vm423, %v3638
      %3671 = vst.msk [vmem:[#allocation3 + $0xc0] sm:$0xff] %vm423, %v3639
      %3672 = vst.msk [vmem:[#allocation3 + $0xc8] sm:$0xff] %vm423, %v3640
      %3673 = vst.msk [vmem:[#allocation3 + $0xd0] sm:$0xff] %vm423, %v3641
      %3674 = vst.msk [vmem:[#allocation3 + $0xd8] sm:$0xff] %vm423, %v3642
      %3675 = vst.msk [vmem:[#allocation3 + $0xe0] sm:$0xff] %vm423, %v3643
      %3676 = vst.msk [vmem:[#allocation3 + $0xe8] sm:$0xff] %vm423, %v3644
      %3677 = vst.msk [vmem:[#allocation3 + $0xf0] sm:$0xff] %vm423, %v3645
      %3678 = vst.msk [vmem:[#allocation3 + $0xf8] sm:$0xff] %vm423, %v3646
      %v3679 = vld [vmem:[#allocation3] sm:$0xff]
      %v3680 = vld [vmem:[#allocation3 + $0x8] sm:$0xff]
      %v3681 = vld [vmem:[#allocation3 + $0x10] sm:$0xff]
      %v3682 = vld [vmem:[#allocation3 + $0x18] sm:$0xff]
      %v3683 = vld [vmem:[#allocation3 + $0x20] sm:$0xff]
      %v3684 = vld [vmem:[#allocation3 + $0x28] sm:$0xff]
      %v3685 = vld [vmem:[#allocation3 + $0x30] sm:$0xff]
      %v3686 = vld [vmem:[#allocation3 + $0x38] sm:$0xff]
      %v3687 = vld [vmem:[#allocation3 + $0x40] sm:$0xff]
      %v3688 = vld [vmem:[#allocation3 + $0x48] sm:$0xff]
      %v3689 = vld [vmem:[#allocation3 + $0x50] sm:$0xff]
      %v3690 = vld [vmem:[#allocation3 + $0x58] sm:$0xff]
      %v3691 = vld [vmem:[#allocation3 + $0x60] sm:$0xff]
      %v3692 = vld [vmem:[#allocation3 + $0x68] sm:$0xff]
      %v3693 = vld [vmem:[#allocation3 + $0x70] sm:$0xff]
      %v3694 = vld [vmem:[#allocation3 + $0x78] sm:$0xff]
      %v3695 = vld [vmem:[#allocation3 + $0x80] sm:$0xff]
      %v3696 = vld [vmem:[#allocation3 + $0x88] sm:$0xff]
      %v3697 = vld [vmem:[#allocation3 + $0x90] sm:$0xff]
      %v3698 = vld [vmem:[#allocation3 + $0x98] sm:$0xff]
      %v3699 = vld [vmem:[#allocation3 + $0xa0] sm:$0xff]
      %v3700 = vld [vmem:[#allocation3 + $0xa8] sm:$0xff]
      %v3701 = vld [vmem:[#allocation3 + $0xb0] sm:$0xff]
      %v3702 = vld [vmem:[#allocation3 + $0xb8] sm:$0xff]
      %v3703 = vld [vmem:[#allocation3 + $0xc0] sm:$0xff]
      %v3704 = vld [vmem:[#allocation3 + $0xc8] sm:$0xff]
      %v3705 = vld [vmem:[#allocation3 + $0xd0] sm:$0xff]
      %v3706 = vld [vmem:[#allocation3 + $0xd8] sm:$0xff]
      %v3707 = vld [vmem:[#allocation3 + $0xe0] sm:$0xff]
      %v3708 = vld [vmem:[#allocation3 + $0xe8] sm:$0xff]
      %v3709 = vld [vmem:[#allocation3 + $0xf0] sm:$0xff]
      %v3710 = vld [vmem:[#allocation3 + $0xf8] sm:$0xff]
      %v3711 = vpack.c.bf16 %v3680, %v3679
      %v3712 = vpack.c.bf16 %v3682, %v3681
      %v3713 = vpack.c.bf16 %v3684, %v3683
      %v3714 = vpack.c.bf16 %v3686, %v3685
      %v3715 = vpack.c.bf16 %v3688, %v3687
      %v3716 = vpack.c.bf16 %v3690, %v3689
      %v3717 = vpack.c.bf16 %v3692, %v3691
      %v3718 = vpack.c.bf16 %v3694, %v3693
      %v3719 = vpack.c.bf16 %v3696, %v3695
      %v3720 = vpack.c.bf16 %v3698, %v3697
      %v3721 = vpack.c.bf16 %v3700, %v3699
      %v3722 = vpack.c.bf16 %v3702, %v3701
      %v3723 = vpack.c.bf16 %v3704, %v3703
      %v3724 = vpack.c.bf16 %v3706, %v3705
      %v3725 = vpack.c.bf16 %v3708, %v3707
      %v3726 = vpack.c.bf16 %v3710, %v3709
      %v3743 = vunpack.c.l.b16 %v3711
      %v3744 = vunpack.c.h.b16 %v3711
      %v3745 = vunpack.c.l.b16 %v3712
      %v3746 = vunpack.c.h.b16 %v3712
      %v3747 = vunpack.c.l.b16 %v3713
      %v3748 = vunpack.c.h.b16 %v3713
      %v3749 = vunpack.c.l.b16 %v3714
      %v3750 = vunpack.c.h.b16 %v3714
      %v3751 = vunpack.c.l.b16 %v3715
      %v3752 = vunpack.c.h.b16 %v3715
      %v3753 = vunpack.c.l.b16 %v3716
      %v3754 = vunpack.c.h.b16 %v3716
      %v3755 = vunpack.c.l.b16 %v3717
      %v3756 = vunpack.c.h.b16 %v3717
      %v3757 = vunpack.c.l.b16 %v3718
      %v3758 = vunpack.c.h.b16 %v3718
      %v3759 = vunpack.c.l.b16 %v3719
      %v3760 = vunpack.c.h.b16 %v3719
      %v3761 = vunpack.c.l.b16 %v3720
      %v3762 = vunpack.c.h.b16 %v3720
      %v3763 = vunpack.c.l.b16 %v3721
      %v3764 = vunpack.c.h.b16 %v3721
      %v3765 = vunpack.c.l.b16 %v3722
      %v3766 = vunpack.c.h.b16 %v3722
      %v3767 = vunpack.c.l.b16 %v3723
      %v3768 = vunpack.c.h.b16 %v3723
      %v3769 = vunpack.c.l.b16 %v3724
      %v3770 = vunpack.c.h.b16 %v3724
      %v3771 = vunpack.c.l.b16 %v3725
      %v3772 = vunpack.c.h.b16 %v3725
      %v3773 = vunpack.c.l.b16 %v3726
      %v3774 = vunpack.c.h.b16 %v3726
      %v3775 = vpack.c.b16 %v3743, %v3743
      %v3776 = vpack.c.b16 %v3744, %v3744
      %v3777 = vpack.c.b16 %v3745, %v3745
      %v3778 = vpack.c.b16 %v3746, %v3746
      %v3779 = vpack.c.b16 %v3747, %v3747
      %v3780 = vpack.c.b16 %v3748, %v3748
      %v3781 = vpack.c.b16 %v3749, %v3749
      %v3782 = vpack.c.b16 %v3750, %v3750
      %v3783 = vpack.c.b16 %v3751, %v3751
      %v3784 = vpack.c.b16 %v3752, %v3752
      %v3785 = vpack.c.b16 %v3753, %v3753
      %v3786 = vpack.c.b16 %v3754, %v3754
      %v3787 = vpack.c.b16 %v3755, %v3755
      %v3788 = vpack.c.b16 %v3756, %v3756
      %v3789 = vpack.c.b16 %v3757, %v3757
      %v3790 = vpack.c.b16 %v3758, %v3758
      %v3791 = vpack.c.b16 %v3759, %v3759
      %v3792 = vpack.c.b16 %v3760, %v3760
      %v3793 = vpack.c.b16 %v3761, %v3761
      %v3794 = vpack.c.b16 %v3762, %v3762
      %v3795 = vpack.c.b16 %v3763, %v3763
      %v3796 = vpack.c.b16 %v3764, %v3764
      %v3797 = vpack.c.b16 %v3765, %v3765
      %v3798 = vpack.c.b16 %v3766, %v3766
      %v3799 = vpack.c.b16 %v3767, %v3767
      %v3800 = vpack.c.b16 %v3768, %v3768
      %v3801 = vpack.c.b16 %v3769, %v3769
      %v3802 = vpack.c.b16 %v3770, %v3770
      %v3803 = vpack.c.b16 %v3771, %v3771
      %v3804 = vpack.c.b16 %v3772, %v3772
      %v3805 = vpack.c.b16 %v3773, %v3773
      %v3806 = vpack.c.b16 %v3774, %v3774
      %vm3839 = vcmask 60416
      %3840 = vst.msk [vmem:[%s262] sm:$0xf] %vm3839, %v3775
      %3841 = vst.msk [vmem:[%s262 + $0x4] sm:$0xf] %vm3839, %v3776
      %3842 = vst.msk [vmem:[%s262 + $0x8] sm:$0xf] %vm3839, %v3777
      %3843 = vst.msk [vmem:[%s262 + $0xc] sm:$0xf] %vm3839, %v3778
      %3844 = vst.msk [vmem:[%s262 + $0x10] sm:$0xf] %vm3839, %v3779
      %3845 = vst.msk [vmem:[%s262 + $0x14] sm:$0xf] %vm3839, %v3780
      %3846 = vst.msk [vmem:[%s262 + $0x18] sm:$0xf] %vm3839, %v3781
      %3847 = vst.msk [vmem:[%s262 + $0x1c] sm:$0xf] %vm3839, %v3782
      %3848 = vst.msk [vmem:[%s262 + $0x20] sm:$0xf] %vm3839, %v3783
      %3849 = vst.msk [vmem:[%s262 + $0x24] sm:$0xf] %vm3839, %v3784
      %3850 = vst.msk [vmem:[%s262 + $0x28] sm:$0xf] %vm3839, %v3785
      %3851 = vst.msk [vmem:[%s262 + $0x2c] sm:$0xf] %vm3839, %v3786
      %3852 = vst.msk [vmem:[%s262 + $0x30] sm:$0xf] %vm3839, %v3787
      %3853 = vst.msk [vmem:[%s262 + $0x34] sm:$0xf] %vm3839, %v3788
      %3854 = vst.msk [vmem:[%s262 + $0x38] sm:$0xf] %vm3839, %v3789
      %3855 = vst.msk [vmem:[%s262 + $0x3c] sm:$0xf] %vm3839, %v3790
      %3856 = vst.msk [vmem:[%s262 + $0x40] sm:$0xf] %vm3839, %v3791
      %3857 = vst.msk [vmem:[%s262 + $0x44] sm:$0xf] %vm3839, %v3792
      %3858 = vst.msk [vmem:[%s262 + $0x48] sm:$0xf] %vm3839, %v3793
      %3859 = vst.msk [vmem:[%s262 + $0x4c] sm:$0xf] %vm3839, %v3794
      %3860 = vst.msk [vmem:[%s262 + $0x50] sm:$0xf] %vm3839, %v3795
      %3861 = vst.msk [vmem:[%s262 + $0x54] sm:$0xf] %vm3839, %v3796
      %3862 = vst.msk [vmem:[%s262 + $0x58] sm:$0xf] %vm3839, %v3797
      %3863 = vst.msk [vmem:[%s262 + $0x5c] sm:$0xf] %vm3839, %v3798
      %3864 = vst.msk [vmem:[%s262 + $0x60] sm:$0xf] %vm3839, %v3799
      %3865 = vst.msk [vmem:[%s262 + $0x64] sm:$0xf] %vm3839, %v3800
      %3866 = vst.msk [vmem:[%s262 + $0x68] sm:$0xf] %vm3839, %v3801
      %3867 = vst.msk [vmem:[%s262 + $0x6c] sm:$0xf] %vm3839, %v3802
      %3868 = vst.msk [vmem:[%s262 + $0x70] sm:$0xf] %vm3839, %v3803
      %3869 = vst.msk [vmem:[%s262 + $0x74] sm:$0xf] %vm3839, %v3804
      %3870 = vst.msk [vmem:[%s262 + $0x78] sm:$0xf] %vm3839, %v3805
      %3871 = vst.msk [vmem:[%s262 + $0x7c] sm:$0xf] %vm3839, %v3806
      %v3872 = vsel %vm423, %v3679, 0.0
      %v3873 = vsel %vm423, %v3680, 0.0
      %v3874 = vadd.f32 %v3872, %v3873
      %v3875 = vsel %vm423, %v3681, 0.0
      %v3876 = vadd.f32 %v3874, %v3875
      %v3877 = vsel %vm423, %v3682, 0.0
      %v3878 = vadd.f32 %v3876, %v3877
      %v3879 = vsel %vm423, %v3683, 0.0
      %v3880 = vadd.f32 %v3878, %v3879
      %v3881 = vsel %vm423, %v3684, 0.0
      %v3882 = vadd.f32 %v3880, %v3881
      %v3883 = vsel %vm423, %v3685, 0.0
      %v3884 = vadd.f32 %v3882, %v3883
      %v3885 = vsel %vm423, %v3686, 0.0
      %v3886 = vadd.f32 %v3884, %v3885
      %v3887 = vsel %vm423, %v3687, 0.0
      %v3888 = vadd.f32 %v3886, %v3887
      %v3889 = vsel %vm423, %v3688, 0.0
      %v3890 = vadd.f32 %v3888, %v3889
      %v3891 = vsel %vm423, %v3689, 0.0
      %v3892 = vadd.f32 %v3890, %v3891
      %v3893 = vsel %vm423, %v3690, 0.0
      %v3894 = vadd.f32 %v3892, %v3893
      %v3895 = vsel %vm423, %v3691, 0.0
      %v3896 = vadd.f32 %v3894, %v3895
      %v3897 = vsel %vm423, %v3692, 0.0
      %v3898 = vadd.f32 %v3896, %v3897
      %v3899 = vsel %vm423, %v3693, 0.0
      %v3900 = vadd.f32 %v3898, %v3899
      %v3901 = vsel %vm423, %v3694, 0.0
      %v3902 = vadd.f32 %v3900, %v3901
      %v3903 = vsel %vm423, %v3695, 0.0
      %v3904 = vadd.f32 %v3902, %v3903
      %v3905 = vsel %vm423, %v3696, 0.0
      %v3906 = vadd.f32 %v3904, %v3905
      %v3907 = vsel %vm423, %v3697, 0.0
      %v3908 = vadd.f32 %v3906, %v3907
      %v3909 = vsel %vm423, %v3698, 0.0
      %v3910 = vadd.f32 %v3908, %v3909
      %v3911 = vsel %vm423, %v3699, 0.0
      %v3912 = vadd.f32 %v3910, %v3911
      %v3913 = vsel %vm423, %v3700, 0.0
      %v3914 = vadd.f32 %v3912, %v3913
      %v3915 = vsel %vm423, %v3701, 0.0
      %v3916 = vadd.f32 %v3914, %v3915
      %v3917 = vsel %vm423, %v3702, 0.0
      %v3918 = vadd.f32 %v3916, %v3917
      %v3919 = vsel %vm423, %v3703, 0.0
      %v3920 = vadd.f32 %v3918, %v3919
      %v3921 = vsel %vm423, %v3704, 0.0
      %v3922 = vadd.f32 %v3920, %v3921
      %v3923 = vsel %vm423, %v3705, 0.0
      %v3924 = vadd.f32 %v3922, %v3923
      %v3925 = vsel %vm423, %v3706, 0.0
      %v3926 = vadd.f32 %v3924, %v3925
      %v3927 = vsel %vm423, %v3707, 0.0
      %v3928 = vadd.f32 %v3926, %v3927
      %v3929 = vsel %vm423, %v3708, 0.0
      %v3930 = vadd.f32 %v3928, %v3929
      %v3931 = vsel %vm423, %v3709, 0.0
      %v3932 = vadd.f32 %v3930, %v3931
      %v3933 = vsel %vm423, %v3710, 0.0
      %v3934 = vadd.f32 %v3932, %v3933
      %v3935 = vrot.slane %v3934, 4
      %v3936 = vadd.f32 %v3934, %v3935
      %v3937 = vrot.slane %v3936, 2
      %v3938 = vadd.f32 %v3936, %v3937
      %v3939 = vrot.slane %v3938, 1
      %v3940 = vadd.f32 %v3938, %v3939
      %vm3941 = vcmask 57344
      %3942 = vst.msk [vmem:[%s265] sm:$0x1] %vm3941, %v3940
      %v3943 = vmul.f32 %v3679, %v3679
      %v3944 = vmul.f32 %v3680, %v3680
      %v3945 = vmul.f32 %v3681, %v3681
      %v3946 = vmul.f32 %v3682, %v3682
      %v3947 = vmul.f32 %v3683, %v3683
      %v3948 = vmul.f32 %v3684, %v3684
      %v3949 = vmul.f32 %v3685, %v3685
      %v3950 = vmul.f32 %v3686, %v3686
      %v3951 = vmul.f32 %v3687, %v3687
      %v3952 = vmul.f32 %v3688, %v3688
      %v3953 = vmul.f32 %v3689, %v3689
      %v3954 = vmul.f32 %v3690, %v3690
      %v3955 = vmul.f32 %v3691, %v3691
      %v3956 = vmul.f32 %v3692, %v3692
      %v3957 = vmul.f32 %v3693, %v3693
      %v3958 = vmul.f32 %v3694, %v3694
      %v3959 = vmul.f32 %v3695, %v3695
      %v3960 = vmul.f32 %v3696, %v3696
      %v3961 = vmul.f32 %v3697, %v3697
      %v3962 = vmul.f32 %v3698, %v3698
      %v3963 = vmul.f32 %v3699, %v3699
      %v3964 = vmul.f32 %v3700, %v3700
      %v3965 = vmul.f32 %v3701, %v3701
      %v3966 = vmul.f32 %v3702, %v3702
      %v3967 = vmul.f32 %v3703, %v3703
      %v3968 = vmul.f32 %v3704, %v3704
      %v3969 = vmul.f32 %v3705, %v3705
      %v3970 = vmul.f32 %v3706, %v3706
      %v3971 = vmul.f32 %v3707, %v3707
      %v3972 = vmul.f32 %v3708, %v3708
      %v3973 = vmul.f32 %v3709, %v3709
      %v3974 = vmul.f32 %v3710, %v3710
      %v3975 = vsel %vm423, %v3943, 0.0
      %v3976 = vsel %vm423, %v3944, 0.0
      %v3977 = vadd.f32 %v3975, %v3976
      %v3978 = vsel %vm423, %v3945, 0.0
      %v3979 = vadd.f32 %v3977, %v3978
      %v3980 = vsel %vm423, %v3946, 0.0
      %v3981 = vadd.f32 %v3979, %v3980
      %v3982 = vsel %vm423, %v3947, 0.0
      %v3983 = vadd.f32 %v3981, %v3982
      %v3984 = vsel %vm423, %v3948, 0.0
      %v3985 = vadd.f32 %v3983, %v3984
      %v3986 = vsel %vm423, %v3949, 0.0
      %v3987 = vadd.f32 %v3985, %v3986
      %v3988 = vsel %vm423, %v3950, 0.0
      %v3989 = vadd.f32 %v3987, %v3988
      %v3990 = vsel %vm423, %v3951, 0.0
      %v3991 = vadd.f32 %v3989, %v3990
      %v3992 = vsel %vm423, %v3952, 0.0
      %v3993 = vadd.f32 %v3991, %v3992
      %v3994 = vsel %vm423, %v3953, 0.0
      %v3995 = vadd.f32 %v3993, %v3994
      %v3996 = vsel %vm423, %v3954, 0.0
      %v3997 = vadd.f32 %v3995, %v3996
      %v3998 = vsel %vm423, %v3955, 0.0
      %v3999 = vadd.f32 %v3997, %v3998
      %v4000 = vsel %vm423, %v3956, 0.0
      %v4001 = vadd.f32 %v3999, %v4000
      %v4002 = vsel %vm423, %v3957, 0.0
      %v4003 = vadd.f32 %v4001, %v4002
      %v4004 = vsel %vm423, %v3958, 0.0
      %v4005 = vadd.f32 %v4003, %v4004
      %v4006 = vsel %vm423, %v3959, 0.0
      %v4007 = vadd.f32 %v4005, %v4006
      %v4008 = vsel %vm423, %v3960, 0.0
      %v4009 = vadd.f32 %v4007, %v4008
      %v4010 = vsel %vm423, %v3961, 0.0
      %v4011 = vadd.f32 %v4009, %v4010
      %v4012 = vsel %vm423, %v3962, 0.0
      %v4013 = vadd.f32 %v4011, %v4012
      %v4014 = vsel %vm423, %v3963, 0.0
      %v4015 = vadd.f32 %v4013, %v4014
      %v4016 = vsel %vm423, %v3964, 0.0
      %v4017 = vadd.f32 %v4015, %v4016
      %v4018 = vsel %vm423, %v3965, 0.0
      %v4019 = vadd.f32 %v4017, %v4018
      %v4020 = vsel %vm423, %v3966, 0.0
      %v4021 = vadd.f32 %v4019, %v4020
      %v4022 = vsel %vm423, %v3967, 0.0
      %v4023 = vadd.f32 %v4021, %v4022
      %v4024 = vsel %vm423, %v3968, 0.0
      %v4025 = vadd.f32 %v4023, %v4024
      %v4026 = vsel %vm423, %v3969, 0.0
      %v4027 = vadd.f32 %v4025, %v4026
      %v4028 = vsel %vm423, %v3970, 0.0
      %v4029 = vadd.f32 %v4027, %v4028
      %v4030 = vsel %vm423, %v3971, 0.0
      %v4031 = vadd.f32 %v4029, %v4030
      %v4032 = vsel %vm423, %v3972, 0.0
      %v4033 = vadd.f32 %v4031, %v4032
      %v4034 = vsel %vm423, %v3973, 0.0
      %v4035 = vadd.f32 %v4033, %v4034
      %v4036 = vsel %vm423, %v3974, 0.0
      %v4037 = vadd.f32 %v4035, %v4036
      %v4038 = vrot.slane %v4037, 4
      %v4039 = vadd.f32 %v4037, %v4038
      %v4040 = vrot.slane %v4039, 2
      %v4041 = vadd.f32 %v4039, %v4040
      %v4042 = vrot.slane %v4041, 1
      %v4043 = vadd.f32 %v4041, %v4042
      %4044 = vst.msk [vmem:[%s268] sm:$0x1] %vm3941, %v4043
      %p4045 = scmp.lt.s32.totalorder %s18, 1
      %s4046 = scalar_select %p4045, %s18, 1
      %s4047 = smul.addr %s4046, 32
      %s4048 = smul.addr %s4047, 4
      %s4049 = scalar_lea.vmem %s4, %s4048
      %p4050 = scmp.lt.s32.totalorder %s18, 1
      %s4051 = scalar_select %p4050, %s18, 1
      %s4052 = scalar_lea.vmem %s5, %s4051
      %p4053 = scmp.lt.s32.totalorder %s18, 1
      %s4054 = scalar_select %p4053, %s18, 1
      %s4055 = scalar_lea.vmem %s6, %s4054
      // Predicated region
      $region37: #{densenet_block_forward.4} parent=35 // pred_check
        %p4056 = pneg %p125
      $region38: #{densenet_block_forward.4} parent=35 // pred_check_branch
        %4058 = sbr.rel (%p4056) target = $region40
      $region39: #{densenet_block_forward.4} parent=35 // pred_region
        _
      $region40: #{densenet_block_forward.4} parent=35 // pred_fallthru
        _
      // Predicated region
      $region41: #{densenet_block_forward.4} parent=35 // pred_check
        %p4059 = pneg %p151
      $region42: #{densenet_block_forward.4} parent=35 // pred_check_branch
        %4061 = sbr.rel (%p4059) target = $region44
      $region43: #{densenet_block_forward.4} parent=35 // pred_region
        _
      $region44: #{densenet_block_forward.4} parent=35 // pred_fallthru
        _
      // Predicated region
      $region45: #{densenet_block_forward.4} parent=35 // pred_check
        %p4062 = pneg %p177
      $region46: #{densenet_block_forward.4} parent=35 // pred_check_branch
        %4064 = sbr.rel (%p4062) target = $region48
      $region47: #{densenet_block_forward.4} parent=35 // pred_region
        _
      $region48: #{densenet_block_forward.4} parent=35 // pred_fallthru
        _
    $region36: #{densenet_block_forward.4} parent=5 // pred_fallthru
      _
    %p4065 = scmp.le.s32.totalorder 2, %s13
    // Predicated region
    $region49: #{densenet_block_forward.4} parent=5 // pred_check
      %p4066 = pneg %p4065
    $region50: #{densenet_block_forward.4} parent=5 // pred_check_branch
      %4068 = sbr.rel (%p4066) target = $region52
    $region51: #{densenet_block_forward.4} parent=5 // pred_region
      %s4069 = ssub.s32 %s13, 2
      // Predicated region
      $region53: #{densenet_block_forward.4} parent=51 // pred_check
        %p4070 = pneg %p131
      $region54: #{densenet_block_forward.4} parent=51 // pred_check_branch
        %4072 = sbr.rel (%p4070) target = $region56
      $region55: #{densenet_block_forward.4} parent=51 // pred_region
        %p4073 = scmp.lt.s32.totalorder %s19, 1
        %s4074 = scalar_select %p4073, %s19, 1
        %s4075 = smul.addr %s4074, 32
        %s4076 = smul.addr %s4075, 4
        %s4077 = scalar_lea.vmem %s4, %s4076
      $region56: #{densenet_block_forward.4} parent=51 // pred_fallthru
        _
      // Predicated region
      $region57: #{densenet_block_forward.4} parent=51 // pred_check
        %p4078 = pneg %p157
      $region58: #{densenet_block_forward.4} parent=51 // pred_check_branch
        %4080 = sbr.rel (%p4078) target = $region60
      $region59: #{densenet_block_forward.4} parent=51 // pred_region
        %p4081 = scmp.lt.s32.totalorder %s19, 1
        %s4082 = scalar_select %p4081, %s19, 1
        %s4083 = scalar_lea.vmem %s5, %s4082
      $region60: #{densenet_block_forward.4} parent=51 // pred_fallthru
        _
      // Predicated region
      $region61: #{densenet_block_forward.4} parent=51 // pred_check
        %p4084 = pneg %p183
      $region62: #{densenet_block_forward.4} parent=51 // pred_check_branch
        %4086 = sbr.rel (%p4084) target = $region64
      $region63: #{densenet_block_forward.4} parent=51 // pred_region
        %p4087 = scmp.lt.s32.totalorder %s19, 1
        %s4088 = scalar_select %p4087, %s19, 1
        %s4089 = scalar_lea.vmem %s6, %s4088
      $region64: #{densenet_block_forward.4} parent=51 // pred_fallthru
        _
    $region52: #{densenet_block_forward.4} parent=5 // pred_fallthru
      _
  $region6: #{densenet_block_forward.4} parent=0 // loop_footer
    %s17 = sadd.s32 1, %s13
  $region7: #{densenet_block_forward.4} parent=0 // loop_footer_branch
    %12 = sbr.rel target = $region3
  $region8: #{densenet_block_forward.4} parent=0 // loop_exit
    _

// kernel: densenet_block_forward.5
$region0: #{densenet_block_forward.5}
  #allocation0 [shape = 'u32[]', space=smem, size = 0x4, offset = 0x4, fixed_abs, tag = 'smem constant byte address 0x4 - core index']
  #allocation1 [shape = 'u32[144,128]{1,0:T(1,128)}', space=vmem, size = 0x12000, scoped, tag = 'internal scratch']
  #allocation2 [shape = 'f32[18,18,8]{2,1,0:T(8,128)}', space=vmem, size = 0x36000, scoped, tag = 'scratch operand']
  #allocation3 [shape = 'f32[256,8]{1,0:T(8,128)}', space=vmem, size = 0x20000, scoped, tag = 'scratch operand']
  %s0 = inlined_call_operand.vmem [shape: bf16[2,16,16,8], index: 0, kind: input, shape index: {}]
  %s1 = inlined_call_operand.vmem [shape: f32[1,8], index: 1, kind: input, shape index: {}]
  %s2 = inlined_call_operand.vmem [shape: f32[1,8], index: 2, kind: input, shape index: {}]
  %s3 = inlined_call_operand.vmem [shape: bf16[9,8,8], index: 3, kind: input, shape index: {}]
  %s4 = inlined_call_operand.vmem [shape: bf16[2,16,16,8], index: 4, kind: output, shape index: {0}]
  %s5 = inlined_call_operand.vmem [shape: f32[2,1,8], index: 5, kind: output, shape index: {1}]
  %s6 = inlined_call_operand.vmem [shape: f32[2,1,8], index: 6, kind: output, shape index: {2}]
  %7 = xla_tuple %s4, %s5, %s6
  %s8 = sld [smem:[#allocation0]]
  $region65: #{densenet_block_forward.5} parent=0
    _
  %s10 = ssub.s32 1, %s8
  %s11 = scalar_select 0, %s10, %s8
  loop: start=0, step=1, limit=4
  $region2: #{densenet_block_forward.5} parent=0 // loop_pre_header
    _
  $region3: #{densenet_block_forward.5} parent=0 // loop_header
    %s13 = sphi 0, %s17
    %p14 = scmp.ge.s32.totalorder %s13, 4
    %s23 = sphi 0, %s25
    %s26 = sphi 0, %s23
    %s27 = sphi 0, %s26
    %s43 = sphi 0, %s27
    %s47 = sphi 0, %s47
    %s49 = sphi 0, %s47
    %s50 = sphi 0, %s49
    %s64 = sphi 0, %s50
    %s68 = sphi 0, %s68
    %s70 = sphi 0, %s68
    %s71 = sphi 0, %s70
    %s85 = sphi 0, %s71
    %s89 = sphi 0, %s89
    %s91 = sphi 0, %s89
    %s92 = sphi 0, %s91
    %s106 = sphi 0, %s92
    %s112 = sphi 0, %s114
    %s115 = sphi 0, %s112
    %s116 = sphi 0, %s115
    %s132 = sphi 0, %s116
    %s138 = sphi 0, %s140
    %s141 = sphi 0, %s138
    %s142 = sphi 0, %s141
    %s158 = sphi 0, %s142
    %s164 = sphi 0, %s166
    %s167 = sphi 0, %s164
    %s168 = sphi 0, %s167
    %s184 = sphi 0, %s168
  $region4: #{densenet_block_forward.5} parent=0 // loop_header_branch
    %16 = sbr.rel (%p14) target = $region8
  $region5: #{densenet_block_forward.5} parent=0 // loop_body
    %s18 = ssub.s32 %s13, 1
    %s19 = ssub.s32 %s13, 2
    %s20 = sadd.s32 %s13, 1
    %s21 = ssub.s32 %s13, %s20
    %p22 = scmp.eq.s32.totalorder %s21, 0
    %s24 = sadd.s32 %s23, 1
    %s25 = scalar_select %p22, %s23, %s24
    %p28 = pneg %p22
    %p29 = scmp.eq.s32.totalorder %s13, 1
    %p30 = por %p28, %p29
    %p31 = scmp.ne.s32.totalorder %s23, %s26
    %p32 = scmp.eq.s32.totalorder %s13, 0
    %p33 = por %p31, %p32
    %p34 = scmp.ne.s32.totalorder %s23, %s26
    %p35 = scmp.eq.s32.totalorder %s18, 1
    %p36 = por %p34, %p35
    %p37 = scmp.ne.s32.totalorder %s26, %s27
    %p38 = scmp.eq.s32.totalorder %s18, 0
    %p39 = por %p37, %p38
    %p40 = scmp.ne.s32.totalorder %s26, %s27
    %p41 = scmp.eq.s32.totalorder %s19, 1
    %p42 = por %p40, %p41
    %p44 = scmp.ne.s32.totalorder %s27, %s43
    %p45 = scmp.eq.s32.totalorder %s19, 0
    %p46 = por %p44, %p45
    %s48 = sadd.s32 %s47, 1
    %p51 = scmp.eq.s32.totalorder %s13, 1
    %p52 = scmp.ne.s32.totalorder %s47, %s49
    %p53 = scmp.eq.s32.totalorder %s13, 0
    %p54 = por %p52, %p53
    %p55 = scmp.ne.s32.totalorder %s47, %s49
    %p56 = scmp.eq.s32.totalorder %s18, 1
    %p57 = por %p55, %p56
    %p58 = scmp.ne.s32.totalorder %s49, %s50
    %p59 = scmp.eq.s32.totalorder %s18, 0
    %p60 = por %p58, %p59
    %p61 = scmp.ne.s32.totalorder %s49, %s50
    %p62 = scmp.eq.s32.totalorder %s19, 1
    %p63 = por %p61, %p62
    %p65 = scmp.ne.s32.totalorder %s50, %s64
    %p66 = scmp.eq.s32.totalorder %s19, 0
    %p67 = por %p65, %p66
    %s69 = sadd.s32 %s68, 1
    %p72 = scmp.eq.s32.totalorder %s13, 1
    %p73 = scmp.ne.s32.totalorder %s68, %s70
    %p74 = scmp.eq.s32.totalorder %s13, 0
    %p75 = por %p73, %p74
    %p76 = scmp.ne.s32.totalorder %s68, %s70
    %p77 = scmp.eq.s32.totalorder %s18, 1
    %p78 = por %p76, %p77
    %p79 = scmp.ne.s32.totalorder %s70, %s71
    %p80 = scmp.eq.s32.totalorder %s18, 0
    %p81 = por %p79, %p80
    %p82 = scmp.ne.s32.totalorder %s70, %s71
    %p83 = scmp.eq.s32.totalorder %s19, 1
    %p84 = por %p82, %p83
    %p86 = scmp.ne.s32.totalorder %s71, %s85
    %p87 = scmp.eq.s32.totalorder %s19, 0
    %p88 = por %p86, %p87
    %s90 = sadd.s32 %s89, 1
    %p93 = scmp.eq.s32.totalorder %s13, 1
    %p94 = scmp.ne.s32.totalorder %s89, %s91
    %p95 = scmp.eq.s32.totalorder %s13, 0
    %p96 = por %p94, %p95
    %p97 = scmp.ne.s32.totalorder %s89, %s91
    %p98 = scmp.eq.s32.totalorder %s18, 1
    %p99 = por %p97, %p98
    %p100 = scmp.ne.s32.totalorder %s91, %s92
    %p101 = scmp.eq.s32.totalorder %s18, 0
    %p102 = por %p100, %p101
    %p103 = scmp.ne.s32.totalorder %s91, %s92
    %p104 = scmp.eq.s32.totalorder %s19, 1
    %p105 = por %p103, %p104
    %p107 = scmp.ne.s32.totalorder %s92, %s106
    %p108 = scmp.eq.s32.totalorder %s19, 0
    %p109 = por %p107, %p108
    %s110 = ssub.s32 %s13, %s20
    %p111 = scmp.eq.s32.totalorder %s110, 0
    %s113 = sadd.s32 %s112, 1
    %s114 = scalar_select %p111, %s112, %s113
    %p117 = pneg %p111
    %p118 = scmp.eq.s32.totalorder %s13, 1
    %p119 = por %p117, %p118
    %p120 = scmp.ne.s32.totalorder %s112, %s115
    %p121 = scmp.eq.s32.totalorder %s13, 0
    %p122 = por %p120, %p121
    %p123 = scmp.ne.s32.totalorder %s112, %s115
    %p124 = scmp.eq.s32.totalorder %s18, 1
    %p125 = por %p123, %p124
    %p126 = scmp.ne.s32.totalorder %s115, %s116
    %p127 = scmp.eq.s32.totalorder %s18, 0
    %p128 = por %p126, %p127
    %p129 = scmp.ne.s32.totalorder %s115, %s116
    %p130 = scmp.eq.s32.totalorder %s19, 1
    %p131 = por %p129, %p130
    %p133 = scmp.ne.s32.totalorder %s116, %s132
    %p134 = scmp.eq.s32.totalorder %s19, 0
    %p135 = por %p133, %p134
    %s136 = ssub.s32 %s13, %s20
    %p137 = scmp.eq.s32.totalorder %s136, 0
    %s139 = sadd.s32 %s138, 1
    %s140 = scalar_select %p137, %s138, %s139
    %p143 = pneg %p137
    %p144 = scmp.eq.s32.totalorder %s13, 1
    %p145 = por %p143, %p144
    %p146 = scmp.ne.s32.totalorder %s138, %s141
    %p147 = scmp.eq.s32.totalorder %s13, 0
    %p148 = por %p146, %p147
    %p149 = scmp.ne.s32.totalorder %s138, %s141
    %p150 = scmp.eq.s32.totalorder %s18, 1
    %p151 = por %p149, %p150
    %p152 = scmp.ne.s32.totalorder %s141, %s142
    %p153 = scmp.eq.s32.totalorder %s18, 0
    %p154 = por %p152, %p153
    %p155 = scmp.ne.s32.totalorder %s141, %s142
    %p156 = scmp.eq.s32.totalorder %s19, 1
    %p157 = por %p155, %p156
    %p159 = scmp.ne.s32.totalorder %s142, %s158
    %p160 = scmp.eq.s32.totalorder %s19, 0
    %p161 = por %p159, %p160
    %s162 = ssub.s32 %s13, %s20
    %p163 = scmp.eq.s32.totalorder %s162, 0
    %s165 = sadd.s32 %s164, 1
    %s166 = scalar_select %p163, %s164, %s165
    %p169 = pneg %p163
    %p170 = scmp.eq.s32.totalorder %s13, 1
    %p171 = por %p169, %p170
    %p172 = scmp.ne.s32.totalorder %s164, %s167
    %p173 = scmp.eq.s32.totalorder %s13, 0
    %p174 = por %p172, %p173
    %p175 = scmp.ne.s32.totalorder %s164, %s167
    %p176 = scmp.eq.s32.totalorder %s18, 1
    %p177 = por %p175, %p176
    %p178 = scmp.ne.s32.totalorder %s167, %s168
    %p179 = scmp.eq.s32.totalorder %s18, 0
    %p180 = por %p178, %p179
    %p181 = scmp.ne.s32.totalorder %s167, %s168
    %p182 = scmp.eq.s32.totalorder %s19, 1
    %p183 = por %p181, %p182
    %p185 = scmp.ne.s32.totalorder %s168, %s184
    %p186 = scmp.eq.s32.totalorder %s19, 0
    %p187 = por %p185, %p186
    %p188 = scmp.le.s32.totalorder 1, %s13
    %p189 = scmp.lt.s32.totalorder %s13, 3
    %p190 = pnand %p188, %p189
    %p191 = pneg %p190
    // Predicated region
    $region9: #{densenet_block_forward.5} parent=5 // pred_check
      _
    $region10: #{densenet_block_forward.5} parent=5 // pred_check_branch
      %193 = sbr.rel (%p190) target = $region12
    $region11: #{densenet_block_forward.5} parent=5 // pred_region
      %s194 = ssub.s32 %s13, 1
      // Predicated region
      $region13: #{densenet_block_forward.5} parent=11 // pred_check
        %p195 = pneg %p60
      $region14: #{densenet_block_forward.5} parent=11 // pred_check_branch
        %197 = sbr.rel (%p195) target = $region16
      $region15: #{densenet_block_forward.5} parent=11 // pred_region
        _
      $region16: #{densenet_block_forward.5} parent=11 // pred_fallthru
        _
      // Predicated region
      $region17: #{densenet_block_forward.5} parent=11 // pred_check
        %p198 = pneg %p81
      $region18: #{densenet_block_forward.5} parent=11 // pred_check_branch
        %200 = sbr.rel (%p198) target = $region20
      $region19: #{densenet_block_forward.5} parent=11 // pred_region
        _
      $region20: #{densenet_block_forward.5} parent=11 // pred_fallthru
        _
      // Predicated region
      $region21: #{densenet_block_forward.5} parent=11 // pred_check
        %p201 = pneg %p102
      $region22: #{densenet_block_forward.5} parent=11 // pred_check_branch
        %203 = sbr.rel (%p201) target = $region24
      $region23: #{densenet_block_forward.5} parent=11 // pred_region
        _
      $region24: #{densenet_block_forward.5} parent=11 // pred_fallthru
        _
    $region12: #{densenet_block_forward.5} parent=5 // pred_fallthru
      _
    %p204 = scmp.lt.s32.totalorder %s13, 2
    // Predicated region
    $region25: #{densenet_block_forward.5} parent=5 // pred_check
      %p205 = pneg %p204
    $region26: #{densenet_block_forward.5} parent=5 // pred_check_branch
      %207 = sbr.rel (%p205) target = $region28
    $region27: #{densenet_block_forward.5} parent=5 // pred_region
      // Predicated region
      $region29: #{densenet_block_forward.5} parent=27 // pred_check
        %p208 = pneg %p33
      $region30: #{densenet_block_forward.5} parent=27 // pred_check_branch
        %210 = sbr.rel (%p208) target = $region32
      $region31: #{densenet_block_forward.5} parent=27 // pred_region
        %p211 = scmp.lt.s32.totalorder %s13, 1
        %s212 = scalar_select %p211, %s13, 1
        %s213 = smul.addr %s212, 32
        %s214 = smul.addr %s213, 4
        %s215 = scalar_lea.vmem %s0, %s214
      $region32: #{densenet_block_forward.5} parent=27 // pred_fallthru
        _
    $region28: #{densenet_block_forward.5} parent=5 // pred_fallthru
      _
    %p216 = scmp.le.s32.totalorder 1, %s13
    %p217 = scmp.lt.s32.totalorder %s13, 3
    %p218 = pnand %p216, %p217
    %p219 = pneg %p218
    // Predicated region
    $region33: #{densenet_block_forward.5} parent=5 // pred_check
      _
    $region34: #{densenet_block_forward.5} parent=5 // pred_check_branch
      %221 = sbr.rel (%p218) target = $region36
    $region35: #{densenet_block_forward.5} parent=5 // pred_region
      %s222 = ssub.s32 %s13, 1
      %p223 = scmp.lt.s32.totalorder %s18, 1
      %s224 = scalar_select %p223, %s18, 1
      %s225 = smul.addr %s224, 32
      %s226 = smul.addr %s225, 4
      %s227 = scalar_lea.vmem %s0, %s226
      %p228 = pneg %p39
      %p229 = pneg %p36
      %p230 = pneg %p60
      %p231 = pneg %p57
      %p232 = pneg %p81
      %p233 = pneg %p78
      %p234 = pneg %p102
      %p235 = pneg %p99
      %p236 = pneg %p128
      %p237 = pneg %p125
      %p238 = scmp.lt.s32.totalorder %s18, 1
      %s239 = scalar_select %p238, %s18, 1
      %s240 = smul.addr %s239, 32
      %s241 = smul.addr %s240, 4
      %s242 = scalar_lea.vmem %s4, %s241
      %p243 = pneg %p154
      %p244 = pneg %p151
      %p245 = scmp.lt.s32.totalorder %s18, 1
      %s246 = scalar_select %p245, %s18, 1
      %s247 = scalar_lea.vmem %s5, %s246
      %p248 = pneg %p180
      %p249 = pneg %p177
      %p250 = scmp.lt.s32.totalorder %s18, 1
      %s251 = scalar_select %p250, %s18, 1
      %s252 = scalar_lea.vmem %s6, %s251
      %p253 = scmp.lt.s32.totalorder %s18, 1
      %s254 = scalar_select %p253, %s18, 1
      %s255 = smul.addr %s254, 32
      %s256 = smul.addr %s255, 4
      %s257 = scalar_lea.vmem %s0, %s256
      %p258 = scmp.lt.s32.totalorder %s18, 1
      %s259 = scalar_select %p258, %s18, 1
      %s260 = smul.addr %s259, 32
      %s261 = smul.addr %s260, 4
      %s262 = scalar_lea.vmem %s4, %s261
      %p263 = scmp.lt.s32.totalorder %s18, 1
      %s264 = scalar_select %p263, %s18, 1
      %s265 = scalar_lea.vmem %s5, %s264
      %p266 = scmp.lt.s32.totalorder %s18, 1
      %s267 = scalar_select %p266, %s18, 1
      %s268 = scalar_lea.vmem %s6, %s267
      %v270 = vld [vmem:[%s257] sm:$0xf]
      %v271 = vld [vmem:[%s257 + $0x4] sm:$0xf]
      %v272 = vld [vmem:[%s257 + $0x8] sm:$0xf]
      %v273 = vld [vmem:[%s257 + $0xc] sm:$0xf]
      %v274 = vld [vmem:[%s257 + $0x10] sm:$0xf]
      %v275 = vld [vmem:[%s257 + $0x14] sm:$0xf]
      %v276 = vld [vmem:[%s257 + $0x18] sm:$0xf]
      %v277 = vld [vmem:[%s257 + $0x1c] sm:$0xf]
      %v278 = vld [vmem:[%s257 + $0x20] sm:$0xf]
      %v279 = vld [vmem:[%s257 + $0x24] sm:$0xf]
      %v280 = vld [vmem:[%s257 + $0x28] sm:$0xf]
      %v281 = vld [vmem:[%s257 + $0x2c] sm:$0xf]
      %v282 = vld [vmem:[%s257 + $0x30] sm:$0xf]
      %v283 = vld [vmem:[%s257 + $0x34] sm:$0xf]
      %v284 = vld [vmem:[%s257 + $0x38] sm:$0xf]
      %v285 = vld [vmem:[%s257 + $0x3c] sm:$0xf]
      %v286 = vld [vmem:[%s257 + $0x40] sm:$0xf]
      %v287 = vld [vmem:[%s257 + $0x44] sm:$0xf]
      %v288 = vld [vmem:[%s257 + $0x48] sm:$0xf]
      %v289 = vld [vmem:[%s257 + $0x4c] sm:$0xf]
      %v290 = vld [vmem:[%s257 + $0x50] sm:$0xf]
      %v291 = vld [vmem:[%s257 + $0x54] sm:$0xf]
      %v292 = vld [vmem:[%s257 + $0x58] sm:$0xf]
      %v293 = vld [vmem:[%s257 + $0x5c] sm:$0xf]
      %v294 = vld [vmem:[%s257 + $0x60] sm:$0xf]
      %v295 = vld [vmem:[%s257 + $0x64] sm:$0xf]
      %v296 = vld [vmem:[%s257 + $0x68] sm:$0xf]
      %v297 = vld [vmem:[%s257 + $0x6c] sm:$0xf]
      %v298 = vld [vmem:[%s257 + $0x70] sm:$0xf]
      %v299 = vld [vmem:[%s257 + $0x74] sm:$0xf]
      %v300 = vld [vmem:[%s257 + $0x78] sm:$0xf]
      %v301 = vld [vmem:[%s257 + $0x7c] sm:$0xf]
      %v302 = vunpack.c.l.bf16 %v270
      %v303 = vunpack.c.l.bf16 %v271
      %v304 = vunpack.c.l.bf16 %v272
      %v305 = vunpack.c.l.bf16 %v273
      %v306 = vunpack.c.l.bf16 %v274
      %v307 = vunpack.c.l.bf16 %v275
      %v308 = vunpack.c.l.bf16 %v276
      %v309 = vunpack.c.l.bf16 %v277
      %v310 = vunpack.c.l.bf16 %v278
      %v311 = vunpack.c.l.bf16 %v279
      %v312 = vunpack.c.l.bf16 %v280
      %v313 = vunpack.c.l.bf16 %v281
      %v314 = vunpack.c.l.bf16 %v282
      %v315 = vunpack.c.l.bf16 %v283
      %v316 = vunpack.c.l.bf16 %v284
      %v317 = vunpack.c.l.bf16 %v285
      %v318 = vunpack.c.l.bf16 %v286
      %v319 = vunpack.c.l.bf16 %v287
      %v320 = vunpack.c.l.bf16 %v288
      %v321 = vunpack.c.l.bf16 %v289
      %v322 = vunpack.c.l.bf16 %v290
      %v323 = vunpack.c.l.bf16 %v291
      %v324 = vunpack.c.l.bf16 %v292
      %v325 = vunpack.c.l.bf16 %v293
      %v326 = vunpack.c.l.bf16 %v294
      %v327 = vunpack.c.l.bf16 %v295
      %v328 = vunpack.c.l.bf16 %v296
      %v329 = vunpack.c.l.bf16 %v297
      %v330 = vunpack.c.l.bf16 %v298
      %v331 = vunpack.c.l.bf16 %v299
      %v332 = vunpack.c.l.bf16 %v300
      %v333 = vunpack.c.l.bf16 %v301
      %v334 = vld [vmem:[%s1] sm:$0x1]
      %v335 = vld [vmem:[%s2] sm:$0x1]
      %v337 = vlaneseq
      %v338 = vshrl.u32 %v337, 7
      %v339 = vsub.s32 0, %v338
      %v340 = vrot.slane %v334, %v339
      %v342 = vmul.f32 %v302, %v340
      %v343 = vmul.f32 %v303, %v340
      %v344 = vmul.f32 %v304, %v340
      %v345 = vmul.f32 %v305, %v340
      %v346 = vmul.f32 %v306, %v340
      %v347 = vmul.f32 %v307, %v340
      %v348 = vmul.f32 %v308, %v340
      %v349 = vmul.f32 %v309, %v340
      %v350 = vmul.f32 %v310, %v340
      %v351 = vmul.f32 %v311, %v340
      %v352 = vmul.f32 %v312, %v340
      %v353 = vmul.f32 %v313, %v340
      %v354 = vmul.f32 %v314, %v340
      %v355 = vmul.f32 %v315, %v340
      %v356 = vmul.f32 %v316, %v340
      %v357 = vmul.f32 %v317, %v340
      %v358 = vmul.f32 %v318, %v340
      %v359 = vmul.f32 %v319, %v340
      %v360 = vmul.f32 %v320, %v340
      %v361 = vmul.f32 %v321, %v340
      %v362 = vmul.f32 %v322, %v340
      %v363 = vmul.f32 %v323, %v340
      %v364 = vmul.f32 %v324, %v340
      %v365 = vmul.f32 %v325, %v340
      %v366 = vmul.f32 %v326, %v340
      %v367 = vmul.f32 %v327, %v340
      %v368 = vmul.f32 %v328, %v340
      %v369 = vmul.f32 %v329, %v340
      %v370 = vmul.f32 %v330, %v340
      %v371 = vmul.f32 %v331, %v340
      %v372 = vmul.f32 %v332, %v340
      %v373 = vmul.f32 %v333, %v340
      %v375 = vlaneseq
      %v376 = vshrl.u32 %v375, 7
      %v377 = vsub.s32 0, %v376
      %v378 = vrot.slane %v335, %v377
      %v380 = vadd.f32 %v342, %v378
      %v381 = vadd.f32 %v343, %v378
      %v382 = vadd.f32 %v344, %v378
      %v383 = vadd.f32 %v345, %v378
      %v384 = vadd.f32 %v346, %v378
      %v385 = vadd.f32 %v347, %v378
      %v386 = vadd.f32 %v348, %v378
      %v387 = vadd.f32 %v349, %v378
      %v388 = vadd.f32 %v350, %v378
      %v389 = vadd.f32 %v351, %v378
      %v390 = vadd.f32 %v352, %v378
      %v391 = vadd.f32 %v353, %v378
      %v392 = vadd.f32 %v354, %v378
      %v393 = vadd.f32 %v355, %v378
      %v394 = vadd.f32 %v356, %v378
      %v395 = vadd.f32 %v357, %v378
      %v396 = vadd.f32 %v358, %v378
      %v397 = vadd.f32 %v359, %v378
      %v398 = vadd.f32 %v360, %v378
      %v399 = vadd.f32 %v361, %v378
      %v400 = vadd.f32 %v362, %v378
      %v401 = vadd.f32 %v363, %v378
      %v402 = vadd.f32 %v364, %v378
      %v403 = vadd.f32 %v365, %v378
      %v404 = vadd.f32 %v366, %v378
      %v405 = vadd.f32 %v367, %v378
      %v406 = vadd.f32 %v368, %v378
      %v407 = vadd.f32 %v369, %v378
      %v408 = vadd.f32 %v370, %v378
      %v409 = vadd.f32 %v371, %v378
      %v410 = vadd.f32 %v372, %v378
      %v411 = vadd.f32 %v373, %v378
      %v412 = vmax.f32 %v380, 0.0
      %v413 = vmax.f32 %v381, 0.0
      %v414 = vmax.f32 %v382, 0.0
      %v415 = vmax.f32 %v383, 0.0
      %v416 = vmax.f32 %v384, 0.0
      %v417 = vmax.f32 %v385, 0.0
      %v418 = vmax.f32 %v386, 0.0
      %v419 = vmax.f32 %v387, 0.0
      %v420 = vmax.f32 %v388, 0.0
      %v421 = vmax.f32 %v389, 0.0
      %v422 = vmax.f32 %v390, 0.0
      %v423 = vmax.f32 %v391, 0.0
      %v424 = vmax.f32 %v392, 0.0
      %v425 = vmax.f32 %v393, 0.0
      %v426 = vmax.f32 %v394, 0.0
      %v427 = vmax.f32 %v395, 0.0
      %v428 = vmax.f32 %v396, 0.0
      %v429 = vmax.f32 %v397, 0.0
      %v430 = vmax.f32 %v398, 0.0
      %v431 = vmax.f32 %v399, 0.0
      %v432 = vmax.f32 %v400, 0.0
      %v433 = vmax.f32 %v401, 0.0
      %v434 = vmax.f32 %v402, 0.0
      %v435 = vmax.f32 %v403, 0.0
      %v436 = vmax.f32 %v404, 0.0
      %v437 = vmax.f32 %v405, 0.0
      %v438 = vmax.f32 %v406, 0.0
      %v439 = vmax.f32 %v407, 0.0
      %v440 = vmax.f32 %v408, 0.0
      %v441 = vmax.f32 %v409, 0.0
      %v442 = vmax.f32 %v410, 0.0
      %v443 = vmax.f32 %v411, 0.0
      %vm444 = vcmask 64512
      %445 = vst.msk [vmem:[#allocation2] sm:$0xff] %vm444, 0.0
      %446 = vst.msk [vmem:[#allocation2 + $0x8] sm:$0xff] %vm444, 0.0
      %vm447 = vcmask 58368
      %448 = vst.msk [vmem:[#allocation2 + $0x10] sm:$0x3] %vm447, 0.0
      %449 = vst.msk [vmem:[#allocation2 + $0x18] sm:$0xff] %vm444, 0.0
      %450 = vst.msk [vmem:[#allocation2 + $0x20] sm:$0xff] %vm444, 0.0
      %451 = vst.msk [vmem:[#allocation2 + $0x28] sm:$0x3] %vm447, 0.0
      %452 = vst.msk [vmem:[#allocation2 + $0x30] sm:$0xff] %vm444, 0.0
      %453 = vst.msk [vmem:[#allocation2 + $0x38] sm:$0xff] %vm444, 0.0
      %454 = vst.msk [vmem:[#allocation2 + $0x40] sm:$0x3] %vm447, 0.0
      %455 = vst.msk [vmem:[#allocation2 + $0x48] sm:$0xff] %vm444, 0.0
      %456 = vst.msk [vmem:[#allocation2 + $0x50] sm:$0xff] %vm444, 0.0
      %457 = vst.msk [vmem:[#allocation2 + $0x58] sm:$0x3] %vm447, 0.0
      %458 = vst.msk [vmem:[#allocation2 + $0x60] sm:$0xff] %vm444, 0.0
      %459 = vst.msk [vmem:[#allocation2 + $0x68] sm:$0xff] %vm444, 0.0
      %460 = vst.msk [vmem:[#allocation2 + $0x70] sm:$0x3] %vm447, 0.0
      %461 = vst.msk [vmem:[#allocation2 + $0x78] sm:$0xff] %vm444, 0.0
      %462 = vst.msk [vmem:[#allocation2 + $0x80] sm:$0xff] %vm444, 0.0
      %463 = vst.msk [vmem:[#allocation2 + $0x88] sm:$0x3] %vm447, 0.0
      %464 = vst.msk [vmem:[#allocation2 + $0x90] sm:$0xff] %vm444, 0.0
      %465 = vst.msk [vmem:[#allocation2 + $0x98] sm:$0xff] %vm444, 0.0
      %466 = vst.msk [vmem:[#allocation2 + $0xa0] sm:$0x3] %vm447, 0.0
      %467 = vst.msk [vmem:[#allocation2 + $0xa8] sm:$0xff] %vm444, 0.0
      %468 = vst.msk [vmem:[#allocation2 + $0xb0] sm:$0xff] %vm444, 0.0
      %469 = vst.msk [vmem:[#allocation2 + $0xb8] sm:$0x3] %vm447, 0.0
      %470 = vst.msk [vmem:[#allocation2 + $0xc0] sm:$0xff] %vm444, 0.0
      %471 = vst.msk [vmem:[#allocation2 + $0xc8] sm:$0xff] %vm444, 0.0
      %472 = vst.msk [vmem:[#allocation2 + $0xd0] sm:$0x3] %vm447, 0.0
      %473 = vst.msk [vmem:[#allocation2 + $0xd8] sm:$0xff] %vm444, 0.0
      %474 = vst.msk [vmem:[#allocation2 + $0xe0] sm:$0xff] %vm444, 0.0
      %475 = vst.msk [vmem:[#allocation2 + $0xe8] sm:$0x3] %vm447, 0.0
      %476 = vst.msk [vmem:[#allocation2 + $0xf0] sm:$0xff] %vm444, 0.0
      %477 = vst.msk [vmem:[#allocation2 + $0xf8] sm:$0xff] %vm444, 0.0
      %478 = vst.msk [vmem:[#allocation2 + $0x100] sm:$0x3] %vm447, 0.0
      %479 = vst.msk [vmem:[#allocation2 + $0x108] sm:$0xff] %vm444, 0.0
      %480 = vst.msk [vmem:[#allocation2 + $0x110] sm:$0xff] %vm444, 0.0
      %481 = vst.msk [vmem:[#allocation2 + $0x118] sm:$0x3] %vm447, 0.0
      %482 = vst.msk [vmem:[#allocation2 + $0x120] sm:$0xff] %vm444, 0.0
      %483 = vst.msk [vmem:[#allocation2 + $0x128] sm:$0xff] %vm444, 0.0
      %484 = vst.msk [vmem:[#allocation2 + $0x130] sm:$0x3] %vm447, 0.0
      %485 = vst.msk [vmem:[#allocation2 + $0x138] sm:$0xff] %vm444, 0.0
      %486 = vst.msk [vmem:[#allocation2 + $0x140] sm:$0xff] %vm444, 0.0
      %487 = vst.msk [vmem:[#allocation2 + $0x148] sm:$0x3] %vm447, 0.0
      %488 = vst.msk [vmem:[#allocation2 + $0x150] sm:$0xff] %vm444, 0.0
      %489 = vst.msk [vmem:[#allocation2 + $0x158] sm:$0xff] %vm444, 0.0
      %490 = vst.msk [vmem:[#allocation2 + $0x160] sm:$0x3] %vm447, 0.0
      %491 = vst.msk [vmem:[#allocation2 + $0x168] sm:$0xff] %vm444, 0.0
      %492 = vst.msk [vmem:[#allocation2 + $0x170] sm:$0xff] %vm444, 0.0
      %493 = vst.msk [vmem:[#allocation2 + $0x178] sm:$0x3] %vm447, 0.0
      %494 = vst.msk [vmem:[#allocation2 + $0x180] sm:$0xff] %vm444, 0.0
      %495 = vst.msk [vmem:[#allocation2 + $0x188] sm:$0xff] %vm444, 0.0
      %496 = vst.msk [vmem:[#allocation2 + $0x190] sm:$0x3] %vm447, 0.0
      %497 = vst.msk [vmem:[#allocation2 + $0x198] sm:$0xff] %vm444, 0.0
      %498 = vst.msk [vmem:[#allocation2 + $0x1a0] sm:$0xff] %vm444, 0.0
      %499 = vst.msk [vmem:[#allocation2 + $0x1a8] sm:$0x3] %vm447, 0.0
      %s500 = scalar_lea.vmem [#allocation2], 24
      %501 = vst.msk [vmem:[%s500 + $0x1] sm:$0xff] %vm444, %v412
      %502 = vst.msk [vmem:[%s500 + $0x9] sm:$0xff] %vm444, %v413
      %503 = vst.msk [vmem:[%s500 + $0x19] sm:$0xff] %vm444, %v414
      %504 = vst.msk [vmem:[%s500 + $0x21] sm:$0xff] %vm444, %v415
      %505 = vst.msk [vmem:[%s500 + $0x31] sm:$0xff] %vm444, %v416
      %506 = vst.msk [vmem:[%s500 + $0x39] sm:$0xff] %vm444, %v417
      %507 = vst.msk [vmem:[%s500 + $0x49] sm:$0xff] %vm444, %v418
      %508 = vst.msk [vmem:[%s500 + $0x51] sm:$0xff] %vm444, %v419
      %509 = vst.msk [vmem:[%s500 + $0x61] sm:$0xff] %vm444, %v420
      %510 = vst.msk [vmem:[%s500 + $0x69] sm:$0xff] %vm444, %v421
      %511 = vst.msk [vmem:[%s500 + $0x79] sm:$0xff] %vm444, %v422
      %512 = vst.msk [vmem:[%s500 + $0x81] sm:$0xff] %vm444, %v423
      %513 = vst.msk [vmem:[%s500 + $0x91] sm:$0xff] %vm444, %v424
      %514 = vst.msk [vmem:[%s500 + $0x99] sm:$0xff] %vm444, %v425
      %515 = vst.msk [vmem:[%s500 + $0xa9] sm:$0xff] %vm444, %v426
      %516 = vst.msk [vmem:[%s500 + $0xb1] sm:$0xff] %vm444, %v427
      %517 = vst.msk [vmem:[%s500 + $0xc1] sm:$0xff] %vm444, %v428
      %518 = vst.msk [vmem:[%s500 + $0xc9] sm:$0xff] %vm444, %v429
      %519 = vst.msk [vmem:[%s500 + $0xd9] sm:$0xff] %vm444, %v430
      %520 = vst.msk [vmem:[%s500 + $0xe1] sm:$0xff] %vm444, %v431
      %521 = vst.msk [vmem:[%s500 + $0xf1] sm:$0xff] %vm444, %v432
      %522 = vst.msk [vmem:[%s500 + $0xf9] sm:$0xff] %vm444, %v433
      %523 = vst.msk [vmem:[%s500 + $0x109] sm:$0xff] %vm444, %v434
      %524 = vst.msk [vmem:[%s500 + $0x111] sm:$0xff] %vm444, %v435
      %525 = vst.msk [vmem:[%s500 + $0x121] sm:$0xff] %vm444, %v436
      %526 = vst.msk [vmem:[%s500 + $0x129] sm:$0xff] %vm444, %v437
      %527 = vst.msk [vmem:[%s500 + $0x139] sm:$0xff] %vm444, %v438
      %528 = vst.msk [vmem:[%s500 + $0x141] sm:$0xff] %vm444, %v439
      %529 = vst.msk [vmem:[%s500 + $0x151] sm:$0xff] %vm444, %v440
      %530 = vst.msk [vmem:[%s500 + $0x159] sm:$0xff] %vm444, %v441
      %531 = vst.msk [vmem:[%s500 + $0x169] sm:$0xff] %vm444, %v442
      %532 = vst.msk [vmem:[%s500 + $0x171] sm:$0xff] %vm444, %v443
      %533 = vst.msk [vmem:[#allocation3] sm:$0xff] %vm444, 0.0
      %534 = vst.msk [vmem:[#allocation3 + $0x8] sm:$0xff] %vm444, 0.0
      %535 = vst.msk [vmem:[#allocation3 + $0x10] sm:$0xff] %vm444, 0.0
      %536 = vst.msk [vmem:[#allocation3 + $0x18] sm:$0xff] %vm444, 0.0
      %537 = vst.msk [vmem:[#allocation3 + $0x20] sm:$0xff] %vm444, 0.0
      %538 = vst.msk [vmem:[#allocation3 + $0x28] sm:$0xff] %vm444, 0.0
      %539 = vst.msk [vmem:[#allocation3 + $0x30] sm:$0xff] %vm444, 0.0
      %540 = vst.msk [vmem:[#allocation3 + $0x38] sm:$0xff] %vm444, 0.0
      %541 = vst.msk [vmem:[#allocation3 + $0x40] sm:$0xff] %vm444, 0.0
      %542 = vst.msk [vmem:[#allocation3 + $0x48] sm:$0xff] %vm444, 0.0
      %543 = vst.msk [vmem:[#allocation3 + $0x50] sm:$0xff] %vm444, 0.0
      %544 = vst.msk [vmem:[#allocation3 + $0x58] sm:$0xff] %vm444, 0.0
      %545 = vst.msk [vmem:[#allocation3 + $0x60] sm:$0xff] %vm444, 0.0
      %546 = vst.msk [vmem:[#allocation3 + $0x68] sm:$0xff] %vm444, 0.0
      %547 = vst.msk [vmem:[#allocation3 + $0x70] sm:$0xff] %vm444, 0.0
      %548 = vst.msk [vmem:[#allocation3 + $0x78] sm:$0xff] %vm444, 0.0
      %549 = vst.msk [vmem:[#allocation3 + $0x80] sm:$0xff] %vm444, 0.0
      %550 = vst.msk [vmem:[#allocation3 + $0x88] sm:$0xff] %vm444, 0.0
      %551 = vst.msk [vmem:[#allocation3 + $0x90] sm:$0xff] %vm444, 0.0
      %552 = vst.msk [vmem:[#allocation3 + $0x98] sm:$0xff] %vm444, 0.0
      %553 = vst.msk [vmem:[#allocation3 + $0xa0] sm:$0xff] %vm444, 0.0
      %554 = vst.msk [vmem:[#allocation3 + $0xa8] sm:$0xff] %vm444, 0.0
      %555 = vst.msk [vmem:[#allocation3 + $0xb0] sm:$0xff] %vm444, 0.0
      %556 = vst.msk [vmem:[#allocation3 + $0xb8] sm:$0xff] %vm444, 0.0
      %557 = vst.msk [vmem:[#allocation3 + $0xc0] sm:$0xff] %vm444, 0.0
      %558 = vst.msk [vmem:[#allocation3 + $0xc8] sm:$0xff] %vm444, 0.0
      %559 = vst.msk [vmem:[#allocation3 + $0xd0] sm:$0xff] %vm444, 0.0
      %560 = vst.msk [vmem:[#allocation3 + $0xd8] sm:$0xff] %vm444, 0.0
      %561 = vst.msk [vmem:[#allocation3 + $0xe0] sm:$0xff] %vm444, 0.0
      %562 = vst.msk [vmem:[#allocation3 + $0xe8] sm:$0xff] %vm444, 0.0
      %563 = vst.msk [vmem:[#allocation3 + $0xf0] sm:$0xff] %vm444, 0.0
      %564 = vst.msk [vmem:[#allocation3 + $0xf8] sm:$0xff] %vm444, 0.0
      %v565 = vld [vmem:[#allocation2] sm:$0xff]
      %v566 = vld [vmem:[#allocation2 + $0x8] sm:$0xff]
      %v567 = vld [vmem:[#allocation2 + $0x18] sm:$0xff]
      %v568 = vld [vmem:[#allocation2 + $0x20] sm:$0xff]
      %v569 = vld [vmem:[#allocation2 + $0x30] sm:$0xff]
      %v570 = vld [vmem:[#allocation2 + $0x38] sm:$0xff]
      %v571 = vld [vmem:[#allocation2 + $0x48] sm:$0xff]
      %v572 = vld [vmem:[#allocation2 + $0x50] sm:$0xff]
      %v573 = vld [vmem:[#allocation2 + $0x60] sm:$0xff]
      %v574 = vld [vmem:[#allocation2 + $0x68] sm:$0xff]
      %v575 = vld [vmem:[#allocation2 + $0x78] sm:$0xff]
      %v576 = vld [vmem:[#allocation2 + $0x80] sm:$0xff]
      %v577 = vld [vmem:[#allocation2 + $0x90] sm:$0xff]
      %v578 = vld [vmem:[#allocation2 + $0x98] sm:$0xff]
      %v579 = vld [vmem:[#allocation2 + $0xa8] sm:$0xff]
      %v580 = vld [vmem:[#allocation2 + $0xb0] sm:$0xff]
      %v581 = vld [vmem:[#allocation2 + $0xc0] sm:$0xff]
      %v582 = vld [vmem:[#allocation2 + $0xc8] sm:$0xff]
      %v583 = vld [vmem:[#allocation2 + $0xd8] sm:$0xff]
      %v584 = vld [vmem:[#allocation2 + $0xe0] sm:$0xff]
      %v585 = vld [vmem:[#allocation2 + $0xf0] sm:$0xff]
      %v586 = vld [vmem:[#allocation2 + $0xf8] sm:$0xff]
      %v587 = vld [vmem:[#allocation2 + $0x108] sm:$0xff]
      %v588 = vld [vmem:[#allocation2 + $0x110] sm:$0xff]
      %v589 = vld [vmem:[#allocation2 + $0x120] sm:$0xff]
      %v590 = vld [vmem:[#allocation2 + $0x128] sm:$0xff]
      %v591 = vld [vmem:[#allocation2 + $0x138] sm:$0xff]
      %v592 = vld [vmem:[#allocation2 + $0x140] sm:$0xff]
      %v593 = vld [vmem:[#allocation2 + $0x150] sm:$0xff]
      %v594 = vld [vmem:[#allocation2 + $0x158] sm:$0xff]
      %v595 = vld [vmem:[#allocation2 + $0x168] sm:$0xff]
      %v596 = vld [vmem:[#allocation2 + $0x170] sm:$0xff]
      %v597 = vpack.c.bf16 %v566, %v565
      %v598 = vpack.c.bf16 %v568, %v567
      %v599 = vpack.c.bf16 %v570, %v569
      %v600 = vpack.c.bf16 %v572, %v571
      %v601 = vpack.c.bf16 %v574, %v573
      %v602 = vpack.c.bf16 %v576, %v575
      %v603 = vpack.c.bf16 %v578, %v577
      %v604 = vpack.c.bf16 %v580, %v579
      %v605 = vpack.c.bf16 %v582, %v581
      %v606 = vpack.c.bf16 %v584, %v583
      %v607 = vpack.c.bf16 %v586, %v585
      %v608 = vpack.c.bf16 %v588, %v587
      %v609 = vpack.c.bf16 %v590, %v589
      %v610 = vpack.c.bf16 %v592, %v591
      %v611 = vpack.c.bf16 %v594, %v593
      %v612 = vpack.c.bf16 %v596, %v595
      %v613 = vld [vmem:[#allocation3] sm:$0xff]
      %v614 = vld [vmem:[#allocation3 + $0x8] sm:$0xff]
      %v615 = vld [vmem:[#allocation3 + $0x10] sm:$0xff]
      %v616 = vld [vmem:[#allocation3 + $0x18] sm:$0xff]
      %v617 = vld [vmem:[#allocation3 + $0x20] sm:$0xff]
      %v618 = vld [vmem:[#allocation3 + $0x28] sm:$0xff]
      %v619 = vld [vmem:[#allocation3 + $0x30] sm:$0xff]
      %v620 = vld [vmem:[#allocation3 + $0x38] sm:$0xff]
      %v621 = vld [vmem:[#allocation3 + $0x40] sm:$0xff]
      %v622 = vld [vmem:[#allocation3 + $0x48] sm:$0xff]
      %v623 = vld [vmem:[#allocation3 + $0x50] sm:$0xff]
      %v624 = vld [vmem:[#allocation3 + $0x58] sm:$0xff]
      %v625 = vld [vmem:[#allocation3 + $0x60] sm:$0xff]
      %v626 = vld [vmem:[#allocation3 + $0x68] sm:$0xff]
      %v627 = vld [vmem:[#allocation3 + $0x70] sm:$0xff]
      %v628 = vld [vmem:[#allocation3 + $0x78] sm:$0xff]
      %v629 = vld [vmem:[#allocation3 + $0x80] sm:$0xff]
      %v630 = vld [vmem:[#allocation3 + $0x88] sm:$0xff]
      %v631 = vld [vmem:[#allocation3 + $0x90] sm:$0xff]
      %v632 = vld [vmem:[#allocation3 + $0x98] sm:$0xff]
      %v633 = vld [vmem:[#allocation3 + $0xa0] sm:$0xff]
      %v634 = vld [vmem:[#allocation3 + $0xa8] sm:$0xff]
      %v635 = vld [vmem:[#allocation3 + $0xb0] sm:$0xff]
      %v636 = vld [vmem:[#allocation3 + $0xb8] sm:$0xff]
      %v637 = vld [vmem:[#allocation3 + $0xc0] sm:$0xff]
      %v638 = vld [vmem:[#allocation3 + $0xc8] sm:$0xff]
      %v639 = vld [vmem:[#allocation3 + $0xd0] sm:$0xff]
      %v640 = vld [vmem:[#allocation3 + $0xd8] sm:$0xff]
      %v641 = vld [vmem:[#allocation3 + $0xe0] sm:$0xff]
      %v642 = vld [vmem:[#allocation3 + $0xe8] sm:$0xff]
      %v643 = vld [vmem:[#allocation3 + $0xf0] sm:$0xff]
      %v644 = vld [vmem:[#allocation3 + $0xf8] sm:$0xff]
      %v645 = vld [vmem:[%s3] sm:$0xf]
      %v647 = vsel %vm444, %v597, 0
      %v650 = vsel %vm444, %v598, 0
      %v653 = vsel %vm444, %v599, 0
      %v656 = vsel %vm444, %v600, 0
      %v659 = vsel %vm444, %v601, 0
      %v662 = vsel %vm444, %v602, 0
      %v665 = vsel %vm444, %v603, 0
      %v668 = vsel %vm444, %v604, 0
      %v671 = vsel %vm444, %v605, 0
      %v674 = vsel %vm444, %v606, 0
      %v677 = vsel %vm444, %v607, 0
      %v680 = vsel %vm444, %v608, 0
      %v683 = vsel %vm444, %v609, 0
      %v686 = vsel %vm444, %v610, 0
      %v689 = vsel %vm444, %v611, 0
      %v692 = vsel %vm444, %v612, 0
      %vm694 = vcmask 1043456
      %v696 = vsel %vm694, %v645, 0
      %698 = vmatprep.subr.bf16.mxu0 0
      %699 = vmatpush1.bf16.msra.mxu0 %v696
      %700 = vmatprep.subr.bf16.mxu0 0
      %701 = vmatpush1.bf16.msra.mxu0 0
      %702 = vmatprep.subr.bf16.mxu0 0
      %703 = vmatpush1.bf16.msra.mxu0 0
      %704 = vmatprep.subr.bf16.mxu0 0
      %705 = vmatpush1.bf16.msra.mxu0 0
      %706 = vmatprep.subr.bf16.mxu0 0
      %707 = vmatpush1.bf16.msra.mxu0 0
      %708 = vmatprep.subr.bf16.mxu0 0
      %709 = vmatpush1.bf16.msra.mxu0 0
      %710 = vmatprep.subr.bf16.mxu0 0
      %711 = vmatpush1.bf16.msra.mxu0 0
      %712 = vmatprep.subr.bf16.mxu0 0
      %713 = vmatpush1.bf16.msra.mxu0 0
      %714 = vmatprep.subr.bf16.mxu0 0
      %715 = vmatpush1.bf16.msra.mxu0 0
      %716 = vmatprep.subr.bf16.mxu0 0
      %717 = vmatpush1.bf16.msra.mxu0 0
      %718 = vmatprep.subr.bf16.mxu0 0
      %719 = vmatpush1.bf16.msra.mxu0 0
      %720 = vmatprep.subr.bf16.mxu0 0
      %721 = vmatpush1.bf16.msra.mxu0 0
      %722 = vmatprep.subr.bf16.mxu0 0
      %723 = vmatpush1.bf16.msra.mxu0 0
      %724 = vmatprep.subr.bf16.mxu0 0
      %725 = vmatpush1.bf16.msra.mxu0 0
      %726 = vmatprep.subr.bf16.mxu0 0
      %727 = vmatpush1.bf16.msra.mxu0 0
      %728 = vmatprep.subr.bf16.mxu0 0
      %729 = vmatpush1.bf16.msra.mxu0 0
      %730 = vmatprep.mubr.bf16.mxu0 0
      %731 = vmatmul.mubr.bf16.gmra.mrb[0].mxu0 %v647
      %v732 = vpop.f32.mrb[0].mxu0
      %v733 = vadd.f32 0.0, %v732
      %v734 = vpop.f32.mrb[0].mxu0
      %v735 = vpop.f32.mrb[0].mxu0
      %v736 = vadd.f32 0.0, %v735
      %v737 = vpop.f32.mrb[0].mxu0
      %738 = vmatprep.mubr.bf16.mxu0 0
      %739 = vmatmul.mubr.bf16.gmra.mrb[0].mxu0 %v650
      %v740 = vpop.f32.mrb[0].mxu0
      %v741 = vadd.f32 0.0, %v740
      %v742 = vpop.f32.mrb[0].mxu0
      %v743 = vpop.f32.mrb[0].mxu0
      %v744 = vadd.f32 0.0, %v743
      %v745 = vpop.f32.mrb[0].mxu0
      %746 = vmatprep.mubr.bf16.mxu0 0
      %747 = vmatmul.mubr.bf16.gmra.mrb[0].mxu0 %v653
      %v748 = vpop.f32.mrb[0].mxu0
      %v749 = vadd.f32 0.0, %v748
      %v750 = vpop.f32.mrb[0].mxu0
      %v751 = vpop.f32.mrb[0].mxu0
      %v752 = vadd.f32 0.0, %v751
      %v753 = vpop.f32.mrb[0].mxu0
      %754 = vmatprep.mubr.bf16.mxu0 0
      %755 = vmatmul.mubr.bf16.gmra.mrb[0].mxu0 %v656
      %v756 = vpop.f32.mrb[0].mxu0
      %v757 = vadd.f32 0.0, %v756
      %v758 = vpop.f32.mrb[0].mxu0
      %v759 = vpop.f32.mrb[0].mxu0
      %v760 = vadd.f32 0.0, %v759
      %v761 = vpop.f32.mrb[0].mxu0
      %762 = vmatprep.mubr.bf16.mxu0 0
      %763 = vmatmul.mubr.bf16.gmra.mrb[0].mxu0 %v659
      %v764 = vpop.f32.mrb[0].mxu0
      %v765 = vadd.f32 0.0, %v764
      %v766 = vpop.f32.mrb[0].mxu0
      %v767 = vpop.f32.mrb[0].mxu0
      %v768 = vadd.f32 0.0, %v767
      %v769 = vpop.f32.mrb[0].mxu0
      %770 = vmatprep.mubr.bf16.mxu0 0
      %771 = vmatmul.mubr.bf16.gmra.mrb[0].mxu0 %v662
      %v772 = vpop.f32.mrb[0].mxu0
      %v773 = vadd.f32 0.0, %v772
      %v774 = vpop.f32.mrb[0].mxu0
      %v775 = vpop.f32.mrb[0].mxu0
      %v776 = vadd.f32 0.0, %v775
      %v777 = vpop.f32.mrb[0].mxu0
      %778 = vmatprep.mubr.bf16.mxu0 0
      %779 = vmatmul.mubr.bf16.gmra.mrb[0].mxu0 %v665
      %v780 = vpop.f32.mrb[0].mxu0
      %v781 = vadd.f32 0.0, %v780
      %v782 = vpop.f32.mrb[0].mxu0
      %v783 = vpop.f32.mrb[0].mxu0
      %v784 = vadd.f32 0.0, %v783
      %v785 = vpop.f32.mrb[0].mxu0
      %786 = vmatprep.mubr.bf16.mxu0 0
      %787 = vmatmul.mubr.bf16.gmra.mrb[0].mxu0 %v668
      %v788 = vpop.f32.mrb[0].mxu0
      %v789 = vadd.f32 0.0, %v788
      %v790 = vpop.f32.mrb[0].mxu0
      %v791 = vpop.f32.mrb[0].mxu0
      %v792 = vadd.f32 0.0, %v791
      %v793 = vpop.f32.mrb[0].mxu0
      %794 = vmatprep.mubr.bf16.mxu0 0
      %795 = vmatmul.mubr.bf16.gmra.mrb[0].mxu0 %v671
      %v796 = vpop.f32.mrb[0].mxu0
      %v797 = vadd.f32 0.0, %v796
      %v798 = vpop.f32.mrb[0].mxu0
      %v799 = vpop.f32.mrb[0].mxu0
      %v800 = vadd.f32 0.0, %v799
      %v801 = vpop.f32.mrb[0].mxu0
      %802 = vmatprep.mubr.bf16.mxu0 0
      %803 = vmatmul.mubr.bf16.gmra.mrb[0].mxu0 %v674
      %v804 = vpop.f32.mrb[0].mxu0
      %v805 = vadd.f32 0.0, %v804
      %v806 = vpop.f32.mrb[0].mxu0
      %v807 = vpop.f32.mrb[0].mxu0
      %v808 = vadd.f32 0.0, %v807
      %v809 = vpop.f32.mrb[0].mxu0
      %810 = vmatprep.mubr.bf16.mxu0 0
      %811 = vmatmul.mubr.bf16.gmra.mrb[0].mxu0 %v677
      %v812 = vpop.f32.mrb[0].mxu0
      %v813 = vadd.f32 0.0, %v812
      %v814 = vpop.f32.mrb[0].mxu0
      %v815 = vpop.f32.mrb[0].mxu0
      %v816 = vadd.f32 0.0, %v815
      %v817 = vpop.f32.mrb[0].mxu0
      %818 = vmatprep.mubr.bf16.mxu0 0
      %819 = vmatmul.mubr.bf16.gmra.mrb[0].mxu0 %v680
      %v820 = vpop.f32.mrb[0].mxu0
      %v821 = vadd.f32 0.0, %v820
      %v822 = vpop.f32.mrb[0].mxu0
      %v823 = vpop.f32.mrb[0].mxu0
      %v824 = vadd.f32 0.0, %v823
      %v825 = vpop.f32.mrb[0].mxu0
      %826 = vmatprep.mubr.bf16.mxu0 0
      %827 = vmatmul.mubr.bf16.gmra.mrb[0].mxu0 %v683
      %v828 = vpop.f32.mrb[0].mxu0
      %v829 = vadd.f32 0.0, %v828
      %v830 = vpop.f32.mrb[0].mxu0
      %v831 = vpop.f32.mrb[0].mxu0
      %v832 = vadd.f32 0.0, %v831
      %v833 = vpop.f32.mrb[0].mxu0
      %834 = vmatprep.mubr.bf16.mxu0 0
      %835 = vmatmul.mubr.bf16.gmra.mrb[0].mxu0 %v686
      %v836 = vpop.f32.mrb[0].mxu0
      %v837 = vadd.f32 0.0, %v836
      %v838 = vpop.f32.mrb[0].mxu0
      %v839 = vpop.f32.mrb[0].mxu0
      %v840 = vadd.f32 0.0, %v839
      %v841 = vpop.f32.mrb[0].mxu0
      %842 = vmatprep.mubr.bf16.mxu0 0
      %843 = vmatmul.mubr.bf16.gmra.mrb[0].mxu0 %v689
      %v844 = vpop.f32.mrb[0].mxu0
      %v845 = vadd.f32 0.0, %v844
      %v846 = vpop.f32.mrb[0].mxu0
      %v847 = vpop.f32.mrb[0].mxu0
      %v848 = vadd.f32 0.0, %v847
      %v849 = vpop.f32.mrb[0].mxu0
      %850 = vmatprep.mubr.bf16.mxu0 0
      %851 = vmatmul.mubr.bf16.gmra.mrb[0].mxu0 %v692
      %v852 = vpop.f32.mrb[0].mxu0
      %v853 = vadd.f32 0.0, %v852
      %v854 = vpop.f32.mrb[0].mxu0
      %v855 = vpop.f32.mrb[0].mxu0
      %v856 = vadd.f32 0.0, %v855
      %v857 = vpop.f32.mrb[0].mxu0
      %858 = vdwg.mxu0
      %v859 = vadd.f32 %v613, %v733
      %v860 = vadd.f32 %v614, %v736
      %v861 = vadd.f32 %v615, %v741
      %v862 = vadd.f32 %v616, %v744
      %v863 = vadd.f32 %v617, %v749
      %v864 = vadd.f32 %v618, %v752
      %v865 = vadd.f32 %v619, %v757
      %v866 = vadd.f32 %v620, %v760
      %v867 = vadd.f32 %v621, %v765
      %v868 = vadd.f32 %v622, %v768
      %v869 = vadd.f32 %v623, %v773
      %v870 = vadd.f32 %v624, %v776
      %v871 = vadd.f32 %v625, %v781
      %v872 = vadd.f32 %v626, %v784
      %v873 = vadd.f32 %v627, %v789
      %v874 = vadd.f32 %v628, %v792
      %v875 = vadd.f32 %v629, %v797
      %v876 = vadd.f32 %v630, %v800
      %v877 = vadd.f32 %v631, %v805
      %v878 = vadd.f32 %v632, %v808
      %v879 = vadd.f32 %v633, %v813
      %v880 = vadd.f32 %v634, %v816
      %v881 = vadd.f32 %v635, %v821
      %v882 = vadd.f32 %v636, %v824
      %v883 = vadd.f32 %v637, %v829
      %v884 = vadd.f32 %v638, %v832
      %v885 = vadd.f32 %v639, %v837
      %v886 = vadd.f32 %v640, %v840
      %v887 = vadd.f32 %v641, %v845
      %v888 = vadd.f32 %v642, %v848
      %v889 = vadd.f32 %v643, %v853
      %v890 = vadd.f32 %v644, %v856
      %891 = vst.msk [vmem:[#allocation3] sm:$0xff] %vm444, %v859
      %892 = vst.msk [vmem:[#allocation3 + $0x8] sm:$0xff] %vm444, %v860
      %893 = vst.msk [vmem:[#allocation3 + $0x10] sm:$0xff] %vm444, %v861
      %894 = vst.msk [vmem:[#allocation3 + $0x18] sm:$0xff] %vm444, %v862
      %895 = vst.msk [vmem:[#allocation3 + $0x20] sm:$0xff] %vm444, %v863
      %896 = vst.msk [vmem:[#allocation3 + $0x28] sm:$0xff] %vm444, %v864
      %897 = vst.msk [vmem:[#allocation3 + $0x30] sm:$0xff] %vm444, %v865
      %898 = vst.msk [vmem:[#allocation3 + $0x38] sm:$0xff] %vm444, %v866
      %899 = vst.msk [vmem:[#allocation3 + $0x40] sm:$0xff] %vm444, %v867
      %900 = vst.msk [vmem:[#allocation3 + $0x48] sm:$0xff] %vm444, %v868
      %901 = vst.msk [vmem:[#allocation3 + $0x50] sm:$0xff] %vm444, %v869
      %902 = vst.msk [vmem:[#allocation3 + $0x58] sm:$0xff] %vm444, %v870
      %903 = vst.msk [vmem:[#allocation3 + $0x60] sm:$0xff] %vm444, %v871
      %904 = vst.msk [vmem:[#allocation3 + $0x68] sm:$0xff] %vm444, %v872
      %905 = vst.msk [vmem:[#allocation3 + $0x70] sm:$0xff] %vm444, %v873
      %906 = vst.msk [vmem:[#allocation3 + $0x78] sm:$0xff] %vm444, %v874
      %907 = vst.msk [vmem:[#allocation3 + $0x80] sm:$0xff] %vm444, %v875
      %908 = vst.msk [vmem:[#allocation3 + $0x88] sm:$0xff] %vm444, %v876
      %909 = vst.msk [vmem:[#allocation3 + $0x90] sm:$0xff] %vm444, %v877
      %910 = vst.msk [vmem:[#allocation3 + $0x98] sm:$0xff] %vm444, %v878
      %911 = vst.msk [vmem:[#allocation3 + $0xa0] sm:$0xff] %vm444, %v879
      %912 = vst.msk [vmem:[#allocation3 + $0xa8] sm:$0xff] %vm444, %v880
      %913 = vst.msk [vmem:[#allocation3 + $0xb0] sm:$0xff] %vm444, %v881
      %914 = vst.msk [vmem:[#allocation3 + $0xb8] sm:$0xff] %vm444, %v882
      %915 = vst.msk [vmem:[#allocation3 + $0xc0] sm:$0xff] %vm444, %v883
      %916 = vst.msk [vmem:[#allocation3 + $0xc8] sm:$0xff] %vm444, %v884
      %917 = vst.msk [vmem:[#allocation3 + $0xd0] sm:$0xff] %vm444, %v885
      %918 = vst.msk [vmem:[#allocation3 + $0xd8] sm:$0xff] %vm444, %v886
      %919 = vst.msk [vmem:[#allocation3 + $0xe0] sm:$0xff] %vm444, %v887
      %920 = vst.msk [vmem:[#allocation3 + $0xe8] sm:$0xff] %vm444, %v888
      %921 = vst.msk [vmem:[#allocation3 + $0xf0] sm:$0xff] %vm444, %v889
      %922 = vst.msk [vmem:[#allocation3 + $0xf8] sm:$0xff] %vm444, %v890
      %v923 = vld [vmem:[#allocation2 + $0x1] sm:$0xff]
      %v924 = vld [vmem:[#allocation2 + $0x9] sm:$0xff]
      %v925 = vld [vmem:[#allocation2 + $0x19] sm:$0xff]
      %v926 = vld [vmem:[#allocation2 + $0x21] sm:$0xff]
      %v927 = vld [vmem:[#allocation2 + $0x31] sm:$0xff]
      %v928 = vld [vmem:[#allocation2 + $0x39] sm:$0xff]
      %v929 = vld [vmem:[#allocation2 + $0x49] sm:$0xff]
      %v930 = vld [vmem:[#allocation2 + $0x51] sm:$0xff]
      %v931 = vld [vmem:[#allocation2 + $0x61] sm:$0xff]
      %v932 = vld [vmem:[#allocation2 + $0x69] sm:$0xff]
      %v933 = vld [vmem:[#allocation2 + $0x79] sm:$0xff]
      %v934 = vld [vmem:[#allocation2 + $0x81] sm:$0xff]
      %v935 = vld [vmem:[#allocation2 + $0x91] sm:$0xff]
      %v936 = vld [vmem:[#allocation2 + $0x99] sm:$0xff]
      %v937 = vld [vmem:[#allocation2 + $0xa9] sm:$0xff]
      %v938 = vld [vmem:[#allocation2 + $0xb1] sm:$0xff]
      %v939 = vld [vmem:[#allocation2 + $0xc1] sm:$0xff]
      %v940 = vld [vmem:[#allocation2 + $0xc9] sm:$0xff]
      %v941 = vld [vmem:[#allocation2 + $0xd9] sm:$0xff]
      %v942 = vld [vmem:[#allocation2 + $0xe1] sm:$0xff]
      %v943 = vld [vmem:[#allocation2 + $0xf1] sm:$0xff]
      %v944 = vld [vmem:[#allocation2 + $0xf9] sm:$0xff]
      %v945 = vld [vmem:[#allocation2 + $0x109] sm:$0xff]
      %v946 = vld [vmem:[#allocation2 + $0x111] sm:$0xff]
      %v947 = vld [vmem:[#allocation2 + $0x121] sm:$0xff]
      %v948 = vld [vmem:[#allocation2 + $0x129] sm:$0xff]
      %v949 = vld [vmem:[#allocation2 + $0x139] sm:$0xff]
      %v950 = vld [vmem:[#allocation2 + $0x141] sm:$0xff]
      %v951 = vld [vmem:[#allocation2 + $0x151] sm:$0xff]
      %v952 = vld [vmem:[#allocation2 + $0x159] sm:$0xff]
      %v953 = vld [vmem:[#allocation2 + $0x169] sm:$0xff]
      %v954 = vld [vmem:[#allocation2 + $0x171] sm:$0xff]
      %v955 = vpack.c.bf16 %v924, %v923
      %v956 = vpack.c.bf16 %v926, %v925
      %v957 = vpack.c.bf16 %v928, %v927
      %v958 = vpack.c.bf16 %v930, %v929
      %v959 = vpack.c.bf16 %v932, %v931
      %v960 = vpack.c.bf16 %v934, %v933
      %v961 = vpack.c.bf16 %v936, %v935
      %v962 = vpack.c.bf16 %v938, %v937
      %v963 = vpack.c.bf16 %v940, %v939
      %v964 = vpack.c.bf16 %v942, %v941
      %v965 = vpack.c.bf16 %v944, %v943
      %v966 = vpack.c.bf16 %v946, %v945
      %v967 = vpack.c.bf16 %v948, %v947
      %v968 = vpack.c.bf16 %v950, %v949
      %v969 = vpack.c.bf16 %v952, %v951
      %v970 = vpack.c.bf16 %v954, %v953
      %v971 = vld [vmem:[#allocation3] sm:$0xff]
      %v972 = vld [vmem:[#allocation3 + $0x8] sm:$0xff]
      %v973 = vld [vmem:[#allocation3 + $0x10] sm:$0xff]
      %v974 = vld [vmem:[#allocation3 + $0x18] sm:$0xff]
      %v975 = vld [vmem:[#allocation3 + $0x20] sm:$0xff]
      %v976 = vld [vmem:[#allocation3 + $0x28] sm:$0xff]
      %v977 = vld [vmem:[#allocation3 + $0x30] sm:$0xff]
      %v978 = vld [vmem:[#allocation3 + $0x38] sm:$0xff]
      %v979 = vld [vmem:[#allocation3 + $0x40] sm:$0xff]
      %v980 = vld [vmem:[#allocation3 + $0x48] sm:$0xff]
      %v981 = vld [vmem:[#allocation3 + $0x50] sm:$0xff]
      %v982 = vld [vmem:[#allocation3 + $0x58] sm:$0xff]
      %v983 = vld [vmem:[#allocation3 + $0x60] sm:$0xff]
      %v984 = vld [vmem:[#allocation3 + $0x68] sm:$0xff]
      %v985 = vld [vmem:[#allocation3 + $0x70] sm:$0xff]
      %v986 = vld [vmem:[#allocation3 + $0x78] sm:$0xff]
      %v987 = vld [vmem:[#allocation3 + $0x80] sm:$0xff]
      %v988 = vld [vmem:[#allocation3 + $0x88] sm:$0xff]
      %v989 = vld [vmem:[#allocation3 + $0x90] sm:$0xff]
      %v990 = vld [vmem:[#allocation3 + $0x98] sm:$0xff]
      %v991 = vld [vmem:[#allocation3 + $0xa0] sm:$0xff]
      %v992 = vld [vmem:[#allocation3 + $0xa8] sm:$0xff]
      %v993 = vld [vmem:[#allocation3 + $0xb0] sm:$0xff]
      %v994 = vld [vmem:[#allocation3 + $0xb8] sm:$0xff]
      %v995 = vld [vmem:[#allocation3 + $0xc0] sm:$0xff]
      %v996 = vld [vmem:[#allocation3 + $0xc8] sm:$0xff]
      %v997 = vld [vmem:[#allocation3 + $0xd0] sm:$0xff]
      %v998 = vld [vmem:[#allocation3 + $0xd8] sm:$0xff]
      %v999 = vld [vmem:[#allocation3 + $0xe0] sm:$0xff]
      %v1000 = vld [vmem:[#allocation3 + $0xe8] sm:$0xff]
      %v1001 = vld [vmem:[#allocation3 + $0xf0] sm:$0xff]
      %v1002 = vld [vmem:[#allocation3 + $0xf8] sm:$0xff]
      %s1003 = scalar_lea.vmem %s3, 4
      %v1004 = vld [vmem:[%s1003] sm:$0xf]
      %v1006 = vsel %vm444, %v955, 0
      %v1009 = vsel %vm444, %v956, 0
      %v1012 = vsel %vm444, %v957, 0
      %v1015 = vsel %vm444, %v958, 0
      %v1018 = vsel %vm444, %v959, 0
      %v1021 = vsel %vm444, %v960, 0
      %v1024 = vsel %vm444, %v961, 0
      %v1027 = vsel %vm444, %v962, 0
      %v1030 = vsel %vm444, %v963, 0
      %v1033 = vsel %vm444, %v964, 0
      %v1036 = vsel %vm444, %v965, 0
      %v1039 = vsel %vm444, %v966, 0
      %v1042 = vsel %vm444, %v967, 0
      %v1045 = vsel %vm444, %v968, 0
      %v1048 = vsel %vm444, %v969, 0
      %v1051 = vsel %vm444, %v970, 0
      %v1054 = vsel %vm694, %v1004, 0
      %1056 = vmatprep.subr.bf16.mxu0 0
      %1057 = vmatpush1.bf16.msra.mxu0 %v1054
      %1058 = vmatprep.subr.bf16.mxu0 0
      %1059 = vmatpush1.bf16.msra.mxu0 0
      %1060 = vmatprep.subr.bf16.mxu0 0
      %1061 = vmatpush1.bf16.msra.mxu0 0
      %1062 = vmatprep.subr.bf16.mxu0 0
      %1063 = vmatpush1.bf16.msra.mxu0 0
      %1064 = vmatprep.subr.bf16.mxu0 0
      %1065 = vmatpush1.bf16.msra.mxu0 0
      %1066 = vmatprep.subr.bf16.mxu0 0
      %1067 = vmatpush1.bf16.msra.mxu0 0
      %1068 = vmatprep.subr.bf16.mxu0 0
      %1069 = vmatpush1.bf16.msra.mxu0 0
      %1070 = vmatprep.subr.bf16.mxu0 0
      %1071 = vmatpush1.bf16.msra.mxu0 0
      %1072 = vmatprep.subr.bf16.mxu0 0
      %1073 = vmatpush1.bf16.msra.mxu0 0
      %1074 = vmatprep.subr.bf16.mxu0 0
      %1075 = vmatpush1.bf16.msra.mxu0 0
      %1076 = vmatprep.subr.bf16.mxu0 0
      %1077 = vmatpush1.bf16.msra.mxu0 0
      %1078 = vmatprep.subr.bf16.mxu0 0
      %1079 = vmatpush1.bf16.msra.mxu0 0
      %1080 = vmatprep.subr.bf16.mxu0 0
      %1081 = vmatpush1.bf16.msra.mxu0 0
      %1082 = vmatprep.subr.bf16.mxu0 0
      %1083 = vmatpush1.bf16.msra.mxu0 0
      %1084 = vmatprep.subr.bf16.mxu0 0
      %1085 = vmatpush1.bf16.msra.mxu0 0
      %1086 = vmatprep.subr.bf16.mxu0 0
      %1087 = vmatpush1.bf16.msra.mxu0 0
      %1088 = vmatprep.mubr.bf16.mxu0 0
      %1089 = vmatmul.mubr.bf16.gmra.mrb[0].mxu0 %v1006
      %v1090 = vpop.f32.mrb[0].mxu0
      %v1091 = vadd.f32 0.0, %v1090
      %v1092 = vpop.f32.mrb[0].mxu0
      %v1093 = vpop.f32.mrb[0].mxu0
      %v1094 = vadd.f32 0.0, %v1093
      %v1095 = vpop.f32.mrb[0].mxu0
      %1096 = vmatprep.mubr.bf16.mxu0 0
      %1097 = vmatmul.mubr.bf16.gmra.mrb[0].mxu0 %v1009
      %v1098 = vpop.f32.mrb[0].mxu0
      %v1099 = vadd.f32 0.0, %v1098
      %v1100 = vpop.f32.mrb[0].mxu0
      %v1101 = vpop.f32.mrb[0].mxu0
      %v1102 = vadd.f32 0.0, %v1101
      %v1103 = vpop.f32.mrb[0].mxu0
      %1104 = vmatprep.mubr.bf16.mxu0 0
      %1105 = vmatmul.mubr.bf16.gmra.mrb[0].mxu0 %v1012
      %v1106 = vpop.f32.mrb[0].mxu0
      %v1107 = vadd.f32 0.0, %v1106
      %v1108 = vpop.f32.mrb[0].mxu0
      %v1109 = vpop.f32.mrb[0].mxu0
      %v1110 = vadd.f32 0.0, %v1109
      %v1111 = vpop.f32.mrb[0].mxu0
      %1112 = vmatprep.mubr.bf16.mxu0 0
      %1113 = vmatmul.mubr.bf16.gmra.mrb[0].mxu0 %v1015
      %v1114 = vpop.f32.mrb[0].mxu0
      %v1115 = vadd.f32 0.0, %v1114
      %v1116 = vpop.f32.mrb[0].mxu0
      %v1117 = vpop.f32.mrb[0].mxu0
      %v1118 = vadd.f32 0.0, %v1117
      %v1119 = vpop.f32.mrb[0].mxu0
      %1120 = vmatprep.mubr.bf16.mxu0 0
      %1121 = vmatmul.mubr.bf16.gmra.mrb[0].mxu0 %v1018
      %v1122 = vpop.f32.mrb[0].mxu0
      %v1123 = vadd.f32 0.0, %v1122
      %v1124 = vpop.f32.mrb[0].mxu0
      %v1125 = vpop.f32.mrb[0].mxu0
      %v1126 = vadd.f32 0.0, %v1125
      %v1127 = vpop.f32.mrb[0].mxu0
      %1128 = vmatprep.mubr.bf16.mxu0 0
      %1129 = vmatmul.mubr.bf16.gmra.mrb[0].mxu0 %v1021
      %v1130 = vpop.f32.mrb[0].mxu0
      %v1131 = vadd.f32 0.0, %v1130
      %v1132 = vpop.f32.mrb[0].mxu0
      %v1133 = vpop.f32.mrb[0].mxu0
      %v1134 = vadd.f32 0.0, %v1133
      %v1135 = vpop.f32.mrb[0].mxu0
      %1136 = vmatprep.mubr.bf16.mxu0 0
      %1137 = vmatmul.mubr.bf16.gmra.mrb[0].mxu0 %v1024
      %v1138 = vpop.f32.mrb[0].mxu0
      %v1139 = vadd.f32 0.0, %v1138
      %v1140 = vpop.f32.mrb[0].mxu0
      %v1141 = vpop.f32.mrb[0].mxu0
      %v1142 = vadd.f32 0.0, %v1141
      %v1143 = vpop.f32.mrb[0].mxu0
      %1144 = vmatprep.mubr.bf16.mxu0 0
      %1145 = vmatmul.mubr.bf16.gmra.mrb[0].mxu0 %v1027
      %v1146 = vpop.f32.mrb[0].mxu0
      %v1147 = vadd.f32 0.0, %v1146
      %v1148 = vpop.f32.mrb[0].mxu0
      %v1149 = vpop.f32.mrb[0].mxu0
      %v1150 = vadd.f32 0.0, %v1149
      %v1151 = vpop.f32.mrb[0].mxu0
      %1152 = vmatprep.mubr.bf16.mxu0 0
      %1153 = vmatmul.mubr.bf16.gmra.mrb[0].mxu0 %v1030
      %v1154 = vpop.f32.mrb[0].mxu0
      %v1155 = vadd.f32 0.0, %v1154
      %v1156 = vpop.f32.mrb[0].mxu0
      %v1157 = vpop.f32.mrb[0].mxu0
      %v1158 = vadd.f32 0.0, %v1157
      %v1159 = vpop.f32.mrb[0].mxu0
      %1160 = vmatprep.mubr.bf16.mxu0 0
      %1161 = vmatmul.mubr.bf16.gmra.mrb[0].mxu0 %v1033
      %v1162 = vpop.f32.mrb[0].mxu0
      %v1163 = vadd.f32 0.0, %v1162
      %v1164 = vpop.f32.mrb[0].mxu0
      %v1165 = vpop.f32.mrb[0].mxu0
      %v1166 = vadd.f32 0.0, %v1165
      %v1167 = vpop.f32.mrb[0].mxu0
      %1168 = vmatprep.mubr.bf16.mxu0 0
      %1169 = vmatmul.mubr.bf16.gmra.mrb[0].mxu0 %v1036
      %v1170 = vpop.f32.mrb[0].mxu0
      %v1171 = vadd.f32 0.0, %v1170
      %v1172 = vpop.f32.mrb[0].mxu0
      %v1173 = vpop.f32.mrb[0].mxu0
      %v1174 = vadd.f32 0.0, %v1173
      %v1175 = vpop.f32.mrb[0].mxu0
      %1176 = vmatprep.mubr.bf16.mxu0 0
      %1177 = vmatmul.mubr.bf16.gmra.mrb[0].mxu0 %v1039
      %v1178 = vpop.f32.mrb[0].mxu0
      %v1179 = vadd.f32 0.0, %v1178
      %v1180 = vpop.f32.mrb[0].mxu0
      %v1181 = vpop.f32.mrb[0].mxu0
      %v1182 = vadd.f32 0.0, %v1181
      %v1183 = vpop.f32.mrb[0].mxu0
      %1184 = vmatprep.mubr.bf16.mxu0 0
      %1185 = vmatmul.mubr.bf16.gmra.mrb[0].mxu0 %v1042
      %v1186 = vpop.f32.mrb[0].mxu0
      %v1187 = vadd.f32 0.0, %v1186
      %v1188 = vpop.f32.mrb[0].mxu0
      %v1189 = vpop.f32.mrb[0].mxu0
      %v1190 = vadd.f32 0.0, %v1189
      %v1191 = vpop.f32.mrb[0].mxu0
      %1192 = vmatprep.mubr.bf16.mxu0 0
      %1193 = vmatmul.mubr.bf16.gmra.mrb[0].mxu0 %v1045
      %v1194 = vpop.f32.mrb[0].mxu0
      %v1195 = vadd.f32 0.0, %v1194
      %v1196 = vpop.f32.mrb[0].mxu0
      %v1197 = vpop.f32.mrb[0].mxu0
      %v1198 = vadd.f32 0.0, %v1197
      %v1199 = vpop.f32.mrb[0].mxu0
      %1200 = vmatprep.mubr.bf16.mxu0 0
      %1201 = vmatmul.mubr.bf16.gmra.mrb[0].mxu0 %v1048
      %v1202 = vpop.f32.mrb[0].mxu0
      %v1203 = vadd.f32 0.0, %v1202
      %v1204 = vpop.f32.mrb[0].mxu0
      %v1205 = vpop.f32.mrb[0].mxu0
      %v1206 = vadd.f32 0.0, %v1205
      %v1207 = vpop.f32.mrb[0].mxu0
      %1208 = vmatprep.mubr.bf16.mxu0 0
      %1209 = vmatmul.mubr.bf16.gmra.mrb[0].mxu0 %v1051
      %v1210 = vpop.f32.mrb[0].mxu0
      %v1211 = vadd.f32 0.0, %v1210
      %v1212 = vpop.f32.mrb[0].mxu0
      %v1213 = vpop.f32.mrb[0].mxu0
      %v1214 = vadd.f32 0.0, %v1213
      %v1215 = vpop.f32.mrb[0].mxu0
      %1216 = vdwg.mxu0
      %v1217 = vadd.f32 %v971, %v1091
      %v1218 = vadd.f32 %v972, %v1094
      %v1219 = vadd.f32 %v973, %v1099
      %v1220 = vadd.f32 %v974, %v1102
      %v1221 = vadd.f32 %v975, %v1107
      %v1222 = vadd.f32 %v976, %v1110
      %v1223 = vadd.f32 %v977, %v1115
      %v1224 = vadd.f32 %v978, %v1118
      %v1225 = vadd.f32 %v979, %v1123
      %v1226 = vadd.f32 %v980, %v1126
      %v1227 = vadd.f32 %v981, %v1131
      %v1228 = vadd.f32 %v982, %v1134
      %v1229 = vadd.f32 %v983, %v1139
      %v1230 = vadd.f32 %v984, %v1142
      %v1231 = vadd.f32 %v985, %v1147
      %v1232 = vadd.f32 %v986, %v1150
      %v1233 = vadd.f32 %v987, %v1155
      %v1234 = vadd.f32 %v988, %v1158
      %v1235 = vadd.f32 %v989, %v1163
      %v1236 = vadd.f32 %v990, %v1166
      %v1237 = vadd.f32 %v991, %v1171
      %v1238 = vadd.f32 %v992, %v1174
      %v1239 = vadd.f32 %v993, %v1179
      %v1240 = vadd.f32 %v994, %v1182
      %v1241 = vadd.f32 %v995, %v1187
      %v1242 = vadd.f32 %v996, %v1190
      %v1243 = vadd.f32 %v997, %v1195
      %v1244 = vadd.f32 %v998, %v1198
      %v1245 = vadd.f32 %v999, %v1203
      %v1246 = vadd.f32 %v1000, %v1206
      %v1247 = vadd.f32 %v1001, %v1211
      %v1248 = vadd.f32 %v1002, %v1214
      %1249 = vst.msk [vmem:[#allocation3] sm:$0xff] %vm444, %v1217
      %1250 = vst.msk [vmem:[#allocation3 + $0x8] sm:$0xff] %vm444, %v1218
      %1251 = vst.msk [vmem:[#allocation3 + $0x10] sm:$0xff] %vm444, %v1219
      %1252 = vst.msk [vmem:[#allocation3 + $0x18] sm:$0xff] %vm444, %v1220
      %1253 = vst.msk [vmem:[#allocation3 + $0x20] sm:$0xff] %vm444, %v1221
      %1254 = vst.msk [vmem:[#allocation3 + $0x28] sm:$0xff] %vm444, %v1222
      %1255 = vst.msk [vmem:[#allocation3 + $0x30] sm:$0xff] %vm444, %v1223
      %1256 = vst.msk [vmem:[#allocation3 + $0x38] sm:$0xff] %vm444, %v1224
      %1257 = vst.msk [vmem:[#allocation3 + $0x40] sm:$0xff] %vm444, %v1225
      %1258 = vst.msk [vmem:[#allocation3 + $0x48] sm:$0xff] %vm444, %v1226
      %1259 = vst.msk [vmem:[#allocation3 + $0x50] sm:$0xff] %vm444, %v1227
      %1260 = vst.msk [vmem:[#allocation3 + $0x58] sm:$0xff] %vm444, %v1228
      %1261 = vst.msk [vmem:[#allocation3 + $0x60] sm:$0xff] %vm444, %v1229
      %1262 = vst.msk [vmem:[#allocation3 + $0x68] sm:$0xff] %vm444, %v1230
      %1263 = vst.msk [vmem:[#allocation3 + $0x70] sm:$0xff] %vm444, %v1231
      %1264 = vst.msk [vmem:[#allocation3 + $0x78] sm:$0xff] %vm444, %v1232
      %1265 = vst.msk [vmem:[#allocation3 + $0x80] sm:$0xff] %vm444, %v1233
      %1266 = vst.msk [vmem:[#allocation3 + $0x88] sm:$0xff] %vm444, %v1234
      %1267 = vst.msk [vmem:[#allocation3 + $0x90] sm:$0xff] %vm444, %v1235
      %1268 = vst.msk [vmem:[#allocation3 + $0x98] sm:$0xff] %vm444, %v1236
      %1269 = vst.msk [vmem:[#allocation3 + $0xa0] sm:$0xff] %vm444, %v1237
      %1270 = vst.msk [vmem:[#allocation3 + $0xa8] sm:$0xff] %vm444, %v1238
      %1271 = vst.msk [vmem:[#allocation3 + $0xb0] sm:$0xff] %vm444, %v1239
      %1272 = vst.msk [vmem:[#allocation3 + $0xb8] sm:$0xff] %vm444, %v1240
      %1273 = vst.msk [vmem:[#allocation3 + $0xc0] sm:$0xff] %vm444, %v1241
      %1274 = vst.msk [vmem:[#allocation3 + $0xc8] sm:$0xff] %vm444, %v1242
      %1275 = vst.msk [vmem:[#allocation3 + $0xd0] sm:$0xff] %vm444, %v1243
      %1276 = vst.msk [vmem:[#allocation3 + $0xd8] sm:$0xff] %vm444, %v1244
      %1277 = vst.msk [vmem:[#allocation3 + $0xe0] sm:$0xff] %vm444, %v1245
      %1278 = vst.msk [vmem:[#allocation3 + $0xe8] sm:$0xff] %vm444, %v1246
      %1279 = vst.msk [vmem:[#allocation3 + $0xf0] sm:$0xff] %vm444, %v1247
      %1280 = vst.msk [vmem:[#allocation3 + $0xf8] sm:$0xff] %vm444, %v1248
      %v1281 = vld [vmem:[#allocation2 + $0x2] sm:$0xff]
      %v1282 = vld [vmem:[#allocation2 + $0xa] sm:$0xff]
      %v1283 = vld [vmem:[#allocation2 + $0x1a] sm:$0xff]
      %v1284 = vld [vmem:[#allocation2 + $0x22] sm:$0xff]
      %v1285 = vld [vmem:[#allocation2 + $0x32] sm:$0xff]
      %v1286 = vld [vmem:[#allocation2 + $0x3a] sm:$0xff]
      %v1287 = vld [vmem:[#allocation2 + $0x4a] sm:$0xff]
      %v1288 = vld [vmem:[#allocation2 + $0x52] sm:$0xff]
      %v1289 = vld [vmem:[#allocation2 + $0x62] sm:$0xff]
      %v1290 = vld [vmem:[#allocation2 + $0x6a] sm:$0xff]
      %v1291 = vld [vmem:[#allocation2 + $0x7a] sm:$0xff]
      %v1292 = vld [vmem:[#allocation2 + $0x82] sm:$0xff]
      %v1293 = vld [vmem:[#allocation2 + $0x92] sm:$0xff]
      %v1294 = vld [vmem:[#allocation2 + $0x9a] sm:$0xff]
      %v1295 = vld [vmem:[#allocation2 + $0xaa] sm:$0xff]
      %v1296 = vld [vmem:[#allocation2 + $0xb2] sm:$0xff]
      %v1297 = vld [vmem:[#allocation2 + $0xc2] sm:$0xff]
      %v1298 = vld [vmem:[#allocation2 + $0xca] sm:$0xff]
      %v1299 = vld [vmem:[#allocation2 + $0xda] sm:$0xff]
      %v1300 = vld [vmem:[#allocation2 + $0xe2] sm:$0xff]
      %v1301 = vld [vmem:[#allocation2 + $0xf2] sm:$0xff]
      %v1302 = vld [vmem:[#allocation2 + $0xfa] sm:$0xff]
      %v1303 = vld [vmem:[#allocation2 + $0x10a] sm:$0xff]
      %v1304 = vld [vmem:[#allocation2 + $0x112] sm:$0xff]
      %v1305 = vld [vmem:[#allocation2 + $0x122] sm:$0xff]
      %v1306 = vld [vmem:[#allocation2 + $0x12a] sm:$0xff]
      %v1307 = vld [vmem:[#allocation2 + $0x13a] sm:$0xff]
      %v1308 = vld [vmem:[#allocation2 + $0x142] sm:$0xff]
      %v1309 = vld [vmem:[#allocation2 + $0x152] sm:$0xff]
      %v1310 = vld [vmem:[#allocation2 + $0x15a] sm:$0xff]
      %v1311 = vld [vmem:[#allocation2 + $0x16a] sm:$0xff]
      %v1312 = vld [vmem:[#allocation2 + $0x172] sm:$0xff]
      %v1313 = vpack.c.bf16 %v1282, %v1281
      %v1314 = vpack.c.bf16 %v1284, %v1283
      %v1315 = vpack.c.bf16 %v1286, %v1285
      %v1316 = vpack.c.bf16 %v1288, %v1287
      %v1317 = vpack.c.bf16 %v1290, %v1289
      %v1318 = vpack.c.bf16 %v1292, %v1291
      %v1319 = vpack.c.bf16 %v1294, %v1293
      %v1320 = vpack.c.bf16 %v1296, %v1295
      %v1321 = vpack.c.bf16 %v1298, %v1297
      %v1322 = vpack.c.bf16 %v1300, %v1299
      %v1323 = vpack.c.bf16 %v1302, %v1301
      %v1324 = vpack.c.bf16 %v1304, %v1303
      %v1325 = vpack.c.bf16 %v1306, %v1305
      %v1326 = vpack.c.bf16 %v1308, %v1307
      %v1327 = vpack.c.bf16 %v1310, %v1309
      %v1328 = vpack.c.bf16 %v1312, %v1311
      %v1329 = vld [vmem:[#allocation3] sm:$0xff]
      %v1330 = vld [vmem:[#allocation3 + $0x8] sm:$0xff]
      %v1331 = vld [vmem:[#allocation3 + $0x10] sm:$0xff]
      %v1332 = vld [vmem:[#allocation3 + $0x18] sm:$0xff]
      %v1333 = vld [vmem:[#allocation3 + $0x20] sm:$0xff]
      %v1334 = vld [vmem:[#allocation3 + $0x28] sm:$0xff]
      %v1335 = vld [vmem:[#allocation3 + $0x30] sm:$0xff]
      %v1336 = vld [vmem:[#allocation3 + $0x38] sm:$0xff]
      %v1337 = vld [vmem:[#allocation3 + $0x40] sm:$0xff]
      %v1338 = vld [vmem:[#allocation3 + $0x48] sm:$0xff]
      %v1339 = vld [vmem:[#allocation3 + $0x50] sm:$0xff]
      %v1340 = vld [vmem:[#allocation3 + $0x58] sm:$0xff]
      %v1341 = vld [vmem:[#allocation3 + $0x60] sm:$0xff]
      %v1342 = vld [vmem:[#allocation3 + $0x68] sm:$0xff]
      %v1343 = vld [vmem:[#allocation3 + $0x70] sm:$0xff]
      %v1344 = vld [vmem:[#allocation3 + $0x78] sm:$0xff]
      %v1345 = vld [vmem:[#allocation3 + $0x80] sm:$0xff]
      %v1346 = vld [vmem:[#allocation3 + $0x88] sm:$0xff]
      %v1347 = vld [vmem:[#allocation3 + $0x90] sm:$0xff]
      %v1348 = vld [vmem:[#allocation3 + $0x98] sm:$0xff]
      %v1349 = vld [vmem:[#allocation3 + $0xa0] sm:$0xff]
      %v1350 = vld [vmem:[#allocation3 + $0xa8] sm:$0xff]
      %v1351 = vld [vmem:[#allocation3 + $0xb0] sm:$0xff]
      %v1352 = vld [vmem:[#allocation3 + $0xb8] sm:$0xff]
      %v1353 = vld [vmem:[#allocation3 + $0xc0] sm:$0xff]
      %v1354 = vld [vmem:[#allocation3 + $0xc8] sm:$0xff]
      %v1355 = vld [vmem:[#allocation3 + $0xd0] sm:$0xff]
      %v1356 = vld [vmem:[#allocation3 + $0xd8] sm:$0xff]
      %v1357 = vld [vmem:[#allocation3 + $0xe0] sm:$0xff]
      %v1358 = vld [vmem:[#allocation3 + $0xe8] sm:$0xff]
      %v1359 = vld [vmem:[#allocation3 + $0xf0] sm:$0xff]
      %v1360 = vld [vmem:[#allocation3 + $0xf8] sm:$0xff]
      %s1361 = scalar_lea.vmem %s3, 8
      %v1362 = vld [vmem:[%s1361] sm:$0xf]
      %v1364 = vsel %vm444, %v1313, 0
      %v1367 = vsel %vm444, %v1314, 0
      %v1370 = vsel %vm444, %v1315, 0
      %v1373 = vsel %vm444, %v1316, 0
      %v1376 = vsel %vm444, %v1317, 0
      %v1379 = vsel %vm444, %v1318, 0
      %v1382 = vsel %vm444, %v1319, 0
      %v1385 = vsel %vm444, %v1320, 0
      %v1388 = vsel %vm444, %v1321, 0
      %v1391 = vsel %vm444, %v1322, 0
      %v1394 = vsel %vm444, %v1323, 0
      %v1397 = vsel %vm444, %v1324, 0
      %v1400 = vsel %vm444, %v1325, 0
      %v1403 = vsel %vm444, %v1326, 0
      %v1406 = vsel %vm444, %v1327, 0
      %v1409 = vsel %vm444, %v1328, 0
      %v1412 = vsel %vm694, %v1362, 0
      %1414 = vmatprep.subr.bf16.mxu0 0
      %1415 = vmatpush1.bf16.msra.mxu0 %v1412
      %1416 = vmatprep.subr.bf16.mxu0 0
      %1417 = vmatpush1.bf16.msra.mxu0 0
      %1418 = vmatprep.subr.bf16.mxu0 0
      %1419 = vmatpush1.bf16.msra.mxu0 0
      %1420 = vmatprep.subr.bf16.mxu0 0
      %1421 = vmatpush1.bf16.msra.mxu0 0
      %1422 = vmatprep.subr.bf16.mxu0 0
      %1423 = vmatpush1.bf16.msra.mxu0 0
      %1424 = vmatprep.subr.bf16.mxu0 0
      %1425 = vmatpush1.bf16.msra.mxu0 0
      %1426 = vmatprep.subr.bf16.mxu0 0
      %1427 = vmatpush1.bf16.msra.mxu0 0
      %1428 = vmatprep.subr.bf16.mxu0 0
      %1429 = vmatpush1.bf16.msra.mxu0 0
      %1430 = vmatprep.subr.bf16.mxu0 0
      %1431 = vmatpush1.bf16.msra.mxu0 0
      %1432 = vmatprep.subr.bf16.mxu0 0
      %1433 = vmatpush1.bf16.msra.mxu0 0
      %1434 = vmatprep.subr.bf16.mxu0 0
      %1435 = vmatpush1.bf16.msra.mxu0 0
      %1436 = vmatprep.subr.bf16.mxu0 0
      %1437 = vmatpush1.bf16.msra.mxu0 0
      %1438 = vmatprep.subr.bf16.mxu0 0
      %1439 = vmatpush1.bf16.msra.mxu0 0
      %1440 = vmatprep.subr.bf16.mxu0 0
      %1441 = vmatpush1.bf16.msra.mxu0 0
      %1442 = vmatprep.subr.bf16.mxu0 0
      %1443 = vmatpush1.bf16.msra.mxu0 0
      %1444 = vmatprep.subr.bf16.mxu0 0
      %1445 = vmatpush1.bf16.msra.mxu0 0
      %1446 = vmatprep.mubr.bf16.mxu0 0
      %1447 = vmatmul.mubr.bf16.gmra.mrb[0].mxu0 %v1364
      %v1448 = vpop.f32.mrb[0].mxu0
      %v1449 = vadd.f32 0.0, %v1448
      %v1450 = vpop.f32.mrb[0].mxu0
      %v1451 = vpop.f32.mrb[0].mxu0
      %v1452 = vadd.f32 0.0, %v1451
      %v1453 = vpop.f32.mrb[0].mxu0
      %1454 = vmatprep.mubr.bf16.mxu0 0
      %1455 = vmatmul.mubr.bf16.gmra.mrb[0].mxu0 %v1367
      %v1456 = vpop.f32.mrb[0].mxu0
      %v1457 = vadd.f32 0.0, %v1456
      %v1458 = vpop.f32.mrb[0].mxu0
      %v1459 = vpop.f32.mrb[0].mxu0
      %v1460 = vadd.f32 0.0, %v1459
      %v1461 = vpop.f32.mrb[0].mxu0
      %1462 = vmatprep.mubr.bf16.mxu0 0
      %1463 = vmatmul.mubr.bf16.gmra.mrb[0].mxu0 %v1370
      %v1464 = vpop.f32.mrb[0].mxu0
      %v1465 = vadd.f32 0.0, %v1464
      %v1466 = vpop.f32.mrb[0].mxu0
      %v1467 = vpop.f32.mrb[0].mxu0
      %v1468 = vadd.f32 0.0, %v1467
      %v1469 = vpop.f32.mrb[0].mxu0
      %1470 = vmatprep.mubr.bf16.mxu0 0
      %1471 = vmatmul.mubr.bf16.gmra.mrb[0].mxu0 %v1373
      %v1472 = vpop.f32.mrb[0].mxu0
      %v1473 = vadd.f32 0.0, %v1472
      %v1474 = vpop.f32.mrb[0].mxu0
      %v1475 = vpop.f32.mrb[0].mxu0
      %v1476 = vadd.f32 0.0, %v1475
      %v1477 = vpop.f32.mrb[0].mxu0
      %1478 = vmatprep.mubr.bf16.mxu0 0
      %1479 = vmatmul.mubr.bf16.gmra.mrb[0].mxu0 %v1376
      %v1480 = vpop.f32.mrb[0].mxu0
      %v1481 = vadd.f32 0.0, %v1480
      %v1482 = vpop.f32.mrb[0].mxu0
      %v1483 = vpop.f32.mrb[0].mxu0
      %v1484 = vadd.f32 0.0, %v1483
      %v1485 = vpop.f32.mrb[0].mxu0
      %1486 = vmatprep.mubr.bf16.mxu0 0
      %1487 = vmatmul.mubr.bf16.gmra.mrb[0].mxu0 %v1379
      %v1488 = vpop.f32.mrb[0].mxu0
      %v1489 = vadd.f32 0.0, %v1488
      %v1490 = vpop.f32.mrb[0].mxu0
      %v1491 = vpop.f32.mrb[0].mxu0
      %v1492 = vadd.f32 0.0, %v1491
      %v1493 = vpop.f32.mrb[0].mxu0
      %1494 = vmatprep.mubr.bf16.mxu0 0
      %1495 = vmatmul.mubr.bf16.gmra.mrb[0].mxu0 %v1382
      %v1496 = vpop.f32.mrb[0].mxu0
      %v1497 = vadd.f32 0.0, %v1496
      %v1498 = vpop.f32.mrb[0].mxu0
      %v1499 = vpop.f32.mrb[0].mxu0
      %v1500 = vadd.f32 0.0, %v1499
      %v1501 = vpop.f32.mrb[0].mxu0
      %1502 = vmatprep.mubr.bf16.mxu0 0
      %1503 = vmatmul.mubr.bf16.gmra.mrb[0].mxu0 %v1385
      %v1504 = vpop.f32.mrb[0].mxu0
      %v1505 = vadd.f32 0.0, %v1504
      %v1506 = vpop.f32.mrb[0].mxu0
      %v1507 = vpop.f32.mrb[0].mxu0
      %v1508 = vadd.f32 0.0, %v1507
      %v1509 = vpop.f32.mrb[0].mxu0
      %1510 = vmatprep.mubr.bf16.mxu0 0
      %1511 = vmatmul.mubr.bf16.gmra.mrb[0].mxu0 %v1388
      %v1512 = vpop.f32.mrb[0].mxu0
      %v1513 = vadd.f32 0.0, %v1512
      %v1514 = vpop.f32.mrb[0].mxu0
      %v1515 = vpop.f32.mrb[0].mxu0
      %v1516 = vadd.f32 0.0, %v1515
      %v1517 = vpop.f32.mrb[0].mxu0
      %1518 = vmatprep.mubr.bf16.mxu0 0
      %1519 = vmatmul.mubr.bf16.gmra.mrb[0].mxu0 %v1391
      %v1520 = vpop.f32.mrb[0].mxu0
      %v1521 = vadd.f32 0.0, %v1520
      %v1522 = vpop.f32.mrb[0].mxu0
      %v1523 = vpop.f32.mrb[0].mxu0
      %v1524 = vadd.f32 0.0, %v1523
      %v1525 = vpop.f32.mrb[0].mxu0
      %1526 = vmatprep.mubr.bf16.mxu0 0
      %1527 = vmatmul.mubr.bf16.gmra.mrb[0].mxu0 %v1394
      %v1528 = vpop.f32.mrb[0].mxu0
      %v1529 = vadd.f32 0.0, %v1528
      %v1530 = vpop.f32.mrb[0].mxu0
      %v1531 = vpop.f32.mrb[0].mxu0
      %v1532 = vadd.f32 0.0, %v1531
      %v1533 = vpop.f32.mrb[0].mxu0
      %1534 = vmatprep.mubr.bf16.mxu0 0
      %1535 = vmatmul.mubr.bf16.gmra.mrb[0].mxu0 %v1397
      %v1536 = vpop.f32.mrb[0].mxu0
      %v1537 = vadd.f32 0.0, %v1536
      %v1538 = vpop.f32.mrb[0].mxu0
      %v1539 = vpop.f32.mrb[0].mxu0
      %v1540 = vadd.f32 0.0, %v1539
      %v1541 = vpop.f32.mrb[0].mxu0
      %1542 = vmatprep.mubr.bf16.mxu0 0
      %1543 = vmatmul.mubr.bf16.gmra.mrb[0].mxu0 %v1400
      %v1544 = vpop.f32.mrb[0].mxu0
      %v1545 = vadd.f32 0.0, %v1544
      %v1546 = vpop.f32.mrb[0].mxu0
      %v1547 = vpop.f32.mrb[0].mxu0
      %v1548 = vadd.f32 0.0, %v1547
      %v1549 = vpop.f32.mrb[0].mxu0
      %1550 = vmatprep.mubr.bf16.mxu0 0
      %1551 = vmatmul.mubr.bf16.gmra.mrb[0].mxu0 %v1403
      %v1552 = vpop.f32.mrb[0].mxu0
      %v1553 = vadd.f32 0.0, %v1552
      %v1554 = vpop.f32.mrb[0].mxu0
      %v1555 = vpop.f32.mrb[0].mxu0
      %v1556 = vadd.f32 0.0, %v1555
      %v1557 = vpop.f32.mrb[0].mxu0
      %1558 = vmatprep.mubr.bf16.mxu0 0
      %1559 = vmatmul.mubr.bf16.gmra.mrb[0].mxu0 %v1406
      %v1560 = vpop.f32.mrb[0].mxu0
      %v1561 = vadd.f32 0.0, %v1560
      %v1562 = vpop.f32.mrb[0].mxu0
      %v1563 = vpop.f32.mrb[0].mxu0
      %v1564 = vadd.f32 0.0, %v1563
      %v1565 = vpop.f32.mrb[0].mxu0
      %1566 = vmatprep.mubr.bf16.mxu0 0
      %1567 = vmatmul.mubr.bf16.gmra.mrb[0].mxu0 %v1409
      %v1568 = vpop.f32.mrb[0].mxu0
      %v1569 = vadd.f32 0.0, %v1568
      %v1570 = vpop.f32.mrb[0].mxu0
      %v1571 = vpop.f32.mrb[0].mxu0
      %v1572 = vadd.f32 0.0, %v1571
      %v1573 = vpop.f32.mrb[0].mxu0
      %1574 = vdwg.mxu0
      %v1575 = vadd.f32 %v1329, %v1449
      %v1576 = vadd.f32 %v1330, %v1452
      %v1577 = vadd.f32 %v1331, %v1457
      %v1578 = vadd.f32 %v1332, %v1460
      %v1579 = vadd.f32 %v1333, %v1465
      %v1580 = vadd.f32 %v1334, %v1468
      %v1581 = vadd.f32 %v1335, %v1473
      %v1582 = vadd.f32 %v1336, %v1476
      %v1583 = vadd.f32 %v1337, %v1481
      %v1584 = vadd.f32 %v1338, %v1484
      %v1585 = vadd.f32 %v1339, %v1489
      %v1586 = vadd.f32 %v1340, %v1492
      %v1587 = vadd.f32 %v1341, %v1497
      %v1588 = vadd.f32 %v1342, %v1500
      %v1589 = vadd.f32 %v1343, %v1505
      %v1590 = vadd.f32 %v1344, %v1508
      %v1591 = vadd.f32 %v1345, %v1513
      %v1592 = vadd.f32 %v1346, %v1516
      %v1593 = vadd.f32 %v1347, %v1521
      %v1594 = vadd.f32 %v1348, %v1524
      %v1595 = vadd.f32 %v1349, %v1529
      %v1596 = vadd.f32 %v1350, %v1532
      %v1597 = vadd.f32 %v1351, %v1537
      %v1598 = vadd.f32 %v1352, %v1540
      %v1599 = vadd.f32 %v1353, %v1545
      %v1600 = vadd.f32 %v1354, %v1548
      %v1601 = vadd.f32 %v1355, %v1553
      %v1602 = vadd.f32 %v1356, %v1556
      %v1603 = vadd.f32 %v1357, %v1561
      %v1604 = vadd.f32 %v1358, %v1564
      %v1605 = vadd.f32 %v1359, %v1569
      %v1606 = vadd.f32 %v1360, %v1572
      %1607 = vst.msk [vmem:[#allocation3] sm:$0xff] %vm444, %v1575
      %1608 = vst.msk [vmem:[#allocation3 + $0x8] sm:$0xff] %vm444, %v1576
      %1609 = vst.msk [vmem:[#allocation3 + $0x10] sm:$0xff] %vm444, %v1577
      %1610 = vst.msk [vmem:[#allocation3 + $0x18] sm:$0xff] %vm444, %v1578
      %1611 = vst.msk [vmem:[#allocation3 + $0x20] sm:$0xff] %vm444, %v1579
      %1612 = vst.msk [vmem:[#allocation3 + $0x28] sm:$0xff] %vm444, %v1580
      %1613 = vst.msk [vmem:[#allocation3 + $0x30] sm:$0xff] %vm444, %v1581
      %1614 = vst.msk [vmem:[#allocation3 + $0x38] sm:$0xff] %vm444, %v1582
      %1615 = vst.msk [vmem:[#allocation3 + $0x40] sm:$0xff] %vm444, %v1583
      %1616 = vst.msk [vmem:[#allocation3 + $0x48] sm:$0xff] %vm444, %v1584
      %1617 = vst.msk [vmem:[#allocation3 + $0x50] sm:$0xff] %vm444, %v1585
      %1618 = vst.msk [vmem:[#allocation3 + $0x58] sm:$0xff] %vm444, %v1586
      %1619 = vst.msk [vmem:[#allocation3 + $0x60] sm:$0xff] %vm444, %v1587
      %1620 = vst.msk [vmem:[#allocation3 + $0x68] sm:$0xff] %vm444, %v1588
      %1621 = vst.msk [vmem:[#allocation3 + $0x70] sm:$0xff] %vm444, %v1589
      %1622 = vst.msk [vmem:[#allocation3 + $0x78] sm:$0xff] %vm444, %v1590
      %1623 = vst.msk [vmem:[#allocation3 + $0x80] sm:$0xff] %vm444, %v1591
      %1624 = vst.msk [vmem:[#allocation3 + $0x88] sm:$0xff] %vm444, %v1592
      %1625 = vst.msk [vmem:[#allocation3 + $0x90] sm:$0xff] %vm444, %v1593
      %1626 = vst.msk [vmem:[#allocation3 + $0x98] sm:$0xff] %vm444, %v1594
      %1627 = vst.msk [vmem:[#allocation3 + $0xa0] sm:$0xff] %vm444, %v1595
      %1628 = vst.msk [vmem:[#allocation3 + $0xa8] sm:$0xff] %vm444, %v1596
      %1629 = vst.msk [vmem:[#allocation3 + $0xb0] sm:$0xff] %vm444, %v1597
      %1630 = vst.msk [vmem:[#allocation3 + $0xb8] sm:$0xff] %vm444, %v1598
      %1631 = vst.msk [vmem:[#allocation3 + $0xc0] sm:$0xff] %vm444, %v1599
      %1632 = vst.msk [vmem:[#allocation3 + $0xc8] sm:$0xff] %vm444, %v1600
      %1633 = vst.msk [vmem:[#allocation3 + $0xd0] sm:$0xff] %vm444, %v1601
      %1634 = vst.msk [vmem:[#allocation3 + $0xd8] sm:$0xff] %vm444, %v1602
      %1635 = vst.msk [vmem:[#allocation3 + $0xe0] sm:$0xff] %vm444, %v1603
      %1636 = vst.msk [vmem:[#allocation3 + $0xe8] sm:$0xff] %vm444, %v1604
      %1637 = vst.msk [vmem:[#allocation3 + $0xf0] sm:$0xff] %vm444, %v1605
      %1638 = vst.msk [vmem:[#allocation3 + $0xf8] sm:$0xff] %vm444, %v1606
      %v1639 = vld [vmem:[%s500] sm:$0xff]
      %v1640 = vld [vmem:[%s500 + $0x8] sm:$0xff]
      %v1641 = vld [vmem:[%s500 + $0x18] sm:$0xff]
      %v1642 = vld [vmem:[%s500 + $0x20] sm:$0xff]
      %v1643 = vld [vmem:[%s500 + $0x30] sm:$0xff]
      %v1644 = vld [vmem:[%s500 + $0x38] sm:$0xff]
      %v1645 = vld [vmem:[%s500 + $0x48] sm:$0xff]
      %v1646 = vld [vmem:[%s500 + $0x50] sm:$0xff]
      %v1647 = vld [vmem:[%s500 + $0x60] sm:$0xff]
      %v1648 = vld [vmem:[%s500 + $0x68] sm:$0xff]
      %v1649 = vld [vmem:[%s500 + $0x78] sm:$0xff]
      %v1650 = vld [vmem:[%s500 + $0x80] sm:$0xff]
      %v1651 = vld [vmem:[%s500 + $0x90] sm:$0xff]
      %v1652 = vld [vmem:[%s500 + $0x98] sm:$0xff]
      %v1653 = vld [vmem:[%s500 + $0xa8] sm:$0xff]
      %v1654 = vld [vmem:[%s500 + $0xb0] sm:$0xff]
      %v1655 = vld [vmem:[%s500 + $0xc0] sm:$0xff]
      %v1656 = vld [vmem:[%s500 + $0xc8] sm:$0xff]
      %v1657 = vld [vmem:[%s500 + $0xd8] sm:$0xff]
      %v1658 = vld [vmem:[%s500 + $0xe0] sm:$0xff]
      %v1659 = vld [vmem:[%s500 + $0xf0] sm:$0xff]
      %v1660 = vld [vmem:[%s500 + $0xf8] sm:$0xff]
      %v1661 = vld [vmem:[%s500 + $0x108] sm:$0xff]
      %v1662 = vld [vmem:[%s500 + $0x110] sm:$0xff]
      %v1663 = vld [vmem:[%s500 + $0x120] sm:$0xff]
      %v1664 = vld [vmem:[%s500 + $0x128] sm:$0xff]
      %v1665 = vld [vmem:[%s500 + $0x138] sm:$0xff]
      %v1666 = vld [vmem:[%s500 + $0x140] sm:$0xff]
      %v1667 = vld [vmem:[%s500 + $0x150] sm:$0xff]
      %v1668 = vld [vmem:[%s500 + $0x158] sm:$0xff]
      %v1669 = vld [vmem:[%s500 + $0x168] sm:$0xff]
      %v1670 = vld [vmem:[%s500 + $0x170] sm:$0xff]
      %v1671 = vpack.c.bf16 %v1640, %v1639
      %v1672 = vpack.c.bf16 %v1642, %v1641
      %v1673 = vpack.c.bf16 %v1644, %v1643
      %v1674 = vpack.c.bf16 %v1646, %v1645
      %v1675 = vpack.c.bf16 %v1648, %v1647
      %v1676 = vpack.c.bf16 %v1650, %v1649
      %v1677 = vpack.c.bf16 %v1652, %v1651
      %v1678 = vpack.c.bf16 %v1654, %v1653
      %v1679 = vpack.c.bf16 %v1656, %v1655
      %v1680 = vpack.c.bf16 %v1658, %v1657
      %v1681 = vpack.c.bf16 %v1660, %v1659
      %v1682 = vpack.c.bf16 %v1662, %v1661
      %v1683 = vpack.c.bf16 %v1664, %v1663
      %v1684 = vpack.c.bf16 %v1666, %v1665
      %v1685 = vpack.c.bf16 %v1668, %v1667
      %v1686 = vpack.c.bf16 %v1670, %v1669
      %v1687 = vld [vmem:[#allocation3] sm:$0xff]
      %v1688 = vld [vmem:[#allocation3 + $0x8] sm:$0xff]
      %v1689 = vld [vmem:[#allocation3 + $0x10] sm:$0xff]
      %v1690 = vld [vmem:[#allocation3 + $0x18] sm:$0xff]
      %v1691 = vld [vmem:[#allocation3 + $0x20] sm:$0xff]
      %v1692 = vld [vmem:[#allocation3 + $0x28] sm:$0xff]
      %v1693 = vld [vmem:[#allocation3 + $0x30] sm:$0xff]
      %v1694 = vld [vmem:[#allocation3 + $0x38] sm:$0xff]
      %v1695 = vld [vmem:[#allocation3 + $0x40] sm:$0xff]
      %v1696 = vld [vmem:[#allocation3 + $0x48] sm:$0xff]
      %v1697 = vld [vmem:[#allocation3 + $0x50] sm:$0xff]
      %v1698 = vld [vmem:[#allocation3 + $0x58] sm:$0xff]
      %v1699 = vld [vmem:[#allocation3 + $0x60] sm:$0xff]
      %v1700 = vld [vmem:[#allocation3 + $0x68] sm:$0xff]
      %v1701 = vld [vmem:[#allocation3 + $0x70] sm:$0xff]
      %v1702 = vld [vmem:[#allocation3 + $0x78] sm:$0xff]
      %v1703 = vld [vmem:[#allocation3 + $0x80] sm:$0xff]
      %v1704 = vld [vmem:[#allocation3 + $0x88] sm:$0xff]
      %v1705 = vld [vmem:[#allocation3 + $0x90] sm:$0xff]
      %v1706 = vld [vmem:[#allocation3 + $0x98] sm:$0xff]
      %v1707 = vld [vmem:[#allocation3 + $0xa0] sm:$0xff]
      %v1708 = vld [vmem:[#allocation3 + $0xa8] sm:$0xff]
      %v1709 = vld [vmem:[#allocation3 + $0xb0] sm:$0xff]
      %v1710 = vld [vmem:[#allocation3 + $0xb8] sm:$0xff]
      %v1711 = vld [vmem:[#allocation3 + $0xc0] sm:$0xff]
      %v1712 = vld [vmem:[#allocation3 + $0xc8] sm:$0xff]
      %v1713 = vld [vmem:[#allocation3 + $0xd0] sm:$0xff]
      %v1714 = vld [vmem:[#allocation3 + $0xd8] sm:$0xff]
      %v1715 = vld [vmem:[#allocation3 + $0xe0] sm:$0xff]
      %v1716 = vld [vmem:[#allocation3 + $0xe8] sm:$0xff]
      %v1717 = vld [vmem:[#allocation3 + $0xf0] sm:$0xff]
      %v1718 = vld [vmem:[#allocation3 + $0xf8] sm:$0xff]
      %s1719 = scalar_lea.vmem %s3, 12
      %v1720 = vld [vmem:[%s1719] sm:$0xf]
      %v1722 = vsel %vm444, %v1671, 0
      %v1725 = vsel %vm444, %v1672, 0
      %v1728 = vsel %vm444, %v1673, 0
      %v1731 = vsel %vm444, %v1674, 0
      %v1734 = vsel %vm444, %v1675, 0
      %v1737 = vsel %vm444, %v1676, 0
      %v1740 = vsel %vm444, %v1677, 0
      %v1743 = vsel %vm444, %v1678, 0
      %v1746 = vsel %vm444, %v1679, 0
      %v1749 = vsel %vm444, %v1680, 0
      %v1752 = vsel %vm444, %v1681, 0
      %v1755 = vsel %vm444, %v1682, 0
      %v1758 = vsel %vm444, %v1683, 0
      %v1761 = vsel %vm444, %v1684, 0
      %v1764 = vsel %vm444, %v1685, 0
      %v1767 = vsel %vm444, %v1686, 0
      %v1770 = vsel %vm694, %v1720, 0
      %1772 = vmatprep.subr.bf16.mxu0 0
      %1773 = vmatpush1.bf16.msra.mxu0 %v1770
      %1774 = vmatprep.subr.bf16.mxu0 0
      %1775 = vmatpush1.bf16.msra.mxu0 0
      %1776 = vmatprep.subr.bf16.mxu0 0
      %1777 = vmatpush1.bf16.msra.mxu0 0
      %1778 = vmatprep.subr.bf16.mxu0 0
      %1779 = vmatpush1.bf16.msra.mxu0 0
      %1780 = vmatprep.subr.bf16.mxu0 0
      %1781 = vmatpush1.bf16.msra.mxu0 0
      %1782 = vmatprep.subr.bf16.mxu0 0
      %1783 = vmatpush1.bf16.msra.mxu0 0
      %1784 = vmatprep.subr.bf16.mxu0 0
      %1785 = vmatpush1.bf16.msra.mxu0 0
      %1786 = vmatprep.subr.bf16.mxu0 0
      %1787 = vmatpush1.bf16.msra.mxu0 0
      %1788 = vmatprep.subr.bf16.mxu0 0
      %1789 = vmatpush1.bf16.msra.mxu0 0
      %1790 = vmatprep.subr.bf16.mxu0 0
      %1791 = vmatpush1.bf16.msra.mxu0 0
      %1792 = vmatprep.subr.bf16.mxu0 0
      %1793 = vmatpush1.bf16.msra.mxu0 0
      %1794 = vmatprep.subr.bf16.mxu0 0
      %1795 = vmatpush1.bf16.msra.mxu0 0
      %1796 = vmatprep.subr.bf16.mxu0 0
      %1797 = vmatpush1.bf16.msra.mxu0 0
      %1798 = vmatprep.subr.bf16.mxu0 0
      %1799 = vmatpush1.bf16.msra.mxu0 0
      %1800 = vmatprep.subr.bf16.mxu0 0
      %1801 = vmatpush1.bf16.msra.mxu0 0
      %1802 = vmatprep.subr.bf16.mxu0 0
      %1803 = vmatpush1.bf16.msra.mxu0 0
      %1804 = vmatprep.mubr.bf16.mxu0 0
      %1805 = vmatmul.mubr.bf16.gmra.mrb[0].mxu0 %v1722
      %v1806 = vpop.f32.mrb[0].mxu0
      %v1807 = vadd.f32 0.0, %v1806
      %v1808 = vpop.f32.mrb[0].mxu0
      %v1809 = vpop.f32.mrb[0].mxu0
      %v1810 = vadd.f32 0.0, %v1809
      %v1811 = vpop.f32.mrb[0].mxu0
      %1812 = vmatprep.mubr.bf16.mxu0 0
      %1813 = vmatmul.mubr.bf16.gmra.mrb[0].mxu0 %v1725
      %v1814 = vpop.f32.mrb[0].mxu0
      %v1815 = vadd.f32 0.0, %v1814
      %v1816 = vpop.f32.mrb[0].mxu0
      %v1817 = vpop.f32.mrb[0].mxu0
      %v1818 = vadd.f32 0.0, %v1817
      %v1819 = vpop.f32.mrb[0].mxu0
      %1820 = vmatprep.mubr.bf16.mxu0 0
      %1821 = vmatmul.mubr.bf16.gmra.mrb[0].mxu0 %v1728
      %v1822 = vpop.f32.mrb[0].mxu0
      %v1823 = vadd.f32 0.0, %v1822
      %v1824 = vpop.f32.mrb[0].mxu0
      %v1825 = vpop.f32.mrb[0].mxu0
      %v1826 = vadd.f32 0.0, %v1825
      %v1827 = vpop.f32.mrb[0].mxu0
      %1828 = vmatprep.mubr.bf16.mxu0 0
      %1829 = vmatmul.mubr.bf16.gmra.mrb[0].mxu0 %v1731
      %v1830 = vpop.f32.mrb[0].mxu0
      %v1831 = vadd.f32 0.0, %v1830
      %v1832 = vpop.f32.mrb[0].mxu0
      %v1833 = vpop.f32.mrb[0].mxu0
      %v1834 = vadd.f32 0.0, %v1833
      %v1835 = vpop.f32.mrb[0].mxu0
      %1836 = vmatprep.mubr.bf16.mxu0 0
      %1837 = vmatmul.mubr.bf16.gmra.mrb[0].mxu0 %v1734
      %v1838 = vpop.f32.mrb[0].mxu0
      %v1839 = vadd.f32 0.0, %v1838
      %v1840 = vpop.f32.mrb[0].mxu0
      %v1841 = vpop.f32.mrb[0].mxu0
      %v1842 = vadd.f32 0.0, %v1841
      %v1843 = vpop.f32.mrb[0].mxu0
      %1844 = vmatprep.mubr.bf16.mxu0 0
      %1845 = vmatmul.mubr.bf16.gmra.mrb[0].mxu0 %v1737
      %v1846 = vpop.f32.mrb[0].mxu0
      %v1847 = vadd.f32 0.0, %v1846
      %v1848 = vpop.f32.mrb[0].mxu0
      %v1849 = vpop.f32.mrb[0].mxu0
      %v1850 = vadd.f32 0.0, %v1849
      %v1851 = vpop.f32.mrb[0].mxu0
      %1852 = vmatprep.mubr.bf16.mxu0 0
      %1853 = vmatmul.mubr.bf16.gmra.mrb[0].mxu0 %v1740
      %v1854 = vpop.f32.mrb[0].mxu0
      %v1855 = vadd.f32 0.0, %v1854
      %v1856 = vpop.f32.mrb[0].mxu0
      %v1857 = vpop.f32.mrb[0].mxu0
      %v1858 = vadd.f32 0.0, %v1857
      %v1859 = vpop.f32.mrb[0].mxu0
      %1860 = vmatprep.mubr.bf16.mxu0 0
      %1861 = vmatmul.mubr.bf16.gmra.mrb[0].mxu0 %v1743
      %v1862 = vpop.f32.mrb[0].mxu0
      %v1863 = vadd.f32 0.0, %v1862
      %v1864 = vpop.f32.mrb[0].mxu0
      %v1865 = vpop.f32.mrb[0].mxu0
      %v1866 = vadd.f32 0.0, %v1865
      %v1867 = vpop.f32.mrb[0].mxu0
      %1868 = vmatprep.mubr.bf16.mxu0 0
      %1869 = vmatmul.mubr.bf16.gmra.mrb[0].mxu0 %v1746
      %v1870 = vpop.f32.mrb[0].mxu0
      %v1871 = vadd.f32 0.0, %v1870
      %v1872 = vpop.f32.mrb[0].mxu0
      %v1873 = vpop.f32.mrb[0].mxu0
      %v1874 = vadd.f32 0.0, %v1873
      %v1875 = vpop.f32.mrb[0].mxu0
      %1876 = vmatprep.mubr.bf16.mxu0 0
      %1877 = vmatmul.mubr.bf16.gmra.mrb[0].mxu0 %v1749
      %v1878 = vpop.f32.mrb[0].mxu0
      %v1879 = vadd.f32 0.0, %v1878
      %v1880 = vpop.f32.mrb[0].mxu0
      %v1881 = vpop.f32.mrb[0].mxu0
      %v1882 = vadd.f32 0.0, %v1881
      %v1883 = vpop.f32.mrb[0].mxu0
      %1884 = vmatprep.mubr.bf16.mxu0 0
      %1885 = vmatmul.mubr.bf16.gmra.mrb[0].mxu0 %v1752
      %v1886 = vpop.f32.mrb[0].mxu0
      %v1887 = vadd.f32 0.0, %v1886
      %v1888 = vpop.f32.mrb[0].mxu0
      %v1889 = vpop.f32.mrb[0].mxu0
      %v1890 = vadd.f32 0.0, %v1889
      %v1891 = vpop.f32.mrb[0].mxu0
      %1892 = vmatprep.mubr.bf16.mxu0 0
      %1893 = vmatmul.mubr.bf16.gmra.mrb[0].mxu0 %v1755
      %v1894 = vpop.f32.mrb[0].mxu0
      %v1895 = vadd.f32 0.0, %v1894
      %v1896 = vpop.f32.mrb[0].mxu0
      %v1897 = vpop.f32.mrb[0].mxu0
      %v1898 = vadd.f32 0.0, %v1897
      %v1899 = vpop.f32.mrb[0].mxu0
      %1900 = vmatprep.mubr.bf16.mxu0 0
      %1901 = vmatmul.mubr.bf16.gmra.mrb[0].mxu0 %v1758
      %v1902 = vpop.f32.mrb[0].mxu0
      %v1903 = vadd.f32 0.0, %v1902
      %v1904 = vpop.f32.mrb[0].mxu0
      %v1905 = vpop.f32.mrb[0].mxu0
      %v1906 = vadd.f32 0.0, %v1905
      %v1907 = vpop.f32.mrb[0].mxu0
      %1908 = vmatprep.mubr.bf16.mxu0 0
      %1909 = vmatmul.mubr.bf16.gmra.mrb[0].mxu0 %v1761
      %v1910 = vpop.f32.mrb[0].mxu0
      %v1911 = vadd.f32 0.0, %v1910
      %v1912 = vpop.f32.mrb[0].mxu0
      %v1913 = vpop.f32.mrb[0].mxu0
      %v1914 = vadd.f32 0.0, %v1913
      %v1915 = vpop.f32.mrb[0].mxu0
      %1916 = vmatprep.mubr.bf16.mxu0 0
      %1917 = vmatmul.mubr.bf16.gmra.mrb[0].mxu0 %v1764
      %v1918 = vpop.f32.mrb[0].mxu0
      %v1919 = vadd.f32 0.0, %v1918
      %v1920 = vpop.f32.mrb[0].mxu0
      %v1921 = vpop.f32.mrb[0].mxu0
      %v1922 = vadd.f32 0.0, %v1921
      %v1923 = vpop.f32.mrb[0].mxu0
      %1924 = vmatprep.mubr.bf16.mxu0 0
      %1925 = vmatmul.mubr.bf16.gmra.mrb[0].mxu0 %v1767
      %v1926 = vpop.f32.mrb[0].mxu0
      %v1927 = vadd.f32 0.0, %v1926
      %v1928 = vpop.f32.mrb[0].mxu0
      %v1929 = vpop.f32.mrb[0].mxu0
      %v1930 = vadd.f32 0.0, %v1929
      %v1931 = vpop.f32.mrb[0].mxu0
      %1932 = vdwg.mxu0
      %v1933 = vadd.f32 %v1687, %v1807
      %v1934 = vadd.f32 %v1688, %v1810
      %v1935 = vadd.f32 %v1689, %v1815
      %v1936 = vadd.f32 %v1690, %v1818
      %v1937 = vadd.f32 %v1691, %v1823
      %v1938 = vadd.f32 %v1692, %v1826
      %v1939 = vadd.f32 %v1693, %v1831
      %v1940 = vadd.f32 %v1694, %v1834
      %v1941 = vadd.f32 %v1695, %v1839
      %v1942 = vadd.f32 %v1696, %v1842
      %v1943 = vadd.f32 %v1697, %v1847
      %v1944 = vadd.f32 %v1698, %v1850
      %v1945 = vadd.f32 %v1699, %v1855
      %v1946 = vadd.f32 %v1700, %v1858
      %v1947 = vadd.f32 %v1701, %v1863
      %v1948 = vadd.f32 %v1702, %v1866
      %v1949 = vadd.f32 %v1703, %v1871
      %v1950 = vadd.f32 %v1704, %v1874
      %v1951 = vadd.f32 %v1705, %v1879
      %v1952 = vadd.f32 %v1706, %v1882
      %v1953 = vadd.f32 %v1707, %v1887
      %v1954 = vadd.f32 %v1708, %v1890
      %v1955 = vadd.f32 %v1709, %v1895
      %v1956 = vadd.f32 %v1710, %v1898
      %v1957 = vadd.f32 %v1711, %v1903
      %v1958 = vadd.f32 %v1712, %v1906
      %v1959 = vadd.f32 %v1713, %v1911
      %v1960 = vadd.f32 %v1714, %v1914
      %v1961 = vadd.f32 %v1715, %v1919
      %v1962 = vadd.f32 %v1716, %v1922
      %v1963 = vadd.f32 %v1717, %v1927
      %v1964 = vadd.f32 %v1718, %v1930
      %1965 = vst.msk [vmem:[#allocation3] sm:$0xff] %vm444, %v1933
      %1966 = vst.msk [vmem:[#allocation3 + $0x8] sm:$0xff] %vm444, %v1934
      %1967 = vst.msk [vmem:[#allocation3 + $0x10] sm:$0xff] %vm444, %v1935
      %1968 = vst.msk [vmem:[#allocation3 + $0x18] sm:$0xff] %vm444, %v1936
      %1969 = vst.msk [vmem:[#allocation3 + $0x20] sm:$0xff] %vm444, %v1937
      %1970 = vst.msk [vmem:[#allocation3 + $0x28] sm:$0xff] %vm444, %v1938
      %1971 = vst.msk [vmem:[#allocation3 + $0x30] sm:$0xff] %vm444, %v1939
      %1972 = vst.msk [vmem:[#allocation3 + $0x38] sm:$0xff] %vm444, %v1940
      %1973 = vst.msk [vmem:[#allocation3 + $0x40] sm:$0xff] %vm444, %v1941
      %1974 = vst.msk [vmem:[#allocation3 + $0x48] sm:$0xff] %vm444, %v1942
      %1975 = vst.msk [vmem:[#allocation3 + $0x50] sm:$0xff] %vm444, %v1943
      %1976 = vst.msk [vmem:[#allocation3 + $0x58] sm:$0xff] %vm444, %v1944
      %1977 = vst.msk [vmem:[#allocation3 + $0x60] sm:$0xff] %vm444, %v1945
      %1978 = vst.msk [vmem:[#allocation3 + $0x68] sm:$0xff] %vm444, %v1946
      %1979 = vst.msk [vmem:[#allocation3 + $0x70] sm:$0xff] %vm444, %v1947
      %1980 = vst.msk [vmem:[#allocation3 + $0x78] sm:$0xff] %vm444, %v1948
      %1981 = vst.msk [vmem:[#allocation3 + $0x80] sm:$0xff] %vm444, %v1949
      %1982 = vst.msk [vmem:[#allocation3 + $0x88] sm:$0xff] %vm444, %v1950
      %1983 = vst.msk [vmem:[#allocation3 + $0x90] sm:$0xff] %vm444, %v1951
      %1984 = vst.msk [vmem:[#allocation3 + $0x98] sm:$0xff] %vm444, %v1952
      %1985 = vst.msk [vmem:[#allocation3 + $0xa0] sm:$0xff] %vm444, %v1953
      %1986 = vst.msk [vmem:[#allocation3 + $0xa8] sm:$0xff] %vm444, %v1954
      %1987 = vst.msk [vmem:[#allocation3 + $0xb0] sm:$0xff] %vm444, %v1955
      %1988 = vst.msk [vmem:[#allocation3 + $0xb8] sm:$0xff] %vm444, %v1956
      %1989 = vst.msk [vmem:[#allocation3 + $0xc0] sm:$0xff] %vm444, %v1957
      %1990 = vst.msk [vmem:[#allocation3 + $0xc8] sm:$0xff] %vm444, %v1958
      %1991 = vst.msk [vmem:[#allocation3 + $0xd0] sm:$0xff] %vm444, %v1959
      %1992 = vst.msk [vmem:[#allocation3 + $0xd8] sm:$0xff] %vm444, %v1960
      %1993 = vst.msk [vmem:[#allocation3 + $0xe0] sm:$0xff] %vm444, %v1961
      %1994 = vst.msk [vmem:[#allocation3 + $0xe8] sm:$0xff] %vm444, %v1962
      %1995 = vst.msk [vmem:[#allocation3 + $0xf0] sm:$0xff] %vm444, %v1963
      %1996 = vst.msk [vmem:[#allocation3 + $0xf8] sm:$0xff] %vm444, %v1964
      %v1997 = vld [vmem:[%s500 + $0x1] sm:$0xff]
      %v1998 = vld [vmem:[%s500 + $0x9] sm:$0xff]
      %v1999 = vld [vmem:[%s500 + $0x19] sm:$0xff]
      %v2000 = vld [vmem:[%s500 + $0x21] sm:$0xff]
      %v2001 = vld [vmem:[%s500 + $0x31] sm:$0xff]
      %v2002 = vld [vmem:[%s500 + $0x39] sm:$0xff]
      %v2003 = vld [vmem:[%s500 + $0x49] sm:$0xff]
      %v2004 = vld [vmem:[%s500 + $0x51] sm:$0xff]
      %v2005 = vld [vmem:[%s500 + $0x61] sm:$0xff]
      %v2006 = vld [vmem:[%s500 + $0x69] sm:$0xff]
      %v2007 = vld [vmem:[%s500 + $0x79] sm:$0xff]
      %v2008 = vld [vmem:[%s500 + $0x81] sm:$0xff]
      %v2009 = vld [vmem:[%s500 + $0x91] sm:$0xff]
      %v2010 = vld [vmem:[%s500 + $0x99] sm:$0xff]
      %v2011 = vld [vmem:[%s500 + $0xa9] sm:$0xff]
      %v2012 = vld [vmem:[%s500 + $0xb1] sm:$0xff]
      %v2013 = vld [vmem:[%s500 + $0xc1] sm:$0xff]
      %v2014 = vld [vmem:[%s500 + $0xc9] sm:$0xff]
      %v2015 = vld [vmem:[%s500 + $0xd9] sm:$0xff]
      %v2016 = vld [vmem:[%s500 + $0xe1] sm:$0xff]
      %v2017 = vld [vmem:[%s500 + $0xf1] sm:$0xff]
      %v2018 = vld [vmem:[%s500 + $0xf9] sm:$0xff]
      %v2019 = vld [vmem:[%s500 + $0x109] sm:$0xff]
      %v2020 = vld [vmem:[%s500 + $0x111] sm:$0xff]
      %v2021 = vld [vmem:[%s500 + $0x121] sm:$0xff]
      %v2022 = vld [vmem:[%s500 + $0x129] sm:$0xff]
      %v2023 = vld [vmem:[%s500 + $0x139] sm:$0xff]
      %v2024 = vld [vmem:[%s500 + $0x141] sm:$0xff]
      %v2025 = vld [vmem:[%s500 + $0x151] sm:$0xff]
      %v2026 = vld [vmem:[%s500 + $0x159] sm:$0xff]
      %v2027 = vld [vmem:[%s500 + $0x169] sm:$0xff]
      %v2028 = vld [vmem:[%s500 + $0x171] sm:$0xff]
      %v2029 = vpack.c.bf16 %v1998, %v1997
      %v2030 = vpack.c.bf16 %v2000, %v1999
      %v2031 = vpack.c.bf16 %v2002, %v2001
      %v2032 = vpack.c.bf16 %v2004, %v2003
      %v2033 = vpack.c.bf16 %v2006, %v2005
      %v2034 = vpack.c.bf16 %v2008, %v2007
      %v2035 = vpack.c.bf16 %v2010, %v2009
      %v2036 = vpack.c.bf16 %v2012, %v2011
      %v2037 = vpack.c.bf16 %v2014, %v2013
      %v2038 = vpack.c.bf16 %v2016, %v2015
      %v2039 = vpack.c.bf16 %v2018, %v2017
      %v2040 = vpack.c.bf16 %v2020, %v2019
      %v2041 = vpack.c.bf16 %v2022, %v2021
      %v2042 = vpack.c.bf16 %v2024, %v2023
      %v2043 = vpack.c.bf16 %v2026, %v2025
      %v2044 = vpack.c.bf16 %v2028, %v2027
      %v2045 = vld [vmem:[#allocation3] sm:$0xff]
      %v2046 = vld [vmem:[#allocation3 + $0x8] sm:$0xff]
      %v2047 = vld [vmem:[#allocation3 + $0x10] sm:$0xff]
      %v2048 = vld [vmem:[#allocation3 + $0x18] sm:$0xff]
      %v2049 = vld [vmem:[#allocation3 + $0x20] sm:$0xff]
      %v2050 = vld [vmem:[#allocation3 + $0x28] sm:$0xff]
      %v2051 = vld [vmem:[#allocation3 + $0x30] sm:$0xff]
      %v2052 = vld [vmem:[#allocation3 + $0x38] sm:$0xff]
      %v2053 = vld [vmem:[#allocation3 + $0x40] sm:$0xff]
      %v2054 = vld [vmem:[#allocation3 + $0x48] sm:$0xff]
      %v2055 = vld [vmem:[#allocation3 + $0x50] sm:$0xff]
      %v2056 = vld [vmem:[#allocation3 + $0x58] sm:$0xff]
      %v2057 = vld [vmem:[#allocation3 + $0x60] sm:$0xff]
      %v2058 = vld [vmem:[#allocation3 + $0x68] sm:$0xff]
      %v2059 = vld [vmem:[#allocation3 + $0x70] sm:$0xff]
      %v2060 = vld [vmem:[#allocation3 + $0x78] sm:$0xff]
      %v2061 = vld [vmem:[#allocation3 + $0x80] sm:$0xff]
      %v2062 = vld [vmem:[#allocation3 + $0x88] sm:$0xff]
      %v2063 = vld [vmem:[#allocation3 + $0x90] sm:$0xff]
      %v2064 = vld [vmem:[#allocation3 + $0x98] sm:$0xff]
      %v2065 = vld [vmem:[#allocation3 + $0xa0] sm:$0xff]
      %v2066 = vld [vmem:[#allocation3 + $0xa8] sm:$0xff]
      %v2067 = vld [vmem:[#allocation3 + $0xb0] sm:$0xff]
      %v2068 = vld [vmem:[#allocation3 + $0xb8] sm:$0xff]
      %v2069 = vld [vmem:[#allocation3 + $0xc0] sm:$0xff]
      %v2070 = vld [vmem:[#allocation3 + $0xc8] sm:$0xff]
      %v2071 = vld [vmem:[#allocation3 + $0xd0] sm:$0xff]
      %v2072 = vld [vmem:[#allocation3 + $0xd8] sm:$0xff]
      %v2073 = vld [vmem:[#allocation3 + $0xe0] sm:$0xff]
      %v2074 = vld [vmem:[#allocation3 + $0xe8] sm:$0xff]
      %v2075 = vld [vmem:[#allocation3 + $0xf0] sm:$0xff]
      %v2076 = vld [vmem:[#allocation3 + $0xf8] sm:$0xff]
      %s2077 = scalar_lea.vmem %s3, 16
      %v2078 = vld [vmem:[%s2077] sm:$0xf]
      %v2080 = vsel %vm444, %v2029, 0
      %v2083 = vsel %vm444, %v2030, 0
      %v2086 = vsel %vm444, %v2031, 0
      %v2089 = vsel %vm444, %v2032, 0
      %v2092 = vsel %vm444, %v2033, 0
      %v2095 = vsel %vm444, %v2034, 0
      %v2098 = vsel %vm444, %v2035, 0
      %v2101 = vsel %vm444, %v2036, 0
      %v2104 = vsel %vm444, %v2037, 0
      %v2107 = vsel %vm444, %v2038, 0
      %v2110 = vsel %vm444, %v2039, 0
      %v2113 = vsel %vm444, %v2040, 0
      %v2116 = vsel %vm444, %v2041, 0
      %v2119 = vsel %vm444, %v2042, 0
      %v2122 = vsel %vm444, %v2043, 0
      %v2125 = vsel %vm444, %v2044, 0
      %v2128 = vsel %vm694, %v2078, 0
      %2130 = vmatprep.subr.bf16.mxu0 0
      %2131 = vmatpush1.bf16.msra.mxu0 %v2128
      %2132 = vmatprep.subr.bf16.mxu0 0
      %2133 = vmatpush1.bf16.msra.mxu0 0
      %2134 = vmatprep.subr.bf16.mxu0 0
      %2135 = vmatpush1.bf16.msra.mxu0 0
      %2136 = vmatprep.subr.bf16.mxu0 0
      %2137 = vmatpush1.bf16.msra.mxu0 0
      %2138 = vmatprep.subr.bf16.mxu0 0
      %2139 = vmatpush1.bf16.msra.mxu0 0
      %2140 = vmatprep.subr.bf16.mxu0 0
      %2141 = vmatpush1.bf16.msra.mxu0 0
      %2142 = vmatprep.subr.bf16.mxu0 0
      %2143 = vmatpush1.bf16.msra.mxu0 0
      %2144 = vmatprep.subr.bf16.mxu0 0
      %2145 = vmatpush1.bf16.msra.mxu0 0
      %2146 = vmatprep.subr.bf16.mxu0 0
      %2147 = vmatpush1.bf16.msra.mxu0 0
      %2148 = vmatprep.subr.bf16.mxu0 0
      %2149 = vmatpush1.bf16.msra.mxu0 0
      %2150 = vmatprep.subr.bf16.mxu0 0
      %2151 = vmatpush1.bf16.msra.mxu0 0
      %2152 = vmatprep.subr.bf16.mxu0 0
      %2153 = vmatpush1.bf16.msra.mxu0 0
      %2154 = vmatprep.subr.bf16.mxu0 0
      %2155 = vmatpush1.bf16.msra.mxu0 0
      %2156 = vmatprep.subr.bf16.mxu0 0
      %2157 = vmatpush1.bf16.msra.mxu0 0
      %2158 = vmatprep.subr.bf16.mxu0 0
      %2159 = vmatpush1.bf16.msra.mxu0 0
      %2160 = vmatprep.subr.bf16.mxu0 0
      %2161 = vmatpush1.bf16.msra.mxu0 0
      %2162 = vmatprep.mubr.bf16.mxu0 0
      %2163 = vmatmul.mubr.bf16.gmra.mrb[0].mxu0 %v2080
      %v2164 = vpop.f32.mrb[0].mxu0
      %v2165 = vadd.f32 0.0, %v2164
      %v2166 = vpop.f32.mrb[0].mxu0
      %v2167 = vpop.f32.mrb[0].mxu0
      %v2168 = vadd.f32 0.0, %v2167
      %v2169 = vpop.f32.mrb[0].mxu0
      %2170 = vmatprep.mubr.bf16.mxu0 0
      %2171 = vmatmul.mubr.bf16.gmra.mrb[0].mxu0 %v2083
      %v2172 = vpop.f32.mrb[0].mxu0
      %v2173 = vadd.f32 0.0, %v2172
      %v2174 = vpop.f32.mrb[0].mxu0
      %v2175 = vpop.f32.mrb[0].mxu0
      %v2176 = vadd.f32 0.0, %v2175
      %v2177 = vpop.f32.mrb[0].mxu0
      %2178 = vmatprep.mubr.bf16.mxu0 0
      %2179 = vmatmul.mubr.bf16.gmra.mrb[0].mxu0 %v2086
      %v2180 = vpop.f32.mrb[0].mxu0
      %v2181 = vadd.f32 0.0, %v2180
      %v2182 = vpop.f32.mrb[0].mxu0
      %v2183 = vpop.f32.mrb[0].mxu0
      %v2184 = vadd.f32 0.0, %v2183
      %v2185 = vpop.f32.mrb[0].mxu0
      %2186 = vmatprep.mubr.bf16.mxu0 0
      %2187 = vmatmul.mubr.bf16.gmra.mrb[0].mxu0 %v2089
      %v2188 = vpop.f32.mrb[0].mxu0
      %v2189 = vadd.f32 0.0, %v2188
      %v2190 = vpop.f32.mrb[0].mxu0
      %v2191 = vpop.f32.mrb[0].mxu0
      %v2192 = vadd.f32 0.0, %v2191
      %v2193 = vpop.f32.mrb[0].mxu0
      %2194 = vmatprep.mubr.bf16.mxu0 0
      %2195 = vmatmul.mubr.bf16.gmra.mrb[0].mxu0 %v2092
      %v2196 = vpop.f32.mrb[0].mxu0
      %v2197 = vadd.f32 0.0, %v2196
      %v2198 = vpop.f32.mrb[0].mxu0
      %v2199 = vpop.f32.mrb[0].mxu0
      %v2200 = vadd.f32 0.0, %v2199
      %v2201 = vpop.f32.mrb[0].mxu0
      %2202 = vmatprep.mubr.bf16.mxu0 0
      %2203 = vmatmul.mubr.bf16.gmra.mrb[0].mxu0 %v2095
      %v2204 = vpop.f32.mrb[0].mxu0
      %v2205 = vadd.f32 0.0, %v2204
      %v2206 = vpop.f32.mrb[0].mxu0
      %v2207 = vpop.f32.mrb[0].mxu0
      %v2208 = vadd.f32 0.0, %v2207
      %v2209 = vpop.f32.mrb[0].mxu0
      %2210 = vmatprep.mubr.bf16.mxu0 0
      %2211 = vmatmul.mubr.bf16.gmra.mrb[0].mxu0 %v2098
      %v2212 = vpop.f32.mrb[0].mxu0
      %v2213 = vadd.f32 0.0, %v2212
      %v2214 = vpop.f32.mrb[0].mxu0
      %v2215 = vpop.f32.mrb[0].mxu0
      %v2216 = vadd.f32 0.0, %v2215
      %v2217 = vpop.f32.mrb[0].mxu0
      %2218 = vmatprep.mubr.bf16.mxu0 0
      %2219 = vmatmul.mubr.bf16.gmra.mrb[0].mxu0 %v2101
      %v2220 = vpop.f32.mrb[0].mxu0
      %v2221 = vadd.f32 0.0, %v2220
      %v2222 = vpop.f32.mrb[0].mxu0
      %v2223 = vpop.f32.mrb[0].mxu0
      %v2224 = vadd.f32 0.0, %v2223
      %v2225 = vpop.f32.mrb[0].mxu0
      %2226 = vmatprep.mubr.bf16.mxu0 0
      %2227 = vmatmul.mubr.bf16.gmra.mrb[0].mxu0 %v2104
      %v2228 = vpop.f32.mrb[0].mxu0
      %v2229 = vadd.f32 0.0, %v2228
      %v2230 = vpop.f32.mrb[0].mxu0
      %v2231 = vpop.f32.mrb[0].mxu0
      %v2232 = vadd.f32 0.0, %v2231
      %v2233 = vpop.f32.mrb[0].mxu0
      %2234 = vmatprep.mubr.bf16.mxu0 0
      %2235 = vmatmul.mubr.bf16.gmra.mrb[0].mxu0 %v2107
      %v2236 = vpop.f32.mrb[0].mxu0
      %v2237 = vadd.f32 0.0, %v2236
      %v2238 = vpop.f32.mrb[0].mxu0
      %v2239 = vpop.f32.mrb[0].mxu0
      %v2240 = vadd.f32 0.0, %v2239
      %v2241 = vpop.f32.mrb[0].mxu0
      %2242 = vmatprep.mubr.bf16.mxu0 0
      %2243 = vmatmul.mubr.bf16.gmra.mrb[0].mxu0 %v2110
      %v2244 = vpop.f32.mrb[0].mxu0
      %v2245 = vadd.f32 0.0, %v2244
      %v2246 = vpop.f32.mrb[0].mxu0
      %v2247 = vpop.f32.mrb[0].mxu0
      %v2248 = vadd.f32 0.0, %v2247
      %v2249 = vpop.f32.mrb[0].mxu0
      %2250 = vmatprep.mubr.bf16.mxu0 0
      %2251 = vmatmul.mubr.bf16.gmra.mrb[0].mxu0 %v2113
      %v2252 = vpop.f32.mrb[0].mxu0
      %v2253 = vadd.f32 0.0, %v2252
      %v2254 = vpop.f32.mrb[0].mxu0
      %v2255 = vpop.f32.mrb[0].mxu0
      %v2256 = vadd.f32 0.0, %v2255
      %v2257 = vpop.f32.mrb[0].mxu0
      %2258 = vmatprep.mubr.bf16.mxu0 0
      %2259 = vmatmul.mubr.bf16.gmra.mrb[0].mxu0 %v2116
      %v2260 = vpop.f32.mrb[0].mxu0
      %v2261 = vadd.f32 0.0, %v2260
      %v2262 = vpop.f32.mrb[0].mxu0
      %v2263 = vpop.f32.mrb[0].mxu0
      %v2264 = vadd.f32 0.0, %v2263
      %v2265 = vpop.f32.mrb[0].mxu0
      %2266 = vmatprep.mubr.bf16.mxu0 0
      %2267 = vmatmul.mubr.bf16.gmra.mrb[0].mxu0 %v2119
      %v2268 = vpop.f32.mrb[0].mxu0
      %v2269 = vadd.f32 0.0, %v2268
      %v2270 = vpop.f32.mrb[0].mxu0
      %v2271 = vpop.f32.mrb[0].mxu0
      %v2272 = vadd.f32 0.0, %v2271
      %v2273 = vpop.f32.mrb[0].mxu0
      %2274 = vmatprep.mubr.bf16.mxu0 0
      %2275 = vmatmul.mubr.bf16.gmra.mrb[0].mxu0 %v2122
      %v2276 = vpop.f32.mrb[0].mxu0
      %v2277 = vadd.f32 0.0, %v2276
      %v2278 = vpop.f32.mrb[0].mxu0
      %v2279 = vpop.f32.mrb[0].mxu0
      %v2280 = vadd.f32 0.0, %v2279
      %v2281 = vpop.f32.mrb[0].mxu0
      %2282 = vmatprep.mubr.bf16.mxu0 0
      %2283 = vmatmul.mubr.bf16.gmra.mrb[0].mxu0 %v2125
      %v2284 = vpop.f32.mrb[0].mxu0
      %v2285 = vadd.f32 0.0, %v2284
      %v2286 = vpop.f32.mrb[0].mxu0
      %v2287 = vpop.f32.mrb[0].mxu0
      %v2288 = vadd.f32 0.0, %v2287
      %v2289 = vpop.f32.mrb[0].mxu0
      %2290 = vdwg.mxu0
      %v2291 = vadd.f32 %v2045, %v2165
      %v2292 = vadd.f32 %v2046, %v2168
      %v2293 = vadd.f32 %v2047, %v2173
      %v2294 = vadd.f32 %v2048, %v2176
      %v2295 = vadd.f32 %v2049, %v2181
      %v2296 = vadd.f32 %v2050, %v2184
      %v2297 = vadd.f32 %v2051, %v2189
      %v2298 = vadd.f32 %v2052, %v2192
      %v2299 = vadd.f32 %v2053, %v2197
      %v2300 = vadd.f32 %v2054, %v2200
      %v2301 = vadd.f32 %v2055, %v2205
      %v2302 = vadd.f32 %v2056, %v2208
      %v2303 = vadd.f32 %v2057, %v2213
      %v2304 = vadd.f32 %v2058, %v2216
      %v2305 = vadd.f32 %v2059, %v2221
      %v2306 = vadd.f32 %v2060, %v2224
      %v2307 = vadd.f32 %v2061, %v2229
      %v2308 = vadd.f32 %v2062, %v2232
      %v2309 = vadd.f32 %v2063, %v2237
      %v2310 = vadd.f32 %v2064, %v2240
      %v2311 = vadd.f32 %v2065, %v2245
      %v2312 = vadd.f32 %v2066, %v2248
      %v2313 = vadd.f32 %v2067, %v2253
      %v2314 = vadd.f32 %v2068, %v2256
      %v2315 = vadd.f32 %v2069, %v2261
      %v2316 = vadd.f32 %v2070, %v2264
      %v2317 = vadd.f32 %v2071, %v2269
      %v2318 = vadd.f32 %v2072, %v2272
      %v2319 = vadd.f32 %v2073, %v2277
      %v2320 = vadd.f32 %v2074, %v2280
      %v2321 = vadd.f32 %v2075, %v2285
      %v2322 = vadd.f32 %v2076, %v2288
      %2323 = vst.msk [vmem:[#allocation3] sm:$0xff] %vm444, %v2291
      %2324 = vst.msk [vmem:[#allocation3 + $0x8] sm:$0xff] %vm444, %v2292
      %2325 = vst.msk [vmem:[#allocation3 + $0x10] sm:$0xff] %vm444, %v2293
      %2326 = vst.msk [vmem:[#allocation3 + $0x18] sm:$0xff] %vm444, %v2294
      %2327 = vst.msk [vmem:[#allocation3 + $0x20] sm:$0xff] %vm444, %v2295
      %2328 = vst.msk [vmem:[#allocation3 + $0x28] sm:$0xff] %vm444, %v2296
      %2329 = vst.msk [vmem:[#allocation3 + $0x30] sm:$0xff] %vm444, %v2297
      %2330 = vst.msk [vmem:[#allocation3 + $0x38] sm:$0xff] %vm444, %v2298
      %2331 = vst.msk [vmem:[#allocation3 + $0x40] sm:$0xff] %vm444, %v2299
      %2332 = vst.msk [vmem:[#allocation3 + $0x48] sm:$0xff] %vm444, %v2300
      %2333 = vst.msk [vmem:[#allocation3 + $0x50] sm:$0xff] %vm444, %v2301
      %2334 = vst.msk [vmem:[#allocation3 + $0x58] sm:$0xff] %vm444, %v2302
      %2335 = vst.msk [vmem:[#allocation3 + $0x60] sm:$0xff] %vm444, %v2303
      %2336 = vst.msk [vmem:[#allocation3 + $0x68] sm:$0xff] %vm444, %v2304
      %2337 = vst.msk [vmem:[#allocation3 + $0x70] sm:$0xff] %vm444, %v2305
      %2338 = vst.msk [vmem:[#allocation3 + $0x78] sm:$0xff] %vm444, %v2306
      %2339 = vst.msk [vmem:[#allocation3 + $0x80] sm:$0xff] %vm444, %v2307
      %2340 = vst.msk [vmem:[#allocation3 + $0x88] sm:$0xff] %vm444, %v2308
      %2341 = vst.msk [vmem:[#allocation3 + $0x90] sm:$0xff] %vm444, %v2309
      %2342 = vst.msk [vmem:[#allocation3 + $0x98] sm:$0xff] %vm444, %v2310
      %2343 = vst.msk [vmem:[#allocation3 + $0xa0] sm:$0xff] %vm444, %v2311
      %2344 = vst.msk [vmem:[#allocation3 + $0xa8] sm:$0xff] %vm444, %v2312
      %2345 = vst.msk [vmem:[#allocation3 + $0xb0] sm:$0xff] %vm444, %v2313
      %2346 = vst.msk [vmem:[#allocation3 + $0xb8] sm:$0xff] %vm444, %v2314
      %2347 = vst.msk [vmem:[#allocation3 + $0xc0] sm:$0xff] %vm444, %v2315
      %2348 = vst.msk [vmem:[#allocation3 + $0xc8] sm:$0xff] %vm444, %v2316
      %2349 = vst.msk [vmem:[#allocation3 + $0xd0] sm:$0xff] %vm444, %v2317
      %2350 = vst.msk [vmem:[#allocation3 + $0xd8] sm:$0xff] %vm444, %v2318
      %2351 = vst.msk [vmem:[#allocation3 + $0xe0] sm:$0xff] %vm444, %v2319
      %2352 = vst.msk [vmem:[#allocation3 + $0xe8] sm:$0xff] %vm444, %v2320
      %2353 = vst.msk [vmem:[#allocation3 + $0xf0] sm:$0xff] %vm444, %v2321
      %2354 = vst.msk [vmem:[#allocation3 + $0xf8] sm:$0xff] %vm444, %v2322
      %v2355 = vld [vmem:[%s500 + $0x2] sm:$0xff]
      %v2356 = vld [vmem:[%s500 + $0xa] sm:$0xff]
      %v2357 = vld [vmem:[%s500 + $0x1a] sm:$0xff]
      %v2358 = vld [vmem:[%s500 + $0x22] sm:$0xff]
      %v2359 = vld [vmem:[%s500 + $0x32] sm:$0xff]
      %v2360 = vld [vmem:[%s500 + $0x3a] sm:$0xff]
      %v2361 = vld [vmem:[%s500 + $0x4a] sm:$0xff]
      %v2362 = vld [vmem:[%s500 + $0x52] sm:$0xff]
      %v2363 = vld [vmem:[%s500 + $0x62] sm:$0xff]
      %v2364 = vld [vmem:[%s500 + $0x6a] sm:$0xff]
      %v2365 = vld [vmem:[%s500 + $0x7a] sm:$0xff]
      %v2366 = vld [vmem:[%s500 + $0x82] sm:$0xff]
      %v2367 = vld [vmem:[%s500 + $0x92] sm:$0xff]
      %v2368 = vld [vmem:[%s500 + $0x9a] sm:$0xff]
      %v2369 = vld [vmem:[%s500 + $0xaa] sm:$0xff]
      %v2370 = vld [vmem:[%s500 + $0xb2] sm:$0xff]
      %v2371 = vld [vmem:[%s500 + $0xc2] sm:$0xff]
      %v2372 = vld [vmem:[%s500 + $0xca] sm:$0xff]
      %v2373 = vld [vmem:[%s500 + $0xda] sm:$0xff]
      %v2374 = vld [vmem:[%s500 + $0xe2] sm:$0xff]
      %v2375 = vld [vmem:[%s500 + $0xf2] sm:$0xff]
      %v2376 = vld [vmem:[%s500 + $0xfa] sm:$0xff]
      %v2377 = vld [vmem:[%s500 + $0x10a] sm:$0xff]
      %v2378 = vld [vmem:[%s500 + $0x112] sm:$0xff]
      %v2379 = vld [vmem:[%s500 + $0x122] sm:$0xff]
      %v2380 = vld [vmem:[%s500 + $0x12a] sm:$0xff]
      %v2381 = vld [vmem:[%s500 + $0x13a] sm:$0xff]
      %v2382 = vld [vmem:[%s500 + $0x142] sm:$0xff]
      %v2383 = vld [vmem:[%s500 + $0x152] sm:$0xff]
      %v2384 = vld [vmem:[%s500 + $0x15a] sm:$0xff]
      %v2385 = vld [vmem:[%s500 + $0x16a] sm:$0xff]
      %v2386 = vld [vmem:[%s500 + $0x172] sm:$0xff]
      %v2387 = vpack.c.bf16 %v2356, %v2355
      %v2388 = vpack.c.bf16 %v2358, %v2357
      %v2389 = vpack.c.bf16 %v2360, %v2359
      %v2390 = vpack.c.bf16 %v2362, %v2361
      %v2391 = vpack.c.bf16 %v2364, %v2363
      %v2392 = vpack.c.bf16 %v2366, %v2365
      %v2393 = vpack.c.bf16 %v2368, %v2367
      %v2394 = vpack.c.bf16 %v2370, %v2369
      %v2395 = vpack.c.bf16 %v2372, %v2371
      %v2396 = vpack.c.bf16 %v2374, %v2373
      %v2397 = vpack.c.bf16 %v2376, %v2375
      %v2398 = vpack.c.bf16 %v2378, %v2377
      %v2399 = vpack.c.bf16 %v2380, %v2379
      %v2400 = vpack.c.bf16 %v2382, %v2381
      %v2401 = vpack.c.bf16 %v2384, %v2383
      %v2402 = vpack.c.bf16 %v2386, %v2385
      %v2403 = vld [vmem:[#allocation3] sm:$0xff]
      %v2404 = vld [vmem:[#allocation3 + $0x8] sm:$0xff]
      %v2405 = vld [vmem:[#allocation3 + $0x10] sm:$0xff]
      %v2406 = vld [vmem:[#allocation3 + $0x18] sm:$0xff]
      %v2407 = vld [vmem:[#allocation3 + $0x20] sm:$0xff]
      %v2408 = vld [vmem:[#allocation3 + $0x28] sm:$0xff]
      %v2409 = vld [vmem:[#allocation3 + $0x30] sm:$0xff]
      %v2410 = vld [vmem:[#allocation3 + $0x38] sm:$0xff]
      %v2411 = vld [vmem:[#allocation3 + $0x40] sm:$0xff]
      %v2412 = vld [vmem:[#allocation3 + $0x48] sm:$0xff]
      %v2413 = vld [vmem:[#allocation3 + $0x50] sm:$0xff]
      %v2414 = vld [vmem:[#allocation3 + $0x58] sm:$0xff]
      %v2415 = vld [vmem:[#allocation3 + $0x60] sm:$0xff]
      %v2416 = vld [vmem:[#allocation3 + $0x68] sm:$0xff]
      %v2417 = vld [vmem:[#allocation3 + $0x70] sm:$0xff]
      %v2418 = vld [vmem:[#allocation3 + $0x78] sm:$0xff]
      %v2419 = vld [vmem:[#allocation3 + $0x80] sm:$0xff]
      %v2420 = vld [vmem:[#allocation3 + $0x88] sm:$0xff]
      %v2421 = vld [vmem:[#allocation3 + $0x90] sm:$0xff]
      %v2422 = vld [vmem:[#allocation3 + $0x98] sm:$0xff]
      %v2423 = vld [vmem:[#allocation3 + $0xa0] sm:$0xff]
      %v2424 = vld [vmem:[#allocation3 + $0xa8] sm:$0xff]
      %v2425 = vld [vmem:[#allocation3 + $0xb0] sm:$0xff]
      %v2426 = vld [vmem:[#allocation3 + $0xb8] sm:$0xff]
      %v2427 = vld [vmem:[#allocation3 + $0xc0] sm:$0xff]
      %v2428 = vld [vmem:[#allocation3 + $0xc8] sm:$0xff]
      %v2429 = vld [vmem:[#allocation3 + $0xd0] sm:$0xff]
      %v2430 = vld [vmem:[#allocation3 + $0xd8] sm:$0xff]
      %v2431 = vld [vmem:[#allocation3 + $0xe0] sm:$0xff]
      %v2432 = vld [vmem:[#allocation3 + $0xe8] sm:$0xff]
      %v2433 = vld [vmem:[#allocation3 + $0xf0] sm:$0xff]
      %v2434 = vld [vmem:[#allocation3 + $0xf8] sm:$0xff]
      %s2435 = scalar_lea.vmem %s3, 20
      %v2436 = vld [vmem:[%s2435] sm:$0xf]
      %v2438 = vsel %vm444, %v2387, 0
      %v2441 = vsel %vm444, %v2388, 0
      %v2444 = vsel %vm444, %v2389, 0
      %v2447 = vsel %vm444, %v2390, 0
      %v2450 = vsel %vm444, %v2391, 0
      %v2453 = vsel %vm444, %v2392, 0
      %v2456 = vsel %vm444, %v2393, 0
      %v2459 = vsel %vm444, %v2394, 0
      %v2462 = vsel %vm444, %v2395, 0
      %v2465 = vsel %vm444, %v2396, 0
      %v2468 = vsel %vm444, %v2397, 0
      %v2471 = vsel %vm444, %v2398, 0
      %v2474 = vsel %vm444, %v2399, 0
      %v2477 = vsel %vm444, %v2400, 0
      %v2480 = vsel %vm444, %v2401, 0
      %v2483 = vsel %vm444, %v2402, 0
      %v2486 = vsel %vm694, %v2436, 0
      %2488 = vmatprep.subr.bf16.mxu0 0
      %2489 = vmatpush1.bf16.msra.mxu0 %v2486
      %2490 = vmatprep.subr.bf16.mxu0 0
      %2491 = vmatpush1.bf16.msra.mxu0 0
      %2492 = vmatprep.subr.bf16.mxu0 0
      %2493 = vmatpush1.bf16.msra.mxu0 0
      %2494 = vmatprep.subr.bf16.mxu0 0
      %2495 = vmatpush1.bf16.msra.mxu0 0
      %2496 = vmatprep.subr.bf16.mxu0 0
      %2497 = vmatpush1.bf16.msra.mxu0 0
      %2498 = vmatprep.subr.bf16.mxu0 0
      %2499 = vmatpush1.bf16.msra.mxu0 0
      %2500 = vmatprep.subr.bf16.mxu0 0
      %2501 = vmatpush1.bf16.msra.mxu0 0
      %2502 = vmatprep.subr.bf16.mxu0 0
      %2503 = vmatpush1.bf16.msra.mxu0 0
      %2504 = vmatprep.subr.bf16.mxu0 0
      %2505 = vmatpush1.bf16.msra.mxu0 0
      %2506 = vmatprep.subr.bf16.mxu0 0
      %2507 = vmatpush1.bf16.msra.mxu0 0
      %2508 = vmatprep.subr.bf16.mxu0 0
      %2509 = vmatpush1.bf16.msra.mxu0 0
      %2510 = vmatprep.subr.bf16.mxu0 0
      %2511 = vmatpush1.bf16.msra.mxu0 0
      %2512 = vmatprep.subr.bf16.mxu0 0
      %2513 = vmatpush1.bf16.msra.mxu0 0
      %2514 = vmatprep.subr.bf16.mxu0 0
      %2515 = vmatpush1.bf16.msra.mxu0 0
      %2516 = vmatprep.subr.bf16.mxu0 0
      %2517 = vmatpush1.bf16.msra.mxu0 0
      %2518 = vmatprep.subr.bf16.mxu0 0
      %2519 = vmatpush1.bf16.msra.mxu0 0
      %2520 = vmatprep.mubr.bf16.mxu0 0
      %2521 = vmatmul.mubr.bf16.gmra.mrb[0].mxu0 %v2438
      %v2522 = vpop.f32.mrb[0].mxu0
      %v2523 = vadd.f32 0.0, %v2522
      %v2524 = vpop.f32.mrb[0].mxu0
      %v2525 = vpop.f32.mrb[0].mxu0
      %v2526 = vadd.f32 0.0, %v2525
      %v2527 = vpop.f32.mrb[0].mxu0
      %2528 = vmatprep.mubr.bf16.mxu0 0
      %2529 = vmatmul.mubr.bf16.gmra.mrb[0].mxu0 %v2441
      %v2530 = vpop.f32.mrb[0].mxu0
      %v2531 = vadd.f32 0.0, %v2530
      %v2532 = vpop.f32.mrb[0].mxu0
      %v2533 = vpop.f32.mrb[0].mxu0
      %v2534 = vadd.f32 0.0, %v2533
      %v2535 = vpop.f32.mrb[0].mxu0
      %2536 = vmatprep.mubr.bf16.mxu0 0
      %2537 = vmatmul.mubr.bf16.gmra.mrb[0].mxu0 %v2444
      %v2538 = vpop.f32.mrb[0].mxu0
      %v2539 = vadd.f32 0.0, %v2538
      %v2540 = vpop.f32.mrb[0].mxu0
      %v2541 = vpop.f32.mrb[0].mxu0
      %v2542 = vadd.f32 0.0, %v2541
      %v2543 = vpop.f32.mrb[0].mxu0
      %2544 = vmatprep.mubr.bf16.mxu0 0
      %2545 = vmatmul.mubr.bf16.gmra.mrb[0].mxu0 %v2447
      %v2546 = vpop.f32.mrb[0].mxu0
      %v2547 = vadd.f32 0.0, %v2546
      %v2548 = vpop.f32.mrb[0].mxu0
      %v2549 = vpop.f32.mrb[0].mxu0
      %v2550 = vadd.f32 0.0, %v2549
      %v2551 = vpop.f32.mrb[0].mxu0
      %2552 = vmatprep.mubr.bf16.mxu0 0
      %2553 = vmatmul.mubr.bf16.gmra.mrb[0].mxu0 %v2450
      %v2554 = vpop.f32.mrb[0].mxu0
      %v2555 = vadd.f32 0.0, %v2554
      %v2556 = vpop.f32.mrb[0].mxu0
      %v2557 = vpop.f32.mrb[0].mxu0
      %v2558 = vadd.f32 0.0, %v2557
      %v2559 = vpop.f32.mrb[0].mxu0
      %2560 = vmatprep.mubr.bf16.mxu0 0
      %2561 = vmatmul.mubr.bf16.gmra.mrb[0].mxu0 %v2453
      %v2562 = vpop.f32.mrb[0].mxu0
      %v2563 = vadd.f32 0.0, %v2562
      %v2564 = vpop.f32.mrb[0].mxu0
      %v2565 = vpop.f32.mrb[0].mxu0
      %v2566 = vadd.f32 0.0, %v2565
      %v2567 = vpop.f32.mrb[0].mxu0
      %2568 = vmatprep.mubr.bf16.mxu0 0
      %2569 = vmatmul.mubr.bf16.gmra.mrb[0].mxu0 %v2456
      %v2570 = vpop.f32.mrb[0].mxu0
      %v2571 = vadd.f32 0.0, %v2570
      %v2572 = vpop.f32.mrb[0].mxu0
      %v2573 = vpop.f32.mrb[0].mxu0
      %v2574 = vadd.f32 0.0, %v2573
      %v2575 = vpop.f32.mrb[0].mxu0
      %2576 = vmatprep.mubr.bf16.mxu0 0
      %2577 = vmatmul.mubr.bf16.gmra.mrb[0].mxu0 %v2459
      %v2578 = vpop.f32.mrb[0].mxu0
      %v2579 = vadd.f32 0.0, %v2578
      %v2580 = vpop.f32.mrb[0].mxu0
      %v2581 = vpop.f32.mrb[0].mxu0
      %v2582 = vadd.f32 0.0, %v2581
      %v2583 = vpop.f32.mrb[0].mxu0
      %2584 = vmatprep.mubr.bf16.mxu0 0
      %2585 = vmatmul.mubr.bf16.gmra.mrb[0].mxu0 %v2462
      %v2586 = vpop.f32.mrb[0].mxu0
      %v2587 = vadd.f32 0.0, %v2586
      %v2588 = vpop.f32.mrb[0].mxu0
      %v2589 = vpop.f32.mrb[0].mxu0
      %v2590 = vadd.f32 0.0, %v2589
      %v2591 = vpop.f32.mrb[0].mxu0
      %2592 = vmatprep.mubr.bf16.mxu0 0
      %2593 = vmatmul.mubr.bf16.gmra.mrb[0].mxu0 %v2465
      %v2594 = vpop.f32.mrb[0].mxu0
      %v2595 = vadd.f32 0.0, %v2594
      %v2596 = vpop.f32.mrb[0].mxu0
      %v2597 = vpop.f32.mrb[0].mxu0
      %v2598 = vadd.f32 0.0, %v2597
      %v2599 = vpop.f32.mrb[0].mxu0
      %2600 = vmatprep.mubr.bf16.mxu0 0
      %2601 = vmatmul.mubr.bf16.gmra.mrb[0].mxu0 %v2468
      %v2602 = vpop.f32.mrb[0].mxu0
      %v2603 = vadd.f32 0.0, %v2602
      %v2604 = vpop.f32.mrb[0].mxu0
      %v2605 = vpop.f32.mrb[0].mxu0
      %v2606 = vadd.f32 0.0, %v2605
      %v2607 = vpop.f32.mrb[0].mxu0
      %2608 = vmatprep.mubr.bf16.mxu0 0
      %2609 = vmatmul.mubr.bf16.gmra.mrb[0].mxu0 %v2471
      %v2610 = vpop.f32.mrb[0].mxu0
      %v2611 = vadd.f32 0.0, %v2610
      %v2612 = vpop.f32.mrb[0].mxu0
      %v2613 = vpop.f32.mrb[0].mxu0
      %v2614 = vadd.f32 0.0, %v2613
      %v2615 = vpop.f32.mrb[0].mxu0
      %2616 = vmatprep.mubr.bf16.mxu0 0
      %2617 = vmatmul.mubr.bf16.gmra.mrb[0].mxu0 %v2474
      %v2618 = vpop.f32.mrb[0].mxu0
      %v2619 = vadd.f32 0.0, %v2618
      %v2620 = vpop.f32.mrb[0].mxu0
      %v2621 = vpop.f32.mrb[0].mxu0
      %v2622 = vadd.f32 0.0, %v2621
      %v2623 = vpop.f32.mrb[0].mxu0
      %2624 = vmatprep.mubr.bf16.mxu0 0
      %2625 = vmatmul.mubr.bf16.gmra.mrb[0].mxu0 %v2477
      %v2626 = vpop.f32.mrb[0].mxu0
      %v2627 = vadd.f32 0.0, %v2626
      %v2628 = vpop.f32.mrb[0].mxu0
      %v2629 = vpop.f32.mrb[0].mxu0
      %v2630 = vadd.f32 0.0, %v2629
      %v2631 = vpop.f32.mrb[0].mxu0
      %2632 = vmatprep.mubr.bf16.mxu0 0
      %2633 = vmatmul.mubr.bf16.gmra.mrb[0].mxu0 %v2480
      %v2634 = vpop.f32.mrb[0].mxu0
      %v2635 = vadd.f32 0.0, %v2634
      %v2636 = vpop.f32.mrb[0].mxu0
      %v2637 = vpop.f32.mrb[0].mxu0
      %v2638 = vadd.f32 0.0, %v2637
      %v2639 = vpop.f32.mrb[0].mxu0
      %2640 = vmatprep.mubr.bf16.mxu0 0
      %2641 = vmatmul.mubr.bf16.gmra.mrb[0].mxu0 %v2483
      %v2642 = vpop.f32.mrb[0].mxu0
      %v2643 = vadd.f32 0.0, %v2642
      %v2644 = vpop.f32.mrb[0].mxu0
      %v2645 = vpop.f32.mrb[0].mxu0
      %v2646 = vadd.f32 0.0, %v2645
      %v2647 = vpop.f32.mrb[0].mxu0
      %2648 = vdwg.mxu0
      %v2649 = vadd.f32 %v2403, %v2523
      %v2650 = vadd.f32 %v2404, %v2526
      %v2651 = vadd.f32 %v2405, %v2531
      %v2652 = vadd.f32 %v2406, %v2534
      %v2653 = vadd.f32 %v2407, %v2539
      %v2654 = vadd.f32 %v2408, %v2542
      %v2655 = vadd.f32 %v2409, %v2547
      %v2656 = vadd.f32 %v2410, %v2550
      %v2657 = vadd.f32 %v2411, %v2555
      %v2658 = vadd.f32 %v2412, %v2558
      %v2659 = vadd.f32 %v2413, %v2563
      %v2660 = vadd.f32 %v2414, %v2566
      %v2661 = vadd.f32 %v2415, %v2571
      %v2662 = vadd.f32 %v2416, %v2574
      %v2663 = vadd.f32 %v2417, %v2579
      %v2664 = vadd.f32 %v2418, %v2582
      %v2665 = vadd.f32 %v2419, %v2587
      %v2666 = vadd.f32 %v2420, %v2590
      %v2667 = vadd.f32 %v2421, %v2595
      %v2668 = vadd.f32 %v2422, %v2598
      %v2669 = vadd.f32 %v2423, %v2603
      %v2670 = vadd.f32 %v2424, %v2606
      %v2671 = vadd.f32 %v2425, %v2611
      %v2672 = vadd.f32 %v2426, %v2614
      %v2673 = vadd.f32 %v2427, %v2619
      %v2674 = vadd.f32 %v2428, %v2622
      %v2675 = vadd.f32 %v2429, %v2627
      %v2676 = vadd.f32 %v2430, %v2630
      %v2677 = vadd.f32 %v2431, %v2635
      %v2678 = vadd.f32 %v2432, %v2638
      %v2679 = vadd.f32 %v2433, %v2643
      %v2680 = vadd.f32 %v2434, %v2646
      %2681 = vst.msk [vmem:[#allocation3] sm:$0xff] %vm444, %v2649
      %2682 = vst.msk [vmem:[#allocation3 + $0x8] sm:$0xff] %vm444, %v2650
      %2683 = vst.msk [vmem:[#allocation3 + $0x10] sm:$0xff] %vm444, %v2651
      %2684 = vst.msk [vmem:[#allocation3 + $0x18] sm:$0xff] %vm444, %v2652
      %2685 = vst.msk [vmem:[#allocation3 + $0x20] sm:$0xff] %vm444, %v2653
      %2686 = vst.msk [vmem:[#allocation3 + $0x28] sm:$0xff] %vm444, %v2654
      %2687 = vst.msk [vmem:[#allocation3 + $0x30] sm:$0xff] %vm444, %v2655
      %2688 = vst.msk [vmem:[#allocation3 + $0x38] sm:$0xff] %vm444, %v2656
      %2689 = vst.msk [vmem:[#allocation3 + $0x40] sm:$0xff] %vm444, %v2657
      %2690 = vst.msk [vmem:[#allocation3 + $0x48] sm:$0xff] %vm444, %v2658
      %2691 = vst.msk [vmem:[#allocation3 + $0x50] sm:$0xff] %vm444, %v2659
      %2692 = vst.msk [vmem:[#allocation3 + $0x58] sm:$0xff] %vm444, %v2660
      %2693 = vst.msk [vmem:[#allocation3 + $0x60] sm:$0xff] %vm444, %v2661
      %2694 = vst.msk [vmem:[#allocation3 + $0x68] sm:$0xff] %vm444, %v2662
      %2695 = vst.msk [vmem:[#allocation3 + $0x70] sm:$0xff] %vm444, %v2663
      %2696 = vst.msk [vmem:[#allocation3 + $0x78] sm:$0xff] %vm444, %v2664
      %2697 = vst.msk [vmem:[#allocation3 + $0x80] sm:$0xff] %vm444, %v2665
      %2698 = vst.msk [vmem:[#allocation3 + $0x88] sm:$0xff] %vm444, %v2666
      %2699 = vst.msk [vmem:[#allocation3 + $0x90] sm:$0xff] %vm444, %v2667
      %2700 = vst.msk [vmem:[#allocation3 + $0x98] sm:$0xff] %vm444, %v2668
      %2701 = vst.msk [vmem:[#allocation3 + $0xa0] sm:$0xff] %vm444, %v2669
      %2702 = vst.msk [vmem:[#allocation3 + $0xa8] sm:$0xff] %vm444, %v2670
      %2703 = vst.msk [vmem:[#allocation3 + $0xb0] sm:$0xff] %vm444, %v2671
      %2704 = vst.msk [vmem:[#allocation3 + $0xb8] sm:$0xff] %vm444, %v2672
      %2705 = vst.msk [vmem:[#allocation3 + $0xc0] sm:$0xff] %vm444, %v2673
      %2706 = vst.msk [vmem:[#allocation3 + $0xc8] sm:$0xff] %vm444, %v2674
      %2707 = vst.msk [vmem:[#allocation3 + $0xd0] sm:$0xff] %vm444, %v2675
      %2708 = vst.msk [vmem:[#allocation3 + $0xd8] sm:$0xff] %vm444, %v2676
      %2709 = vst.msk [vmem:[#allocation3 + $0xe0] sm:$0xff] %vm444, %v2677
      %2710 = vst.msk [vmem:[#allocation3 + $0xe8] sm:$0xff] %vm444, %v2678
      %2711 = vst.msk [vmem:[#allocation3 + $0xf0] sm:$0xff] %vm444, %v2679
      %2712 = vst.msk [vmem:[#allocation3 + $0xf8] sm:$0xff] %vm444, %v2680
      %s2713 = scalar_lea.vmem [#allocation2], 48
      %v2714 = vld [vmem:[%s2713] sm:$0xff]
      %v2715 = vld [vmem:[%s2713 + $0x8] sm:$0xff]
      %v2716 = vld [vmem:[%s2713 + $0x18] sm:$0xff]
      %v2717 = vld [vmem:[%s2713 + $0x20] sm:$0xff]
      %v2718 = vld [vmem:[%s2713 + $0x30] sm:$0xff]
      %v2719 = vld [vmem:[%s2713 + $0x38] sm:$0xff]
      %v2720 = vld [vmem:[%s2713 + $0x48] sm:$0xff]
      %v2721 = vld [vmem:[%s2713 + $0x50] sm:$0xff]
      %v2722 = vld [vmem:[%s2713 + $0x60] sm:$0xff]
      %v2723 = vld [vmem:[%s2713 + $0x68] sm:$0xff]
      %v2724 = vld [vmem:[%s2713 + $0x78] sm:$0xff]
      %v2725 = vld [vmem:[%s2713 + $0x80] sm:$0xff]
      %v2726 = vld [vmem:[%s2713 + $0x90] sm:$0xff]
      %v2727 = vld [vmem:[%s2713 + $0x98] sm:$0xff]
      %v2728 = vld [vmem:[%s2713 + $0xa8] sm:$0xff]
      %v2729 = vld [vmem:[%s2713 + $0xb0] sm:$0xff]
      %v2730 = vld [vmem:[%s2713 + $0xc0] sm:$0xff]
      %v2731 = vld [vmem:[%s2713 + $0xc8] sm:$0xff]
      %v2732 = vld [vmem:[%s2713 + $0xd8] sm:$0xff]
      %v2733 = vld [vmem:[%s2713 + $0xe0] sm:$0xff]
      %v2734 = vld [vmem:[%s2713 + $0xf0] sm:$0xff]
      %v2735 = vld [vmem:[%s2713 + $0xf8] sm:$0xff]
      %v2736 = vld [vmem:[%s2713 + $0x108] sm:$0xff]
      %v2737 = vld [vmem:[%s2713 + $0x110] sm:$0xff]
      %v2738 = vld [vmem:[%s2713 + $0x120] sm:$0xff]
      %v2739 = vld [vmem:[%s2713 + $0x128] sm:$0xff]
      %v2740 = vld [vmem:[%s2713 + $0x138] sm:$0xff]
      %v2741 = vld [vmem:[%s2713 + $0x140] sm:$0xff]
      %v2742 = vld [vmem:[%s2713 + $0x150] sm:$0xff]
      %v2743 = vld [vmem:[%s2713 + $0x158] sm:$0xff]
      %v2744 = vld [vmem:[%s2713 + $0x168] sm:$0xff]
      %v2745 = vld [vmem:[%s2713 + $0x170] sm:$0xff]
      %v2746 = vpack.c.bf16 %v2715, %v2714
      %v2747 = vpack.c.bf16 %v2717, %v2716
      %v2748 = vpack.c.bf16 %v2719, %v2718
      %v2749 = vpack.c.bf16 %v2721, %v2720
      %v2750 = vpack.c.bf16 %v2723, %v2722
      %v2751 = vpack.c.bf16 %v2725, %v2724
      %v2752 = vpack.c.bf16 %v2727, %v2726
      %v2753 = vpack.c.bf16 %v2729, %v2728
      %v2754 = vpack.c.bf16 %v2731, %v2730
      %v2755 = vpack.c.bf16 %v2733, %v2732
      %v2756 = vpack.c.bf16 %v2735, %v2734
      %v2757 = vpack.c.bf16 %v2737, %v2736
      %v2758 = vpack.c.bf16 %v2739, %v2738
      %v2759 = vpack.c.bf16 %v2741, %v2740
      %v2760 = vpack.c.bf16 %v2743, %v2742
      %v2761 = vpack.c.bf16 %v2745, %v2744
      %v2762 = vld [vmem:[#allocation3] sm:$0xff]
      %v2763 = vld [vmem:[#allocation3 + $0x8] sm:$0xff]
      %v2764 = vld [vmem:[#allocation3 + $0x10] sm:$0xff]
      %v2765 = vld [vmem:[#allocation3 + $0x18] sm:$0xff]
      %v2766 = vld [vmem:[#allocation3 + $0x20] sm:$0xff]
      %v2767 = vld [vmem:[#allocation3 + $0x28] sm:$0xff]
      %v2768 = vld [vmem:[#allocation3 + $0x30] sm:$0xff]
      %v2769 = vld [vmem:[#allocation3 + $0x38] sm:$0xff]
      %v2770 = vld [vmem:[#allocation3 + $0x40] sm:$0xff]
      %v2771 = vld [vmem:[#allocation3 + $0x48] sm:$0xff]
      %v2772 = vld [vmem:[#allocation3 + $0x50] sm:$0xff]
      %v2773 = vld [vmem:[#allocation3 + $0x58] sm:$0xff]
      %v2774 = vld [vmem:[#allocation3 + $0x60] sm:$0xff]
      %v2775 = vld [vmem:[#allocation3 + $0x68] sm:$0xff]
      %v2776 = vld [vmem:[#allocation3 + $0x70] sm:$0xff]
      %v2777 = vld [vmem:[#allocation3 + $0x78] sm:$0xff]
      %v2778 = vld [vmem:[#allocation3 + $0x80] sm:$0xff]
      %v2779 = vld [vmem:[#allocation3 + $0x88] sm:$0xff]
      %v2780 = vld [vmem:[#allocation3 + $0x90] sm:$0xff]
      %v2781 = vld [vmem:[#allocation3 + $0x98] sm:$0xff]
      %v2782 = vld [vmem:[#allocation3 + $0xa0] sm:$0xff]
      %v2783 = vld [vmem:[#allocation3 + $0xa8] sm:$0xff]
      %v2784 = vld [vmem:[#allocation3 + $0xb0] sm:$0xff]
      %v2785 = vld [vmem:[#allocation3 + $0xb8] sm:$0xff]
      %v2786 = vld [vmem:[#allocation3 + $0xc0] sm:$0xff]
      %v2787 = vld [vmem:[#allocation3 + $0xc8] sm:$0xff]
      %v2788 = vld [vmem:[#allocation3 + $0xd0] sm:$0xff]
      %v2789 = vld [vmem:[#allocation3 + $0xd8] sm:$0xff]
      %v2790 = vld [vmem:[#allocation3 + $0xe0] sm:$0xff]
      %v2791 = vld [vmem:[#allocation3 + $0xe8] sm:$0xff]
      %v2792 = vld [vmem:[#allocation3 + $0xf0] sm:$0xff]
      %v2793 = vld [vmem:[#allocation3 + $0xf8] sm:$0xff]
      %s2794 = scalar_lea.vmem %s3, 24
      %v2795 = vld [vmem:[%s2794] sm:$0xf]
      %v2797 = vsel %vm444, %v2746, 0
      %v2800 = vsel %vm444, %v2747, 0
      %v2803 = vsel %vm444, %v2748, 0
      %v2806 = vsel %vm444, %v2749, 0
      %v2809 = vsel %vm444, %v2750, 0
      %v2812 = vsel %vm444, %v2751, 0
      %v2815 = vsel %vm444, %v2752, 0
      %v2818 = vsel %vm444, %v2753, 0
      %v2821 = vsel %vm444, %v2754, 0
      %v2824 = vsel %vm444, %v2755, 0
      %v2827 = vsel %vm444, %v2756, 0
      %v2830 = vsel %vm444, %v2757, 0
      %v2833 = vsel %vm444, %v2758, 0
      %v2836 = vsel %vm444, %v2759, 0
      %v2839 = vsel %vm444, %v2760, 0
      %v2842 = vsel %vm444, %v2761, 0
      %v2845 = vsel %vm694, %v2795, 0
      %2847 = vmatprep.subr.bf16.mxu0 0
      %2848 = vmatpush1.bf16.msra.mxu0 %v2845
      %2849 = vmatprep.subr.bf16.mxu0 0
      %2850 = vmatpush1.bf16.msra.mxu0 0
      %2851 = vmatprep.subr.bf16.mxu0 0
      %2852 = vmatpush1.bf16.msra.mxu0 0
      %2853 = vmatprep.subr.bf16.mxu0 0
      %2854 = vmatpush1.bf16.msra.mxu0 0
      %2855 = vmatprep.subr.bf16.mxu0 0
      %2856 = vmatpush1.bf16.msra.mxu0 0
      %2857 = vmatprep.subr.bf16.mxu0 0
      %2858 = vmatpush1.bf16.msra.mxu0 0
      %2859 = vmatprep.subr.bf16.mxu0 0
      %2860 = vmatpush1.bf16.msra.mxu0 0
      %2861 = vmatprep.subr.bf16.mxu0 0
      %2862 = vmatpush1.bf16.msra.mxu0 0
      %2863 = vmatprep.subr.bf16.mxu0 0
      %2864 = vmatpush1.bf16.msra.mxu0 0
      %2865 = vmatprep.subr.bf16.mxu0 0
      %2866 = vmatpush1.bf16.msra.mxu0 0
      %2867 = vmatprep.subr.bf16.mxu0 0
      %2868 = vmatpush1.bf16.msra.mxu0 0
      %2869 = vmatprep.subr.bf16.mxu0 0
      %2870 = vmatpush1.bf16.msra.mxu0 0
      %2871 = vmatprep.subr.bf16.mxu0 0
      %2872 = vmatpush1.bf16.msra.mxu0 0
      %2873 = vmatprep.subr.bf16.mxu0 0
      %2874 = vmatpush1.bf16.msra.mxu0 0
      %2875 = vmatprep.subr.bf16.mxu0 0
      %2876 = vmatpush1.bf16.msra.mxu0 0
      %2877 = vmatprep.subr.bf16.mxu0 0
      %2878 = vmatpush1.bf16.msra.mxu0 0
      %2879 = vmatprep.mubr.bf16.mxu0 0
      %2880 = vmatmul.mubr.bf16.gmra.mrb[0].mxu0 %v2797
      %v2881 = vpop.f32.mrb[0].mxu0
      %v2882 = vadd.f32 0.0, %v2881
      %v2883 = vpop.f32.mrb[0].mxu0
      %v2884 = vpop.f32.mrb[0].mxu0
      %v2885 = vadd.f32 0.0, %v2884
      %v2886 = vpop.f32.mrb[0].mxu0
      %2887 = vmatprep.mubr.bf16.mxu0 0
      %2888 = vmatmul.mubr.bf16.gmra.mrb[0].mxu0 %v2800
      %v2889 = vpop.f32.mrb[0].mxu0
      %v2890 = vadd.f32 0.0, %v2889
      %v2891 = vpop.f32.mrb[0].mxu0
      %v2892 = vpop.f32.mrb[0].mxu0
      %v2893 = vadd.f32 0.0, %v2892
      %v2894 = vpop.f32.mrb[0].mxu0
      %2895 = vmatprep.mubr.bf16.mxu0 0
      %2896 = vmatmul.mubr.bf16.gmra.mrb[0].mxu0 %v2803
      %v2897 = vpop.f32.mrb[0].mxu0
      %v2898 = vadd.f32 0.0, %v2897
      %v2899 = vpop.f32.mrb[0].mxu0
      %v2900 = vpop.f32.mrb[0].mxu0
      %v2901 = vadd.f32 0.0, %v2900
      %v2902 = vpop.f32.mrb[0].mxu0
      %2903 = vmatprep.mubr.bf16.mxu0 0
      %2904 = vmatmul.mubr.bf16.gmra.mrb[0].mxu0 %v2806
      %v2905 = vpop.f32.mrb[0].mxu0
      %v2906 = vadd.f32 0.0, %v2905
      %v2907 = vpop.f32.mrb[0].mxu0
      %v2908 = vpop.f32.mrb[0].mxu0
      %v2909 = vadd.f32 0.0, %v2908
      %v2910 = vpop.f32.mrb[0].mxu0
      %2911 = vmatprep.mubr.bf16.mxu0 0
      %2912 = vmatmul.mubr.bf16.gmra.mrb[0].mxu0 %v2809
      %v2913 = vpop.f32.mrb[0].mxu0
      %v2914 = vadd.f32 0.0, %v2913
      %v2915 = vpop.f32.mrb[0].mxu0
      %v2916 = vpop.f32.mrb[0].mxu0
      %v2917 = vadd.f32 0.0, %v2916
      %v2918 = vpop.f32.mrb[0].mxu0
      %2919 = vmatprep.mubr.bf16.mxu0 0
      %2920 = vmatmul.mubr.bf16.gmra.mrb[0].mxu0 %v2812
      %v2921 = vpop.f32.mrb[0].mxu0
      %v2922 = vadd.f32 0.0, %v2921
      %v2923 = vpop.f32.mrb[0].mxu0
      %v2924 = vpop.f32.mrb[0].mxu0
      %v2925 = vadd.f32 0.0, %v2924
      %v2926 = vpop.f32.mrb[0].mxu0
      %2927 = vmatprep.mubr.bf16.mxu0 0
      %2928 = vmatmul.mubr.bf16.gmra.mrb[0].mxu0 %v2815
      %v2929 = vpop.f32.mrb[0].mxu0
      %v2930 = vadd.f32 0.0, %v2929
      %v2931 = vpop.f32.mrb[0].mxu0
      %v2932 = vpop.f32.mrb[0].mxu0
      %v2933 = vadd.f32 0.0, %v2932
      %v2934 = vpop.f32.mrb[0].mxu0
      %2935 = vmatprep.mubr.bf16.mxu0 0
      %2936 = vmatmul.mubr.bf16.gmra.mrb[0].mxu0 %v2818
      %v2937 = vpop.f32.mrb[0].mxu0
      %v2938 = vadd.f32 0.0, %v2937
      %v2939 = vpop.f32.mrb[0].mxu0
      %v2940 = vpop.f32.mrb[0].mxu0
      %v2941 = vadd.f32 0.0, %v2940
      %v2942 = vpop.f32.mrb[0].mxu0
      %2943 = vmatprep.mubr.bf16.mxu0 0
      %2944 = vmatmul.mubr.bf16.gmra.mrb[0].mxu0 %v2821
      %v2945 = vpop.f32.mrb[0].mxu0
      %v2946 = vadd.f32 0.0, %v2945
      %v2947 = vpop.f32.mrb[0].mxu0
      %v2948 = vpop.f32.mrb[0].mxu0
      %v2949 = vadd.f32 0.0, %v2948
      %v2950 = vpop.f32.mrb[0].mxu0
      %2951 = vmatprep.mubr.bf16.mxu0 0
      %2952 = vmatmul.mubr.bf16.gmra.mrb[0].mxu0 %v2824
      %v2953 = vpop.f32.mrb[0].mxu0
      %v2954 = vadd.f32 0.0, %v2953
      %v2955 = vpop.f32.mrb[0].mxu0
      %v2956 = vpop.f32.mrb[0].mxu0
      %v2957 = vadd.f32 0.0, %v2956
      %v2958 = vpop.f32.mrb[0].mxu0
      %2959 = vmatprep.mubr.bf16.mxu0 0
      %2960 = vmatmul.mubr.bf16.gmra.mrb[0].mxu0 %v2827
      %v2961 = vpop.f32.mrb[0].mxu0
      %v2962 = vadd.f32 0.0, %v2961
      %v2963 = vpop.f32.mrb[0].mxu0
      %v2964 = vpop.f32.mrb[0].mxu0
      %v2965 = vadd.f32 0.0, %v2964
      %v2966 = vpop.f32.mrb[0].mxu0
      %2967 = vmatprep.mubr.bf16.mxu0 0
      %2968 = vmatmul.mubr.bf16.gmra.mrb[0].mxu0 %v2830
      %v2969 = vpop.f32.mrb[0].mxu0
      %v2970 = vadd.f32 0.0, %v2969
      %v2971 = vpop.f32.mrb[0].mxu0
      %v2972 = vpop.f32.mrb[0].mxu0
      %v2973 = vadd.f32 0.0, %v2972
      %v2974 = vpop.f32.mrb[0].mxu0
      %2975 = vmatprep.mubr.bf16.mxu0 0
      %2976 = vmatmul.mubr.bf16.gmra.mrb[0].mxu0 %v2833
      %v2977 = vpop.f32.mrb[0].mxu0
      %v2978 = vadd.f32 0.0, %v2977
      %v2979 = vpop.f32.mrb[0].mxu0
      %v2980 = vpop.f32.mrb[0].mxu0
      %v2981 = vadd.f32 0.0, %v2980
      %v2982 = vpop.f32.mrb[0].mxu0
      %2983 = vmatprep.mubr.bf16.mxu0 0
      %2984 = vmatmul.mubr.bf16.gmra.mrb[0].mxu0 %v2836
      %v2985 = vpop.f32.mrb[0].mxu0
      %v2986 = vadd.f32 0.0, %v2985
      %v2987 = vpop.f32.mrb[0].mxu0
      %v2988 = vpop.f32.mrb[0].mxu0
      %v2989 = vadd.f32 0.0, %v2988
      %v2990 = vpop.f32.mrb[0].mxu0
      %2991 = vmatprep.mubr.bf16.mxu0 0
      %2992 = vmatmul.mubr.bf16.gmra.mrb[0].mxu0 %v2839
      %v2993 = vpop.f32.mrb[0].mxu0
      %v2994 = vadd.f32 0.0, %v2993
      %v2995 = vpop.f32.mrb[0].mxu0
      %v2996 = vpop.f32.mrb[0].mxu0
      %v2997 = vadd.f32 0.0, %v2996
      %v2998 = vpop.f32.mrb[0].mxu0
      %2999 = vmatprep.mubr.bf16.mxu0 0
      %3000 = vmatmul.mubr.bf16.gmra.mrb[0].mxu0 %v2842
      %v3001 = vpop.f32.mrb[0].mxu0
      %v3002 = vadd.f32 0.0, %v3001
      %v3003 = vpop.f32.mrb[0].mxu0
      %v3004 = vpop.f32.mrb[0].mxu0
      %v3005 = vadd.f32 0.0, %v3004
      %v3006 = vpop.f32.mrb[0].mxu0
      %3007 = vdwg.mxu0
      %v3008 = vadd.f32 %v2762, %v2882
      %v3009 = vadd.f32 %v2763, %v2885
      %v3010 = vadd.f32 %v2764, %v2890
      %v3011 = vadd.f32 %v2765, %v2893
      %v3012 = vadd.f32 %v2766, %v2898
      %v3013 = vadd.f32 %v2767, %v2901
      %v3014 = vadd.f32 %v2768, %v2906
      %v3015 = vadd.f32 %v2769, %v2909
      %v3016 = vadd.f32 %v2770, %v2914
      %v3017 = vadd.f32 %v2771, %v2917
      %v3018 = vadd.f32 %v2772, %v2922
      %v3019 = vadd.f32 %v2773, %v2925
      %v3020 = vadd.f32 %v2774, %v2930
      %v3021 = vadd.f32 %v2775, %v2933
      %v3022 = vadd.f32 %v2776, %v2938
      %v3023 = vadd.f32 %v2777, %v2941
      %v3024 = vadd.f32 %v2778, %v2946
      %v3025 = vadd.f32 %v2779, %v2949
      %v3026 = vadd.f32 %v2780, %v2954
      %v3027 = vadd.f32 %v2781, %v2957
      %v3028 = vadd.f32 %v2782, %v2962
      %v3029 = vadd.f32 %v2783, %v2965
      %v3030 = vadd.f32 %v2784, %v2970
      %v3031 = vadd.f32 %v2785, %v2973
      %v3032 = vadd.f32 %v2786, %v2978
      %v3033 = vadd.f32 %v2787, %v2981
      %v3034 = vadd.f32 %v2788, %v2986
      %v3035 = vadd.f32 %v2789, %v2989
      %v3036 = vadd.f32 %v2790, %v2994
      %v3037 = vadd.f32 %v2791, %v2997
      %v3038 = vadd.f32 %v2792, %v3002
      %v3039 = vadd.f32 %v2793, %v3005
      %3040 = vst.msk [vmem:[#allocation3] sm:$0xff] %vm444, %v3008
      %3041 = vst.msk [vmem:[#allocation3 + $0x8] sm:$0xff] %vm444, %v3009
      %3042 = vst.msk [vmem:[#allocation3 + $0x10] sm:$0xff] %vm444, %v3010
      %3043 = vst.msk [vmem:[#allocation3 + $0x18] sm:$0xff] %vm444, %v3011
      %3044 = vst.msk [vmem:[#allocation3 + $0x20] sm:$0xff] %vm444, %v3012
      %3045 = vst.msk [vmem:[#allocation3 + $0x28] sm:$0xff] %vm444, %v3013
      %3046 = vst.msk [vmem:[#allocation3 + $0x30] sm:$0xff] %vm444, %v3014
      %3047 = vst.msk [vmem:[#allocation3 + $0x38] sm:$0xff] %vm444, %v3015
      %3048 = vst.msk [vmem:[#allocation3 + $0x40] sm:$0xff] %vm444, %v3016
      %3049 = vst.msk [vmem:[#allocation3 + $0x48] sm:$0xff] %vm444, %v3017
      %3050 = vst.msk [vmem:[#allocation3 + $0x50] sm:$0xff] %vm444, %v3018
      %3051 = vst.msk [vmem:[#allocation3 + $0x58] sm:$0xff] %vm444, %v3019
      %3052 = vst.msk [vmem:[#allocation3 + $0x60] sm:$0xff] %vm444, %v3020
      %3053 = vst.msk [vmem:[#allocation3 + $0x68] sm:$0xff] %vm444, %v3021
      %3054 = vst.msk [vmem:[#allocation3 + $0x70] sm:$0xff] %vm444, %v3022
      %3055 = vst.msk [vmem:[#allocation3 + $0x78] sm:$0xff] %vm444, %v3023
      %3056 = vst.msk [vmem:[#allocation3 + $0x80] sm:$0xff] %vm444, %v3024
      %3057 = vst.msk [vmem:[#allocation3 + $0x88] sm:$0xff] %vm444, %v3025
      %3058 = vst.msk [vmem:[#allocation3 + $0x90] sm:$0xff] %vm444, %v3026
      %3059 = vst.msk [vmem:[#allocation3 + $0x98] sm:$0xff] %vm444, %v3027
      %3060 = vst.msk [vmem:[#allocation3 + $0xa0] sm:$0xff] %vm444, %v3028
      %3061 = vst.msk [vmem:[#allocation3 + $0xa8] sm:$0xff] %vm444, %v3029
      %3062 = vst.msk [vmem:[#allocation3 + $0xb0] sm:$0xff] %vm444, %v3030
      %3063 = vst.msk [vmem:[#allocation3 + $0xb8] sm:$0xff] %vm444, %v3031
      %3064 = vst.msk [vmem:[#allocation3 + $0xc0] sm:$0xff] %vm444, %v3032
      %3065 = vst.msk [vmem:[#allocation3 + $0xc8] sm:$0xff] %vm444, %v3033
      %3066 = vst.msk [vmem:[#allocation3 + $0xd0] sm:$0xff] %vm444, %v3034
      %3067 = vst.msk [vmem:[#allocation3 + $0xd8] sm:$0xff] %vm444, %v3035
      %3068 = vst.msk [vmem:[#allocation3 + $0xe0] sm:$0xff] %vm444, %v3036
      %3069 = vst.msk [vmem:[#allocation3 + $0xe8] sm:$0xff] %vm444, %v3037
      %3070 = vst.msk [vmem:[#allocation3 + $0xf0] sm:$0xff] %vm444, %v3038
      %3071 = vst.msk [vmem:[#allocation3 + $0xf8] sm:$0xff] %vm444, %v3039
      %v3072 = vld [vmem:[%s2713 + $0x1] sm:$0xff]
      %v3073 = vld [vmem:[%s2713 + $0x9] sm:$0xff]
      %v3074 = vld [vmem:[%s2713 + $0x19] sm:$0xff]
      %v3075 = vld [vmem:[%s2713 + $0x21] sm:$0xff]
      %v3076 = vld [vmem:[%s2713 + $0x31] sm:$0xff]
      %v3077 = vld [vmem:[%s2713 + $0x39] sm:$0xff]
      %v3078 = vld [vmem:[%s2713 + $0x49] sm:$0xff]
      %v3079 = vld [vmem:[%s2713 + $0x51] sm:$0xff]
      %v3080 = vld [vmem:[%s2713 + $0x61] sm:$0xff]
      %v3081 = vld [vmem:[%s2713 + $0x69] sm:$0xff]
      %v3082 = vld [vmem:[%s2713 + $0x79] sm:$0xff]
      %v3083 = vld [vmem:[%s2713 + $0x81] sm:$0xff]
      %v3084 = vld [vmem:[%s2713 + $0x91] sm:$0xff]
      %v3085 = vld [vmem:[%s2713 + $0x99] sm:$0xff]
      %v3086 = vld [vmem:[%s2713 + $0xa9] sm:$0xff]
      %v3087 = vld [vmem:[%s2713 + $0xb1] sm:$0xff]
      %v3088 = vld [vmem:[%s2713 + $0xc1] sm:$0xff]
      %v3089 = vld [vmem:[%s2713 + $0xc9] sm:$0xff]
      %v3090 = vld [vmem:[%s2713 + $0xd9] sm:$0xff]
      %v3091 = vld [vmem:[%s2713 + $0xe1] sm:$0xff]
      %v3092 = vld [vmem:[%s2713 + $0xf1] sm:$0xff]
      %v3093 = vld [vmem:[%s2713 + $0xf9] sm:$0xff]
      %v3094 = vld [vmem:[%s2713 + $0x109] sm:$0xff]
      %v3095 = vld [vmem:[%s2713 + $0x111] sm:$0xff]
      %v3096 = vld [vmem:[%s2713 + $0x121] sm:$0xff]
      %v3097 = vld [vmem:[%s2713 + $0x129] sm:$0xff]
      %v3098 = vld [vmem:[%s2713 + $0x139] sm:$0xff]
      %v3099 = vld [vmem:[%s2713 + $0x141] sm:$0xff]
      %v3100 = vld [vmem:[%s2713 + $0x151] sm:$0xff]
      %v3101 = vld [vmem:[%s2713 + $0x159] sm:$0xff]
      %v3102 = vld [vmem:[%s2713 + $0x169] sm:$0xff]
      %v3103 = vld [vmem:[%s2713 + $0x171] sm:$0xff]
      %v3104 = vpack.c.bf16 %v3073, %v3072
      %v3105 = vpack.c.bf16 %v3075, %v3074
      %v3106 = vpack.c.bf16 %v3077, %v3076
      %v3107 = vpack.c.bf16 %v3079, %v3078
      %v3108 = vpack.c.bf16 %v3081, %v3080
      %v3109 = vpack.c.bf16 %v3083, %v3082
      %v3110 = vpack.c.bf16 %v3085, %v3084
      %v3111 = vpack.c.bf16 %v3087, %v3086
      %v3112 = vpack.c.bf16 %v3089, %v3088
      %v3113 = vpack.c.bf16 %v3091, %v3090
      %v3114 = vpack.c.bf16 %v3093, %v3092
      %v3115 = vpack.c.bf16 %v3095, %v3094
      %v3116 = vpack.c.bf16 %v3097, %v3096
      %v3117 = vpack.c.bf16 %v3099, %v3098
      %v3118 = vpack.c.bf16 %v3101, %v3100
      %v3119 = vpack.c.bf16 %v3103, %v3102
      %v3120 = vld [vmem:[#allocation3] sm:$0xff]
      %v3121 = vld [vmem:[#allocation3 + $0x8] sm:$0xff]
      %v3122 = vld [vmem:[#allocation3 + $0x10] sm:$0xff]
      %v3123 = vld [vmem:[#allocation3 + $0x18] sm:$0xff]
      %v3124 = vld [vmem:[#allocation3 + $0x20] sm:$0xff]
      %v3125 = vld [vmem:[#allocation3 + $0x28] sm:$0xff]
      %v3126 = vld [vmem:[#allocation3 + $0x30] sm:$0xff]
      %v3127 = vld [vmem:[#allocation3 + $0x38] sm:$0xff]
      %v3128 = vld [vmem:[#allocation3 + $0x40] sm:$0xff]
      %v3129 = vld [vmem:[#allocation3 + $0x48] sm:$0xff]
      %v3130 = vld [vmem:[#allocation3 + $0x50] sm:$0xff]
      %v3131 = vld [vmem:[#allocation3 + $0x58] sm:$0xff]
      %v3132 = vld [vmem:[#allocation3 + $0x60] sm:$0xff]
      %v3133 = vld [vmem:[#allocation3 + $0x68] sm:$0xff]
      %v3134 = vld [vmem:[#allocation3 + $0x70] sm:$0xff]
      %v3135 = vld [vmem:[#allocation3 + $0x78] sm:$0xff]
      %v3136 = vld [vmem:[#allocation3 + $0x80] sm:$0xff]
      %v3137 = vld [vmem:[#allocation3 + $0x88] sm:$0xff]
      %v3138 = vld [vmem:[#allocation3 + $0x90] sm:$0xff]
      %v3139 = vld [vmem:[#allocation3 + $0x98] sm:$0xff]
      %v3140 = vld [vmem:[#allocation3 + $0xa0] sm:$0xff]
      %v3141 = vld [vmem:[#allocation3 + $0xa8] sm:$0xff]
      %v3142 = vld [vmem:[#allocation3 + $0xb0] sm:$0xff]
      %v3143 = vld [vmem:[#allocation3 + $0xb8] sm:$0xff]
      %v3144 = vld [vmem:[#allocation3 + $0xc0] sm:$0xff]
      %v3145 = vld [vmem:[#allocation3 + $0xc8] sm:$0xff]
      %v3146 = vld [vmem:[#allocation3 + $0xd0] sm:$0xff]
      %v3147 = vld [vmem:[#allocation3 + $0xd8] sm:$0xff]
      %v3148 = vld [vmem:[#allocation3 + $0xe0] sm:$0xff]
      %v3149 = vld [vmem:[#allocation3 + $0xe8] sm:$0xff]
      %v3150 = vld [vmem:[#allocation3 + $0xf0] sm:$0xff]
      %v3151 = vld [vmem:[#allocation3 + $0xf8] sm:$0xff]
      %s3152 = scalar_lea.vmem %s3, 28
      %v3153 = vld [vmem:[%s3152] sm:$0xf]
      %v3155 = vsel %vm444, %v3104, 0
      %v3158 = vsel %vm444, %v3105, 0
      %v3161 = vsel %vm444, %v3106, 0
      %v3164 = vsel %vm444, %v3107, 0
      %v3167 = vsel %vm444, %v3108, 0
      %v3170 = vsel %vm444, %v3109, 0
      %v3173 = vsel %vm444, %v3110, 0
      %v3176 = vsel %vm444, %v3111, 0
      %v3179 = vsel %vm444, %v3112, 0
      %v3182 = vsel %vm444, %v3113, 0
      %v3185 = vsel %vm444, %v3114, 0
      %v3188 = vsel %vm444, %v3115, 0
      %v3191 = vsel %vm444, %v3116, 0
      %v3194 = vsel %vm444, %v3117, 0
      %v3197 = vsel %vm444, %v3118, 0
      %v3200 = vsel %vm444, %v3119, 0
      %v3203 = vsel %vm694, %v3153, 0
      %3205 = vmatprep.subr.bf16.mxu0 0
      %3206 = vmatpush1.bf16.msra.mxu0 %v3203
      %3207 = vmatprep.subr.bf16.mxu0 0
      %3208 = vmatpush1.bf16.msra.mxu0 0
      %3209 = vmatprep.subr.bf16.mxu0 0
      %3210 = vmatpush1.bf16.msra.mxu0 0
      %3211 = vmatprep.subr.bf16.mxu0 0
      %3212 = vmatpush1.bf16.msra.mxu0 0
      %3213 = vmatprep.subr.bf16.mxu0 0
      %3214 = vmatpush1.bf16.msra.mxu0 0
      %3215 = vmatprep.subr.bf16.mxu0 0
      %3216 = vmatpush1.bf16.msra.mxu0 0
      %3217 = vmatprep.subr.bf16.mxu0 0
      %3218 = vmatpush1.bf16.msra.mxu0 0
      %3219 = vmatprep.subr.bf16.mxu0 0
      %3220 = vmatpush1.bf16.msra.mxu0 0
      %3221 = vmatprep.subr.bf16.mxu0 0
      %3222 = vmatpush1.bf16.msra.mxu0 0
      %3223 = vmatprep.subr.bf16.mxu0 0
      %3224 = vmatpush1.bf16.msra.mxu0 0
      %3225 = vmatprep.subr.bf16.mxu0 0
      %3226 = vmatpush1.bf16.msra.mxu0 0
      %3227 = vmatprep.subr.bf16.mxu0 0
      %3228 = vmatpush1.bf16.msra.mxu0 0
      %3229 = vmatprep.subr.bf16.mxu0 0
      %3230 = vmatpush1.bf16.msra.mxu0 0
      %3231 = vmatprep.subr.bf16.mxu0 0
      %3232 = vmatpush1.bf16.msra.mxu0 0
      %3233 = vmatprep.subr.bf16.mxu0 0
      %3234 = vmatpush1.bf16.msra.mxu0 0
      %3235 = vmatprep.subr.bf16.mxu0 0
      %3236 = vmatpush1.bf16.msra.mxu0 0
      %3237 = vmatprep.mubr.bf16.mxu0 0
      %3238 = vmatmul.mubr.bf16.gmra.mrb[0].mxu0 %v3155
      %v3239 = vpop.f32.mrb[0].mxu0
      %v3240 = vadd.f32 0.0, %v3239
      %v3241 = vpop.f32.mrb[0].mxu0
      %v3242 = vpop.f32.mrb[0].mxu0
      %v3243 = vadd.f32 0.0, %v3242
      %v3244 = vpop.f32.mrb[0].mxu0
      %3245 = vmatprep.mubr.bf16.mxu0 0
      %3246 = vmatmul.mubr.bf16.gmra.mrb[0].mxu0 %v3158
      %v3247 = vpop.f32.mrb[0].mxu0
      %v3248 = vadd.f32 0.0, %v3247
      %v3249 = vpop.f32.mrb[0].mxu0
      %v3250 = vpop.f32.mrb[0].mxu0
      %v3251 = vadd.f32 0.0, %v3250
      %v3252 = vpop.f32.mrb[0].mxu0
      %3253 = vmatprep.mubr.bf16.mxu0 0
      %3254 = vmatmul.mubr.bf16.gmra.mrb[0].mxu0 %v3161
      %v3255 = vpop.f32.mrb[0].mxu0
      %v3256 = vadd.f32 0.0, %v3255
      %v3257 = vpop.f32.mrb[0].mxu0
      %v3258 = vpop.f32.mrb[0].mxu0
      %v3259 = vadd.f32 0.0, %v3258
      %v3260 = vpop.f32.mrb[0].mxu0
      %3261 = vmatprep.mubr.bf16.mxu0 0
      %3262 = vmatmul.mubr.bf16.gmra.mrb[0].mxu0 %v3164
      %v3263 = vpop.f32.mrb[0].mxu0
      %v3264 = vadd.f32 0.0, %v3263
      %v3265 = vpop.f32.mrb[0].mxu0
      %v3266 = vpop.f32.mrb[0].mxu0
      %v3267 = vadd.f32 0.0, %v3266
      %v3268 = vpop.f32.mrb[0].mxu0
      %3269 = vmatprep.mubr.bf16.mxu0 0
      %3270 = vmatmul.mubr.bf16.gmra.mrb[0].mxu0 %v3167
      %v3271 = vpop.f32.mrb[0].mxu0
      %v3272 = vadd.f32 0.0, %v3271
      %v3273 = vpop.f32.mrb[0].mxu0
      %v3274 = vpop.f32.mrb[0].mxu0
      %v3275 = vadd.f32 0.0, %v3274
      %v3276 = vpop.f32.mrb[0].mxu0
      %3277 = vmatprep.mubr.bf16.mxu0 0
      %3278 = vmatmul.mubr.bf16.gmra.mrb[0].mxu0 %v3170
      %v3279 = vpop.f32.mrb[0].mxu0
      %v3280 = vadd.f32 0.0, %v3279
      %v3281 = vpop.f32.mrb[0].mxu0
      %v3282 = vpop.f32.mrb[0].mxu0
      %v3283 = vadd.f32 0.0, %v3282
      %v3284 = vpop.f32.mrb[0].mxu0
      %3285 = vmatprep.mubr.bf16.mxu0 0
      %3286 = vmatmul.mubr.bf16.gmra.mrb[0].mxu0 %v3173
      %v3287 = vpop.f32.mrb[0].mxu0
      %v3288 = vadd.f32 0.0, %v3287
      %v3289 = vpop.f32.mrb[0].mxu0
      %v3290 = vpop.f32.mrb[0].mxu0
      %v3291 = vadd.f32 0.0, %v3290
      %v3292 = vpop.f32.mrb[0].mxu0
      %3293 = vmatprep.mubr.bf16.mxu0 0
      %3294 = vmatmul.mubr.bf16.gmra.mrb[0].mxu0 %v3176
      %v3295 = vpop.f32.mrb[0].mxu0
      %v3296 = vadd.f32 0.0, %v3295
      %v3297 = vpop.f32.mrb[0].mxu0
      %v3298 = vpop.f32.mrb[0].mxu0
      %v3299 = vadd.f32 0.0, %v3298
      %v3300 = vpop.f32.mrb[0].mxu0
      %3301 = vmatprep.mubr.bf16.mxu0 0
      %3302 = vmatmul.mubr.bf16.gmra.mrb[0].mxu0 %v3179
      %v3303 = vpop.f32.mrb[0].mxu0
      %v3304 = vadd.f32 0.0, %v3303
      %v3305 = vpop.f32.mrb[0].mxu0
      %v3306 = vpop.f32.mrb[0].mxu0
      %v3307 = vadd.f32 0.0, %v3306
      %v3308 = vpop.f32.mrb[0].mxu0
      %3309 = vmatprep.mubr.bf16.mxu0 0
      %3310 = vmatmul.mubr.bf16.gmra.mrb[0].mxu0 %v3182
      %v3311 = vpop.f32.mrb[0].mxu0
      %v3312 = vadd.f32 0.0, %v3311
      %v3313 = vpop.f32.mrb[0].mxu0
      %v3314 = vpop.f32.mrb[0].mxu0
      %v3315 = vadd.f32 0.0, %v3314
      %v3316 = vpop.f32.mrb[0].mxu0
      %3317 = vmatprep.mubr.bf16.mxu0 0
      %3318 = vmatmul.mubr.bf16.gmra.mrb[0].mxu0 %v3185
      %v3319 = vpop.f32.mrb[0].mxu0
      %v3320 = vadd.f32 0.0, %v3319
      %v3321 = vpop.f32.mrb[0].mxu0
      %v3322 = vpop.f32.mrb[0].mxu0
      %v3323 = vadd.f32 0.0, %v3322
      %v3324 = vpop.f32.mrb[0].mxu0
      %3325 = vmatprep.mubr.bf16.mxu0 0
      %3326 = vmatmul.mubr.bf16.gmra.mrb[0].mxu0 %v3188
      %v3327 = vpop.f32.mrb[0].mxu0
      %v3328 = vadd.f32 0.0, %v3327
      %v3329 = vpop.f32.mrb[0].mxu0
      %v3330 = vpop.f32.mrb[0].mxu0
      %v3331 = vadd.f32 0.0, %v3330
      %v3332 = vpop.f32.mrb[0].mxu0
      %3333 = vmatprep.mubr.bf16.mxu0 0
      %3334 = vmatmul.mubr.bf16.gmra.mrb[0].mxu0 %v3191
      %v3335 = vpop.f32.mrb[0].mxu0
      %v3336 = vadd.f32 0.0, %v3335
      %v3337 = vpop.f32.mrb[0].mxu0
      %v3338 = vpop.f32.mrb[0].mxu0
      %v3339 = vadd.f32 0.0, %v3338
      %v3340 = vpop.f32.mrb[0].mxu0
      %3341 = vmatprep.mubr.bf16.mxu0 0
      %3342 = vmatmul.mubr.bf16.gmra.mrb[0].mxu0 %v3194
      %v3343 = vpop.f32.mrb[0].mxu0
      %v3344 = vadd.f32 0.0, %v3343
      %v3345 = vpop.f32.mrb[0].mxu0
      %v3346 = vpop.f32.mrb[0].mxu0
      %v3347 = vadd.f32 0.0, %v3346
      %v3348 = vpop.f32.mrb[0].mxu0
      %3349 = vmatprep.mubr.bf16.mxu0 0
      %3350 = vmatmul.mubr.bf16.gmra.mrb[0].mxu0 %v3197
      %v3351 = vpop.f32.mrb[0].mxu0
      %v3352 = vadd.f32 0.0, %v3351
      %v3353 = vpop.f32.mrb[0].mxu0
      %v3354 = vpop.f32.mrb[0].mxu0
      %v3355 = vadd.f32 0.0, %v3354
      %v3356 = vpop.f32.mrb[0].mxu0
      %3357 = vmatprep.mubr.bf16.mxu0 0
      %3358 = vmatmul.mubr.bf16.gmra.mrb[0].mxu0 %v3200
      %v3359 = vpop.f32.mrb[0].mxu0
      %v3360 = vadd.f32 0.0, %v3359
      %v3361 = vpop.f32.mrb[0].mxu0
      %v3362 = vpop.f32.mrb[0].mxu0
      %v3363 = vadd.f32 0.0, %v3362
      %v3364 = vpop.f32.mrb[0].mxu0
      %3365 = vdwg.mxu0
      %v3366 = vadd.f32 %v3120, %v3240
      %v3367 = vadd.f32 %v3121, %v3243
      %v3368 = vadd.f32 %v3122, %v3248
      %v3369 = vadd.f32 %v3123, %v3251
      %v3370 = vadd.f32 %v3124, %v3256
      %v3371 = vadd.f32 %v3125, %v3259
      %v3372 = vadd.f32 %v3126, %v3264
      %v3373 = vadd.f32 %v3127, %v3267
      %v3374 = vadd.f32 %v3128, %v3272
      %v3375 = vadd.f32 %v3129, %v3275
      %v3376 = vadd.f32 %v3130, %v3280
      %v3377 = vadd.f32 %v3131, %v3283
      %v3378 = vadd.f32 %v3132, %v3288
      %v3379 = vadd.f32 %v3133, %v3291
      %v3380 = vadd.f32 %v3134, %v3296
      %v3381 = vadd.f32 %v3135, %v3299
      %v3382 = vadd.f32 %v3136, %v3304
      %v3383 = vadd.f32 %v3137, %v3307
      %v3384 = vadd.f32 %v3138, %v3312
      %v3385 = vadd.f32 %v3139, %v3315
      %v3386 = vadd.f32 %v3140, %v3320
      %v3387 = vadd.f32 %v3141, %v3323
      %v3388 = vadd.f32 %v3142, %v3328
      %v3389 = vadd.f32 %v3143, %v3331
      %v3390 = vadd.f32 %v3144, %v3336
      %v3391 = vadd.f32 %v3145, %v3339
      %v3392 = vadd.f32 %v3146, %v3344
      %v3393 = vadd.f32 %v3147, %v3347
      %v3394 = vadd.f32 %v3148, %v3352
      %v3395 = vadd.f32 %v3149, %v3355
      %v3396 = vadd.f32 %v3150, %v3360
      %v3397 = vadd.f32 %v3151, %v3363
      %3398 = vst.msk [vmem:[#allocation3] sm:$0xff] %vm444, %v3366
      %3399 = vst.msk [vmem:[#allocation3 + $0x8] sm:$0xff] %vm444, %v3367
      %3400 = vst.msk [vmem:[#allocation3 + $0x10] sm:$0xff] %vm444, %v3368
      %3401 = vst.msk [vmem:[#allocation3 + $0x18] sm:$0xff] %vm444, %v3369
      %3402 = vst.msk [vmem:[#allocation3 + $0x20] sm:$0xff] %vm444, %v3370
      %3403 = vst.msk [vmem:[#allocation3 + $0x28] sm:$0xff] %vm444, %v3371
      %3404 = vst.msk [vmem:[#allocation3 + $0x30] sm:$0xff] %vm444, %v3372
      %3405 = vst.msk [vmem:[#allocation3 + $0x38] sm:$0xff] %vm444, %v3373
      %3406 = vst.msk [vmem:[#allocation3 + $0x40] sm:$0xff] %vm444, %v3374
      %3407 = vst.msk [vmem:[#allocation3 + $0x48] sm:$0xff] %vm444, %v3375
      %3408 = vst.msk [vmem:[#allocation3 + $0x50] sm:$0xff] %vm444, %v3376
      %3409 = vst.msk [vmem:[#allocation3 + $0x58] sm:$0xff] %vm444, %v3377
      %3410 = vst.msk [vmem:[#allocation3 + $0x60] sm:$0xff] %vm444, %v3378
      %3411 = vst.msk [vmem:[#allocation3 + $0x68] sm:$0xff] %vm444, %v3379
      %3412 = vst.msk [vmem:[#allocation3 + $0x70] sm:$0xff] %vm444, %v3380
      %3413 = vst.msk [vmem:[#allocation3 + $0x78] sm:$0xff] %vm444, %v3381
      %3414 = vst.msk [vmem:[#allocation3 + $0x80] sm:$0xff] %vm444, %v3382
      %3415 = vst.msk [vmem:[#allocation3 + $0x88] sm:$0xff] %vm444, %v3383
      %3416 = vst.msk [vmem:[#allocation3 + $0x90] sm:$0xff] %vm444, %v3384
      %3417 = vst.msk [vmem:[#allocation3 + $0x98] sm:$0xff] %vm444, %v3385
      %3418 = vst.msk [vmem:[#allocation3 + $0xa0] sm:$0xff] %vm444, %v3386
      %3419 = vst.msk [vmem:[#allocation3 + $0xa8] sm:$0xff] %vm444, %v3387
      %3420 = vst.msk [vmem:[#allocation3 + $0xb0] sm:$0xff] %vm444, %v3388
      %3421 = vst.msk [vmem:[#allocation3 + $0xb8] sm:$0xff] %vm444, %v3389
      %3422 = vst.msk [vmem:[#allocation3 + $0xc0] sm:$0xff] %vm444, %v3390
      %3423 = vst.msk [vmem:[#allocation3 + $0xc8] sm:$0xff] %vm444, %v3391
      %3424 = vst.msk [vmem:[#allocation3 + $0xd0] sm:$0xff] %vm444, %v3392
      %3425 = vst.msk [vmem:[#allocation3 + $0xd8] sm:$0xff] %vm444, %v3393
      %3426 = vst.msk [vmem:[#allocation3 + $0xe0] sm:$0xff] %vm444, %v3394
      %3427 = vst.msk [vmem:[#allocation3 + $0xe8] sm:$0xff] %vm444, %v3395
      %3428 = vst.msk [vmem:[#allocation3 + $0xf0] sm:$0xff] %vm444, %v3396
      %3429 = vst.msk [vmem:[#allocation3 + $0xf8] sm:$0xff] %vm444, %v3397
      %v3430 = vld [vmem:[%s2713 + $0x2] sm:$0xff]
      %v3431 = vld [vmem:[%s2713 + $0xa] sm:$0xff]
      %v3432 = vld [vmem:[%s2713 + $0x1a] sm:$0xff]
      %v3433 = vld [vmem:[%s2713 + $0x22] sm:$0xff]
      %v3434 = vld [vmem:[%s2713 + $0x32] sm:$0xff]
      %v3435 = vld [vmem:[%s2713 + $0x3a] sm:$0xff]
      %v3436 = vld [vmem:[%s2713 + $0x4a] sm:$0xff]
      %v3437 = vld [vmem:[%s2713 + $0x52] sm:$0xff]
      %v3438 = vld [vmem:[%s2713 + $0x62] sm:$0xff]
      %v3439 = vld [vmem:[%s2713 + $0x6a] sm:$0xff]
      %v3440 = vld [vmem:[%s2713 + $0x7a] sm:$0xff]
      %v3441 = vld [vmem:[%s2713 + $0x82] sm:$0xff]
      %v3442 = vld [vmem:[%s2713 + $0x92] sm:$0xff]
      %v3443 = vld [vmem:[%s2713 + $0x9a] sm:$0xff]
      %v3444 = vld [vmem:[%s2713 + $0xaa] sm:$0xff]
      %v3445 = vld [vmem:[%s2713 + $0xb2] sm:$0xff]
      %v3446 = vld [vmem:[%s2713 + $0xc2] sm:$0xff]
      %v3447 = vld [vmem:[%s2713 + $0xca] sm:$0xff]
      %v3448 = vld [vmem:[%s2713 + $0xda] sm:$0xff]
      %v3449 = vld [vmem:[%s2713 + $0xe2] sm:$0xff]
      %v3450 = vld [vmem:[%s2713 + $0xf2] sm:$0xff]
      %v3451 = vld [vmem:[%s2713 + $0xfa] sm:$0xff]
      %v3452 = vld [vmem:[%s2713 + $0x10a] sm:$0xff]
      %v3453 = vld [vmem:[%s2713 + $0x112] sm:$0xff]
      %v3454 = vld [vmem:[%s2713 + $0x122] sm:$0xff]
      %v3455 = vld [vmem:[%s2713 + $0x12a] sm:$0xff]
      %v3456 = vld [vmem:[%s2713 + $0x13a] sm:$0xff]
      %v3457 = vld [vmem:[%s2713 + $0x142] sm:$0xff]
      %v3458 = vld [vmem:[%s2713 + $0x152] sm:$0xff]
      %v3459 = vld [vmem:[%s2713 + $0x15a] sm:$0xff]
      %v3460 = vld [vmem:[%s2713 + $0x16a] sm:$0xff]
      %v3461 = vld [vmem:[%s2713 + $0x172] sm:$0xff]
      %v3462 = vpack.c.bf16 %v3431, %v3430
      %v3463 = vpack.c.bf16 %v3433, %v3432
      %v3464 = vpack.c.bf16 %v3435, %v3434
      %v3465 = vpack.c.bf16 %v3437, %v3436
      %v3466 = vpack.c.bf16 %v3439, %v3438
      %v3467 = vpack.c.bf16 %v3441, %v3440
      %v3468 = vpack.c.bf16 %v3443, %v3442
      %v3469 = vpack.c.bf16 %v3445, %v3444
      %v3470 = vpack.c.bf16 %v3447, %v3446
      %v3471 = vpack.c.bf16 %v3449, %v3448
      %v3472 = vpack.c.bf16 %v3451, %v3450
      %v3473 = vpack.c.bf16 %v3453, %v3452
      %v3474 = vpack.c.bf16 %v3455, %v3454
      %v3475 = vpack.c.bf16 %v3457, %v3456
      %v3476 = vpack.c.bf16 %v3459, %v3458
      %v3477 = vpack.c.bf16 %v3461, %v3460
      %v3478 = vld [vmem:[#allocation3] sm:$0xff]
      %v3479 = vld [vmem:[#allocation3 + $0x8] sm:$0xff]
      %v3480 = vld [vmem:[#allocation3 + $0x10] sm:$0xff]
      %v3481 = vld [vmem:[#allocation3 + $0x18] sm:$0xff]
      %v3482 = vld [vmem:[#allocation3 + $0x20] sm:$0xff]
      %v3483 = vld [vmem:[#allocation3 + $0x28] sm:$0xff]
      %v3484 = vld [vmem:[#allocation3 + $0x30] sm:$0xff]
      %v3485 = vld [vmem:[#allocation3 + $0x38] sm:$0xff]
      %v3486 = vld [vmem:[#allocation3 + $0x40] sm:$0xff]
      %v3487 = vld [vmem:[#allocation3 + $0x48] sm:$0xff]
      %v3488 = vld [vmem:[#allocation3 + $0x50] sm:$0xff]
      %v3489 = vld [vmem:[#allocation3 + $0x58] sm:$0xff]
      %v3490 = vld [vmem:[#allocation3 + $0x60] sm:$0xff]
      %v3491 = vld [vmem:[#allocation3 + $0x68] sm:$0xff]
      %v3492 = vld [vmem:[#allocation3 + $0x70] sm:$0xff]
      %v3493 = vld [vmem:[#allocation3 + $0x78] sm:$0xff]
      %v3494 = vld [vmem:[#allocation3 + $0x80] sm:$0xff]
      %v3495 = vld [vmem:[#allocation3 + $0x88] sm:$0xff]
      %v3496 = vld [vmem:[#allocation3 + $0x90] sm:$0xff]
      %v3497 = vld [vmem:[#allocation3 + $0x98] sm:$0xff]
      %v3498 = vld [vmem:[#allocation3 + $0xa0] sm:$0xff]
      %v3499 = vld [vmem:[#allocation3 + $0xa8] sm:$0xff]
      %v3500 = vld [vmem:[#allocation3 + $0xb0] sm:$0xff]
      %v3501 = vld [vmem:[#allocation3 + $0xb8] sm:$0xff]
      %v3502 = vld [vmem:[#allocation3 + $0xc0] sm:$0xff]
      %v3503 = vld [vmem:[#allocation3 + $0xc8] sm:$0xff]
      %v3504 = vld [vmem:[#allocation3 + $0xd0] sm:$0xff]
      %v3505 = vld [vmem:[#allocation3 + $0xd8] sm:$0xff]
      %v3506 = vld [vmem:[#allocation3 + $0xe0] sm:$0xff]
      %v3507 = vld [vmem:[#allocation3 + $0xe8] sm:$0xff]
      %v3508 = vld [vmem:[#allocation3 + $0xf0] sm:$0xff]
      %v3509 = vld [vmem:[#allocation3 + $0xf8] sm:$0xff]
      %s3510 = scalar_lea.vmem %s3, 32
      %v3511 = vld [vmem:[%s3510] sm:$0xf]
      %v3513 = vsel %vm444, %v3462, 0
      %v3516 = vsel %vm444, %v3463, 0
      %v3519 = vsel %vm444, %v3464, 0
      %v3522 = vsel %vm444, %v3465, 0
      %v3525 = vsel %vm444, %v3466, 0
      %v3528 = vsel %vm444, %v3467, 0
      %v3531 = vsel %vm444, %v3468, 0
      %v3534 = vsel %vm444, %v3469, 0
      %v3537 = vsel %vm444, %v3470, 0
      %v3540 = vsel %vm444, %v3471, 0
      %v3543 = vsel %vm444, %v3472, 0
      %v3546 = vsel %vm444, %v3473, 0
      %v3549 = vsel %vm444, %v3474, 0
      %v3552 = vsel %vm444, %v3475, 0
      %v3555 = vsel %vm444, %v3476, 0
      %v3558 = vsel %vm444, %v3477, 0
      %v3561 = vsel %vm694, %v3511, 0
      %3563 = vmatprep.subr.bf16.mxu0 0
      %3564 = vmatpush1.bf16.msra.mxu0 %v3561
      %3565 = vmatprep.subr.bf16.mxu0 0
      %3566 = vmatpush1.bf16.msra.mxu0 0
      %3567 = vmatprep.subr.bf16.mxu0 0
      %3568 = vmatpush1.bf16.msra.mxu0 0
      %3569 = vmatprep.subr.bf16.mxu0 0
      %3570 = vmatpush1.bf16.msra.mxu0 0
      %3571 = vmatprep.subr.bf16.mxu0 0
      %3572 = vmatpush1.bf16.msra.mxu0 0
      %3573 = vmatprep.subr.bf16.mxu0 0
      %3574 = vmatpush1.bf16.msra.mxu0 0
      %3575 = vmatprep.subr.bf16.mxu0 0
      %3576 = vmatpush1.bf16.msra.mxu0 0
      %3577 = vmatprep.subr.bf16.mxu0 0
      %3578 = vmatpush1.bf16.msra.mxu0 0
      %3579 = vmatprep.subr.bf16.mxu0 0
      %3580 = vmatpush1.bf16.msra.mxu0 0
      %3581 = vmatprep.subr.bf16.mxu0 0
      %3582 = vmatpush1.bf16.msra.mxu0 0
      %3583 = vmatprep.subr.bf16.mxu0 0
      %3584 = vmatpush1.bf16.msra.mxu0 0
      %3585 = vmatprep.subr.bf16.mxu0 0
      %3586 = vmatpush1.bf16.msra.mxu0 0
      %3587 = vmatprep.subr.bf16.mxu0 0
      %3588 = vmatpush1.bf16.msra.mxu0 0
      %3589 = vmatprep.subr.bf16.mxu0 0
      %3590 = vmatpush1.bf16.msra.mxu0 0
      %3591 = vmatprep.subr.bf16.mxu0 0
      %3592 = vmatpush1.bf16.msra.mxu0 0
      %3593 = vmatprep.subr.bf16.mxu0 0
      %3594 = vmatpush1.bf16.msra.mxu0 0
      %3595 = vmatprep.mubr.bf16.mxu0 0
      %3596 = vmatmul.mubr.bf16.gmra.mrb[0].mxu0 %v3513
      %v3597 = vpop.f32.mrb[0].mxu0
      %v3598 = vadd.f32 0.0, %v3597
      %v3599 = vpop.f32.mrb[0].mxu0
      %v3600 = vpop.f32.mrb[0].mxu0
      %v3601 = vadd.f32 0.0, %v3600
      %v3602 = vpop.f32.mrb[0].mxu0
      %3603 = vmatprep.mubr.bf16.mxu0 0
      %3604 = vmatmul.mubr.bf16.gmra.mrb[0].mxu0 %v3516
      %v3605 = vpop.f32.mrb[0].mxu0
      %v3606 = vadd.f32 0.0, %v3605
      %v3607 = vpop.f32.mrb[0].mxu0
      %v3608 = vpop.f32.mrb[0].mxu0
      %v3609 = vadd.f32 0.0, %v3608
      %v3610 = vpop.f32.mrb[0].mxu0
      %3611 = vmatprep.mubr.bf16.mxu0 0
      %3612 = vmatmul.mubr.bf16.gmra.mrb[0].mxu0 %v3519
      %v3613 = vpop.f32.mrb[0].mxu0
      %v3614 = vadd.f32 0.0, %v3613
      %v3615 = vpop.f32.mrb[0].mxu0
      %v3616 = vpop.f32.mrb[0].mxu0
      %v3617 = vadd.f32 0.0, %v3616
      %v3618 = vpop.f32.mrb[0].mxu0
      %3619 = vmatprep.mubr.bf16.mxu0 0
      %3620 = vmatmul.mubr.bf16.gmra.mrb[0].mxu0 %v3522
      %v3621 = vpop.f32.mrb[0].mxu0
      %v3622 = vadd.f32 0.0, %v3621
      %v3623 = vpop.f32.mrb[0].mxu0
      %v3624 = vpop.f32.mrb[0].mxu0
      %v3625 = vadd.f32 0.0, %v3624
      %v3626 = vpop.f32.mrb[0].mxu0
      %3627 = vmatprep.mubr.bf16.mxu0 0
      %3628 = vmatmul.mubr.bf16.gmra.mrb[0].mxu0 %v3525
      %v3629 = vpop.f32.mrb[0].mxu0
      %v3630 = vadd.f32 0.0, %v3629
      %v3631 = vpop.f32.mrb[0].mxu0
      %v3632 = vpop.f32.mrb[0].mxu0
      %v3633 = vadd.f32 0.0, %v3632
      %v3634 = vpop.f32.mrb[0].mxu0
      %3635 = vmatprep.mubr.bf16.mxu0 0
      %3636 = vmatmul.mubr.bf16.gmra.mrb[0].mxu0 %v3528
      %v3637 = vpop.f32.mrb[0].mxu0
      %v3638 = vadd.f32 0.0, %v3637
      %v3639 = vpop.f32.mrb[0].mxu0
      %v3640 = vpop.f32.mrb[0].mxu0
      %v3641 = vadd.f32 0.0, %v3640
      %v3642 = vpop.f32.mrb[0].mxu0
      %3643 = vmatprep.mubr.bf16.mxu0 0
      %3644 = vmatmul.mubr.bf16.gmra.mrb[0].mxu0 %v3531
      %v3645 = vpop.f32.mrb[0].mxu0
      %v3646 = vadd.f32 0.0, %v3645
      %v3647 = vpop.f32.mrb[0].mxu0
      %v3648 = vpop.f32.mrb[0].mxu0
      %v3649 = vadd.f32 0.0, %v3648
      %v3650 = vpop.f32.mrb[0].mxu0
      %3651 = vmatprep.mubr.bf16.mxu0 0
      %3652 = vmatmul.mubr.bf16.gmra.mrb[0].mxu0 %v3534
      %v3653 = vpop.f32.mrb[0].mxu0
      %v3654 = vadd.f32 0.0, %v3653
      %v3655 = vpop.f32.mrb[0].mxu0
      %v3656 = vpop.f32.mrb[0].mxu0
      %v3657 = vadd.f32 0.0, %v3656
      %v3658 = vpop.f32.mrb[0].mxu0
      %3659 = vmatprep.mubr.bf16.mxu0 0
      %3660 = vmatmul.mubr.bf16.gmra.mrb[0].mxu0 %v3537
      %v3661 = vpop.f32.mrb[0].mxu0
      %v3662 = vadd.f32 0.0, %v3661
      %v3663 = vpop.f32.mrb[0].mxu0
      %v3664 = vpop.f32.mrb[0].mxu0
      %v3665 = vadd.f32 0.0, %v3664
      %v3666 = vpop.f32.mrb[0].mxu0
      %3667 = vmatprep.mubr.bf16.mxu0 0
      %3668 = vmatmul.mubr.bf16.gmra.mrb[0].mxu0 %v3540
      %v3669 = vpop.f32.mrb[0].mxu0
      %v3670 = vadd.f32 0.0, %v3669
      %v3671 = vpop.f32.mrb[0].mxu0
      %v3672 = vpop.f32.mrb[0].mxu0
      %v3673 = vadd.f32 0.0, %v3672
      %v3674 = vpop.f32.mrb[0].mxu0
      %3675 = vmatprep.mubr.bf16.mxu0 0
      %3676 = vmatmul.mubr.bf16.gmra.mrb[0].mxu0 %v3543
      %v3677 = vpop.f32.mrb[0].mxu0
      %v3678 = vadd.f32 0.0, %v3677
      %v3679 = vpop.f32.mrb[0].mxu0
      %v3680 = vpop.f32.mrb[0].mxu0
      %v3681 = vadd.f32 0.0, %v3680
      %v3682 = vpop.f32.mrb[0].mxu0
      %3683 = vmatprep.mubr.bf16.mxu0 0
      %3684 = vmatmul.mubr.bf16.gmra.mrb[0].mxu0 %v3546
      %v3685 = vpop.f32.mrb[0].mxu0
      %v3686 = vadd.f32 0.0, %v3685
      %v3687 = vpop.f32.mrb[0].mxu0
      %v3688 = vpop.f32.mrb[0].mxu0
      %v3689 = vadd.f32 0.0, %v3688
      %v3690 = vpop.f32.mrb[0].mxu0
      %3691 = vmatprep.mubr.bf16.mxu0 0
      %3692 = vmatmul.mubr.bf16.gmra.mrb[0].mxu0 %v3549
      %v3693 = vpop.f32.mrb[0].mxu0
      %v3694 = vadd.f32 0.0, %v3693
      %v3695 = vpop.f32.mrb[0].mxu0
      %v3696 = vpop.f32.mrb[0].mxu0
      %v3697 = vadd.f32 0.0, %v3696
      %v3698 = vpop.f32.mrb[0].mxu0
      %3699 = vmatprep.mubr.bf16.mxu0 0
      %3700 = vmatmul.mubr.bf16.gmra.mrb[0].mxu0 %v3552
      %v3701 = vpop.f32.mrb[0].mxu0
      %v3702 = vadd.f32 0.0, %v3701
      %v3703 = vpop.f32.mrb[0].mxu0
      %v3704 = vpop.f32.mrb[0].mxu0
      %v3705 = vadd.f32 0.0, %v3704
      %v3706 = vpop.f32.mrb[0].mxu0
      %3707 = vmatprep.mubr.bf16.mxu0 0
      %3708 = vmatmul.mubr.bf16.gmra.mrb[0].mxu0 %v3555
      %v3709 = vpop.f32.mrb[0].mxu0
      %v3710 = vadd.f32 0.0, %v3709
      %v3711 = vpop.f32.mrb[0].mxu0
      %v3712 = vpop.f32.mrb[0].mxu0
      %v3713 = vadd.f32 0.0, %v3712
      %v3714 = vpop.f32.mrb[0].mxu0
      %3715 = vmatprep.mubr.bf16.mxu0 0
      %3716 = vmatmul.mubr.bf16.gmra.mrb[0].mxu0 %v3558
      %v3717 = vpop.f32.mrb[0].mxu0
      %v3718 = vadd.f32 0.0, %v3717
      %v3719 = vpop.f32.mrb[0].mxu0
      %v3720 = vpop.f32.mrb[0].mxu0
      %v3721 = vadd.f32 0.0, %v3720
      %v3722 = vpop.f32.mrb[0].mxu0
      %3723 = vdwg.mxu0
      %v3724 = vadd.f32 %v3478, %v3598
      %v3725 = vadd.f32 %v3479, %v3601
      %v3726 = vadd.f32 %v3480, %v3606
      %v3727 = vadd.f32 %v3481, %v3609
      %v3728 = vadd.f32 %v3482, %v3614
      %v3729 = vadd.f32 %v3483, %v3617
      %v3730 = vadd.f32 %v3484, %v3622
      %v3731 = vadd.f32 %v3485, %v3625
      %v3732 = vadd.f32 %v3486, %v3630
      %v3733 = vadd.f32 %v3487, %v3633
      %v3734 = vadd.f32 %v3488, %v3638
      %v3735 = vadd.f32 %v3489, %v3641
      %v3736 = vadd.f32 %v3490, %v3646
      %v3737 = vadd.f32 %v3491, %v3649
      %v3738 = vadd.f32 %v3492, %v3654
      %v3739 = vadd.f32 %v3493, %v3657
      %v3740 = vadd.f32 %v3494, %v3662
      %v3741 = vadd.f32 %v3495, %v3665
      %v3742 = vadd.f32 %v3496, %v3670
      %v3743 = vadd.f32 %v3497, %v3673
      %v3744 = vadd.f32 %v3498, %v3678
      %v3745 = vadd.f32 %v3499, %v3681
      %v3746 = vadd.f32 %v3500, %v3686
      %v3747 = vadd.f32 %v3501, %v3689
      %v3748 = vadd.f32 %v3502, %v3694
      %v3749 = vadd.f32 %v3503, %v3697
      %v3750 = vadd.f32 %v3504, %v3702
      %v3751 = vadd.f32 %v3505, %v3705
      %v3752 = vadd.f32 %v3506, %v3710
      %v3753 = vadd.f32 %v3507, %v3713
      %v3754 = vadd.f32 %v3508, %v3718
      %v3755 = vadd.f32 %v3509, %v3721
      %3756 = vst.msk [vmem:[#allocation3] sm:$0xff] %vm444, %v3724
      %3757 = vst.msk [vmem:[#allocation3 + $0x8] sm:$0xff] %vm444, %v3725
      %3758 = vst.msk [vmem:[#allocation3 + $0x10] sm:$0xff] %vm444, %v3726
      %3759 = vst.msk [vmem:[#allocation3 + $0x18] sm:$0xff] %vm444, %v3727
      %3760 = vst.msk [vmem:[#allocation3 + $0x20] sm:$0xff] %vm444, %v3728
      %3761 = vst.msk [vmem:[#allocation3 + $0x28] sm:$0xff] %vm444, %v3729
      %3762 = vst.msk [vmem:[#allocation3 + $0x30] sm:$0xff] %vm444, %v3730
      %3763 = vst.msk [vmem:[#allocation3 + $0x38] sm:$0xff] %vm444, %v3731
      %3764 = vst.msk [vmem:[#allocation3 + $0x40] sm:$0xff] %vm444, %v3732
      %3765 = vst.msk [vmem:[#allocation3 + $0x48] sm:$0xff] %vm444, %v3733
      %3766 = vst.msk [vmem:[#allocation3 + $0x50] sm:$0xff] %vm444, %v3734
      %3767 = vst.msk [vmem:[#allocation3 + $0x58] sm:$0xff] %vm444, %v3735
      %3768 = vst.msk [vmem:[#allocation3 + $0x60] sm:$0xff] %vm444, %v3736
      %3769 = vst.msk [vmem:[#allocation3 + $0x68] sm:$0xff] %vm444, %v3737
      %3770 = vst.msk [vmem:[#allocation3 + $0x70] sm:$0xff] %vm444, %v3738
      %3771 = vst.msk [vmem:[#allocation3 + $0x78] sm:$0xff] %vm444, %v3739
      %3772 = vst.msk [vmem:[#allocation3 + $0x80] sm:$0xff] %vm444, %v3740
      %3773 = vst.msk [vmem:[#allocation3 + $0x88] sm:$0xff] %vm444, %v3741
      %3774 = vst.msk [vmem:[#allocation3 + $0x90] sm:$0xff] %vm444, %v3742
      %3775 = vst.msk [vmem:[#allocation3 + $0x98] sm:$0xff] %vm444, %v3743
      %3776 = vst.msk [vmem:[#allocation3 + $0xa0] sm:$0xff] %vm444, %v3744
      %3777 = vst.msk [vmem:[#allocation3 + $0xa8] sm:$0xff] %vm444, %v3745
      %3778 = vst.msk [vmem:[#allocation3 + $0xb0] sm:$0xff] %vm444, %v3746
      %3779 = vst.msk [vmem:[#allocation3 + $0xb8] sm:$0xff] %vm444, %v3747
      %3780 = vst.msk [vmem:[#allocation3 + $0xc0] sm:$0xff] %vm444, %v3748
      %3781 = vst.msk [vmem:[#allocation3 + $0xc8] sm:$0xff] %vm444, %v3749
      %3782 = vst.msk [vmem:[#allocation3 + $0xd0] sm:$0xff] %vm444, %v3750
      %3783 = vst.msk [vmem:[#allocation3 + $0xd8] sm:$0xff] %vm444, %v3751
      %3784 = vst.msk [vmem:[#allocation3 + $0xe0] sm:$0xff] %vm444, %v3752
      %3785 = vst.msk [vmem:[#allocation3 + $0xe8] sm:$0xff] %vm444, %v3753
      %3786 = vst.msk [vmem:[#allocation3 + $0xf0] sm:$0xff] %vm444, %v3754
      %3787 = vst.msk [vmem:[#allocation3 + $0xf8] sm:$0xff] %vm444, %v3755
      %v3788 = vld [vmem:[#allocation3] sm:$0xff]
      %v3789 = vld [vmem:[#allocation3 + $0x8] sm:$0xff]
      %v3790 = vld [vmem:[#allocation3 + $0x10] sm:$0xff]
      %v3791 = vld [vmem:[#allocation3 + $0x18] sm:$0xff]
      %v3792 = vld [vmem:[#allocation3 + $0x20] sm:$0xff]
      %v3793 = vld [vmem:[#allocation3 + $0x28] sm:$0xff]
      %v3794 = vld [vmem:[#allocation3 + $0x30] sm:$0xff]
      %v3795 = vld [vmem:[#allocation3 + $0x38] sm:$0xff]
      %v3796 = vld [vmem:[#allocation3 + $0x40] sm:$0xff]
      %v3797 = vld [vmem:[#allocation3 + $0x48] sm:$0xff]
      %v3798 = vld [vmem:[#allocation3 + $0x50] sm:$0xff]
      %v3799 = vld [vmem:[#allocation3 + $0x58] sm:$0xff]
      %v3800 = vld [vmem:[#allocation3 + $0x60] sm:$0xff]
      %v3801 = vld [vmem:[#allocation3 + $0x68] sm:$0xff]
      %v3802 = vld [vmem:[#allocation3 + $0x70] sm:$0xff]
      %v3803 = vld [vmem:[#allocation3 + $0x78] sm:$0xff]
      %v3804 = vld [vmem:[#allocation3 + $0x80] sm:$0xff]
      %v3805 = vld [vmem:[#allocation3 + $0x88] sm:$0xff]
      %v3806 = vld [vmem:[#allocation3 + $0x90] sm:$0xff]
      %v3807 = vld [vmem:[#allocation3 + $0x98] sm:$0xff]
      %v3808 = vld [vmem:[#allocation3 + $0xa0] sm:$0xff]
      %v3809 = vld [vmem:[#allocation3 + $0xa8] sm:$0xff]
      %v3810 = vld [vmem:[#allocation3 + $0xb0] sm:$0xff]
      %v3811 = vld [vmem:[#allocation3 + $0xb8] sm:$0xff]
      %v3812 = vld [vmem:[#allocation3 + $0xc0] sm:$0xff]
      %v3813 = vld [vmem:[#allocation3 + $0xc8] sm:$0xff]
      %v3814 = vld [vmem:[#allocation3 + $0xd0] sm:$0xff]
      %v3815 = vld [vmem:[#allocation3 + $0xd8] sm:$0xff]
      %v3816 = vld [vmem:[#allocation3 + $0xe0] sm:$0xff]
      %v3817 = vld [vmem:[#allocation3 + $0xe8] sm:$0xff]
      %v3818 = vld [vmem:[#allocation3 + $0xf0] sm:$0xff]
      %v3819 = vld [vmem:[#allocation3 + $0xf8] sm:$0xff]
      %v3820 = vpack.c.bf16 %v3789, %v3788
      %v3821 = vpack.c.bf16 %v3791, %v3790
      %v3822 = vpack.c.bf16 %v3793, %v3792
      %v3823 = vpack.c.bf16 %v3795, %v3794
      %v3824 = vpack.c.bf16 %v3797, %v3796
      %v3825 = vpack.c.bf16 %v3799, %v3798
      %v3826 = vpack.c.bf16 %v3801, %v3800
      %v3827 = vpack.c.bf16 %v3803, %v3802
      %v3828 = vpack.c.bf16 %v3805, %v3804
      %v3829 = vpack.c.bf16 %v3807, %v3806
      %v3830 = vpack.c.bf16 %v3809, %v3808
      %v3831 = vpack.c.bf16 %v3811, %v3810
      %v3832 = vpack.c.bf16 %v3813, %v3812
      %v3833 = vpack.c.bf16 %v3815, %v3814
      %v3834 = vpack.c.bf16 %v3817, %v3816
      %v3835 = vpack.c.bf16 %v3819, %v3818
      %v3852 = vunpack.c.l.b16 %v3820
      %v3853 = vunpack.c.h.b16 %v3820
      %v3854 = vunpack.c.l.b16 %v3821
      %v3855 = vunpack.c.h.b16 %v3821
      %v3856 = vunpack.c.l.b16 %v3822
      %v3857 = vunpack.c.h.b16 %v3822
      %v3858 = vunpack.c.l.b16 %v3823
      %v3859 = vunpack.c.h.b16 %v3823
      %v3860 = vunpack.c.l.b16 %v3824
      %v3861 = vunpack.c.h.b16 %v3824
      %v3862 = vunpack.c.l.b16 %v3825
      %v3863 = vunpack.c.h.b16 %v3825
      %v3864 = vunpack.c.l.b16 %v3826
      %v3865 = vunpack.c.h.b16 %v3826
      %v3866 = vunpack.c.l.b16 %v3827
      %v3867 = vunpack.c.h.b16 %v3827
      %v3868 = vunpack.c.l.b16 %v3828
      %v3869 = vunpack.c.h.b16 %v3828
      %v3870 = vunpack.c.l.b16 %v3829
      %v3871 = vunpack.c.h.b16 %v3829
      %v3872 = vunpack.c.l.b16 %v3830
      %v3873 = vunpack.c.h.b16 %v3830
      %v3874 = vunpack.c.l.b16 %v3831
      %v3875 = vunpack.c.h.b16 %v3831
      %v3876 = vunpack.c.l.b16 %v3832
      %v3877 = vunpack.c.h.b16 %v3832
      %v3878 = vunpack.c.l.b16 %v3833
      %v3879 = vunpack.c.h.b16 %v3833
      %v3880 = vunpack.c.l.b16 %v3834
      %v3881 = vunpack.c.h.b16 %v3834
      %v3882 = vunpack.c.l.b16 %v3835
      %v3883 = vunpack.c.h.b16 %v3835
      %v3884 = vpack.c.b16 %v3852, %v3852
      %v3885 = vpack.c.b16 %v3853, %v3853
      %v3886 = vpack.c.b16 %v3854, %v3854
      %v3887 = vpack.c.b16 %v3855, %v3855
      %v3888 = vpack.c.b16 %v3856, %v3856
      %v3889 = vpack.c.b16 %v3857, %v3857
      %v3890 = vpack.c.b16 %v3858, %v3858
      %v3891 = vpack.c.b16 %v3859, %v3859
      %v3892 = vpack.c.b16 %v3860, %v3860
      %v3893 = vpack.c.b16 %v3861, %v3861
      %v3894 = vpack.c.b16 %v3862, %v3862
      %v3895 = vpack.c.b16 %v3863, %v3863
      %v3896 = vpack.c.b16 %v3864, %v3864
      %v3897 = vpack.c.b16 %v3865, %v3865
      %v3898 = vpack.c.b16 %v3866, %v3866
      %v3899 = vpack.c.b16 %v3867, %v3867
      %v3900 = vpack.c.b16 %v3868, %v3868
      %v3901 = vpack.c.b16 %v3869, %v3869
      %v3902 = vpack.c.b16 %v3870, %v3870
      %v3903 = vpack.c.b16 %v3871, %v3871
      %v3904 = vpack.c.b16 %v3872, %v3872
      %v3905 = vpack.c.b16 %v3873, %v3873
      %v3906 = vpack.c.b16 %v3874, %v3874
      %v3907 = vpack.c.b16 %v3875, %v3875
      %v3908 = vpack.c.b16 %v3876, %v3876
      %v3909 = vpack.c.b16 %v3877, %v3877
      %v3910 = vpack.c.b16 %v3878, %v3878
      %v3911 = vpack.c.b16 %v3879, %v3879
      %v3912 = vpack.c.b16 %v3880, %v3880
      %v3913 = vpack.c.b16 %v3881, %v3881
      %v3914 = vpack.c.b16 %v3882, %v3882
      %v3915 = vpack.c.b16 %v3883, %v3883
      %vm3948 = vcmask 60416
      %3949 = vst.msk [vmem:[%s262] sm:$0xf] %vm3948, %v3884
      %3950 = vst.msk [vmem:[%s262 + $0x4] sm:$0xf] %vm3948, %v3885
      %3951 = vst.msk [vmem:[%s262 + $0x8] sm:$0xf] %vm3948, %v3886
      %3952 = vst.msk [vmem:[%s262 + $0xc] sm:$0xf] %vm3948, %v3887
      %3953 = vst.msk [vmem:[%s262 + $0x10] sm:$0xf] %vm3948, %v3888
      %3954 = vst.msk [vmem:[%s262 + $0x14] sm:$0xf] %vm3948, %v3889
      %3955 = vst.msk [vmem:[%s262 + $0x18] sm:$0xf] %vm3948, %v3890
      %3956 = vst.msk [vmem:[%s262 + $0x1c] sm:$0xf] %vm3948, %v3891
      %3957 = vst.msk [vmem:[%s262 + $0x20] sm:$0xf] %vm3948, %v3892
      %3958 = vst.msk [vmem:[%s262 + $0x24] sm:$0xf] %vm3948, %v3893
      %3959 = vst.msk [vmem:[%s262 + $0x28] sm:$0xf] %vm3948, %v3894
      %3960 = vst.msk [vmem:[%s262 + $0x2c] sm:$0xf] %vm3948, %v3895
      %3961 = vst.msk [vmem:[%s262 + $0x30] sm:$0xf] %vm3948, %v3896
      %3962 = vst.msk [vmem:[%s262 + $0x34] sm:$0xf] %vm3948, %v3897
      %3963 = vst.msk [vmem:[%s262 + $0x38] sm:$0xf] %vm3948, %v3898
      %3964 = vst.msk [vmem:[%s262 + $0x3c] sm:$0xf] %vm3948, %v3899
      %3965 = vst.msk [vmem:[%s262 + $0x40] sm:$0xf] %vm3948, %v3900
      %3966 = vst.msk [vmem:[%s262 + $0x44] sm:$0xf] %vm3948, %v3901
      %3967 = vst.msk [vmem:[%s262 + $0x48] sm:$0xf] %vm3948, %v3902
      %3968 = vst.msk [vmem:[%s262 + $0x4c] sm:$0xf] %vm3948, %v3903
      %3969 = vst.msk [vmem:[%s262 + $0x50] sm:$0xf] %vm3948, %v3904
      %3970 = vst.msk [vmem:[%s262 + $0x54] sm:$0xf] %vm3948, %v3905
      %3971 = vst.msk [vmem:[%s262 + $0x58] sm:$0xf] %vm3948, %v3906
      %3972 = vst.msk [vmem:[%s262 + $0x5c] sm:$0xf] %vm3948, %v3907
      %3973 = vst.msk [vmem:[%s262 + $0x60] sm:$0xf] %vm3948, %v3908
      %3974 = vst.msk [vmem:[%s262 + $0x64] sm:$0xf] %vm3948, %v3909
      %3975 = vst.msk [vmem:[%s262 + $0x68] sm:$0xf] %vm3948, %v3910
      %3976 = vst.msk [vmem:[%s262 + $0x6c] sm:$0xf] %vm3948, %v3911
      %3977 = vst.msk [vmem:[%s262 + $0x70] sm:$0xf] %vm3948, %v3912
      %3978 = vst.msk [vmem:[%s262 + $0x74] sm:$0xf] %vm3948, %v3913
      %3979 = vst.msk [vmem:[%s262 + $0x78] sm:$0xf] %vm3948, %v3914
      %3980 = vst.msk [vmem:[%s262 + $0x7c] sm:$0xf] %vm3948, %v3915
      %v3981 = vsel %vm444, %v3788, 0.0
      %v3982 = vsel %vm444, %v3789, 0.0
      %v3983 = vadd.f32 %v3981, %v3982
      %v3984 = vsel %vm444, %v3790, 0.0
      %v3985 = vadd.f32 %v3983, %v3984
      %v3986 = vsel %vm444, %v3791, 0.0
      %v3987 = vadd.f32 %v3985, %v3986
      %v3988 = vsel %vm444, %v3792, 0.0
      %v3989 = vadd.f32 %v3987, %v3988
      %v3990 = vsel %vm444, %v3793, 0.0
      %v3991 = vadd.f32 %v3989, %v3990
      %v3992 = vsel %vm444, %v3794, 0.0
      %v3993 = vadd.f32 %v3991, %v3992
      %v3994 = vsel %vm444, %v3795, 0.0
      %v3995 = vadd.f32 %v3993, %v3994
      %v3996 = vsel %vm444, %v3796, 0.0
      %v3997 = vadd.f32 %v3995, %v3996
      %v3998 = vsel %vm444, %v3797, 0.0
      %v3999 = vadd.f32 %v3997, %v3998
      %v4000 = vsel %vm444, %v3798, 0.0
      %v4001 = vadd.f32 %v3999, %v4000
      %v4002 = vsel %vm444, %v3799, 0.0
      %v4003 = vadd.f32 %v4001, %v4002
      %v4004 = vsel %vm444, %v3800, 0.0
      %v4005 = vadd.f32 %v4003, %v4004
      %v4006 = vsel %vm444, %v3801, 0.0
      %v4007 = vadd.f32 %v4005, %v4006
      %v4008 = vsel %vm444, %v3802, 0.0
      %v4009 = vadd.f32 %v4007, %v4008
      %v4010 = vsel %vm444, %v3803, 0.0
      %v4011 = vadd.f32 %v4009, %v4010
      %v4012 = vsel %vm444, %v3804, 0.0
      %v4013 = vadd.f32 %v4011, %v4012
      %v4014 = vsel %vm444, %v3805, 0.0
      %v4015 = vadd.f32 %v4013, %v4014
      %v4016 = vsel %vm444, %v3806, 0.0
      %v4017 = vadd.f32 %v4015, %v4016
      %v4018 = vsel %vm444, %v3807, 0.0
      %v4019 = vadd.f32 %v4017, %v4018
      %v4020 = vsel %vm444, %v3808, 0.0
      %v4021 = vadd.f32 %v4019, %v4020
      %v4022 = vsel %vm444, %v3809, 0.0
      %v4023 = vadd.f32 %v4021, %v4022
      %v4024 = vsel %vm444, %v3810, 0.0
      %v4025 = vadd.f32 %v4023, %v4024
      %v4026 = vsel %vm444, %v3811, 0.0
      %v4027 = vadd.f32 %v4025, %v4026
      %v4028 = vsel %vm444, %v3812, 0.0
      %v4029 = vadd.f32 %v4027, %v4028
      %v4030 = vsel %vm444, %v3813, 0.0
      %v4031 = vadd.f32 %v4029, %v4030
      %v4032 = vsel %vm444, %v3814, 0.0
      %v4033 = vadd.f32 %v4031, %v4032
      %v4034 = vsel %vm444, %v3815, 0.0
      %v4035 = vadd.f32 %v4033, %v4034
      %v4036 = vsel %vm444, %v3816, 0.0
      %v4037 = vadd.f32 %v4035, %v4036
      %v4038 = vsel %vm444, %v3817, 0.0
      %v4039 = vadd.f32 %v4037, %v4038
      %v4040 = vsel %vm444, %v3818, 0.0
      %v4041 = vadd.f32 %v4039, %v4040
      %v4042 = vsel %vm444, %v3819, 0.0
      %v4043 = vadd.f32 %v4041, %v4042
      %v4044 = vrot.slane %v4043, 4
      %v4045 = vadd.f32 %v4043, %v4044
      %v4046 = vrot.slane %v4045, 2
      %v4047 = vadd.f32 %v4045, %v4046
      %v4048 = vrot.slane %v4047, 1
      %v4049 = vadd.f32 %v4047, %v4048
      %vm4050 = vcmask 57344
      %4051 = vst.msk [vmem:[%s265] sm:$0x1] %vm4050, %v4049
      %v4052 = vmul.f32 %v3788, %v3788
      %v4053 = vmul.f32 %v3789, %v3789
      %v4054 = vmul.f32 %v3790, %v3790
      %v4055 = vmul.f32 %v3791, %v3791
      %v4056 = vmul.f32 %v3792, %v3792
      %v4057 = vmul.f32 %v3793, %v3793
      %v4058 = vmul.f32 %v3794, %v3794
      %v4059 = vmul.f32 %v3795, %v3795
      %v4060 = vmul.f32 %v3796, %v3796
      %v4061 = vmul.f32 %v3797, %v3797
      %v4062 = vmul.f32 %v3798, %v3798
      %v4063 = vmul.f32 %v3799, %v3799
      %v4064 = vmul.f32 %v3800, %v3800
      %v4065 = vmul.f32 %v3801, %v3801
      %v4066 = vmul.f32 %v3802, %v3802
      %v4067 = vmul.f32 %v3803, %v3803
      %v4068 = vmul.f32 %v3804, %v3804
      %v4069 = vmul.f32 %v3805, %v3805
      %v4070 = vmul.f32 %v3806, %v3806
      %v4071 = vmul.f32 %v3807, %v3807
      %v4072 = vmul.f32 %v3808, %v3808
      %v4073 = vmul.f32 %v3809, %v3809
      %v4074 = vmul.f32 %v3810, %v3810
      %v4075 = vmul.f32 %v3811, %v3811
      %v4076 = vmul.f32 %v3812, %v3812
      %v4077 = vmul.f32 %v3813, %v3813
      %v4078 = vmul.f32 %v3814, %v3814
      %v4079 = vmul.f32 %v3815, %v3815
      %v4080 = vmul.f32 %v3816, %v3816
      %v4081 = vmul.f32 %v3817, %v3817
      %v4082 = vmul.f32 %v3818, %v3818
      %v4083 = vmul.f32 %v3819, %v3819
      %v4084 = vsel %vm444, %v4052, 0.0
      %v4085 = vsel %vm444, %v4053, 0.0
      %v4086 = vadd.f32 %v4084, %v4085
      %v4087 = vsel %vm444, %v4054, 0.0
      %v4088 = vadd.f32 %v4086, %v4087
      %v4089 = vsel %vm444, %v4055, 0.0
      %v4090 = vadd.f32 %v4088, %v4089
      %v4091 = vsel %vm444, %v4056, 0.0
      %v4092 = vadd.f32 %v4090, %v4091
      %v4093 = vsel %vm444, %v4057, 0.0
      %v4094 = vadd.f32 %v4092, %v4093
      %v4095 = vsel %vm444, %v4058, 0.0
      %v4096 = vadd.f32 %v4094, %v4095
      %v4097 = vsel %vm444, %v4059, 0.0
      %v4098 = vadd.f32 %v4096, %v4097
      %v4099 = vsel %vm444, %v4060, 0.0
      %v4100 = vadd.f32 %v4098, %v4099
      %v4101 = vsel %vm444, %v4061, 0.0
      %v4102 = vadd.f32 %v4100, %v4101
      %v4103 = vsel %vm444, %v4062, 0.0
      %v4104 = vadd.f32 %v4102, %v4103
      %v4105 = vsel %vm444, %v4063, 0.0
      %v4106 = vadd.f32 %v4104, %v4105
      %v4107 = vsel %vm444, %v4064, 0.0
      %v4108 = vadd.f32 %v4106, %v4107
      %v4109 = vsel %vm444, %v4065, 0.0
      %v4110 = vadd.f32 %v4108, %v4109
      %v4111 = vsel %vm444, %v4066, 0.0
      %v4112 = vadd.f32 %v4110, %v4111
      %v4113 = vsel %vm444, %v4067, 0.0
      %v4114 = vadd.f32 %v4112, %v4113
      %v4115 = vsel %vm444, %v4068, 0.0
      %v4116 = vadd.f32 %v4114, %v4115
      %v4117 = vsel %vm444, %v4069, 0.0
      %v4118 = vadd.f32 %v4116, %v4117
      %v4119 = vsel %vm444, %v4070, 0.0
      %v4120 = vadd.f32 %v4118, %v4119
      %v4121 = vsel %vm444, %v4071, 0.0
      %v4122 = vadd.f32 %v4120, %v4121
      %v4123 = vsel %vm444, %v4072, 0.0
      %v4124 = vadd.f32 %v4122, %v4123
      %v4125 = vsel %vm444, %v4073, 0.0
      %v4126 = vadd.f32 %v4124, %v4125
      %v4127 = vsel %vm444, %v4074, 0.0
      %v4128 = vadd.f32 %v4126, %v4127
      %v4129 = vsel %vm444, %v4075, 0.0
      %v4130 = vadd.f32 %v4128, %v4129
      %v4131 = vsel %vm444, %v4076, 0.0
      %v4132 = vadd.f32 %v4130, %v4131
      %v4133 = vsel %vm444, %v4077, 0.0
      %v4134 = vadd.f32 %v4132, %v4133
      %v4135 = vsel %vm444, %v4078, 0.0
      %v4136 = vadd.f32 %v4134, %v4135
      %v4137 = vsel %vm444, %v4079, 0.0
      %v4138 = vadd.f32 %v4136, %v4137
      %v4139 = vsel %vm444, %v4080, 0.0
      %v4140 = vadd.f32 %v4138, %v4139
      %v4141 = vsel %vm444, %v4081, 0.0
      %v4142 = vadd.f32 %v4140, %v4141
      %v4143 = vsel %vm444, %v4082, 0.0
      %v4144 = vadd.f32 %v4142, %v4143
      %v4145 = vsel %vm444, %v4083, 0.0
      %v4146 = vadd.f32 %v4144, %v4145
      %v4147 = vrot.slane %v4146, 4
      %v4148 = vadd.f32 %v4146, %v4147
      %v4149 = vrot.slane %v4148, 2
      %v4150 = vadd.f32 %v4148, %v4149
      %v4151 = vrot.slane %v4150, 1
      %v4152 = vadd.f32 %v4150, %v4151
      %4153 = vst.msk [vmem:[%s268] sm:$0x1] %vm4050, %v4152
      %p4154 = scmp.lt.s32.totalorder %s18, 1
      %s4155 = scalar_select %p4154, %s18, 1
      %s4156 = smul.addr %s4155, 32
      %s4157 = smul.addr %s4156, 4
      %s4158 = scalar_lea.vmem %s4, %s4157
      %p4159 = scmp.lt.s32.totalorder %s18, 1
      %s4160 = scalar_select %p4159, %s18, 1
      %s4161 = scalar_lea.vmem %s5, %s4160
      %p4162 = scmp.lt.s32.totalorder %s18, 1
      %s4163 = scalar_select %p4162, %s18, 1
      %s4164 = scalar_lea.vmem %s6, %s4163
      // Predicated region
      $region37: #{densenet_block_forward.5} parent=35 // pred_check
        %p4165 = pneg %p125
      $region38: #{densenet_block_forward.5} parent=35 // pred_check_branch
        %4167 = sbr.rel (%p4165) target = $region40
      $region39: #{densenet_block_forward.5} parent=35 // pred_region
        _
      $region40: #{densenet_block_forward.5} parent=35 // pred_fallthru
        _
      // Predicated region
      $region41: #{densenet_block_forward.5} parent=35 // pred_check
        %p4168 = pneg %p151
      $region42: #{densenet_block_forward.5} parent=35 // pred_check_branch
        %4170 = sbr.rel (%p4168) target = $region44
      $region43: #{densenet_block_forward.5} parent=35 // pred_region
        _
      $region44: #{densenet_block_forward.5} parent=35 // pred_fallthru
        _
      // Predicated region
      $region45: #{densenet_block_forward.5} parent=35 // pred_check
        %p4171 = pneg %p177
      $region46: #{densenet_block_forward.5} parent=35 // pred_check_branch
        %4173 = sbr.rel (%p4171) target = $region48
      $region47: #{densenet_block_forward.5} parent=35 // pred_region
        _
      $region48: #{densenet_block_forward.5} parent=35 // pred_fallthru
        _
    $region36: #{densenet_block_forward.5} parent=5 // pred_fallthru
      _
    %p4174 = scmp.le.s32.totalorder 2, %s13
    // Predicated region
    $region49: #{densenet_block_forward.5} parent=5 // pred_check
      %p4175 = pneg %p4174
    $region50: #{densenet_block_forward.5} parent=5 // pred_check_branch
      %4177 = sbr.rel (%p4175) target = $region52
    $region51: #{densenet_block_forward.5} parent=5 // pred_region
      %s4178 = ssub.s32 %s13, 2
      // Predicated region
      $region53: #{densenet_block_forward.5} parent=51 // pred_check
        %p4179 = pneg %p131
      $region54: #{densenet_block_forward.5} parent=51 // pred_check_branch
        %4181 = sbr.rel (%p4179) target = $region56
      $region55: #{densenet_block_forward.5} parent=51 // pred_region
        %p4182 = scmp.lt.s32.totalorder %s19, 1
        %s4183 = scalar_select %p4182, %s19, 1
        %s4184 = smul.addr %s4183, 32
        %s4185 = smul.addr %s4184, 4
        %s4186 = scalar_lea.vmem %s4, %s4185
      $region56: #{densenet_block_forward.5} parent=51 // pred_fallthru
        _
      // Predicated region
      $region57: #{densenet_block_forward.5} parent=51 // pred_check
        %p4187 = pneg %p157
      $region58: #{densenet_block_forward.5} parent=51 // pred_check_branch
        %4189 = sbr.rel (%p4187) target = $region60
      $region59: #{densenet_block_forward.5} parent=51 // pred_region
        %p4190 = scmp.lt.s32.totalorder %s19, 1
        %s4191 = scalar_select %p4190, %s19, 1
        %s4192 = scalar_lea.vmem %s5, %s4191
      $region60: #{densenet_block_forward.5} parent=51 // pred_fallthru
        _
      // Predicated region
      $region61: #{densenet_block_forward.5} parent=51 // pred_check
        %p4193 = pneg %p183
      $region62: #{densenet_block_forward.5} parent=51 // pred_check_branch
        %4195 = sbr.rel (%p4193) target = $region64
      $region63: #{densenet_block_forward.5} parent=51 // pred_region
        %p4196 = scmp.lt.s32.totalorder %s19, 1
        %s4197 = scalar_select %p4196, %s19, 1
        %s4198 = scalar_lea.vmem %s6, %s4197
      $region64: #{densenet_block_forward.5} parent=51 // pred_fallthru
        _
    $region52: #{densenet_block_forward.5} parent=5 // pred_fallthru
      _
  $region6: #{densenet_block_forward.5} parent=0 // loop_footer
    %s17 = sadd.s32 1, %s13
  $region7: #{densenet_block_forward.5} parent=0 // loop_footer_branch
    %12 = sbr.rel target = $region3
  $region8: #{densenet_block_forward.5} parent=0 // loop_exit
    _

</llo_original>
